<compile_context>
chip_gen: v6e
topology: v6e:2x2x1
jax: 0.10.0
libtpu: 0.0.40
codegen_flags: <defaults>
</compile_context>

<pallas_src>
import functools

import jax
import jax.numpy as jnp
from jax import lax
from jax.experimental import pallas as pl
from jax.experimental.pallas import tpu as pltpu


# ----------------------------- Pallas kernel --------------------------------

def backbone_kernel(x_ref, w1_ref, w2_ref, bias_ref, out_ref, *,
                    num_blocks, res_scale):
    """One grid step = one batch element; all ResBlocks run in-kernel.

    x_ref:    (1, H, W*C)      activation, lane-dense (lane index = w*C + c)
    w1_ref:   (3*B, W*C, W*C)  banded conv1 weights, one matrix per (block, ky)
    w2_ref:   (3*B, W*C, W*C)  banded conv2 weights
    bias_ref: (2*B, 1, W*C)    lane-dense bias rows (conv1 row, conv2 row per block)
    out_ref:  (1, H, W*C)
    """
    H, WC = x_ref.shape[1], x_ref.shape[2]

    # Row-boundary masks for the ky = 0 / 2 taps (hoisted out of the block loop;
    # JAX does not CSE broadcast_in_dim).
    row = lax.broadcasted_iota(jnp.int32, (H, WC), 0)
    not_top = row != 0
    not_bot = row != (H - 1)

    def shifted_rows(a, ky):
        # Returns s with s[h, :] = a[h + ky - 1, :], zero outside [0, H).
        if ky == 1:
            return a
        if ky == 0:   # need a[h-1]: roll down by 1, zero row 0 (XLU roll + VPU select)
            return jnp.where(not_top, pltpu.roll(a, shift=1, axis=0), 0.0)
        # ky == 2: need a[h+1]: roll up by 1 (== down by H-1), zero last row
        return jnp.where(not_bot, pltpu.roll(a, shift=H - 1, axis=0), 0.0)

    def conv3x3(a, w_ref, b):
        # 3x3 SAME conv == 3 lane-dense MXU matmuls; kx shift, channel mixing and
        # the W-boundary zero padding are all encoded in the banded weight.
        acc = None
        for ky in range(3):
            t = jnp.dot(shifted_rows(a, ky), w_ref[3 * b + ky],
                        precision=lax.Precision.HIGHEST,
                        preferred_element_type=jnp.float32)
            acc = t if acc is None else acc + t
        return acc

    act = x_ref[0].astype(jnp.float32)                       # (H, W*C), ~2 vregs

    # Fully-unrolled in-kernel ResBlock loop (== lax.fori_loop(..., unroll=True)).
    # TODO(synk): for large B switch to lax.fori_loop with dynamic w_ref[3*b+ky]
    # indexing to bound code size / live ranges.
    for b in range(num_blocks):
        y = conv3x3(act, w1_ref, b) + bias_ref[2 * b]         # conv1 + bias
        y = jnp.maximum(y, 0.0)                               # relu, stays in vregs
        z = conv3x3(y, w2_ref, b) + bias_ref[2 * b + 1]       # conv2 + bias
        act = act + z * jnp.float32(res_scale)                # residual

    out_ref[0] = act.astype(out_ref.dtype)                    # lane-dense store


# ------------------------- weight / layout preprocessing ---------------------

def build_banded_weights(w_hwio, W):
    """(B, 3, 3, C, C) HWIO conv weights -> (3*B, W*C, W*C) banded matrices.

    banded[b*3 + ky][w_in*C + ci, w_out*C + co] =
        w_hwio[b, ky, kx, ci, co]  with kx = w_in - w_out + 1, if 0 <= kx <= 2
        0                          otherwise (encodes zero padding along W).
    """
    B = w_hwio.shape[0]
    C = w_hwio.shape[-1]
    WC = W * C
    kx = jnp.arange(W)[:, None] - jnp.arange(W)[None, :] + 1        # (w_in, w_out)
    valid = (kx >= 0) & (kx <= 2)
    blocks = w_hwio[:, :, jnp.clip(kx, 0, 2)]                       # (B,3,W,W,C,C)
    blocks = jnp.where(valid[None, None, :, :, None, None], blocks, 0.0)
    banded = blocks.transpose(0, 1, 2, 4, 3, 5).reshape(B, 3, WC, WC)
    return banded.reshape(B * 3, WC, WC).astype(jnp.float32)


def build_bias_rows(b1, b2, W):
    """(B, C) biases -> (2*B, 1, W*C) lane-dense rows (conv1 row, conv2 row)."""
    B, C = b1.shape
    rows = jnp.stack([jnp.tile(b1, (1, W)), jnp.tile(b2, (1, W))], axis=1)  # (B,2,W*C)
    return rows.reshape(B * 2, 1, W * C).astype(jnp.float32)


# ------------------------------ pallas_call wrapper ---------------------------

def resnet_backbone_lane_dense(x_wc, w1_banded, w2_banded, bias_rows, res_scale):
    """x_wc: (N, H, W*C) f32 lane-dense activations. Returns same shape."""
    N, H, WC = x_wc.shape
    B = w1_banded.shape[0] // 3

    flops = N * B * 2 * 3 * 2 * H * WC * WC                     # banded-matmul MACs*2
    bytes_accessed = 4 * (2 * N * H * WC + 2 * 3 * B * WC * WC + 2 * B * WC)

    kernel = functools.partial(backbone_kernel, num_blocks=B,
                               res_scale=float(res_scale))

    return pl.pallas_call(
        kernel,
        out_shape=jax.ShapeDtypeStruct((N, H, WC), jnp.float32),
        grid_spec=pltpu.PrefetchScalarGridSpec(
            num_scalar_prefetch=0,
            grid=(N,),                                           # B handled in-kernel
            in_specs=[
                pl.BlockSpec((1, H, WC), lambda n: (n, 0, 0)),            # activation
                # Constant block index -> fetched once, resident across the grid.
                pl.BlockSpec((3 * B, WC, WC), lambda n: (0, 0, 0)),       # conv1 banded
                pl.BlockSpec((3 * B, WC, WC), lambda n: (0, 0, 0)),       # conv2 banded
                pl.BlockSpec((2 * B, 1, WC), lambda n: (0, 0, 0)),        # bias rows
            ],
            out_specs=pl.BlockSpec((1, H, WC), lambda n: (n, 0, 0)),
        ),
        compiler_params=pltpu.CompilerParams(
            dimension_semantics=("parallel",),                   # megacore over batch
            vmem_limit_bytes=32 * 1024 * 1024),
        cost_estimate=pl.CostEstimate(flops=flops, transcendentals=0,
                                      bytes_accessed=bytes_accessed),
    )(x_wc, w1_banded, w2_banded, bias_rows)


@functools.partial(jax.jit, static_argnames=("res_scale",))
def resnet_backbone_apply(x_nchw, w1_banded, w2_banded, bias_rows, res_scale):
    """PyTorch-compatible entry: (N, C, H, W) -> (N, C, H, W).

    The NCHW <-> lane-dense relayout lives only in this compat adapter; keeping
    the surrounding model NHWC end-to-end removes the transposes entirely (the
    reshape to (N, H, W*C) is then a free view) so the kernel's HBM traffic stays
    read-once / write-once.
    """
    N, C, H, W = x_nchw.shape
    x_wc = jnp.transpose(x_nchw, (0, 2, 3, 1)).reshape(N, H, W * C)
    y = resnet_backbone_lane_dense(x_wc.astype(jnp.float32),
                                   w1_banded, w2_banded, bias_rows, res_scale)
    return jnp.transpose(y.reshape(N, H, W, C), (0, 3, 1, 2))


# ------------------------------ pure-JAX reference ----------------------------

def ref_backbone(x_nchw, w1_hwio, b1, w2_hwio, b2, res_scale):
    x = jnp.transpose(x_nchw, (0, 2, 3, 1)).astype(jnp.float32)
    for i in range(w1_hwio.shape[0]):
        y = lax.conv_general_dilated(
            x, w1_hwio[i], (1, 1), "SAME",
            dimension_numbers=("NHWC", "HWIO", "NHWC"),
            precision=lax.Precision.HIGHEST) + b1[i]
        y = jnp.maximum(y, 0.0)
        z = lax.conv_general_dilated(
            y, w2_hwio[i], (1, 1), "SAME",
            dimension_numbers=("NHWC", "HWIO", "NHWC"),
            precision=lax.Precision.HIGHEST) + b2[i]
        x = x + z * res_scale
    return jnp.transpose(x, (0, 3, 1, 2))


# ----------------------------------- main ------------------------------------

if __name__ == "__main__":
    B_BLOCKS = 2      # number of ResBlocks
    FEAT = 8          # channels F   (W * FEAT = 128 -> exactly one lane-dense row)
    H = W = 16
    RES_SCALE = 0.1

    key = jax.random.PRNGKey(0)
    k_x, k1, k2, k3, k4 = jax.random.split(key, 5)

    # PyTorch-style NCHW input: (batch=2, channels=8, 16, 16)
    x = jax.random.normal(k_x, (2, FEAT, H, W), jnp.float32)

    std = 1.0 / float((9 * FEAT) ** 0.5)
    w1 = jax.random.normal(k1, (B_BLOCKS, 3, 3, FEAT, FEAT), jnp.float32) * std  # HWIO
    b1 = jax.random.normal(k2, (B_BLOCKS, FEAT), jnp.float32) * 0.01
    w2 = jax.random.normal(k3, (B_BLOCKS, 3, 3, FEAT, FEAT), jnp.float32) * std
    b2 = jax.random.normal(k4, (B_BLOCKS, FEAT), jnp.float32) * 0.01

    # One-time weight preprocessing (tiny tensors, done outside the kernel).
    w1_banded = build_banded_weights(w1, W)
    w2_banded = build_banded_weights(w2, W)
    bias_rows = build_bias_rows(b1, b2, W)

    out = jax.block_until_ready(
        resnet_backbone_apply(x, w1_banded, w2_banded, bias_rows, RES_SCALE))
    ref = jax.block_until_ready(ref_backbone(x, w1, b1, w2, b2, RES_SCALE))

    assert out.shape == x.shape, (out.shape, x.shape)
    max_err = float(jnp.max(jnp.abs(out - ref)))
    assert max_err < 2e-3, max_err
    print("KERNEL_OK")
</pallas_src>

<mosaic_0001>
module attributes {stable_mosaic.version = 11 : i64} {
  func.func @backbone_kernel(%arg0: i32, %arg1: memref<1x16x128xf32, #tpu.memory_space<vmem>>, %arg2: memref<6x128x128xf32, #tpu.memory_space<vmem>>, %arg3: memref<6x128x128xf32, #tpu.memory_space<vmem>>, %arg4: memref<4x1x128xf32, #tpu.memory_space<vmem>>, %arg5: memref<1x16x128xf32, #tpu.memory_space<vmem>>) attributes {dimension_semantics = [#tpu.dimension_semantics<parallel>], iteration_bounds = array<i64: 2>, scalar_prefetch = 0 : i64, scratch_operands = 0 : i64, tpu.core_type = #tpu.core_type<tc>, window_params = [{transform_indices = @transform_0, window_bounds = array<i64: 1, 16, 128>}, {pipeline_mode = #tpu.pipeline_mode<synchronous>, transform_indices = @transform_1, window_bounds = array<i64: 6, 128, 128>}, {pipeline_mode = #tpu.pipeline_mode<synchronous>, transform_indices = @transform_2, window_bounds = array<i64: 6, 128, 128>}, {pipeline_mode = #tpu.pipeline_mode<synchronous>, transform_indices = @transform_3, window_bounds = array<i64: 4, 1, 128>}, {transform_indices = @transform_4, window_bounds = array<i64: 1, 16, 128>}]} {
    %0 = tpu.iota {dimensions = array<i32: 0>} : vector<16x128xi32>
    %c0_i32 = arith.constant 0 : i32
    %1 = vector.broadcast %c0_i32 : i32 to vector<16x128xi32>
    %2 = arith.cmpi ne, %0, %1 : vector<16x128xi32>
    %c15_i32 = arith.constant 15 : i32
    %3 = vector.broadcast %c15_i32 : i32 to vector<16x128xi32>
    %4 = arith.cmpi ne, %0, %3 : vector<16x128xi32>
    %c0 = arith.constant 0 : index
    %c0_0 = arith.constant 0 : index
    %c0_1 = arith.constant 0 : index
    %5 = vector.load %arg1[%c0, %c0_0, %c0_1] : memref<1x16x128xf32, #tpu.memory_space<vmem>>, vector<1x16x128xf32>
    %6 = vector.shape_cast %5 : vector<1x16x128xf32> to vector<16x128xf32>
    %c1_i32 = arith.constant 1 : i32
    %7 = tpu.dynamic_rotate %6 by %c1_i32 dim 0 : vector<16x128xf32>, i32 -> vector<16x128xf32>
    %cst = arith.constant 0.000000e+00 : f32
    %8 = vector.broadcast %cst : f32 to vector<16x128xf32>
    %9 = arith.select %2, %7, %8 : vector<16x128xi1>, vector<16x128xf32>
    %c0_2 = arith.constant 0 : index
    %c0_3 = arith.constant 0 : index
    %c0_4 = arith.constant 0 : index
    %10 = vector.load %arg2[%c0_2, %c0_3, %c0_4] : memref<6x128x128xf32, #tpu.memory_space<vmem>>, vector<1x128x128xf32>
    %11 = vector.shape_cast %10 : vector<1x128x128xf32> to vector<128x128xf32>
    %cst_5 = arith.constant dense<0.000000e+00> : vector<16x128xf32>
    %12 = tpu.matmul %9, %11, %cst_5 {dimension_numbers = #tpu.dot_dimension_numbers<[1], [0], [0], [1], [0, 0, 1, 1], [], []>, precision = #tpu.contract_precision<fp32>} : vector<16x128xf32>, vector<128x128xf32>, vector<16x128xf32> -> vector<16x128xf32>
    %c1 = arith.constant 1 : index
    %c0_6 = arith.constant 0 : index
    %c0_7 = arith.constant 0 : index
    %13 = vector.load %arg2[%c1, %c0_6, %c0_7] : memref<6x128x128xf32, #tpu.memory_space<vmem>>, vector<1x128x128xf32>
    %14 = vector.shape_cast %13 : vector<1x128x128xf32> to vector<128x128xf32>
    %cst_8 = arith.constant dense<0.000000e+00> : vector<16x128xf32>
    %15 = tpu.matmul %6, %14, %cst_8 {dimension_numbers = #tpu.dot_dimension_numbers<[1], [0], [0], [1], [0, 0, 1, 1], [], []>, precision = #tpu.contract_precision<fp32>} : vector<16x128xf32>, vector<128x128xf32>, vector<16x128xf32> -> vector<16x128xf32>
    %16 = arith.addf %12, %15 : vector<16x128xf32>
    %c15_i32_9 = arith.constant 15 : i32
    %17 = tpu.dynamic_rotate %6 by %c15_i32_9 dim 0 : vector<16x128xf32>, i32 -> vector<16x128xf32>
    %cst_10 = arith.constant 0.000000e+00 : f32
    %18 = vector.broadcast %cst_10 : f32 to vector<16x128xf32>
    %19 = arith.select %4, %17, %18 : vector<16x128xi1>, vector<16x128xf32>
    %c2 = arith.constant 2 : index
    %c0_11 = arith.constant 0 : index
    %c0_12 = arith.constant 0 : index
    %20 = vector.load %arg2[%c2, %c0_11, %c0_12] : memref<6x128x128xf32, #tpu.memory_space<vmem>>, vector<1x128x128xf32>
    %21 = vector.shape_cast %20 : vector<1x128x128xf32> to vector<128x128xf32>
    %cst_13 = arith.constant dense<0.000000e+00> : vector<16x128xf32>
    %22 = tpu.matmul %19, %21, %cst_13 {dimension_numbers = #tpu.dot_dimension_numbers<[1], [0], [0], [1], [0, 0, 1, 1], [], []>, precision = #tpu.contract_precision<fp32>} : vector<16x128xf32>, vector<128x128xf32>, vector<16x128xf32> -> vector<16x128xf32>
    %23 = arith.addf %16, %22 : vector<16x128xf32>
    %c0_14 = arith.constant 0 : index
    %c0_15 = arith.constant 0 : index
    %c0_16 = arith.constant 0 : index
    %24 = vector.load %arg4[%c0_14, %c0_15, %c0_16] : memref<4x1x128xf32, #tpu.memory_space<vmem>>, vector<1x1x128xf32>
    %25 = vector.shape_cast %24 : vector<1x1x128xf32> to vector<1x128xf32>
    %26 = vector.broadcast %25 : vector<1x128xf32> to vector<16x128xf32>
    %27 = arith.addf %23, %26 : vector<16x128xf32>
    %cst_17 = arith.constant 0.000000e+00 : f32
    %28 = vector.broadcast %cst_17 : f32 to vector<16x128xf32>
    %29 = arith.maximumf %27, %28 : vector<16x128xf32>
    %c1_i32_18 = arith.constant 1 : i32
    %30 = tpu.dynamic_rotate %29 by %c1_i32_18 dim 0 : vector<16x128xf32>, i32 -> vector<16x128xf32>
    %cst_19 = arith.constant 0.000000e+00 : f32
    %31 = vector.broadcast %cst_19 : f32 to vector<16x128xf32>
    %32 = arith.select %2, %30, %31 : vector<16x128xi1>, vector<16x128xf32>
    %c0_20 = arith.constant 0 : index
    %c0_21 = arith.constant 0 : index
    %c0_22 = arith.constant 0 : index
    %33 = vector.load %arg3[%c0_20, %c0_21, %c0_22] : memref<6x128x128xf32, #tpu.memory_space<vmem>>, vector<1x128x128xf32>
    %34 = vector.shape_cast %33 : vector<1x128x128xf32> to vector<128x128xf32>
    %cst_23 = arith.constant dense<0.000000e+00> : vector<16x128xf32>
    %35 = tpu.matmul %32, %34, %cst_23 {dimension_numbers = #tpu.dot_dimension_numbers<[1], [0], [0], [1], [0, 0, 1, 1], [], []>, precision = #tpu.contract_precision<fp32>} : vector<16x128xf32>, vector<128x128xf32>, vector<16x128xf32> -> vector<16x128xf32>
    %c1_24 = arith.constant 1 : index
    %c0_25 = arith.constant 0 : index
    %c0_26 = arith.constant 0 : index
    %36 = vector.load %arg3[%c1_24, %c0_25, %c0_26] : memref<6x128x128xf32, #tpu.memory_space<vmem>>, vector<1x128x128xf32>
    %37 = vector.shape_cast %36 : vector<1x128x128xf32> to vector<128x128xf32>
    %cst_27 = arith.constant dense<0.000000e+00> : vector<16x128xf32>
    %38 = tpu.matmul %29, %37, %cst_27 {dimension_numbers = #tpu.dot_dimension_numbers<[1], [0], [0], [1], [0, 0, 1, 1], [], []>, precision = #tpu.contract_precision<fp32>} : vector<16x128xf32>, vector<128x128xf32>, vector<16x128xf32> -> vector<16x128xf32>
    %39 = arith.addf %35, %38 : vector<16x128xf32>
    %c15_i32_28 = arith.constant 15 : i32
    %40 = tpu.dynamic_rotate %29 by %c15_i32_28 dim 0 : vector<16x128xf32>, i32 -> vector<16x128xf32>
    %cst_29 = arith.constant 0.000000e+00 : f32
    %41 = vector.broadcast %cst_29 : f32 to vector<16x128xf32>
    %42 = arith.select %4, %40, %41 : vector<16x128xi1>, vector<16x128xf32>
    %c2_30 = arith.constant 2 : index
    %c0_31 = arith.constant 0 : index
    %c0_32 = arith.constant 0 : index
    %43 = vector.load %arg3[%c2_30, %c0_31, %c0_32] : memref<6x128x128xf32, #tpu.memory_space<vmem>>, vector<1x128x128xf32>
    %44 = vector.shape_cast %43 : vector<1x128x128xf32> to vector<128x128xf32>
    %cst_33 = arith.constant dense<0.000000e+00> : vector<16x128xf32>
    %45 = tpu.matmul %42, %44, %cst_33 {dimension_numbers = #tpu.dot_dimension_numbers<[1], [0], [0], [1], [0, 0, 1, 1], [], []>, precision = #tpu.contract_precision<fp32>} : vector<16x128xf32>, vector<128x128xf32>, vector<16x128xf32> -> vector<16x128xf32>
    %46 = arith.addf %39, %45 : vector<16x128xf32>
    %c1_34 = arith.constant 1 : index
    %c0_35 = arith.constant 0 : index
    %c0_36 = arith.constant 0 : index
    %47 = vector.load %arg4[%c1_34, %c0_35, %c0_36] : memref<4x1x128xf32, #tpu.memory_space<vmem>>, vector<1x1x128xf32>
    %48 = vector.shape_cast %47 : vector<1x1x128xf32> to vector<1x128xf32>
    %49 = vector.broadcast %48 : vector<1x128xf32> to vector<16x128xf32>
    %50 = arith.addf %46, %49 : vector<16x128xf32>
    %cst_37 = arith.constant 1.000000e-01 : f32
    %51 = vector.broadcast %cst_37 : f32 to vector<16x128xf32>
    %52 = arith.mulf %50, %51 : vector<16x128xf32>
    %53 = arith.addf %6, %52 : vector<16x128xf32>
    %c1_i32_38 = arith.constant 1 : i32
    %54 = tpu.dynamic_rotate %53 by %c1_i32_38 dim 0 : vector<16x128xf32>, i32 -> vector<16x128xf32>
    %cst_39 = arith.constant 0.000000e+00 : f32
    %55 = vector.broadcast %cst_39 : f32 to vector<16x128xf32>
    %56 = arith.select %2, %54, %55 : vector<16x128xi1>, vector<16x128xf32>
    %c3 = arith.constant 3 : index
    %c0_40 = arith.constant 0 : index
    %c0_41 = arith.constant 0 : index
    %57 = vector.load %arg2[%c3, %c0_40, %c0_41] : memref<6x128x128xf32, #tpu.memory_space<vmem>>, vector<1x128x128xf32>
    %58 = vector.shape_cast %57 : vector<1x128x128xf32> to vector<128x128xf32>
    %cst_42 = arith.constant dense<0.000000e+00> : vector<16x128xf32>
    %59 = tpu.matmul %56, %58, %cst_42 {dimension_numbers = #tpu.dot_dimension_numbers<[1], [0], [0], [1], [0, 0, 1, 1], [], []>, precision = #tpu.contract_precision<fp32>} : vector<16x128xf32>, vector<128x128xf32>, vector<16x128xf32> -> vector<16x128xf32>
    %c4 = arith.constant 4 : index
    %c0_43 = arith.constant 0 : index
    %c0_44 = arith.constant 0 : index
    %60 = vector.load %arg2[%c4, %c0_43, %c0_44] : memref<6x128x128xf32, #tpu.memory_space<vmem>>, vector<1x128x128xf32>
    %61 = vector.shape_cast %60 : vector<1x128x128xf32> to vector<128x128xf32>
    %cst_45 = arith.constant dense<0.000000e+00> : vector<16x128xf32>
    %62 = tpu.matmul %53, %61, %cst_45 {dimension_numbers = #tpu.dot_dimension_numbers<[1], [0], [0], [1], [0, 0, 1, 1], [], []>, precision = #tpu.contract_precision<fp32>} : vector<16x128xf32>, vector<128x128xf32>, vector<16x128xf32> -> vector<16x128xf32>
    %63 = arith.addf %59, %62 : vector<16x128xf32>
    %c15_i32_46 = arith.constant 15 : i32
    %64 = tpu.dynamic_rotate %53 by %c15_i32_46 dim 0 : vector<16x128xf32>, i32 -> vector<16x128xf32>
    %cst_47 = arith.constant 0.000000e+00 : f32
    %65 = vector.broadcast %cst_47 : f32 to vector<16x128xf32>
    %66 = arith.select %4, %64, %65 : vector<16x128xi1>, vector<16x128xf32>
    %c5 = arith.constant 5 : index
    %c0_48 = arith.constant 0 : index
    %c0_49 = arith.constant 0 : index
    %67 = vector.load %arg2[%c5, %c0_48, %c0_49] : memref<6x128x128xf32, #tpu.memory_space<vmem>>, vector<1x128x128xf32>
    %68 = vector.shape_cast %67 : vector<1x128x128xf32> to vector<128x128xf32>
    %cst_50 = arith.constant dense<0.000000e+00> : vector<16x128xf32>
    %69 = tpu.matmul %66, %68, %cst_50 {dimension_numbers = #tpu.dot_dimension_numbers<[1], [0], [0], [1], [0, 0, 1, 1], [], []>, precision = #tpu.contract_precision<fp32>} : vector<16x128xf32>, vector<128x128xf32>, vector<16x128xf32> -> vector<16x128xf32>
    %70 = arith.addf %63, %69 : vector<16x128xf32>
    %c2_51 = arith.constant 2 : index
    %c0_52 = arith.constant 0 : index
    %c0_53 = arith.constant 0 : index
    %71 = vector.load %arg4[%c2_51, %c0_52, %c0_53] : memref<4x1x128xf32, #tpu.memory_space<vmem>>, vector<1x1x128xf32>
    %72 = vector.shape_cast %71 : vector<1x1x128xf32> to vector<1x128xf32>
    %73 = vector.broadcast %72 : vector<1x128xf32> to vector<16x128xf32>
    %74 = arith.addf %70, %73 : vector<16x128xf32>
    %cst_54 = arith.constant 0.000000e+00 : f32
    %75 = vector.broadcast %cst_54 : f32 to vector<16x128xf32>
    %76 = arith.maximumf %74, %75 : vector<16x128xf32>
    %c1_i32_55 = arith.constant 1 : i32
    %77 = tpu.dynamic_rotate %76 by %c1_i32_55 dim 0 : vector<16x128xf32>, i32 -> vector<16x128xf32>
    %cst_56 = arith.constant 0.000000e+00 : f32
    %78 = vector.broadcast %cst_56 : f32 to vector<16x128xf32>
    %79 = arith.select %2, %77, %78 : vector<16x128xi1>, vector<16x128xf32>
    %c3_57 = arith.constant 3 : index
    %c0_58 = arith.constant 0 : index
    %c0_59 = arith.constant 0 : index
    %80 = vector.load %arg3[%c3_57, %c0_58, %c0_59] : memref<6x128x128xf32, #tpu.memory_space<vmem>>, vector<1x128x128xf32>
    %81 = vector.shape_cast %80 : vector<1x128x128xf32> to vector<128x128xf32>
    %cst_60 = arith.constant dense<0.000000e+00> : vector<16x128xf32>
    %82 = tpu.matmul %79, %81, %cst_60 {dimension_numbers = #tpu.dot_dimension_numbers<[1], [0], [0], [1], [0, 0, 1, 1], [], []>, precision = #tpu.contract_precision<fp32>} : vector<16x128xf32>, vector<128x128xf32>, vector<16x128xf32> -> vector<16x128xf32>
    %c4_61 = arith.constant 4 : index
    %c0_62 = arith.constant 0 : index
    %c0_63 = arith.constant 0 : index
    %83 = vector.load %arg3[%c4_61, %c0_62, %c0_63] : memref<6x128x128xf32, #tpu.memory_space<vmem>>, vector<1x128x128xf32>
    %84 = vector.shape_cast %83 : vector<1x128x128xf32> to vector<128x128xf32>
    %cst_64 = arith.constant dense<0.000000e+00> : vector<16x128xf32>
    %85 = tpu.matmul %76, %84, %cst_64 {dimension_numbers = #tpu.dot_dimension_numbers<[1], [0], [0], [1], [0, 0, 1, 1], [], []>, precision = #tpu.contract_precision<fp32>} : vector<16x128xf32>, vector<128x128xf32>, vector<16x128xf32> -> vector<16x128xf32>
    %86 = arith.addf %82, %85 : vector<16x128xf32>
    %c15_i32_65 = arith.constant 15 : i32
    %87 = tpu.dynamic_rotate %76 by %c15_i32_65 dim 0 : vector<16x128xf32>, i32 -> vector<16x128xf32>
    %cst_66 = arith.constant 0.000000e+00 : f32
    %88 = vector.broadcast %cst_66 : f32 to vector<16x128xf32>
    %89 = arith.select %4, %87, %88 : vector<16x128xi1>, vector<16x128xf32>
    %c5_67 = arith.constant 5 : index
    %c0_68 = arith.constant 0 : index
    %c0_69 = arith.constant 0 : index
    %90 = vector.load %arg3[%c5_67, %c0_68, %c0_69] : memref<6x128x128xf32, #tpu.memory_space<vmem>>, vector<1x128x128xf32>
    %91 = vector.shape_cast %90 : vector<1x128x128xf32> to vector<128x128xf32>
    %cst_70 = arith.constant dense<0.000000e+00> : vector<16x128xf32>
    %92 = tpu.matmul %89, %91, %cst_70 {dimension_numbers = #tpu.dot_dimension_numbers<[1], [0], [0], [1], [0, 0, 1, 1], [], []>, precision = #tpu.contract_precision<fp32>} : vector<16x128xf32>, vector<128x128xf32>, vector<16x128xf32> -> vector<16x128xf32>
    %93 = arith.addf %86, %92 : vector<16x128xf32>
    %c3_71 = arith.constant 3 : index
    %c0_72 = arith.constant 0 : index
    %c0_73 = arith.constant 0 : index
    %94 = vector.load %arg4[%c3_71, %c0_72, %c0_73] : memref<4x1x128xf32, #tpu.memory_space<vmem>>, vector<1x1x128xf32>
    %95 = vector.shape_cast %94 : vector<1x1x128xf32> to vector<1x128xf32>
    %96 = vector.broadcast %95 : vector<1x128xf32> to vector<16x128xf32>
    %97 = arith.addf %93, %96 : vector<16x128xf32>
    %cst_74 = arith.constant 1.000000e-01 : f32
    %98 = vector.broadcast %cst_74 : f32 to vector<16x128xf32>
    %99 = arith.mulf %97, %98 : vector<16x128xf32>
    %100 = arith.addf %53, %99 : vector<16x128xf32>
    %c0_75 = arith.constant 0 : index
    %c0_76 = arith.constant 0 : index
    %c0_77 = arith.constant 0 : index
    %101 = vector.load %arg5[%c0_75, %c0_76, %c0_77] : memref<1x16x128xf32, #tpu.memory_space<vmem>>, vector<1x16x128xf32>
    %102 = vector.shape_cast %101 : vector<1x16x128xf32> to vector<16x128xf32>
    %103 = vector.shape_cast %100 : vector<16x128xf32> to vector<1x16x128xf32>
    tpu.vector_store %arg5[%c0_75, %c0_76, %c0_77], %103 {strides = array<i32>} : memref<1x16x128xf32, #tpu.memory_space<vmem>>, vector<1x16x128xf32>,
    return
  }
  func.func @transform_0(%arg0: i32) -> (i32, i32, i32) {
    %c0_i32 = arith.constant 0 : i32
    %c0_i32_0 = arith.constant 0 : i32
    %c0_i32_1 = arith.constant 0 : i32
    return %arg0, %c0_i32, %c0_i32_0 : i32, i32, i32
  }
  func.func @transform_1(%arg0: i32) -> (i32, i32, i32) {
    %c0_i32 = arith.constant 0 : i32
    %c0_i32_0 = arith.constant 0 : i32
    %c0_i32_1 = arith.constant 0 : i32
    %c0_i32_2 = arith.constant 0 : i32
    return %c0_i32, %c0_i32_0, %c0_i32_1 : i32, i32, i32
  }
  func.func @transform_2(%arg0: i32) -> (i32, i32, i32) {
    %c0_i32 = arith.constant 0 : i32
    %c0_i32_0 = arith.constant 0 : i32
    %c0_i32_1 = arith.constant 0 : i32
    %c0_i32_2 = arith.constant 0 : i32
    return %c0_i32, %c0_i32_0, %c0_i32_1 : i32, i32, i32
  }
  func.func @transform_3(%arg0: i32) -> (i32, i32, i32) {
    %c0_i32 = arith.constant 0 : i32
    %c0_i32_0 = arith.constant 0 : i32
    %c0_i32_1 = arith.constant 0 : i32
    %c0_i32_2 = arith.constant 0 : i32
    return %c0_i32, %c0_i32_0, %c0_i32_1 : i32, i32, i32
  }
  func.func @transform_4(%arg0: i32) -> (i32, i32, i32) {
    %c0_i32 = arith.constant 0 : i32
    %c0_i32_0 = arith.constant 0 : i32
    %c0_i32_1 = arith.constant 0 : i32
    return %arg0, %c0_i32, %c0_i32_0 : i32, i32, i32
  }
}

</mosaic_0001>

<llo_original>
// kernel: resnet_backbone_apply.1
$region0: #{resnet_backbone_apply.1}
  #allocation0 [shape = 'u32[]', space=smem, size = 0x4, offset = 0x4, fixed_abs, tag = 'smem constant byte address 0x4 - core index']
  #allocation1 [shape = 'u32[144,128]{1,0:T(1,128)}', space=vmem, size = 0x12000, scoped, tag = 'internal scratch']
  %s0 = inlined_call_operand.vmem [shape: f32[2,16,128], index: 0, kind: input, shape index: {}]
  %s1 = inlined_call_operand.vmem [shape: f32[6,128,128], index: 1, kind: input, shape index: {}]
  %s2 = inlined_call_operand.hbm [shape: f32[6,128,128], index: 2, kind: input, shape index: {}]
  %s3 = inlined_call_operand.vmem [shape: f32[4,1,128], index: 3, kind: input, shape index: {}]
  %s4 = inlined_call_operand.vmem [shape: f32[2,16,128], index: 4, kind: output, shape index: {}]
  %s5 = sld [smem:[#allocation0]]
  $region53: #{resnet_backbone_apply.1} parent=0
    _
  %s7 = ssub.s32 1, %s5
  %s8 = scalar_select 0, %s7, %s5
  $region1: #{resnet_backbone_apply.1} parent=0
    #allocation2 [shape = 'u8[393216]{0}', space=vmem, size = 0x60000, scoped, tag = 'input window, operand 2, single buffered']
    #allocation3 [shape = 's32[2]{0}', space=sflag, size = 0x8, scoped, tag = 'scoped memory for resnet_backbone_apply.1']
    %9 = vsyncpa [#allocation3], 0
    loop: start=0, step=1, limit=4
    $region2: #{resnet_backbone_apply.1} parent=1 // loop_pre_header
      _
    $region3: #{resnet_backbone_apply.1} parent=1 // loop_header
      %s11 = sphi 0, %s15
      %p12 = scmp.ge.s32.totalorder %s11, 4
      %s21 = sphi 0, %s23
      %s24 = sphi 0, %s21
      %s25 = sphi 0, %s24
      %s41 = sphi 0, %s25
      %s45 = sphi 0, %s45
      %s47 = sphi 0, %s45
      %s48 = sphi 0, %s47
      %s62 = sphi 0, %s48
      %s66 = sphi 0, %s66
      %s68 = sphi 0, %s66
      %s69 = sphi 0, %s68
      %s83 = sphi 0, %s69
      %s87 = sphi 0, %s87
      %s89 = sphi 0, %s87
      %s90 = sphi 0, %s89
      %s104 = sphi 0, %s90
      %s110 = sphi 0, %s112
      %s113 = sphi 0, %s110
      %s114 = sphi 0, %s113
      %s130 = sphi 0, %s114
    $region4: #{resnet_backbone_apply.1} parent=1 // loop_header_branch
      %14 = sbr.rel (%p12) target = $region8
    $region5: #{resnet_backbone_apply.1} parent=1 // loop_body
      %s16 = ssub.s32 %s11, 1
      %s17 = ssub.s32 %s11, 2
      %s18 = sadd.s32 %s11, 1
      %s19 = ssub.s32 %s11, %s18
      %p20 = scmp.eq.s32.totalorder %s19, 0
      %s22 = sadd.s32 %s21, 1
      %s23 = scalar_select %p20, %s21, %s22
      %p26 = pneg %p20
      %p27 = scmp.eq.s32.totalorder %s11, 1
      %p28 = por %p26, %p27
      %p29 = scmp.ne.s32.totalorder %s21, %s24
      %p30 = scmp.eq.s32.totalorder %s11, 0
      %p31 = por %p29, %p30
      %p32 = scmp.ne.s32.totalorder %s21, %s24
      %p33 = scmp.eq.s32.totalorder %s16, 1
      %p34 = por %p32, %p33
      %p35 = scmp.ne.s32.totalorder %s24, %s25
      %p36 = scmp.eq.s32.totalorder %s16, 0
      %p37 = por %p35, %p36
      %p38 = scmp.ne.s32.totalorder %s24, %s25
      %p39 = scmp.eq.s32.totalorder %s17, 1
      %p40 = por %p38, %p39
      %p42 = scmp.ne.s32.totalorder %s25, %s41
      %p43 = scmp.eq.s32.totalorder %s17, 0
      %p44 = por %p42, %p43
      %s46 = sadd.s32 %s45, 1
      %p49 = scmp.eq.s32.totalorder %s11, 1
      %p50 = scmp.ne.s32.totalorder %s45, %s47
      %p51 = scmp.eq.s32.totalorder %s11, 0
      %p52 = por %p50, %p51
      %p53 = scmp.ne.s32.totalorder %s45, %s47
      %p54 = scmp.eq.s32.totalorder %s16, 1
      %p55 = por %p53, %p54
      %p56 = scmp.ne.s32.totalorder %s47, %s48
      %p57 = scmp.eq.s32.totalorder %s16, 0
      %p58 = por %p56, %p57
      %p59 = scmp.ne.s32.totalorder %s47, %s48
      %p60 = scmp.eq.s32.totalorder %s17, 1
      %p61 = por %p59, %p60
      %p63 = scmp.ne.s32.totalorder %s48, %s62
      %p64 = scmp.eq.s32.totalorder %s17, 0
      %p65 = por %p63, %p64
      %s67 = sadd.s32 %s66, 1
      %p70 = scmp.eq.s32.totalorder %s11, 1
      %p71 = scmp.ne.s32.totalorder %s66, %s68
      %p72 = scmp.eq.s32.totalorder %s11, 0
      %p73 = por %p71, %p72
      %p74 = scmp.ne.s32.totalorder %s66, %s68
      %p75 = scmp.eq.s32.totalorder %s16, 1
      %p76 = por %p74, %p75
      %p77 = scmp.ne.s32.totalorder %s68, %s69
      %p78 = scmp.eq.s32.totalorder %s16, 0
      %p79 = por %p77, %p78
      %p80 = scmp.ne.s32.totalorder %s68, %s69
      %p81 = scmp.eq.s32.totalorder %s17, 1
      %p82 = por %p80, %p81
      %p84 = scmp.ne.s32.totalorder %s69, %s83
      %p85 = scmp.eq.s32.totalorder %s17, 0
      %p86 = por %p84, %p85
      %s88 = sadd.s32 %s87, 1
      %p91 = scmp.eq.s32.totalorder %s11, 1
      %p92 = scmp.ne.s32.totalorder %s87, %s89
      %p93 = scmp.eq.s32.totalorder %s11, 0
      %p94 = por %p92, %p93
      %p95 = scmp.ne.s32.totalorder %s87, %s89
      %p96 = scmp.eq.s32.totalorder %s16, 1
      %p97 = por %p95, %p96
      %p98 = scmp.ne.s32.totalorder %s89, %s90
      %p99 = scmp.eq.s32.totalorder %s16, 0
      %p100 = por %p98, %p99
      %p101 = scmp.ne.s32.totalorder %s89, %s90
      %p102 = scmp.eq.s32.totalorder %s17, 1
      %p103 = por %p101, %p102
      %p105 = scmp.ne.s32.totalorder %s90, %s104
      %p106 = scmp.eq.s32.totalorder %s17, 0
      %p107 = por %p105, %p106
      %s108 = ssub.s32 %s11, %s18
      %p109 = scmp.eq.s32.totalorder %s108, 0
      %s111 = sadd.s32 %s110, 1
      %s112 = scalar_select %p109, %s110, %s111
      %p115 = pneg %p109
      %p116 = scmp.eq.s32.totalorder %s11, 1
      %p117 = por %p115, %p116
      %p118 = scmp.ne.s32.totalorder %s110, %s113
      %p119 = scmp.eq.s32.totalorder %s11, 0
      %p120 = por %p118, %p119
      %p121 = scmp.ne.s32.totalorder %s110, %s113
      %p122 = scmp.eq.s32.totalorder %s16, 1
      %p123 = por %p121, %p122
      %p124 = scmp.ne.s32.totalorder %s113, %s114
      %p125 = scmp.eq.s32.totalorder %s16, 0
      %p126 = por %p124, %p125
      %p127 = scmp.ne.s32.totalorder %s113, %s114
      %p128 = scmp.eq.s32.totalorder %s17, 1
      %p129 = por %p127, %p128
      %p131 = scmp.ne.s32.totalorder %s114, %s130
      %p132 = scmp.eq.s32.totalorder %s17, 0
      %p133 = por %p131, %p132
      %p134 = scmp.le.s32.totalorder 1, %s11
      %p135 = scmp.lt.s32.totalorder %s11, 3
      %p136 = pnand %p134, %p135
      %p137 = pneg %p136
      // Predicated region
      $region9: #{resnet_backbone_apply.1} parent=5 // pred_check
        _
      $region10: #{resnet_backbone_apply.1} parent=5 // pred_check_branch
        %139 = sbr.rel (%p136) target = $region12
      $region11: #{resnet_backbone_apply.1} parent=5 // pred_region
        %s140 = ssub.s32 %s11, 1
        // Predicated region
        $region13: #{resnet_backbone_apply.1} parent=11 // pred_check
          %p141 = pneg %p58
        $region14: #{resnet_backbone_apply.1} parent=11 // pred_check_branch
          %143 = sbr.rel (%p141) target = $region16
        $region15: #{resnet_backbone_apply.1} parent=11 // pred_region
          _
        $region16: #{resnet_backbone_apply.1} parent=11 // pred_fallthru
          _
        // Predicated region
        $region17: #{resnet_backbone_apply.1} parent=11 // pred_check
          %p144 = pneg %p79
        $region18: #{resnet_backbone_apply.1} parent=11 // pred_check_branch
          %146 = sbr.rel (%p144) target = $region20
        $region19: #{resnet_backbone_apply.1} parent=11 // pred_region
          %s148 = ssub.s32 12288, 12288
          %149 = vsyncadd [#allocation3], %s148
          %s150 = sshll.u32 [#allocation2], 4
          %s151 = int_to_ptr.vmem [resolvable:$true] %s150
          %156 = dma.hbm_to_vmem [thread:$0]  %s2, 12288, %s151, [#allocation3], 128, 128, 8
        $region20: #{resnet_backbone_apply.1} parent=11 // pred_fallthru
          _
        // Predicated region
        $region21: #{resnet_backbone_apply.1} parent=11 // pred_check
          %p157 = pneg %p100
        $region22: #{resnet_backbone_apply.1} parent=11 // pred_check_branch
          %159 = sbr.rel (%p157) target = $region24
        $region23: #{resnet_backbone_apply.1} parent=11 // pred_region
          _
        $region24: #{resnet_backbone_apply.1} parent=11 // pred_fallthru
          _
      $region12: #{resnet_backbone_apply.1} parent=5 // pred_fallthru
        _
      %p160 = scmp.lt.s32.totalorder %s11, 2
      // Predicated region
      $region25: #{resnet_backbone_apply.1} parent=5 // pred_check
        %p161 = pneg %p160
      $region26: #{resnet_backbone_apply.1} parent=5 // pred_check_branch
        %163 = sbr.rel (%p161) target = $region28
      $region27: #{resnet_backbone_apply.1} parent=5 // pred_region
        // Predicated region
        $region29: #{resnet_backbone_apply.1} parent=27 // pred_check
          %p164 = pneg %p31
        $region30: #{resnet_backbone_apply.1} parent=27 // pred_check_branch
          %166 = sbr.rel (%p164) target = $region32
        $region31: #{resnet_backbone_apply.1} parent=27 // pred_region
          %p167 = scmp.lt.s32.totalorder %s11, 1
          %s168 = scalar_select %p167, %s11, 1
          %s169 = smul.addr %s168, 2
          %s170 = smul.addr %s169, 8
          %s171 = scalar_lea.vmem %s0, %s170
        $region32: #{resnet_backbone_apply.1} parent=27 // pred_fallthru
          _
      $region28: #{resnet_backbone_apply.1} parent=5 // pred_fallthru
        _
      %p172 = scmp.le.s32.totalorder 1, %s11
      %p173 = scmp.lt.s32.totalorder %s11, 3
      %p174 = pnand %p172, %p173
      %p175 = pneg %p174
      // Predicated region
      $region33: #{resnet_backbone_apply.1} parent=5 // pred_check
        _
      $region34: #{resnet_backbone_apply.1} parent=5 // pred_check_branch
        %177 = sbr.rel (%p174) target = $region36
      $region35: #{resnet_backbone_apply.1} parent=5 // pred_region
        %s178 = ssub.s32 %s11, 1
        // Predicated region
        $region37: #{resnet_backbone_apply.1} parent=35 // pred_check
          %p179 = pneg %p79
        $region38: #{resnet_backbone_apply.1} parent=35 // pred_check_branch
          %181 = sbr.rel (%p179) target = $region40
        $region39: #{resnet_backbone_apply.1} parent=35 // pred_region
          %182 = dma.done [#allocation3], 12288
        $region40: #{resnet_backbone_apply.1} parent=35 // pred_fallthru
          _
        %p183 = scmp.lt.s32.totalorder %s16, 1
        %s184 = scalar_select %p183, %s16, 1
        %s185 = smul.addr %s184, 2
        %s186 = smul.addr %s185, 8
        %s187 = scalar_lea.vmem %s0, %s186
        %p188 = pneg %p37
        %p189 = pneg %p34
        %p190 = pneg %p58
        %p191 = pneg %p55
        %p192 = pneg %p79
        %p193 = pneg %p76
        %p194 = pneg %p100
        %p195 = pneg %p97
        %p196 = pneg %p126
        %p197 = pneg %p123
        %p198 = scmp.lt.s32.totalorder %s16, 1
        %s199 = scalar_select %p198, %s16, 1
        %s200 = smul.addr %s199, 2
        %s201 = smul.addr %s200, 8
        %s202 = scalar_lea.vmem %s4, %s201
        %p203 = scmp.lt.s32.totalorder %s16, 1
        %s204 = scalar_select %p203, %s16, 1
        %s205 = smul.addr %s204, 2
        %s206 = smul.addr %s205, 8
        %s207 = scalar_lea.vmem %s0, %s206
        %p208 = scmp.lt.s32.totalorder %s16, 1
        %s209 = scalar_select %p208, %s16, 1
        %s210 = smul.addr %s209, 2
        %s211 = smul.addr %s210, 8
        %s212 = scalar_lea.vmem %s4, %s211
        %v213 = vlaneseq
        %v214 = vshrl.u32 %v213, 7
        %v215 = vadd.s32 %v214, 8
        %vm216 = vcmp.ne.s32.totalorder %v214, 0
        %vm217 = vcmp.ne.s32.totalorder %v215, 0
        %vm218 = vcmp.ne.s32.totalorder %v214, 15
        %vm219 = vcmp.ne.s32.totalorder %v215, 15
        %v220 = vld [vmem:[%s207] sm:$0xff]
        %v221 = vld [vmem:[%s207 + $0x8] sm:$0xff]
        %v222 = vrot.slane %v220, 7
        %v223 = vrot.slane %v221, 7
        %vm224 = vcmp.lt.s32.totalorder %v214, 1
        %v225 = vsel %vm224, %v222, %v223
        %v226 = vsel %vm224, %v223, %v222
        %v227 = vsel %vm216, %v226, 0.0
        %v228 = vsel %vm217, %v225, 0.0
        %v229 = vld [vmem:[%s1] sm:$0xff]
        %v230 = vld [vmem:[%s1 + $0x8] sm:$0xff]
        %v231 = vld [vmem:[%s1 + $0x10] sm:$0xff]
        %v232 = vld [vmem:[%s1 + $0x18] sm:$0xff]
        %v233 = vld [vmem:[%s1 + $0x20] sm:$0xff]
        %v234 = vld [vmem:[%s1 + $0x28] sm:$0xff]
        %v235 = vld [vmem:[%s1 + $0x30] sm:$0xff]
        %v236 = vld [vmem:[%s1 + $0x38] sm:$0xff]
        %v237 = vld [vmem:[%s1 + $0x40] sm:$0xff]
        %v238 = vld [vmem:[%s1 + $0x48] sm:$0xff]
        %v239 = vld [vmem:[%s1 + $0x50] sm:$0xff]
        %v240 = vld [vmem:[%s1 + $0x58] sm:$0xff]
        %v241 = vld [vmem:[%s1 + $0x60] sm:$0xff]
        %v242 = vld [vmem:[%s1 + $0x68] sm:$0xff]
        %v243 = vld [vmem:[%s1 + $0x70] sm:$0xff]
        %v244 = vld [vmem:[%s1 + $0x78] sm:$0xff]
        %s245 = scalar_lea.vmem %s1, 128
        %v246 = vld [vmem:[%s245] sm:$0xff]
        %v247 = vld [vmem:[%s245 + $0x8] sm:$0xff]
        %v248 = vld [vmem:[%s245 + $0x10] sm:$0xff]
        %v249 = vld [vmem:[%s245 + $0x18] sm:$0xff]
        %v250 = vld [vmem:[%s245 + $0x20] sm:$0xff]
        %v251 = vld [vmem:[%s245 + $0x28] sm:$0xff]
        %v252 = vld [vmem:[%s245 + $0x30] sm:$0xff]
        %v253 = vld [vmem:[%s245 + $0x38] sm:$0xff]
        %v254 = vld [vmem:[%s245 + $0x40] sm:$0xff]
        %v255 = vld [vmem:[%s245 + $0x48] sm:$0xff]
        %v256 = vld [vmem:[%s245 + $0x50] sm:$0xff]
        %v257 = vld [vmem:[%s245 + $0x58] sm:$0xff]
        %v258 = vld [vmem:[%s245 + $0x60] sm:$0xff]
        %v259 = vld [vmem:[%s245 + $0x68] sm:$0xff]
        %v260 = vld [vmem:[%s245 + $0x70] sm:$0xff]
        %v261 = vld [vmem:[%s245 + $0x78] sm:$0xff]
        %262 = vmatprep.subr.mxu0 0.0
        %v263 = vand.u32 %v261, 4294901760
        %264 = vmatpush1.msra.mxu0 %v263
        %265 = vmatprep.subr.mxu0 0.0
        %v266 = vand.u32 %v260, 4294901760
        %267 = vmatpush1.msra.mxu0 %v266
        %268 = vmatprep.subr.mxu0 0.0
        %v269 = vand.u32 %v259, 4294901760
        %270 = vmatpush1.msra.mxu0 %v269
        %271 = vmatprep.subr.mxu0 0.0
        %v272 = vand.u32 %v258, 4294901760
        %273 = vmatpush1.msra.mxu0 %v272
        %274 = vmatprep.subr.mxu0 0.0
        %v275 = vand.u32 %v257, 4294901760
        %276 = vmatpush1.msra.mxu0 %v275
        %277 = vmatprep.subr.mxu0 0.0
        %v278 = vand.u32 %v256, 4294901760
        %279 = vmatpush1.msra.mxu0 %v278
        %280 = vmatprep.subr.mxu0 0.0
        %v281 = vand.u32 %v255, 4294901760
        %282 = vmatpush1.msra.mxu0 %v281
        %283 = vmatprep.subr.mxu0 0.0
        %v284 = vand.u32 %v254, 4294901760
        %285 = vmatpush1.msra.mxu0 %v284
        %286 = vmatprep.subr.mxu0 0.0
        %v287 = vand.u32 %v253, 4294901760
        %288 = vmatpush1.msra.mxu0 %v287
        %289 = vmatprep.subr.mxu0 0.0
        %v290 = vand.u32 %v252, 4294901760
        %291 = vmatpush1.msra.mxu0 %v290
        %292 = vmatprep.subr.mxu0 0.0
        %v293 = vand.u32 %v251, 4294901760
        %294 = vmatpush1.msra.mxu0 %v293
        %295 = vmatprep.subr.mxu0 0.0
        %v296 = vand.u32 %v250, 4294901760
        %297 = vmatpush1.msra.mxu0 %v296
        %298 = vmatprep.subr.mxu0 0.0
        %v299 = vand.u32 %v249, 4294901760
        %300 = vmatpush1.msra.mxu0 %v299
        %301 = vmatprep.subr.mxu0 0.0
        %v302 = vand.u32 %v248, 4294901760
        %303 = vmatpush1.msra.mxu0 %v302
        %304 = vmatprep.subr.mxu0 0.0
        %v305 = vand.u32 %v247, 4294901760
        %306 = vmatpush1.msra.mxu0 %v305
        %307 = vmatprep.subr.mxu0 0.0
        %v308 = vand.u32 %v246, 4294901760
        %309 = vmatpush1.msra.mxu0 %v308
        %310 = vmatprep.subr.mxu0 0.0
        %311 = vmatpush2.msra.mxu0 0.0
        %312 = vmatprep.subr.mxu0 0.0
        %313 = vmatpush2.msra.mxu0 0.0
        %314 = vmatprep.subr.mxu0 0.0
        %315 = vmatpush2.msra.mxu0 0.0
        %316 = vmatprep.subr.mxu0 0.0
        %317 = vmatpush2.msra.mxu0 0.0
        %318 = vmatprep.subr.mxu0 0.0
        %319 = vmatpush2.msra.mxu0 0.0
        %320 = vmatprep.subr.mxu0 0.0
        %321 = vmatpush2.msra.mxu0 0.0
        %322 = vmatprep.subr.mxu0 0.0
        %323 = vmatpush2.msra.mxu0 0.0
        %324 = vmatprep.subr.mxu0 0.0
        %325 = vmatpush2.msra.mxu0 0.0
        %326 = vmatprep.subr.mxu0 0.0
        %327 = vmatpush2.msra.mxu0 0.0
        %328 = vmatprep.subr.mxu0 0.0
        %329 = vmatpush2.msra.mxu0 0.0
        %330 = vmatprep.subr.mxu0 0.0
        %331 = vmatpush2.msra.mxu0 0.0
        %332 = vmatprep.subr.mxu0 0.0
        %333 = vmatpush2.msra.mxu0 0.0
        %334 = vmatprep.subr.mxu0 0.0
        %335 = vmatpush2.msra.mxu0 0.0
        %336 = vmatprep.subr.mxu0 0.0
        %337 = vmatpush2.msra.mxu0 0.0
        %338 = vmatprep.subr.mxu0 0.0
        %339 = vmatpush2.msra.mxu0 0.0
        %340 = vmatprep.subr.mxu0 0.0
        %341 = vmatpush2.msra.mxu0 0.0
        %342 = vmatprep.mubr.f32.mxu0 0.0
        %v343 = vand.u32 %v220, 4294901760
        %v344 = vsub.f32 %v220, %v343
        %v345 = vand.u32 %v344, 4294901760
        %v346 = vsub.f32 %v344, %v345
        %v347 = vand.u32 %v346, 4294901760
        %348 = vmatmul.mubr.f32.gmra.mxu0 %v347
        %v349 = vpop.f32.mrf.mxu0
        %v350 = vadd.f32 0.0, %v349
        %v351 = vpop.f32.mrf.mxu0
        %352 = vmatprep.mubr.f32.mxu0 0.0
        %v353 = vand.u32 %v221, 4294901760
        %v354 = vsub.f32 %v221, %v353
        %v355 = vand.u32 %v354, 4294901760
        %v356 = vsub.f32 %v354, %v355
        %v357 = vand.u32 %v356, 4294901760
        %358 = vmatmul.mubr.f32.gmra.mxu0 %v357
        %v359 = vpop.f32.mrf.mxu0
        %v360 = vadd.f32 0.0, %v359
        %v361 = vpop.f32.mrf.mxu0
        %362 = vdwg.mxu0
        %363 = vmatprep.subr.mxu0 0.0
        %v364 = vand.u32 %v261, 4294901760
        %v365 = vsub.f32 %v261, %v364
        %v366 = vand.u32 %v365, 4294901760
        %v367 = vsub.f32 %v365, %v366
        %v368 = vand.u32 %v367, 4294901760
        %369 = vmatpush1.msra.mxu0 %v368
        %370 = vmatprep.subr.mxu0 0.0
        %v371 = vand.u32 %v260, 4294901760
        %v372 = vsub.f32 %v260, %v371
        %v373 = vand.u32 %v372, 4294901760
        %v374 = vsub.f32 %v372, %v373
        %v375 = vand.u32 %v374, 4294901760
        %376 = vmatpush1.msra.mxu0 %v375
        %377 = vmatprep.subr.mxu0 0.0
        %v378 = vand.u32 %v259, 4294901760
        %v379 = vsub.f32 %v259, %v378
        %v380 = vand.u32 %v379, 4294901760
        %v381 = vsub.f32 %v379, %v380
        %v382 = vand.u32 %v381, 4294901760
        %383 = vmatpush1.msra.mxu0 %v382
        %384 = vmatprep.subr.mxu0 0.0
        %v385 = vand.u32 %v258, 4294901760
        %v386 = vsub.f32 %v258, %v385
        %v387 = vand.u32 %v386, 4294901760
        %v388 = vsub.f32 %v386, %v387
        %v389 = vand.u32 %v388, 4294901760
        %390 = vmatpush1.msra.mxu0 %v389
        %391 = vmatprep.subr.mxu0 0.0
        %v392 = vand.u32 %v257, 4294901760
        %v393 = vsub.f32 %v257, %v392
        %v394 = vand.u32 %v393, 4294901760
        %v395 = vsub.f32 %v393, %v394
        %v396 = vand.u32 %v395, 4294901760
        %397 = vmatpush1.msra.mxu0 %v396
        %398 = vmatprep.subr.mxu0 0.0
        %v399 = vand.u32 %v256, 4294901760
        %v400 = vsub.f32 %v256, %v399
        %v401 = vand.u32 %v400, 4294901760
        %v402 = vsub.f32 %v400, %v401
        %v403 = vand.u32 %v402, 4294901760
        %404 = vmatpush1.msra.mxu0 %v403
        %405 = vmatprep.subr.mxu0 0.0
        %v406 = vand.u32 %v255, 4294901760
        %v407 = vsub.f32 %v255, %v406
        %v408 = vand.u32 %v407, 4294901760
        %v409 = vsub.f32 %v407, %v408
        %v410 = vand.u32 %v409, 4294901760
        %411 = vmatpush1.msra.mxu0 %v410
        %412 = vmatprep.subr.mxu0 0.0
        %v413 = vand.u32 %v254, 4294901760
        %v414 = vsub.f32 %v254, %v413
        %v415 = vand.u32 %v414, 4294901760
        %v416 = vsub.f32 %v414, %v415
        %v417 = vand.u32 %v416, 4294901760
        %418 = vmatpush1.msra.mxu0 %v417
        %419 = vmatprep.subr.mxu0 0.0
        %v420 = vand.u32 %v253, 4294901760
        %v421 = vsub.f32 %v253, %v420
        %v422 = vand.u32 %v421, 4294901760
        %v423 = vsub.f32 %v421, %v422
        %v424 = vand.u32 %v423, 4294901760
        %425 = vmatpush1.msra.mxu0 %v424
        %426 = vmatprep.subr.mxu0 0.0
        %v427 = vand.u32 %v252, 4294901760
        %v428 = vsub.f32 %v252, %v427
        %v429 = vand.u32 %v428, 4294901760
        %v430 = vsub.f32 %v428, %v429
        %v431 = vand.u32 %v430, 4294901760
        %432 = vmatpush1.msra.mxu0 %v431
        %433 = vmatprep.subr.mxu0 0.0
        %v434 = vand.u32 %v251, 4294901760
        %v435 = vsub.f32 %v251, %v434
        %v436 = vand.u32 %v435, 4294901760
        %v437 = vsub.f32 %v435, %v436
        %v438 = vand.u32 %v437, 4294901760
        %439 = vmatpush1.msra.mxu0 %v438
        %440 = vmatprep.subr.mxu0 0.0
        %v441 = vand.u32 %v250, 4294901760
        %v442 = vsub.f32 %v250, %v441
        %v443 = vand.u32 %v442, 4294901760
        %v444 = vsub.f32 %v442, %v443
        %v445 = vand.u32 %v444, 4294901760
        %446 = vmatpush1.msra.mxu0 %v445
        %447 = vmatprep.subr.mxu0 0.0
        %v448 = vand.u32 %v249, 4294901760
        %v449 = vsub.f32 %v249, %v448
        %v450 = vand.u32 %v449, 4294901760
        %v451 = vsub.f32 %v449, %v450
        %v452 = vand.u32 %v451, 4294901760
        %453 = vmatpush1.msra.mxu0 %v452
        %454 = vmatprep.subr.mxu0 0.0
        %v455 = vand.u32 %v248, 4294901760
        %v456 = vsub.f32 %v248, %v455
        %v457 = vand.u32 %v456, 4294901760
        %v458 = vsub.f32 %v456, %v457
        %v459 = vand.u32 %v458, 4294901760
        %460 = vmatpush1.msra.mxu0 %v459
        %461 = vmatprep.subr.mxu0 0.0
        %v462 = vand.u32 %v247, 4294901760
        %v463 = vsub.f32 %v247, %v462
        %v464 = vand.u32 %v463, 4294901760
        %v465 = vsub.f32 %v463, %v464
        %v466 = vand.u32 %v465, 4294901760
        %467 = vmatpush1.msra.mxu0 %v466
        %468 = vmatprep.subr.mxu0 0.0
        %v469 = vand.u32 %v246, 4294901760
        %v470 = vsub.f32 %v246, %v469
        %v471 = vand.u32 %v470, 4294901760
        %v472 = vsub.f32 %v470, %v471
        %v473 = vand.u32 %v472, 4294901760
        %474 = vmatpush1.msra.mxu0 %v473
        %475 = vmatprep.subr.mxu0 0.0
        %476 = vmatpush2.msra.mxu0 0.0
        %477 = vmatprep.subr.mxu0 0.0
        %478 = vmatpush2.msra.mxu0 0.0
        %479 = vmatprep.subr.mxu0 0.0
        %480 = vmatpush2.msra.mxu0 0.0
        %481 = vmatprep.subr.mxu0 0.0
        %482 = vmatpush2.msra.mxu0 0.0
        %483 = vmatprep.subr.mxu0 0.0
        %484 = vmatpush2.msra.mxu0 0.0
        %485 = vmatprep.subr.mxu0 0.0
        %486 = vmatpush2.msra.mxu0 0.0
        %487 = vmatprep.subr.mxu0 0.0
        %488 = vmatpush2.msra.mxu0 0.0
        %489 = vmatprep.subr.mxu0 0.0
        %490 = vmatpush2.msra.mxu0 0.0
        %491 = vmatprep.subr.mxu0 0.0
        %492 = vmatpush2.msra.mxu0 0.0
        %493 = vmatprep.subr.mxu0 0.0
        %494 = vmatpush2.msra.mxu0 0.0
        %495 = vmatprep.subr.mxu0 0.0
        %496 = vmatpush2.msra.mxu0 0.0
        %497 = vmatprep.subr.mxu0 0.0
        %498 = vmatpush2.msra.mxu0 0.0
        %499 = vmatprep.subr.mxu0 0.0
        %500 = vmatpush2.msra.mxu0 0.0
        %501 = vmatprep.subr.mxu0 0.0
        %502 = vmatpush2.msra.mxu0 0.0
        %503 = vmatprep.subr.mxu0 0.0
        %504 = vmatpush2.msra.mxu0 0.0
        %505 = vmatprep.subr.mxu0 0.0
        %506 = vmatpush2.msra.mxu0 0.0
        %507 = vmatprep.mubr.f32.mxu0 0.0
        %v508 = vand.u32 %v220, 4294901760
        %509 = vmatmul.mubr.f32.gmra.mxu0 %v508
        %v510 = vpop.f32.mrf.mxu0
        %v511 = vadd.f32 %v350, %v510
        %v512 = vpop.f32.mrf.mxu0
        %513 = vmatprep.mubr.f32.mxu0 0.0
        %v514 = vand.u32 %v221, 4294901760
        %515 = vmatmul.mubr.f32.gmra.mxu0 %v514
        %v516 = vpop.f32.mrf.mxu0
        %v517 = vadd.f32 %v360, %v516
        %v518 = vpop.f32.mrf.mxu0
        %519 = vdwg.mxu0
        %520 = vmatprep.subr.mxu0 0.0
        %v521 = vand.u32 %v261, 4294901760
        %v522 = vsub.f32 %v261, %v521
        %523 = vmatpush1.msra.mxu0 %v522
        %524 = vmatprep.subr.mxu0 0.0
        %v525 = vand.u32 %v260, 4294901760
        %v526 = vsub.f32 %v260, %v525
        %527 = vmatpush1.msra.mxu0 %v526
        %528 = vmatprep.subr.mxu0 0.0
        %v529 = vand.u32 %v259, 4294901760
        %v530 = vsub.f32 %v259, %v529
        %531 = vmatpush1.msra.mxu0 %v530
        %532 = vmatprep.subr.mxu0 0.0
        %v533 = vand.u32 %v258, 4294901760
        %v534 = vsub.f32 %v258, %v533
        %535 = vmatpush1.msra.mxu0 %v534
        %536 = vmatprep.subr.mxu0 0.0
        %v537 = vand.u32 %v257, 4294901760
        %v538 = vsub.f32 %v257, %v537
        %539 = vmatpush1.msra.mxu0 %v538
        %540 = vmatprep.subr.mxu0 0.0
        %v541 = vand.u32 %v256, 4294901760
        %v542 = vsub.f32 %v256, %v541
        %543 = vmatpush1.msra.mxu0 %v542
        %544 = vmatprep.subr.mxu0 0.0
        %v545 = vand.u32 %v255, 4294901760
        %v546 = vsub.f32 %v255, %v545
        %547 = vmatpush1.msra.mxu0 %v546
        %548 = vmatprep.subr.mxu0 0.0
        %v549 = vand.u32 %v254, 4294901760
        %v550 = vsub.f32 %v254, %v549
        %551 = vmatpush1.msra.mxu0 %v550
        %552 = vmatprep.subr.mxu0 0.0
        %v553 = vand.u32 %v253, 4294901760
        %v554 = vsub.f32 %v253, %v553
        %555 = vmatpush1.msra.mxu0 %v554
        %556 = vmatprep.subr.mxu0 0.0
        %v557 = vand.u32 %v252, 4294901760
        %v558 = vsub.f32 %v252, %v557
        %559 = vmatpush1.msra.mxu0 %v558
        %560 = vmatprep.subr.mxu0 0.0
        %v561 = vand.u32 %v251, 4294901760
        %v562 = vsub.f32 %v251, %v561
        %563 = vmatpush1.msra.mxu0 %v562
        %564 = vmatprep.subr.mxu0 0.0
        %v565 = vand.u32 %v250, 4294901760
        %v566 = vsub.f32 %v250, %v565
        %567 = vmatpush1.msra.mxu0 %v566
        %568 = vmatprep.subr.mxu0 0.0
        %v569 = vand.u32 %v249, 4294901760
        %v570 = vsub.f32 %v249, %v569
        %571 = vmatpush1.msra.mxu0 %v570
        %572 = vmatprep.subr.mxu0 0.0
        %v573 = vand.u32 %v248, 4294901760
        %v574 = vsub.f32 %v248, %v573
        %575 = vmatpush1.msra.mxu0 %v574
        %576 = vmatprep.subr.mxu0 0.0
        %v577 = vand.u32 %v247, 4294901760
        %v578 = vsub.f32 %v247, %v577
        %579 = vmatpush1.msra.mxu0 %v578
        %580 = vmatprep.subr.mxu0 0.0
        %v581 = vand.u32 %v246, 4294901760
        %v582 = vsub.f32 %v246, %v581
        %583 = vmatpush1.msra.mxu0 %v582
        %584 = vmatprep.subr.mxu0 0.0
        %585 = vmatpush2.msra.mxu0 0.0
        %586 = vmatprep.subr.mxu0 0.0
        %587 = vmatpush2.msra.mxu0 0.0
        %588 = vmatprep.subr.mxu0 0.0
        %589 = vmatpush2.msra.mxu0 0.0
        %590 = vmatprep.subr.mxu0 0.0
        %591 = vmatpush2.msra.mxu0 0.0
        %592 = vmatprep.subr.mxu0 0.0
        %593 = vmatpush2.msra.mxu0 0.0
        %594 = vmatprep.subr.mxu0 0.0
        %595 = vmatpush2.msra.mxu0 0.0
        %596 = vmatprep.subr.mxu0 0.0
        %597 = vmatpush2.msra.mxu0 0.0
        %598 = vmatprep.subr.mxu0 0.0
        %599 = vmatpush2.msra.mxu0 0.0
        %600 = vmatprep.subr.mxu0 0.0
        %601 = vmatpush2.msra.mxu0 0.0
        %602 = vmatprep.subr.mxu0 0.0
        %603 = vmatpush2.msra.mxu0 0.0
        %604 = vmatprep.subr.mxu0 0.0
        %605 = vmatpush2.msra.mxu0 0.0
        %606 = vmatprep.subr.mxu0 0.0
        %607 = vmatpush2.msra.mxu0 0.0
        %608 = vmatprep.subr.mxu0 0.0
        %609 = vmatpush2.msra.mxu0 0.0
        %610 = vmatprep.subr.mxu0 0.0
        %611 = vmatpush2.msra.mxu0 0.0
        %612 = vmatprep.subr.mxu0 0.0
        %613 = vmatpush2.msra.mxu0 0.0
        %614 = vmatprep.subr.mxu0 0.0
        %615 = vmatpush2.msra.mxu0 0.0
        %616 = vmatprep.mubr.f32.mxu0 0.0
        %v617 = vand.u32 %v220, 4294901760
        %v618 = vsub.f32 %v220, %v617
        %619 = vmatmul.mubr.f32.gmra.mxu0 %v618
        %v620 = vpop.f32.mrf.mxu0
        %v621 = vadd.f32 %v511, %v620
        %v622 = vpop.f32.mrf.mxu0
        %623 = vmatprep.mubr.f32.mxu0 0.0
        %v624 = vand.u32 %v221, 4294901760
        %v625 = vsub.f32 %v221, %v624
        %626 = vmatmul.mubr.f32.gmra.mxu0 %v625
        %v627 = vpop.f32.mrf.mxu0
        %v628 = vadd.f32 %v517, %v627
        %v629 = vpop.f32.mrf.mxu0
        %630 = vdwg.mxu0
        %631 = vmatprep.subr.mxu0 0.0
        %v632 = vand.u32 %v261, 4294901760
        %633 = vmatpush1.msra.mxu0 %v632
        %634 = vmatprep.subr.mxu0 0.0
        %v635 = vand.u32 %v260, 4294901760
        %636 = vmatpush1.msra.mxu0 %v635
        %637 = vmatprep.subr.mxu0 0.0
        %v638 = vand.u32 %v259, 4294901760
        %639 = vmatpush1.msra.mxu0 %v638
        %640 = vmatprep.subr.mxu0 0.0
        %v641 = vand.u32 %v258, 4294901760
        %642 = vmatpush1.msra.mxu0 %v641
        %643 = vmatprep.subr.mxu0 0.0
        %v644 = vand.u32 %v257, 4294901760
        %645 = vmatpush1.msra.mxu0 %v644
        %646 = vmatprep.subr.mxu0 0.0
        %v647 = vand.u32 %v256, 4294901760
        %648 = vmatpush1.msra.mxu0 %v647
        %649 = vmatprep.subr.mxu0 0.0
        %v650 = vand.u32 %v255, 4294901760
        %651 = vmatpush1.msra.mxu0 %v650
        %652 = vmatprep.subr.mxu0 0.0
        %v653 = vand.u32 %v254, 4294901760
        %654 = vmatpush1.msra.mxu0 %v653
        %655 = vmatprep.subr.mxu0 0.0
        %v656 = vand.u32 %v253, 4294901760
        %657 = vmatpush1.msra.mxu0 %v656
        %658 = vmatprep.subr.mxu0 0.0
        %v659 = vand.u32 %v252, 4294901760
        %660 = vmatpush1.msra.mxu0 %v659
        %661 = vmatprep.subr.mxu0 0.0
        %v662 = vand.u32 %v251, 4294901760
        %663 = vmatpush1.msra.mxu0 %v662
        %664 = vmatprep.subr.mxu0 0.0
        %v665 = vand.u32 %v250, 4294901760
        %666 = vmatpush1.msra.mxu0 %v665
        %667 = vmatprep.subr.mxu0 0.0
        %v668 = vand.u32 %v249, 4294901760
        %669 = vmatpush1.msra.mxu0 %v668
        %670 = vmatprep.subr.mxu0 0.0
        %v671 = vand.u32 %v248, 4294901760
        %672 = vmatpush1.msra.mxu0 %v671
        %673 = vmatprep.subr.mxu0 0.0
        %v674 = vand.u32 %v247, 4294901760
        %675 = vmatpush1.msra.mxu0 %v674
        %676 = vmatprep.subr.mxu0 0.0
        %v677 = vand.u32 %v246, 4294901760
        %678 = vmatpush1.msra.mxu0 %v677
        %679 = vmatprep.subr.mxu0 0.0
        %680 = vmatpush2.msra.mxu0 0.0
        %681 = vmatprep.subr.mxu0 0.0
        %682 = vmatpush2.msra.mxu0 0.0
        %683 = vmatprep.subr.mxu0 0.0
        %684 = vmatpush2.msra.mxu0 0.0
        %685 = vmatprep.subr.mxu0 0.0
        %686 = vmatpush2.msra.mxu0 0.0
        %687 = vmatprep.subr.mxu0 0.0
        %688 = vmatpush2.msra.mxu0 0.0
        %689 = vmatprep.subr.mxu0 0.0
        %690 = vmatpush2.msra.mxu0 0.0
        %691 = vmatprep.subr.mxu0 0.0
        %692 = vmatpush2.msra.mxu0 0.0
        %693 = vmatprep.subr.mxu0 0.0
        %694 = vmatpush2.msra.mxu0 0.0
        %695 = vmatprep.subr.mxu0 0.0
        %696 = vmatpush2.msra.mxu0 0.0
        %697 = vmatprep.subr.mxu0 0.0
        %698 = vmatpush2.msra.mxu0 0.0
        %699 = vmatprep.subr.mxu0 0.0
        %700 = vmatpush2.msra.mxu0 0.0
        %701 = vmatprep.subr.mxu0 0.0
        %702 = vmatpush2.msra.mxu0 0.0
        %703 = vmatprep.subr.mxu0 0.0
        %704 = vmatpush2.msra.mxu0 0.0
        %705 = vmatprep.subr.mxu0 0.0
        %706 = vmatpush2.msra.mxu0 0.0
        %707 = vmatprep.subr.mxu0 0.0
        %708 = vmatpush2.msra.mxu0 0.0
        %709 = vmatprep.subr.mxu0 0.0
        %710 = vmatpush2.msra.mxu0 0.0
        %711 = vmatprep.mubr.f32.mxu0 0.0
        %v712 = vand.u32 %v220, 4294901760
        %v713 = vsub.f32 %v220, %v712
        %v714 = vand.u32 %v713, 4294901760
        %715 = vmatmul.mubr.f32.gmra.mxu0 %v714
        %v716 = vpop.f32.mrf.mxu0
        %v717 = vadd.f32 %v621, %v716
        %v718 = vpop.f32.mrf.mxu0
        %719 = vmatprep.mubr.f32.mxu0 0.0
        %v720 = vand.u32 %v221, 4294901760
        %v721 = vsub.f32 %v221, %v720
        %v722 = vand.u32 %v721, 4294901760
        %723 = vmatmul.mubr.f32.gmra.mxu0 %v722
        %v724 = vpop.f32.mrf.mxu0
        %v725 = vadd.f32 %v628, %v724
        %v726 = vpop.f32.mrf.mxu0
        %727 = vdwg.mxu0
        %728 = vmatprep.subr.mxu0 0.0
        %v729 = vand.u32 %v261, 4294901760
        %v730 = vsub.f32 %v261, %v729
        %v731 = vand.u32 %v730, 4294901760
        %732 = vmatpush1.msra.mxu0 %v731
        %733 = vmatprep.subr.mxu0 0.0
        %v734 = vand.u32 %v260, 4294901760
        %v735 = vsub.f32 %v260, %v734
        %v736 = vand.u32 %v735, 4294901760
        %737 = vmatpush1.msra.mxu0 %v736
        %738 = vmatprep.subr.mxu0 0.0
        %v739 = vand.u32 %v259, 4294901760
        %v740 = vsub.f32 %v259, %v739
        %v741 = vand.u32 %v740, 4294901760
        %742 = vmatpush1.msra.mxu0 %v741
        %743 = vmatprep.subr.mxu0 0.0
        %v744 = vand.u32 %v258, 4294901760
        %v745 = vsub.f32 %v258, %v744
        %v746 = vand.u32 %v745, 4294901760
        %747 = vmatpush1.msra.mxu0 %v746
        %748 = vmatprep.subr.mxu0 0.0
        %v749 = vand.u32 %v257, 4294901760
        %v750 = vsub.f32 %v257, %v749
        %v751 = vand.u32 %v750, 4294901760
        %752 = vmatpush1.msra.mxu0 %v751
        %753 = vmatprep.subr.mxu0 0.0
        %v754 = vand.u32 %v256, 4294901760
        %v755 = vsub.f32 %v256, %v754
        %v756 = vand.u32 %v755, 4294901760
        %757 = vmatpush1.msra.mxu0 %v756
        %758 = vmatprep.subr.mxu0 0.0
        %v759 = vand.u32 %v255, 4294901760
        %v760 = vsub.f32 %v255, %v759
        %v761 = vand.u32 %v760, 4294901760
        %762 = vmatpush1.msra.mxu0 %v761
        %763 = vmatprep.subr.mxu0 0.0
        %v764 = vand.u32 %v254, 4294901760
        %v765 = vsub.f32 %v254, %v764
        %v766 = vand.u32 %v765, 4294901760
        %767 = vmatpush1.msra.mxu0 %v766
        %768 = vmatprep.subr.mxu0 0.0
        %v769 = vand.u32 %v253, 4294901760
        %v770 = vsub.f32 %v253, %v769
        %v771 = vand.u32 %v770, 4294901760
        %772 = vmatpush1.msra.mxu0 %v771
        %773 = vmatprep.subr.mxu0 0.0
        %v774 = vand.u32 %v252, 4294901760
        %v775 = vsub.f32 %v252, %v774
        %v776 = vand.u32 %v775, 4294901760
        %777 = vmatpush1.msra.mxu0 %v776
        %778 = vmatprep.subr.mxu0 0.0
        %v779 = vand.u32 %v251, 4294901760
        %v780 = vsub.f32 %v251, %v779
        %v781 = vand.u32 %v780, 4294901760
        %782 = vmatpush1.msra.mxu0 %v781
        %783 = vmatprep.subr.mxu0 0.0
        %v784 = vand.u32 %v250, 4294901760
        %v785 = vsub.f32 %v250, %v784
        %v786 = vand.u32 %v785, 4294901760
        %787 = vmatpush1.msra.mxu0 %v786
        %788 = vmatprep.subr.mxu0 0.0
        %v789 = vand.u32 %v249, 4294901760
        %v790 = vsub.f32 %v249, %v789
        %v791 = vand.u32 %v790, 4294901760
        %792 = vmatpush1.msra.mxu0 %v791
        %793 = vmatprep.subr.mxu0 0.0
        %v794 = vand.u32 %v248, 4294901760
        %v795 = vsub.f32 %v248, %v794
        %v796 = vand.u32 %v795, 4294901760
        %797 = vmatpush1.msra.mxu0 %v796
        %798 = vmatprep.subr.mxu0 0.0
        %v799 = vand.u32 %v247, 4294901760
        %v800 = vsub.f32 %v247, %v799
        %v801 = vand.u32 %v800, 4294901760
        %802 = vmatpush1.msra.mxu0 %v801
        %803 = vmatprep.subr.mxu0 0.0
        %v804 = vand.u32 %v246, 4294901760
        %v805 = vsub.f32 %v246, %v804
        %v806 = vand.u32 %v805, 4294901760
        %807 = vmatpush1.msra.mxu0 %v806
        %808 = vmatprep.subr.mxu0 0.0
        %809 = vmatpush2.msra.mxu0 0.0
        %810 = vmatprep.subr.mxu0 0.0
        %811 = vmatpush2.msra.mxu0 0.0
        %812 = vmatprep.subr.mxu0 0.0
        %813 = vmatpush2.msra.mxu0 0.0
        %814 = vmatprep.subr.mxu0 0.0
        %815 = vmatpush2.msra.mxu0 0.0
        %816 = vmatprep.subr.mxu0 0.0
        %817 = vmatpush2.msra.mxu0 0.0
        %818 = vmatprep.subr.mxu0 0.0
        %819 = vmatpush2.msra.mxu0 0.0
        %820 = vmatprep.subr.mxu0 0.0
        %821 = vmatpush2.msra.mxu0 0.0
        %822 = vmatprep.subr.mxu0 0.0
        %823 = vmatpush2.msra.mxu0 0.0
        %824 = vmatprep.subr.mxu0 0.0
        %825 = vmatpush2.msra.mxu0 0.0
        %826 = vmatprep.subr.mxu0 0.0
        %827 = vmatpush2.msra.mxu0 0.0
        %828 = vmatprep.subr.mxu0 0.0
        %829 = vmatpush2.msra.mxu0 0.0
        %830 = vmatprep.subr.mxu0 0.0
        %831 = vmatpush2.msra.mxu0 0.0
        %832 = vmatprep.subr.mxu0 0.0
        %833 = vmatpush2.msra.mxu0 0.0
        %834 = vmatprep.subr.mxu0 0.0
        %835 = vmatpush2.msra.mxu0 0.0
        %836 = vmatprep.subr.mxu0 0.0
        %837 = vmatpush2.msra.mxu0 0.0
        %838 = vmatprep.subr.mxu0 0.0
        %839 = vmatpush2.msra.mxu0 0.0
        %840 = vmatprep.mubr.f32.mxu0 0.0
        %v841 = vand.u32 %v220, 4294901760
        %842 = vmatmul.mubr.f32.gmra.mxu0 %v841
        %v843 = vpop.f32.mrf.mxu0
        %v844 = vadd.f32 %v717, %v843
        %v845 = vpop.f32.mrf.mxu0
        %846 = vmatprep.mubr.f32.mxu0 0.0
        %v847 = vand.u32 %v221, 4294901760
        %848 = vmatmul.mubr.f32.gmra.mxu0 %v847
        %v849 = vpop.f32.mrf.mxu0
        %v850 = vadd.f32 %v725, %v849
        %v851 = vpop.f32.mrf.mxu0
        %852 = vdwg.mxu0
        %853 = vmatprep.subr.mxu0 0.0
        %v854 = vand.u32 %v261, 4294901760
        %855 = vmatpush1.msra.mxu0 %v854
        %856 = vmatprep.subr.mxu0 0.0
        %v857 = vand.u32 %v260, 4294901760
        %858 = vmatpush1.msra.mxu0 %v857
        %859 = vmatprep.subr.mxu0 0.0
        %v860 = vand.u32 %v259, 4294901760
        %861 = vmatpush1.msra.mxu0 %v860
        %862 = vmatprep.subr.mxu0 0.0
        %v863 = vand.u32 %v258, 4294901760
        %864 = vmatpush1.msra.mxu0 %v863
        %865 = vmatprep.subr.mxu0 0.0
        %v866 = vand.u32 %v257, 4294901760
        %867 = vmatpush1.msra.mxu0 %v866
        %868 = vmatprep.subr.mxu0 0.0
        %v869 = vand.u32 %v256, 4294901760
        %870 = vmatpush1.msra.mxu0 %v869
        %871 = vmatprep.subr.mxu0 0.0
        %v872 = vand.u32 %v255, 4294901760
        %873 = vmatpush1.msra.mxu0 %v872
        %874 = vmatprep.subr.mxu0 0.0
        %v875 = vand.u32 %v254, 4294901760
        %876 = vmatpush1.msra.mxu0 %v875
        %877 = vmatprep.subr.mxu0 0.0
        %v878 = vand.u32 %v253, 4294901760
        %879 = vmatpush1.msra.mxu0 %v878
        %880 = vmatprep.subr.mxu0 0.0
        %v881 = vand.u32 %v252, 4294901760
        %882 = vmatpush1.msra.mxu0 %v881
        %883 = vmatprep.subr.mxu0 0.0
        %v884 = vand.u32 %v251, 4294901760
        %885 = vmatpush1.msra.mxu0 %v884
        %886 = vmatprep.subr.mxu0 0.0
        %v887 = vand.u32 %v250, 4294901760
        %888 = vmatpush1.msra.mxu0 %v887
        %889 = vmatprep.subr.mxu0 0.0
        %v890 = vand.u32 %v249, 4294901760
        %891 = vmatpush1.msra.mxu0 %v890
        %892 = vmatprep.subr.mxu0 0.0
        %v893 = vand.u32 %v248, 4294901760
        %894 = vmatpush1.msra.mxu0 %v893
        %895 = vmatprep.subr.mxu0 0.0
        %v896 = vand.u32 %v247, 4294901760
        %897 = vmatpush1.msra.mxu0 %v896
        %898 = vmatprep.subr.mxu0 0.0
        %v899 = vand.u32 %v246, 4294901760
        %900 = vmatpush1.msra.mxu0 %v899
        %901 = vmatprep.subr.mxu0 0.0
        %902 = vmatpush2.msra.mxu0 0.0
        %903 = vmatprep.subr.mxu0 0.0
        %904 = vmatpush2.msra.mxu0 0.0
        %905 = vmatprep.subr.mxu0 0.0
        %906 = vmatpush2.msra.mxu0 0.0
        %907 = vmatprep.subr.mxu0 0.0
        %908 = vmatpush2.msra.mxu0 0.0
        %909 = vmatprep.subr.mxu0 0.0
        %910 = vmatpush2.msra.mxu0 0.0
        %911 = vmatprep.subr.mxu0 0.0
        %912 = vmatpush2.msra.mxu0 0.0
        %913 = vmatprep.subr.mxu0 0.0
        %914 = vmatpush2.msra.mxu0 0.0
        %915 = vmatprep.subr.mxu0 0.0
        %916 = vmatpush2.msra.mxu0 0.0
        %917 = vmatprep.subr.mxu0 0.0
        %918 = vmatpush2.msra.mxu0 0.0
        %919 = vmatprep.subr.mxu0 0.0
        %920 = vmatpush2.msra.mxu0 0.0
        %921 = vmatprep.subr.mxu0 0.0
        %922 = vmatpush2.msra.mxu0 0.0
        %923 = vmatprep.subr.mxu0 0.0
        %924 = vmatpush2.msra.mxu0 0.0
        %925 = vmatprep.subr.mxu0 0.0
        %926 = vmatpush2.msra.mxu0 0.0
        %927 = vmatprep.subr.mxu0 0.0
        %928 = vmatpush2.msra.mxu0 0.0
        %929 = vmatprep.subr.mxu0 0.0
        %930 = vmatpush2.msra.mxu0 0.0
        %931 = vmatprep.subr.mxu0 0.0
        %932 = vmatpush2.msra.mxu0 0.0
        %933 = vmatprep.mubr.f32.mxu0 0.0
        %v934 = vand.u32 %v220, 4294901760
        %935 = vmatmul.mubr.f32.gmra.mxu0 %v934
        %v936 = vpop.f32.mrf.mxu0
        %v937 = vadd.f32 %v844, %v936
        %v938 = vpop.f32.mrf.mxu0
        %939 = vmatprep.mubr.f32.mxu0 0.0
        %v940 = vand.u32 %v221, 4294901760
        %941 = vmatmul.mubr.f32.gmra.mxu0 %v940
        %v942 = vpop.f32.mrf.mxu0
        %v943 = vadd.f32 %v850, %v942
        %v944 = vpop.f32.mrf.mxu0
        %945 = vdwg.mxu0
        %946 = vmatprep.subr.mxu0 0.0
        %v947 = vand.u32 %v244, 4294901760
        %948 = vmatpush1.msra.mxu0 %v947
        %949 = vmatprep.subr.mxu0 0.0
        %v950 = vand.u32 %v243, 4294901760
        %951 = vmatpush1.msra.mxu0 %v950
        %952 = vmatprep.subr.mxu0 0.0
        %v953 = vand.u32 %v242, 4294901760
        %954 = vmatpush1.msra.mxu0 %v953
        %955 = vmatprep.subr.mxu0 0.0
        %v956 = vand.u32 %v241, 4294901760
        %957 = vmatpush1.msra.mxu0 %v956
        %958 = vmatprep.subr.mxu0 0.0
        %v959 = vand.u32 %v240, 4294901760
        %960 = vmatpush1.msra.mxu0 %v959
        %961 = vmatprep.subr.mxu0 0.0
        %v962 = vand.u32 %v239, 4294901760
        %963 = vmatpush1.msra.mxu0 %v962
        %964 = vmatprep.subr.mxu0 0.0
        %v965 = vand.u32 %v238, 4294901760
        %966 = vmatpush1.msra.mxu0 %v965
        %967 = vmatprep.subr.mxu0 0.0
        %v968 = vand.u32 %v237, 4294901760
        %969 = vmatpush1.msra.mxu0 %v968
        %970 = vmatprep.subr.mxu0 0.0
        %v971 = vand.u32 %v236, 4294901760
        %972 = vmatpush1.msra.mxu0 %v971
        %973 = vmatprep.subr.mxu0 0.0
        %v974 = vand.u32 %v235, 4294901760
        %975 = vmatpush1.msra.mxu0 %v974
        %976 = vmatprep.subr.mxu0 0.0
        %v977 = vand.u32 %v234, 4294901760
        %978 = vmatpush1.msra.mxu0 %v977
        %979 = vmatprep.subr.mxu0 0.0
        %v980 = vand.u32 %v233, 4294901760
        %981 = vmatpush1.msra.mxu0 %v980
        %982 = vmatprep.subr.mxu0 0.0
        %v983 = vand.u32 %v232, 4294901760
        %984 = vmatpush1.msra.mxu0 %v983
        %985 = vmatprep.subr.mxu0 0.0
        %v986 = vand.u32 %v231, 4294901760
        %987 = vmatpush1.msra.mxu0 %v986
        %988 = vmatprep.subr.mxu0 0.0
        %v989 = vand.u32 %v230, 4294901760
        %990 = vmatpush1.msra.mxu0 %v989
        %991 = vmatprep.subr.mxu0 0.0
        %v992 = vand.u32 %v229, 4294901760
        %993 = vmatpush1.msra.mxu0 %v992
        %994 = vmatprep.subr.mxu0 0.0
        %995 = vmatpush2.msra.mxu0 0.0
        %996 = vmatprep.subr.mxu0 0.0
        %997 = vmatpush2.msra.mxu0 0.0
        %998 = vmatprep.subr.mxu0 0.0
        %999 = vmatpush2.msra.mxu0 0.0
        %1000 = vmatprep.subr.mxu0 0.0
        %1001 = vmatpush2.msra.mxu0 0.0
        %1002 = vmatprep.subr.mxu0 0.0
        %1003 = vmatpush2.msra.mxu0 0.0
        %1004 = vmatprep.subr.mxu0 0.0
        %1005 = vmatpush2.msra.mxu0 0.0
        %1006 = vmatprep.subr.mxu0 0.0
        %1007 = vmatpush2.msra.mxu0 0.0
        %1008 = vmatprep.subr.mxu0 0.0
        %1009 = vmatpush2.msra.mxu0 0.0
        %1010 = vmatprep.subr.mxu0 0.0
        %1011 = vmatpush2.msra.mxu0 0.0
        %1012 = vmatprep.subr.mxu0 0.0
        %1013 = vmatpush2.msra.mxu0 0.0
        %1014 = vmatprep.subr.mxu0 0.0
        %1015 = vmatpush2.msra.mxu0 0.0
        %1016 = vmatprep.subr.mxu0 0.0
        %1017 = vmatpush2.msra.mxu0 0.0
        %1018 = vmatprep.subr.mxu0 0.0
        %1019 = vmatpush2.msra.mxu0 0.0
        %1020 = vmatprep.subr.mxu0 0.0
        %1021 = vmatpush2.msra.mxu0 0.0
        %1022 = vmatprep.subr.mxu0 0.0
        %1023 = vmatpush2.msra.mxu0 0.0
        %1024 = vmatprep.subr.mxu0 0.0
        %1025 = vmatpush2.msra.mxu0 0.0
        %1026 = vmatprep.mubr.f32.mxu0 0.0
        %v1027 = vand.u32 %v227, 4294901760
        %v1028 = vsub.f32 %v227, %v1027
        %v1029 = vand.u32 %v1028, 4294901760
        %v1030 = vsub.f32 %v1028, %v1029
        %v1031 = vand.u32 %v1030, 4294901760
        %1032 = vmatmul.mubr.f32.gmra.mxu0 %v1031
        %v1033 = vpop.f32.mrf.mxu0
        %v1034 = vadd.f32 %v937, %v1033
        %v1035 = vpop.f32.mrf.mxu0
        %1036 = vmatprep.mubr.f32.mxu0 0.0
        %v1037 = vand.u32 %v228, 4294901760
        %v1038 = vsub.f32 %v228, %v1037
        %v1039 = vand.u32 %v1038, 4294901760
        %v1040 = vsub.f32 %v1038, %v1039
        %v1041 = vand.u32 %v1040, 4294901760
        %1042 = vmatmul.mubr.f32.gmra.mxu0 %v1041
        %v1043 = vpop.f32.mrf.mxu0
        %v1044 = vadd.f32 %v943, %v1043
        %v1045 = vpop.f32.mrf.mxu0
        %1046 = vdwg.mxu0
        %1047 = vmatprep.subr.mxu0 0.0
        %v1048 = vand.u32 %v244, 4294901760
        %v1049 = vsub.f32 %v244, %v1048
        %v1050 = vand.u32 %v1049, 4294901760
        %v1051 = vsub.f32 %v1049, %v1050
        %v1052 = vand.u32 %v1051, 4294901760
        %1053 = vmatpush1.msra.mxu0 %v1052
        %1054 = vmatprep.subr.mxu0 0.0
        %v1055 = vand.u32 %v243, 4294901760
        %v1056 = vsub.f32 %v243, %v1055
        %v1057 = vand.u32 %v1056, 4294901760
        %v1058 = vsub.f32 %v1056, %v1057
        %v1059 = vand.u32 %v1058, 4294901760
        %1060 = vmatpush1.msra.mxu0 %v1059
        %1061 = vmatprep.subr.mxu0 0.0
        %v1062 = vand.u32 %v242, 4294901760
        %v1063 = vsub.f32 %v242, %v1062
        %v1064 = vand.u32 %v1063, 4294901760
        %v1065 = vsub.f32 %v1063, %v1064
        %v1066 = vand.u32 %v1065, 4294901760
        %1067 = vmatpush1.msra.mxu0 %v1066
        %1068 = vmatprep.subr.mxu0 0.0
        %v1069 = vand.u32 %v241, 4294901760
        %v1070 = vsub.f32 %v241, %v1069
        %v1071 = vand.u32 %v1070, 4294901760
        %v1072 = vsub.f32 %v1070, %v1071
        %v1073 = vand.u32 %v1072, 4294901760
        %1074 = vmatpush1.msra.mxu0 %v1073
        %1075 = vmatprep.subr.mxu0 0.0
        %v1076 = vand.u32 %v240, 4294901760
        %v1077 = vsub.f32 %v240, %v1076
        %v1078 = vand.u32 %v1077, 4294901760
        %v1079 = vsub.f32 %v1077, %v1078
        %v1080 = vand.u32 %v1079, 4294901760
        %1081 = vmatpush1.msra.mxu0 %v1080
        %1082 = vmatprep.subr.mxu0 0.0
        %v1083 = vand.u32 %v239, 4294901760
        %v1084 = vsub.f32 %v239, %v1083
        %v1085 = vand.u32 %v1084, 4294901760
        %v1086 = vsub.f32 %v1084, %v1085
        %v1087 = vand.u32 %v1086, 4294901760
        %1088 = vmatpush1.msra.mxu0 %v1087
        %1089 = vmatprep.subr.mxu0 0.0
        %v1090 = vand.u32 %v238, 4294901760
        %v1091 = vsub.f32 %v238, %v1090
        %v1092 = vand.u32 %v1091, 4294901760
        %v1093 = vsub.f32 %v1091, %v1092
        %v1094 = vand.u32 %v1093, 4294901760
        %1095 = vmatpush1.msra.mxu0 %v1094
        %1096 = vmatprep.subr.mxu0 0.0
        %v1097 = vand.u32 %v237, 4294901760
        %v1098 = vsub.f32 %v237, %v1097
        %v1099 = vand.u32 %v1098, 4294901760
        %v1100 = vsub.f32 %v1098, %v1099
        %v1101 = vand.u32 %v1100, 4294901760
        %1102 = vmatpush1.msra.mxu0 %v1101
        %1103 = vmatprep.subr.mxu0 0.0
        %v1104 = vand.u32 %v236, 4294901760
        %v1105 = vsub.f32 %v236, %v1104
        %v1106 = vand.u32 %v1105, 4294901760
        %v1107 = vsub.f32 %v1105, %v1106
        %v1108 = vand.u32 %v1107, 4294901760
        %1109 = vmatpush1.msra.mxu0 %v1108
        %1110 = vmatprep.subr.mxu0 0.0
        %v1111 = vand.u32 %v235, 4294901760
        %v1112 = vsub.f32 %v235, %v1111
        %v1113 = vand.u32 %v1112, 4294901760
        %v1114 = vsub.f32 %v1112, %v1113
        %v1115 = vand.u32 %v1114, 4294901760
        %1116 = vmatpush1.msra.mxu0 %v1115
        %1117 = vmatprep.subr.mxu0 0.0
        %v1118 = vand.u32 %v234, 4294901760
        %v1119 = vsub.f32 %v234, %v1118
        %v1120 = vand.u32 %v1119, 4294901760
        %v1121 = vsub.f32 %v1119, %v1120
        %v1122 = vand.u32 %v1121, 4294901760
        %1123 = vmatpush1.msra.mxu0 %v1122
        %1124 = vmatprep.subr.mxu0 0.0
        %v1125 = vand.u32 %v233, 4294901760
        %v1126 = vsub.f32 %v233, %v1125
        %v1127 = vand.u32 %v1126, 4294901760
        %v1128 = vsub.f32 %v1126, %v1127
        %v1129 = vand.u32 %v1128, 4294901760
        %1130 = vmatpush1.msra.mxu0 %v1129
        %1131 = vmatprep.subr.mxu0 0.0
        %v1132 = vand.u32 %v232, 4294901760
        %v1133 = vsub.f32 %v232, %v1132
        %v1134 = vand.u32 %v1133, 4294901760
        %v1135 = vsub.f32 %v1133, %v1134
        %v1136 = vand.u32 %v1135, 4294901760
        %1137 = vmatpush1.msra.mxu0 %v1136
        %1138 = vmatprep.subr.mxu0 0.0
        %v1139 = vand.u32 %v231, 4294901760
        %v1140 = vsub.f32 %v231, %v1139
        %v1141 = vand.u32 %v1140, 4294901760
        %v1142 = vsub.f32 %v1140, %v1141
        %v1143 = vand.u32 %v1142, 4294901760
        %1144 = vmatpush1.msra.mxu0 %v1143
        %1145 = vmatprep.subr.mxu0 0.0
        %v1146 = vand.u32 %v230, 4294901760
        %v1147 = vsub.f32 %v230, %v1146
        %v1148 = vand.u32 %v1147, 4294901760
        %v1149 = vsub.f32 %v1147, %v1148
        %v1150 = vand.u32 %v1149, 4294901760
        %1151 = vmatpush1.msra.mxu0 %v1150
        %1152 = vmatprep.subr.mxu0 0.0
        %v1153 = vand.u32 %v229, 4294901760
        %v1154 = vsub.f32 %v229, %v1153
        %v1155 = vand.u32 %v1154, 4294901760
        %v1156 = vsub.f32 %v1154, %v1155
        %v1157 = vand.u32 %v1156, 4294901760
        %1158 = vmatpush1.msra.mxu0 %v1157
        %1159 = vmatprep.subr.mxu0 0.0
        %1160 = vmatpush2.msra.mxu0 0.0
        %1161 = vmatprep.subr.mxu0 0.0
        %1162 = vmatpush2.msra.mxu0 0.0
        %1163 = vmatprep.subr.mxu0 0.0
        %1164 = vmatpush2.msra.mxu0 0.0
        %1165 = vmatprep.subr.mxu0 0.0
        %1166 = vmatpush2.msra.mxu0 0.0
        %1167 = vmatprep.subr.mxu0 0.0
        %1168 = vmatpush2.msra.mxu0 0.0
        %1169 = vmatprep.subr.mxu0 0.0
        %1170 = vmatpush2.msra.mxu0 0.0
        %1171 = vmatprep.subr.mxu0 0.0
        %1172 = vmatpush2.msra.mxu0 0.0
        %1173 = vmatprep.subr.mxu0 0.0
        %1174 = vmatpush2.msra.mxu0 0.0
        %1175 = vmatprep.subr.mxu0 0.0
        %1176 = vmatpush2.msra.mxu0 0.0
        %1177 = vmatprep.subr.mxu0 0.0
        %1178 = vmatpush2.msra.mxu0 0.0
        %1179 = vmatprep.subr.mxu0 0.0
        %1180 = vmatpush2.msra.mxu0 0.0
        %1181 = vmatprep.subr.mxu0 0.0
        %1182 = vmatpush2.msra.mxu0 0.0
        %1183 = vmatprep.subr.mxu0 0.0
        %1184 = vmatpush2.msra.mxu0 0.0
        %1185 = vmatprep.subr.mxu0 0.0
        %1186 = vmatpush2.msra.mxu0 0.0
        %1187 = vmatprep.subr.mxu0 0.0
        %1188 = vmatpush2.msra.mxu0 0.0
        %1189 = vmatprep.subr.mxu0 0.0
        %1190 = vmatpush2.msra.mxu0 0.0
        %1191 = vmatprep.mubr.f32.mxu0 0.0
        %v1192 = vand.u32 %v227, 4294901760
        %1193 = vmatmul.mubr.f32.gmra.mxu0 %v1192
        %v1194 = vpop.f32.mrf.mxu0
        %v1195 = vadd.f32 %v1034, %v1194
        %v1196 = vpop.f32.mrf.mxu0
        %1197 = vmatprep.mubr.f32.mxu0 0.0
        %v1198 = vand.u32 %v228, 4294901760
        %1199 = vmatmul.mubr.f32.gmra.mxu0 %v1198
        %v1200 = vpop.f32.mrf.mxu0
        %v1201 = vadd.f32 %v1044, %v1200
        %v1202 = vpop.f32.mrf.mxu0
        %1203 = vdwg.mxu0
        %1204 = vmatprep.subr.mxu0 0.0
        %v1205 = vand.u32 %v244, 4294901760
        %v1206 = vsub.f32 %v244, %v1205
        %1207 = vmatpush1.msra.mxu0 %v1206
        %1208 = vmatprep.subr.mxu0 0.0
        %v1209 = vand.u32 %v243, 4294901760
        %v1210 = vsub.f32 %v243, %v1209
        %1211 = vmatpush1.msra.mxu0 %v1210
        %1212 = vmatprep.subr.mxu0 0.0
        %v1213 = vand.u32 %v242, 4294901760
        %v1214 = vsub.f32 %v242, %v1213
        %1215 = vmatpush1.msra.mxu0 %v1214
        %1216 = vmatprep.subr.mxu0 0.0
        %v1217 = vand.u32 %v241, 4294901760
        %v1218 = vsub.f32 %v241, %v1217
        %1219 = vmatpush1.msra.mxu0 %v1218
        %1220 = vmatprep.subr.mxu0 0.0
        %v1221 = vand.u32 %v240, 4294901760
        %v1222 = vsub.f32 %v240, %v1221
        %1223 = vmatpush1.msra.mxu0 %v1222
        %1224 = vmatprep.subr.mxu0 0.0
        %v1225 = vand.u32 %v239, 4294901760
        %v1226 = vsub.f32 %v239, %v1225
        %1227 = vmatpush1.msra.mxu0 %v1226
        %1228 = vmatprep.subr.mxu0 0.0
        %v1229 = vand.u32 %v238, 4294901760
        %v1230 = vsub.f32 %v238, %v1229
        %1231 = vmatpush1.msra.mxu0 %v1230
        %1232 = vmatprep.subr.mxu0 0.0
        %v1233 = vand.u32 %v237, 4294901760
        %v1234 = vsub.f32 %v237, %v1233
        %1235 = vmatpush1.msra.mxu0 %v1234
        %1236 = vmatprep.subr.mxu0 0.0
        %v1237 = vand.u32 %v236, 4294901760
        %v1238 = vsub.f32 %v236, %v1237
        %1239 = vmatpush1.msra.mxu0 %v1238
        %1240 = vmatprep.subr.mxu0 0.0
        %v1241 = vand.u32 %v235, 4294901760
        %v1242 = vsub.f32 %v235, %v1241
        %1243 = vmatpush1.msra.mxu0 %v1242
        %1244 = vmatprep.subr.mxu0 0.0
        %v1245 = vand.u32 %v234, 4294901760
        %v1246 = vsub.f32 %v234, %v1245
        %1247 = vmatpush1.msra.mxu0 %v1246
        %1248 = vmatprep.subr.mxu0 0.0
        %v1249 = vand.u32 %v233, 4294901760
        %v1250 = vsub.f32 %v233, %v1249
        %1251 = vmatpush1.msra.mxu0 %v1250
        %1252 = vmatprep.subr.mxu0 0.0
        %v1253 = vand.u32 %v232, 4294901760
        %v1254 = vsub.f32 %v232, %v1253
        %1255 = vmatpush1.msra.mxu0 %v1254
        %1256 = vmatprep.subr.mxu0 0.0
        %v1257 = vand.u32 %v231, 4294901760
        %v1258 = vsub.f32 %v231, %v1257
        %1259 = vmatpush1.msra.mxu0 %v1258
        %1260 = vmatprep.subr.mxu0 0.0
        %v1261 = vand.u32 %v230, 4294901760
        %v1262 = vsub.f32 %v230, %v1261
        %1263 = vmatpush1.msra.mxu0 %v1262
        %1264 = vmatprep.subr.mxu0 0.0
        %v1265 = vand.u32 %v229, 4294901760
        %v1266 = vsub.f32 %v229, %v1265
        %1267 = vmatpush1.msra.mxu0 %v1266
        %1268 = vmatprep.subr.mxu0 0.0
        %1269 = vmatpush2.msra.mxu0 0.0
        %1270 = vmatprep.subr.mxu0 0.0
        %1271 = vmatpush2.msra.mxu0 0.0
        %1272 = vmatprep.subr.mxu0 0.0
        %1273 = vmatpush2.msra.mxu0 0.0
        %1274 = vmatprep.subr.mxu0 0.0
        %1275 = vmatpush2.msra.mxu0 0.0
        %1276 = vmatprep.subr.mxu0 0.0
        %1277 = vmatpush2.msra.mxu0 0.0
        %1278 = vmatprep.subr.mxu0 0.0
        %1279 = vmatpush2.msra.mxu0 0.0
        %1280 = vmatprep.subr.mxu0 0.0
        %1281 = vmatpush2.msra.mxu0 0.0
        %1282 = vmatprep.subr.mxu0 0.0
        %1283 = vmatpush2.msra.mxu0 0.0
        %1284 = vmatprep.subr.mxu0 0.0
        %1285 = vmatpush2.msra.mxu0 0.0
        %1286 = vmatprep.subr.mxu0 0.0
        %1287 = vmatpush2.msra.mxu0 0.0
        %1288 = vmatprep.subr.mxu0 0.0
        %1289 = vmatpush2.msra.mxu0 0.0
        %1290 = vmatprep.subr.mxu0 0.0
        %1291 = vmatpush2.msra.mxu0 0.0
        %1292 = vmatprep.subr.mxu0 0.0
        %1293 = vmatpush2.msra.mxu0 0.0
        %1294 = vmatprep.subr.mxu0 0.0
        %1295 = vmatpush2.msra.mxu0 0.0
        %1296 = vmatprep.subr.mxu0 0.0
        %1297 = vmatpush2.msra.mxu0 0.0
        %1298 = vmatprep.subr.mxu0 0.0
        %1299 = vmatpush2.msra.mxu0 0.0
        %1300 = vmatprep.mubr.f32.mxu0 0.0
        %v1301 = vand.u32 %v227, 4294901760
        %v1302 = vsub.f32 %v227, %v1301
        %1303 = vmatmul.mubr.f32.gmra.mxu0 %v1302
        %v1304 = vpop.f32.mrf.mxu0
        %v1305 = vadd.f32 %v1195, %v1304
        %v1306 = vpop.f32.mrf.mxu0
        %1307 = vmatprep.mubr.f32.mxu0 0.0
        %v1308 = vand.u32 %v228, 4294901760
        %v1309 = vsub.f32 %v228, %v1308
        %1310 = vmatmul.mubr.f32.gmra.mxu0 %v1309
        %v1311 = vpop.f32.mrf.mxu0
        %v1312 = vadd.f32 %v1201, %v1311
        %v1313 = vpop.f32.mrf.mxu0
        %1314 = vdwg.mxu0
        %1315 = vmatprep.subr.mxu0 0.0
        %v1316 = vand.u32 %v244, 4294901760
        %1317 = vmatpush1.msra.mxu0 %v1316
        %1318 = vmatprep.subr.mxu0 0.0
        %v1319 = vand.u32 %v243, 4294901760
        %1320 = vmatpush1.msra.mxu0 %v1319
        %1321 = vmatprep.subr.mxu0 0.0
        %v1322 = vand.u32 %v242, 4294901760
        %1323 = vmatpush1.msra.mxu0 %v1322
        %1324 = vmatprep.subr.mxu0 0.0
        %v1325 = vand.u32 %v241, 4294901760
        %1326 = vmatpush1.msra.mxu0 %v1325
        %1327 = vmatprep.subr.mxu0 0.0
        %v1328 = vand.u32 %v240, 4294901760
        %1329 = vmatpush1.msra.mxu0 %v1328
        %1330 = vmatprep.subr.mxu0 0.0
        %v1331 = vand.u32 %v239, 4294901760
        %1332 = vmatpush1.msra.mxu0 %v1331
        %1333 = vmatprep.subr.mxu0 0.0
        %v1334 = vand.u32 %v238, 4294901760
        %1335 = vmatpush1.msra.mxu0 %v1334
        %1336 = vmatprep.subr.mxu0 0.0
        %v1337 = vand.u32 %v237, 4294901760
        %1338 = vmatpush1.msra.mxu0 %v1337
        %1339 = vmatprep.subr.mxu0 0.0
        %v1340 = vand.u32 %v236, 4294901760
        %1341 = vmatpush1.msra.mxu0 %v1340
        %1342 = vmatprep.subr.mxu0 0.0
        %v1343 = vand.u32 %v235, 4294901760
        %1344 = vmatpush1.msra.mxu0 %v1343
        %1345 = vmatprep.subr.mxu0 0.0
        %v1346 = vand.u32 %v234, 4294901760
        %1347 = vmatpush1.msra.mxu0 %v1346
        %1348 = vmatprep.subr.mxu0 0.0
        %v1349 = vand.u32 %v233, 4294901760
        %1350 = vmatpush1.msra.mxu0 %v1349
        %1351 = vmatprep.subr.mxu0 0.0
        %v1352 = vand.u32 %v232, 4294901760
        %1353 = vmatpush1.msra.mxu0 %v1352
        %1354 = vmatprep.subr.mxu0 0.0
        %v1355 = vand.u32 %v231, 4294901760
        %1356 = vmatpush1.msra.mxu0 %v1355
        %1357 = vmatprep.subr.mxu0 0.0
        %v1358 = vand.u32 %v230, 4294901760
        %1359 = vmatpush1.msra.mxu0 %v1358
        %1360 = vmatprep.subr.mxu0 0.0
        %v1361 = vand.u32 %v229, 4294901760
        %1362 = vmatpush1.msra.mxu0 %v1361
        %1363 = vmatprep.subr.mxu0 0.0
        %1364 = vmatpush2.msra.mxu0 0.0
        %1365 = vmatprep.subr.mxu0 0.0
        %1366 = vmatpush2.msra.mxu0 0.0
        %1367 = vmatprep.subr.mxu0 0.0
        %1368 = vmatpush2.msra.mxu0 0.0
        %1369 = vmatprep.subr.mxu0 0.0
        %1370 = vmatpush2.msra.mxu0 0.0
        %1371 = vmatprep.subr.mxu0 0.0
        %1372 = vmatpush2.msra.mxu0 0.0
        %1373 = vmatprep.subr.mxu0 0.0
        %1374 = vmatpush2.msra.mxu0 0.0
        %1375 = vmatprep.subr.mxu0 0.0
        %1376 = vmatpush2.msra.mxu0 0.0
        %1377 = vmatprep.subr.mxu0 0.0
        %1378 = vmatpush2.msra.mxu0 0.0
        %1379 = vmatprep.subr.mxu0 0.0
        %1380 = vmatpush2.msra.mxu0 0.0
        %1381 = vmatprep.subr.mxu0 0.0
        %1382 = vmatpush2.msra.mxu0 0.0
        %1383 = vmatprep.subr.mxu0 0.0
        %1384 = vmatpush2.msra.mxu0 0.0
        %1385 = vmatprep.subr.mxu0 0.0
        %1386 = vmatpush2.msra.mxu0 0.0
        %1387 = vmatprep.subr.mxu0 0.0
        %1388 = vmatpush2.msra.mxu0 0.0
        %1389 = vmatprep.subr.mxu0 0.0
        %1390 = vmatpush2.msra.mxu0 0.0
        %1391 = vmatprep.subr.mxu0 0.0
        %1392 = vmatpush2.msra.mxu0 0.0
        %1393 = vmatprep.subr.mxu0 0.0
        %1394 = vmatpush2.msra.mxu0 0.0
        %1395 = vmatprep.mubr.f32.mxu0 0.0
        %v1396 = vand.u32 %v227, 4294901760
        %v1397 = vsub.f32 %v227, %v1396
        %v1398 = vand.u32 %v1397, 4294901760
        %1399 = vmatmul.mubr.f32.gmra.mxu0 %v1398
        %v1400 = vpop.f32.mrf.mxu0
        %v1401 = vadd.f32 %v1305, %v1400
        %v1402 = vpop.f32.mrf.mxu0
        %1403 = vmatprep.mubr.f32.mxu0 0.0
        %v1404 = vand.u32 %v228, 4294901760
        %v1405 = vsub.f32 %v228, %v1404
        %v1406 = vand.u32 %v1405, 4294901760
        %1407 = vmatmul.mubr.f32.gmra.mxu0 %v1406
        %v1408 = vpop.f32.mrf.mxu0
        %v1409 = vadd.f32 %v1312, %v1408
        %v1410 = vpop.f32.mrf.mxu0
        %1411 = vdwg.mxu0
        %1412 = vmatprep.subr.mxu0 0.0
        %v1413 = vand.u32 %v244, 4294901760
        %v1414 = vsub.f32 %v244, %v1413
        %v1415 = vand.u32 %v1414, 4294901760
        %1416 = vmatpush1.msra.mxu0 %v1415
        %1417 = vmatprep.subr.mxu0 0.0
        %v1418 = vand.u32 %v243, 4294901760
        %v1419 = vsub.f32 %v243, %v1418
        %v1420 = vand.u32 %v1419, 4294901760
        %1421 = vmatpush1.msra.mxu0 %v1420
        %1422 = vmatprep.subr.mxu0 0.0
        %v1423 = vand.u32 %v242, 4294901760
        %v1424 = vsub.f32 %v242, %v1423
        %v1425 = vand.u32 %v1424, 4294901760
        %1426 = vmatpush1.msra.mxu0 %v1425
        %1427 = vmatprep.subr.mxu0 0.0
        %v1428 = vand.u32 %v241, 4294901760
        %v1429 = vsub.f32 %v241, %v1428
        %v1430 = vand.u32 %v1429, 4294901760
        %1431 = vmatpush1.msra.mxu0 %v1430
        %1432 = vmatprep.subr.mxu0 0.0
        %v1433 = vand.u32 %v240, 4294901760
        %v1434 = vsub.f32 %v240, %v1433
        %v1435 = vand.u32 %v1434, 4294901760
        %1436 = vmatpush1.msra.mxu0 %v1435
        %1437 = vmatprep.subr.mxu0 0.0
        %v1438 = vand.u32 %v239, 4294901760
        %v1439 = vsub.f32 %v239, %v1438
        %v1440 = vand.u32 %v1439, 4294901760
        %1441 = vmatpush1.msra.mxu0 %v1440
        %1442 = vmatprep.subr.mxu0 0.0
        %v1443 = vand.u32 %v238, 4294901760
        %v1444 = vsub.f32 %v238, %v1443
        %v1445 = vand.u32 %v1444, 4294901760
        %1446 = vmatpush1.msra.mxu0 %v1445
        %1447 = vmatprep.subr.mxu0 0.0
        %v1448 = vand.u32 %v237, 4294901760
        %v1449 = vsub.f32 %v237, %v1448
        %v1450 = vand.u32 %v1449, 4294901760
        %1451 = vmatpush1.msra.mxu0 %v1450
        %1452 = vmatprep.subr.mxu0 0.0
        %v1453 = vand.u32 %v236, 4294901760
        %v1454 = vsub.f32 %v236, %v1453
        %v1455 = vand.u32 %v1454, 4294901760
        %1456 = vmatpush1.msra.mxu0 %v1455
        %1457 = vmatprep.subr.mxu0 0.0
        %v1458 = vand.u32 %v235, 4294901760
        %v1459 = vsub.f32 %v235, %v1458
        %v1460 = vand.u32 %v1459, 4294901760
        %1461 = vmatpush1.msra.mxu0 %v1460
        %1462 = vmatprep.subr.mxu0 0.0
        %v1463 = vand.u32 %v234, 4294901760
        %v1464 = vsub.f32 %v234, %v1463
        %v1465 = vand.u32 %v1464, 4294901760
        %1466 = vmatpush1.msra.mxu0 %v1465
        %1467 = vmatprep.subr.mxu0 0.0
        %v1468 = vand.u32 %v233, 4294901760
        %v1469 = vsub.f32 %v233, %v1468
        %v1470 = vand.u32 %v1469, 4294901760
        %1471 = vmatpush1.msra.mxu0 %v1470
        %1472 = vmatprep.subr.mxu0 0.0
        %v1473 = vand.u32 %v232, 4294901760
        %v1474 = vsub.f32 %v232, %v1473
        %v1475 = vand.u32 %v1474, 4294901760
        %1476 = vmatpush1.msra.mxu0 %v1475
        %1477 = vmatprep.subr.mxu0 0.0
        %v1478 = vand.u32 %v231, 4294901760
        %v1479 = vsub.f32 %v231, %v1478
        %v1480 = vand.u32 %v1479, 4294901760
        %1481 = vmatpush1.msra.mxu0 %v1480
        %1482 = vmatprep.subr.mxu0 0.0
        %v1483 = vand.u32 %v230, 4294901760
        %v1484 = vsub.f32 %v230, %v1483
        %v1485 = vand.u32 %v1484, 4294901760
        %1486 = vmatpush1.msra.mxu0 %v1485
        %1487 = vmatprep.subr.mxu0 0.0
        %v1488 = vand.u32 %v229, 4294901760
        %v1489 = vsub.f32 %v229, %v1488
        %v1490 = vand.u32 %v1489, 4294901760
        %1491 = vmatpush1.msra.mxu0 %v1490
        %1492 = vmatprep.subr.mxu0 0.0
        %1493 = vmatpush2.msra.mxu0 0.0
        %1494 = vmatprep.subr.mxu0 0.0
        %1495 = vmatpush2.msra.mxu0 0.0
        %1496 = vmatprep.subr.mxu0 0.0
        %1497 = vmatpush2.msra.mxu0 0.0
        %1498 = vmatprep.subr.mxu0 0.0
        %1499 = vmatpush2.msra.mxu0 0.0
        %1500 = vmatprep.subr.mxu0 0.0
        %1501 = vmatpush2.msra.mxu0 0.0
        %1502 = vmatprep.subr.mxu0 0.0
        %1503 = vmatpush2.msra.mxu0 0.0
        %1504 = vmatprep.subr.mxu0 0.0
        %1505 = vmatpush2.msra.mxu0 0.0
        %1506 = vmatprep.subr.mxu0 0.0
        %1507 = vmatpush2.msra.mxu0 0.0
        %1508 = vmatprep.subr.mxu0 0.0
        %1509 = vmatpush2.msra.mxu0 0.0
        %1510 = vmatprep.subr.mxu0 0.0
        %1511 = vmatpush2.msra.mxu0 0.0
        %1512 = vmatprep.subr.mxu0 0.0
        %1513 = vmatpush2.msra.mxu0 0.0
        %1514 = vmatprep.subr.mxu0 0.0
        %1515 = vmatpush2.msra.mxu0 0.0
        %1516 = vmatprep.subr.mxu0 0.0
        %1517 = vmatpush2.msra.mxu0 0.0
        %1518 = vmatprep.subr.mxu0 0.0
        %1519 = vmatpush2.msra.mxu0 0.0
        %1520 = vmatprep.subr.mxu0 0.0
        %1521 = vmatpush2.msra.mxu0 0.0
        %1522 = vmatprep.subr.mxu0 0.0
        %1523 = vmatpush2.msra.mxu0 0.0
        %1524 = vmatprep.mubr.f32.mxu0 0.0
        %v1525 = vand.u32 %v227, 4294901760
        %1526 = vmatmul.mubr.f32.gmra.mxu0 %v1525
        %v1527 = vpop.f32.mrf.mxu0
        %v1528 = vadd.f32 %v1401, %v1527
        %v1529 = vpop.f32.mrf.mxu0
        %1530 = vmatprep.mubr.f32.mxu0 0.0
        %v1531 = vand.u32 %v228, 4294901760
        %1532 = vmatmul.mubr.f32.gmra.mxu0 %v1531
        %v1533 = vpop.f32.mrf.mxu0
        %v1534 = vadd.f32 %v1409, %v1533
        %v1535 = vpop.f32.mrf.mxu0
        %1536 = vdwg.mxu0
        %1537 = vmatprep.subr.mxu0 0.0
        %v1538 = vand.u32 %v244, 4294901760
        %1539 = vmatpush1.msra.mxu0 %v1538
        %1540 = vmatprep.subr.mxu0 0.0
        %v1541 = vand.u32 %v243, 4294901760
        %1542 = vmatpush1.msra.mxu0 %v1541
        %1543 = vmatprep.subr.mxu0 0.0
        %v1544 = vand.u32 %v242, 4294901760
        %1545 = vmatpush1.msra.mxu0 %v1544
        %1546 = vmatprep.subr.mxu0 0.0
        %v1547 = vand.u32 %v241, 4294901760
        %1548 = vmatpush1.msra.mxu0 %v1547
        %1549 = vmatprep.subr.mxu0 0.0
        %v1550 = vand.u32 %v240, 4294901760
        %1551 = vmatpush1.msra.mxu0 %v1550
        %1552 = vmatprep.subr.mxu0 0.0
        %v1553 = vand.u32 %v239, 4294901760
        %1554 = vmatpush1.msra.mxu0 %v1553
        %1555 = vmatprep.subr.mxu0 0.0
        %v1556 = vand.u32 %v238, 4294901760
        %1557 = vmatpush1.msra.mxu0 %v1556
        %1558 = vmatprep.subr.mxu0 0.0
        %v1559 = vand.u32 %v237, 4294901760
        %1560 = vmatpush1.msra.mxu0 %v1559
        %1561 = vmatprep.subr.mxu0 0.0
        %v1562 = vand.u32 %v236, 4294901760
        %1563 = vmatpush1.msra.mxu0 %v1562
        %1564 = vmatprep.subr.mxu0 0.0
        %v1565 = vand.u32 %v235, 4294901760
        %1566 = vmatpush1.msra.mxu0 %v1565
        %1567 = vmatprep.subr.mxu0 0.0
        %v1568 = vand.u32 %v234, 4294901760
        %1569 = vmatpush1.msra.mxu0 %v1568
        %1570 = vmatprep.subr.mxu0 0.0
        %v1571 = vand.u32 %v233, 4294901760
        %1572 = vmatpush1.msra.mxu0 %v1571
        %1573 = vmatprep.subr.mxu0 0.0
        %v1574 = vand.u32 %v232, 4294901760
        %1575 = vmatpush1.msra.mxu0 %v1574
        %1576 = vmatprep.subr.mxu0 0.0
        %v1577 = vand.u32 %v231, 4294901760
        %1578 = vmatpush1.msra.mxu0 %v1577
        %1579 = vmatprep.subr.mxu0 0.0
        %v1580 = vand.u32 %v230, 4294901760
        %1581 = vmatpush1.msra.mxu0 %v1580
        %1582 = vmatprep.subr.mxu0 0.0
        %v1583 = vand.u32 %v229, 4294901760
        %1584 = vmatpush1.msra.mxu0 %v1583
        %1585 = vmatprep.subr.mxu0 0.0
        %1586 = vmatpush2.msra.mxu0 0.0
        %1587 = vmatprep.subr.mxu0 0.0
        %1588 = vmatpush2.msra.mxu0 0.0
        %1589 = vmatprep.subr.mxu0 0.0
        %1590 = vmatpush2.msra.mxu0 0.0
        %1591 = vmatprep.subr.mxu0 0.0
        %1592 = vmatpush2.msra.mxu0 0.0
        %1593 = vmatprep.subr.mxu0 0.0
        %1594 = vmatpush2.msra.mxu0 0.0
        %1595 = vmatprep.subr.mxu0 0.0
        %1596 = vmatpush2.msra.mxu0 0.0
        %1597 = vmatprep.subr.mxu0 0.0
        %1598 = vmatpush2.msra.mxu0 0.0
        %1599 = vmatprep.subr.mxu0 0.0
        %1600 = vmatpush2.msra.mxu0 0.0
        %1601 = vmatprep.subr.mxu0 0.0
        %1602 = vmatpush2.msra.mxu0 0.0
        %1603 = vmatprep.subr.mxu0 0.0
        %1604 = vmatpush2.msra.mxu0 0.0
        %1605 = vmatprep.subr.mxu0 0.0
        %1606 = vmatpush2.msra.mxu0 0.0
        %1607 = vmatprep.subr.mxu0 0.0
        %1608 = vmatpush2.msra.mxu0 0.0
        %1609 = vmatprep.subr.mxu0 0.0
        %1610 = vmatpush2.msra.mxu0 0.0
        %1611 = vmatprep.subr.mxu0 0.0
        %1612 = vmatpush2.msra.mxu0 0.0
        %1613 = vmatprep.subr.mxu0 0.0
        %1614 = vmatpush2.msra.mxu0 0.0
        %1615 = vmatprep.subr.mxu0 0.0
        %1616 = vmatpush2.msra.mxu0 0.0
        %1617 = vmatprep.mubr.f32.mxu0 0.0
        %v1618 = vand.u32 %v227, 4294901760
        %1619 = vmatmul.mubr.f32.gmra.mxu0 %v1618
        %v1620 = vpop.f32.mrf.mxu0
        %v1621 = vadd.f32 %v1528, %v1620
        %v1622 = vpop.f32.mrf.mxu0
        %1623 = vmatprep.mubr.f32.mxu0 0.0
        %v1624 = vand.u32 %v228, 4294901760
        %1625 = vmatmul.mubr.f32.gmra.mxu0 %v1624
        %v1626 = vpop.f32.mrf.mxu0
        %v1627 = vadd.f32 %v1534, %v1626
        %v1628 = vpop.f32.mrf.mxu0
        %1629 = vdwg.mxu0
        %v1630 = vrot.slane %v220, 1
        %v1631 = vrot.slane %v221, 1
        %vm1632 = vcmp.lt.s32.totalorder %v214, 7
        %v1633 = vsel %vm1632, %v1630, %v1631
        %v1634 = vsel %vm1632, %v1631, %v1630
        %v1635 = vsel %vm218, %v1633, 0.0
        %v1636 = vsel %vm219, %v1634, 0.0
        %s1637 = scalar_lea.vmem %s1, 256
        %v1638 = vld [vmem:[%s1637] sm:$0xff]
        %v1639 = vld [vmem:[%s1637 + $0x8] sm:$0xff]
        %v1640 = vld [vmem:[%s1637 + $0x10] sm:$0xff]
        %v1641 = vld [vmem:[%s1637 + $0x18] sm:$0xff]
        %v1642 = vld [vmem:[%s1637 + $0x20] sm:$0xff]
        %v1643 = vld [vmem:[%s1637 + $0x28] sm:$0xff]
        %v1644 = vld [vmem:[%s1637 + $0x30] sm:$0xff]
        %v1645 = vld [vmem:[%s1637 + $0x38] sm:$0xff]
        %v1646 = vld [vmem:[%s1637 + $0x40] sm:$0xff]
        %v1647 = vld [vmem:[%s1637 + $0x48] sm:$0xff]
        %v1648 = vld [vmem:[%s1637 + $0x50] sm:$0xff]
        %v1649 = vld [vmem:[%s1637 + $0x58] sm:$0xff]
        %v1650 = vld [vmem:[%s1637 + $0x60] sm:$0xff]
        %v1651 = vld [vmem:[%s1637 + $0x68] sm:$0xff]
        %v1652 = vld [vmem:[%s1637 + $0x70] sm:$0xff]
        %v1653 = vld [vmem:[%s1637 + $0x78] sm:$0xff]
        %1654 = vmatprep.subr.mxu0 0.0
        %v1655 = vand.u32 %v1653, 4294901760
        %1656 = vmatpush1.msra.mxu0 %v1655
        %1657 = vmatprep.subr.mxu0 0.0
        %v1658 = vand.u32 %v1652, 4294901760
        %1659 = vmatpush1.msra.mxu0 %v1658
        %1660 = vmatprep.subr.mxu0 0.0
        %v1661 = vand.u32 %v1651, 4294901760
        %1662 = vmatpush1.msra.mxu0 %v1661
        %1663 = vmatprep.subr.mxu0 0.0
        %v1664 = vand.u32 %v1650, 4294901760
        %1665 = vmatpush1.msra.mxu0 %v1664
        %1666 = vmatprep.subr.mxu0 0.0
        %v1667 = vand.u32 %v1649, 4294901760
        %1668 = vmatpush1.msra.mxu0 %v1667
        %1669 = vmatprep.subr.mxu0 0.0
        %v1670 = vand.u32 %v1648, 4294901760
        %1671 = vmatpush1.msra.mxu0 %v1670
        %1672 = vmatprep.subr.mxu0 0.0
        %v1673 = vand.u32 %v1647, 4294901760
        %1674 = vmatpush1.msra.mxu0 %v1673
        %1675 = vmatprep.subr.mxu0 0.0
        %v1676 = vand.u32 %v1646, 4294901760
        %1677 = vmatpush1.msra.mxu0 %v1676
        %1678 = vmatprep.subr.mxu0 0.0
        %v1679 = vand.u32 %v1645, 4294901760
        %1680 = vmatpush1.msra.mxu0 %v1679
        %1681 = vmatprep.subr.mxu0 0.0
        %v1682 = vand.u32 %v1644, 4294901760
        %1683 = vmatpush1.msra.mxu0 %v1682
        %1684 = vmatprep.subr.mxu0 0.0
        %v1685 = vand.u32 %v1643, 4294901760
        %1686 = vmatpush1.msra.mxu0 %v1685
        %1687 = vmatprep.subr.mxu0 0.0
        %v1688 = vand.u32 %v1642, 4294901760
        %1689 = vmatpush1.msra.mxu0 %v1688
        %1690 = vmatprep.subr.mxu0 0.0
        %v1691 = vand.u32 %v1641, 4294901760
        %1692 = vmatpush1.msra.mxu0 %v1691
        %1693 = vmatprep.subr.mxu0 0.0
        %v1694 = vand.u32 %v1640, 4294901760
        %1695 = vmatpush1.msra.mxu0 %v1694
        %1696 = vmatprep.subr.mxu0 0.0
        %v1697 = vand.u32 %v1639, 4294901760
        %1698 = vmatpush1.msra.mxu0 %v1697
        %1699 = vmatprep.subr.mxu0 0.0
        %v1700 = vand.u32 %v1638, 4294901760
        %1701 = vmatpush1.msra.mxu0 %v1700
        %1702 = vmatprep.subr.mxu0 0.0
        %1703 = vmatpush2.msra.mxu0 0.0
        %1704 = vmatprep.subr.mxu0 0.0
        %1705 = vmatpush2.msra.mxu0 0.0
        %1706 = vmatprep.subr.mxu0 0.0
        %1707 = vmatpush2.msra.mxu0 0.0
        %1708 = vmatprep.subr.mxu0 0.0
        %1709 = vmatpush2.msra.mxu0 0.0
        %1710 = vmatprep.subr.mxu0 0.0
        %1711 = vmatpush2.msra.mxu0 0.0
        %1712 = vmatprep.subr.mxu0 0.0
        %1713 = vmatpush2.msra.mxu0 0.0
        %1714 = vmatprep.subr.mxu0 0.0
        %1715 = vmatpush2.msra.mxu0 0.0
        %1716 = vmatprep.subr.mxu0 0.0
        %1717 = vmatpush2.msra.mxu0 0.0
        %1718 = vmatprep.subr.mxu0 0.0
        %1719 = vmatpush2.msra.mxu0 0.0
        %1720 = vmatprep.subr.mxu0 0.0
        %1721 = vmatpush2.msra.mxu0 0.0
        %1722 = vmatprep.subr.mxu0 0.0
        %1723 = vmatpush2.msra.mxu0 0.0
        %1724 = vmatprep.subr.mxu0 0.0
        %1725 = vmatpush2.msra.mxu0 0.0
        %1726 = vmatprep.subr.mxu0 0.0
        %1727 = vmatpush2.msra.mxu0 0.0
        %1728 = vmatprep.subr.mxu0 0.0
        %1729 = vmatpush2.msra.mxu0 0.0
        %1730 = vmatprep.subr.mxu0 0.0
        %1731 = vmatpush2.msra.mxu0 0.0
        %1732 = vmatprep.subr.mxu0 0.0
        %1733 = vmatpush2.msra.mxu0 0.0
        %1734 = vmatprep.mubr.f32.mxu0 0.0
        %v1735 = vand.u32 %v1635, 4294901760
        %v1736 = vsub.f32 %v1635, %v1735
        %v1737 = vand.u32 %v1736, 4294901760
        %v1738 = vsub.f32 %v1736, %v1737
        %v1739 = vand.u32 %v1738, 4294901760
        %1740 = vmatmul.mubr.f32.gmra.mxu0 %v1739
        %v1741 = vpop.f32.mrf.mxu0
        %v1742 = vadd.f32 0.0, %v1741
        %v1743 = vpop.f32.mrf.mxu0
        %1744 = vmatprep.mubr.f32.mxu0 0.0
        %v1745 = vand.u32 %v1636, 4294901760
        %v1746 = vsub.f32 %v1636, %v1745
        %v1747 = vand.u32 %v1746, 4294901760
        %v1748 = vsub.f32 %v1746, %v1747
        %v1749 = vand.u32 %v1748, 4294901760
        %1750 = vmatmul.mubr.f32.gmra.mxu0 %v1749
        %v1751 = vpop.f32.mrf.mxu0
        %v1752 = vadd.f32 0.0, %v1751
        %v1753 = vpop.f32.mrf.mxu0
        %1754 = vdwg.mxu0
        %1755 = vmatprep.subr.mxu0 0.0
        %v1756 = vand.u32 %v1653, 4294901760
        %v1757 = vsub.f32 %v1653, %v1756
        %v1758 = vand.u32 %v1757, 4294901760
        %v1759 = vsub.f32 %v1757, %v1758
        %v1760 = vand.u32 %v1759, 4294901760
        %1761 = vmatpush1.msra.mxu0 %v1760
        %1762 = vmatprep.subr.mxu0 0.0
        %v1763 = vand.u32 %v1652, 4294901760
        %v1764 = vsub.f32 %v1652, %v1763
        %v1765 = vand.u32 %v1764, 4294901760
        %v1766 = vsub.f32 %v1764, %v1765
        %v1767 = vand.u32 %v1766, 4294901760
        %1768 = vmatpush1.msra.mxu0 %v1767
        %1769 = vmatprep.subr.mxu0 0.0
        %v1770 = vand.u32 %v1651, 4294901760
        %v1771 = vsub.f32 %v1651, %v1770
        %v1772 = vand.u32 %v1771, 4294901760
        %v1773 = vsub.f32 %v1771, %v1772
        %v1774 = vand.u32 %v1773, 4294901760
        %1775 = vmatpush1.msra.mxu0 %v1774
        %1776 = vmatprep.subr.mxu0 0.0
        %v1777 = vand.u32 %v1650, 4294901760
        %v1778 = vsub.f32 %v1650, %v1777
        %v1779 = vand.u32 %v1778, 4294901760
        %v1780 = vsub.f32 %v1778, %v1779
        %v1781 = vand.u32 %v1780, 4294901760
        %1782 = vmatpush1.msra.mxu0 %v1781
        %1783 = vmatprep.subr.mxu0 0.0
        %v1784 = vand.u32 %v1649, 4294901760
        %v1785 = vsub.f32 %v1649, %v1784
        %v1786 = vand.u32 %v1785, 4294901760
        %v1787 = vsub.f32 %v1785, %v1786
        %v1788 = vand.u32 %v1787, 4294901760
        %1789 = vmatpush1.msra.mxu0 %v1788
        %1790 = vmatprep.subr.mxu0 0.0
        %v1791 = vand.u32 %v1648, 4294901760
        %v1792 = vsub.f32 %v1648, %v1791
        %v1793 = vand.u32 %v1792, 4294901760
        %v1794 = vsub.f32 %v1792, %v1793
        %v1795 = vand.u32 %v1794, 4294901760
        %1796 = vmatpush1.msra.mxu0 %v1795
        %1797 = vmatprep.subr.mxu0 0.0
        %v1798 = vand.u32 %v1647, 4294901760
        %v1799 = vsub.f32 %v1647, %v1798
        %v1800 = vand.u32 %v1799, 4294901760
        %v1801 = vsub.f32 %v1799, %v1800
        %v1802 = vand.u32 %v1801, 4294901760
        %1803 = vmatpush1.msra.mxu0 %v1802
        %1804 = vmatprep.subr.mxu0 0.0
        %v1805 = vand.u32 %v1646, 4294901760
        %v1806 = vsub.f32 %v1646, %v1805
        %v1807 = vand.u32 %v1806, 4294901760
        %v1808 = vsub.f32 %v1806, %v1807
        %v1809 = vand.u32 %v1808, 4294901760
        %1810 = vmatpush1.msra.mxu0 %v1809
        %1811 = vmatprep.subr.mxu0 0.0
        %v1812 = vand.u32 %v1645, 4294901760
        %v1813 = vsub.f32 %v1645, %v1812
        %v1814 = vand.u32 %v1813, 4294901760
        %v1815 = vsub.f32 %v1813, %v1814
        %v1816 = vand.u32 %v1815, 4294901760
        %1817 = vmatpush1.msra.mxu0 %v1816
        %1818 = vmatprep.subr.mxu0 0.0
        %v1819 = vand.u32 %v1644, 4294901760
        %v1820 = vsub.f32 %v1644, %v1819
        %v1821 = vand.u32 %v1820, 4294901760
        %v1822 = vsub.f32 %v1820, %v1821
        %v1823 = vand.u32 %v1822, 4294901760
        %1824 = vmatpush1.msra.mxu0 %v1823
        %1825 = vmatprep.subr.mxu0 0.0
        %v1826 = vand.u32 %v1643, 4294901760
        %v1827 = vsub.f32 %v1643, %v1826
        %v1828 = vand.u32 %v1827, 4294901760
        %v1829 = vsub.f32 %v1827, %v1828
        %v1830 = vand.u32 %v1829, 4294901760
        %1831 = vmatpush1.msra.mxu0 %v1830
        %1832 = vmatprep.subr.mxu0 0.0
        %v1833 = vand.u32 %v1642, 4294901760
        %v1834 = vsub.f32 %v1642, %v1833
        %v1835 = vand.u32 %v1834, 4294901760
        %v1836 = vsub.f32 %v1834, %v1835
        %v1837 = vand.u32 %v1836, 4294901760
        %1838 = vmatpush1.msra.mxu0 %v1837
        %1839 = vmatprep.subr.mxu0 0.0
        %v1840 = vand.u32 %v1641, 4294901760
        %v1841 = vsub.f32 %v1641, %v1840
        %v1842 = vand.u32 %v1841, 4294901760
        %v1843 = vsub.f32 %v1841, %v1842
        %v1844 = vand.u32 %v1843, 4294901760
        %1845 = vmatpush1.msra.mxu0 %v1844
        %1846 = vmatprep.subr.mxu0 0.0
        %v1847 = vand.u32 %v1640, 4294901760
        %v1848 = vsub.f32 %v1640, %v1847
        %v1849 = vand.u32 %v1848, 4294901760
        %v1850 = vsub.f32 %v1848, %v1849
        %v1851 = vand.u32 %v1850, 4294901760
        %1852 = vmatpush1.msra.mxu0 %v1851
        %1853 = vmatprep.subr.mxu0 0.0
        %v1854 = vand.u32 %v1639, 4294901760
        %v1855 = vsub.f32 %v1639, %v1854
        %v1856 = vand.u32 %v1855, 4294901760
        %v1857 = vsub.f32 %v1855, %v1856
        %v1858 = vand.u32 %v1857, 4294901760
        %1859 = vmatpush1.msra.mxu0 %v1858
        %1860 = vmatprep.subr.mxu0 0.0
        %v1861 = vand.u32 %v1638, 4294901760
        %v1862 = vsub.f32 %v1638, %v1861
        %v1863 = vand.u32 %v1862, 4294901760
        %v1864 = vsub.f32 %v1862, %v1863
        %v1865 = vand.u32 %v1864, 4294901760
        %1866 = vmatpush1.msra.mxu0 %v1865
        %1867 = vmatprep.subr.mxu0 0.0
        %1868 = vmatpush2.msra.mxu0 0.0
        %1869 = vmatprep.subr.mxu0 0.0
        %1870 = vmatpush2.msra.mxu0 0.0
        %1871 = vmatprep.subr.mxu0 0.0
        %1872 = vmatpush2.msra.mxu0 0.0
        %1873 = vmatprep.subr.mxu0 0.0
        %1874 = vmatpush2.msra.mxu0 0.0
        %1875 = vmatprep.subr.mxu0 0.0
        %1876 = vmatpush2.msra.mxu0 0.0
        %1877 = vmatprep.subr.mxu0 0.0
        %1878 = vmatpush2.msra.mxu0 0.0
        %1879 = vmatprep.subr.mxu0 0.0
        %1880 = vmatpush2.msra.mxu0 0.0
        %1881 = vmatprep.subr.mxu0 0.0
        %1882 = vmatpush2.msra.mxu0 0.0
        %1883 = vmatprep.subr.mxu0 0.0
        %1884 = vmatpush2.msra.mxu0 0.0
        %1885 = vmatprep.subr.mxu0 0.0
        %1886 = vmatpush2.msra.mxu0 0.0
        %1887 = vmatprep.subr.mxu0 0.0
        %1888 = vmatpush2.msra.mxu0 0.0
        %1889 = vmatprep.subr.mxu0 0.0
        %1890 = vmatpush2.msra.mxu0 0.0
        %1891 = vmatprep.subr.mxu0 0.0
        %1892 = vmatpush2.msra.mxu0 0.0
        %1893 = vmatprep.subr.mxu0 0.0
        %1894 = vmatpush2.msra.mxu0 0.0
        %1895 = vmatprep.subr.mxu0 0.0
        %1896 = vmatpush2.msra.mxu0 0.0
        %1897 = vmatprep.subr.mxu0 0.0
        %1898 = vmatpush2.msra.mxu0 0.0
        %1899 = vmatprep.mubr.f32.mxu0 0.0
        %v1900 = vand.u32 %v1635, 4294901760
        %1901 = vmatmul.mubr.f32.gmra.mxu0 %v1900
        %v1902 = vpop.f32.mrf.mxu0
        %v1903 = vadd.f32 %v1742, %v1902
        %v1904 = vpop.f32.mrf.mxu0
        %1905 = vmatprep.mubr.f32.mxu0 0.0
        %v1906 = vand.u32 %v1636, 4294901760
        %1907 = vmatmul.mubr.f32.gmra.mxu0 %v1906
        %v1908 = vpop.f32.mrf.mxu0
        %v1909 = vadd.f32 %v1752, %v1908
        %v1910 = vpop.f32.mrf.mxu0
        %1911 = vdwg.mxu0
        %1912 = vmatprep.subr.mxu0 0.0
        %v1913 = vand.u32 %v1653, 4294901760
        %v1914 = vsub.f32 %v1653, %v1913
        %1915 = vmatpush1.msra.mxu0 %v1914
        %1916 = vmatprep.subr.mxu0 0.0
        %v1917 = vand.u32 %v1652, 4294901760
        %v1918 = vsub.f32 %v1652, %v1917
        %1919 = vmatpush1.msra.mxu0 %v1918
        %1920 = vmatprep.subr.mxu0 0.0
        %v1921 = vand.u32 %v1651, 4294901760
        %v1922 = vsub.f32 %v1651, %v1921
        %1923 = vmatpush1.msra.mxu0 %v1922
        %1924 = vmatprep.subr.mxu0 0.0
        %v1925 = vand.u32 %v1650, 4294901760
        %v1926 = vsub.f32 %v1650, %v1925
        %1927 = vmatpush1.msra.mxu0 %v1926
        %1928 = vmatprep.subr.mxu0 0.0
        %v1929 = vand.u32 %v1649, 4294901760
        %v1930 = vsub.f32 %v1649, %v1929
        %1931 = vmatpush1.msra.mxu0 %v1930
        %1932 = vmatprep.subr.mxu0 0.0
        %v1933 = vand.u32 %v1648, 4294901760
        %v1934 = vsub.f32 %v1648, %v1933
        %1935 = vmatpush1.msra.mxu0 %v1934
        %1936 = vmatprep.subr.mxu0 0.0
        %v1937 = vand.u32 %v1647, 4294901760
        %v1938 = vsub.f32 %v1647, %v1937
        %1939 = vmatpush1.msra.mxu0 %v1938
        %1940 = vmatprep.subr.mxu0 0.0
        %v1941 = vand.u32 %v1646, 4294901760
        %v1942 = vsub.f32 %v1646, %v1941
        %1943 = vmatpush1.msra.mxu0 %v1942
        %1944 = vmatprep.subr.mxu0 0.0
        %v1945 = vand.u32 %v1645, 4294901760
        %v1946 = vsub.f32 %v1645, %v1945
        %1947 = vmatpush1.msra.mxu0 %v1946
        %1948 = vmatprep.subr.mxu0 0.0
        %v1949 = vand.u32 %v1644, 4294901760
        %v1950 = vsub.f32 %v1644, %v1949
        %1951 = vmatpush1.msra.mxu0 %v1950
        %1952 = vmatprep.subr.mxu0 0.0
        %v1953 = vand.u32 %v1643, 4294901760
        %v1954 = vsub.f32 %v1643, %v1953
        %1955 = vmatpush1.msra.mxu0 %v1954
        %1956 = vmatprep.subr.mxu0 0.0
        %v1957 = vand.u32 %v1642, 4294901760
        %v1958 = vsub.f32 %v1642, %v1957
        %1959 = vmatpush1.msra.mxu0 %v1958
        %1960 = vmatprep.subr.mxu0 0.0
        %v1961 = vand.u32 %v1641, 4294901760
        %v1962 = vsub.f32 %v1641, %v1961
        %1963 = vmatpush1.msra.mxu0 %v1962
        %1964 = vmatprep.subr.mxu0 0.0
        %v1965 = vand.u32 %v1640, 4294901760
        %v1966 = vsub.f32 %v1640, %v1965
        %1967 = vmatpush1.msra.mxu0 %v1966
        %1968 = vmatprep.subr.mxu0 0.0
        %v1969 = vand.u32 %v1639, 4294901760
        %v1970 = vsub.f32 %v1639, %v1969
        %1971 = vmatpush1.msra.mxu0 %v1970
        %1972 = vmatprep.subr.mxu0 0.0
        %v1973 = vand.u32 %v1638, 4294901760
        %v1974 = vsub.f32 %v1638, %v1973
        %1975 = vmatpush1.msra.mxu0 %v1974
        %1976 = vmatprep.subr.mxu0 0.0
        %1977 = vmatpush2.msra.mxu0 0.0
        %1978 = vmatprep.subr.mxu0 0.0
        %1979 = vmatpush2.msra.mxu0 0.0
        %1980 = vmatprep.subr.mxu0 0.0
        %1981 = vmatpush2.msra.mxu0 0.0
        %1982 = vmatprep.subr.mxu0 0.0
        %1983 = vmatpush2.msra.mxu0 0.0
        %1984 = vmatprep.subr.mxu0 0.0
        %1985 = vmatpush2.msra.mxu0 0.0
        %1986 = vmatprep.subr.mxu0 0.0
        %1987 = vmatpush2.msra.mxu0 0.0
        %1988 = vmatprep.subr.mxu0 0.0
        %1989 = vmatpush2.msra.mxu0 0.0
        %1990 = vmatprep.subr.mxu0 0.0
        %1991 = vmatpush2.msra.mxu0 0.0
        %1992 = vmatprep.subr.mxu0 0.0
        %1993 = vmatpush2.msra.mxu0 0.0
        %1994 = vmatprep.subr.mxu0 0.0
        %1995 = vmatpush2.msra.mxu0 0.0
        %1996 = vmatprep.subr.mxu0 0.0
        %1997 = vmatpush2.msra.mxu0 0.0
        %1998 = vmatprep.subr.mxu0 0.0
        %1999 = vmatpush2.msra.mxu0 0.0
        %2000 = vmatprep.subr.mxu0 0.0
        %2001 = vmatpush2.msra.mxu0 0.0
        %2002 = vmatprep.subr.mxu0 0.0
        %2003 = vmatpush2.msra.mxu0 0.0
        %2004 = vmatprep.subr.mxu0 0.0
        %2005 = vmatpush2.msra.mxu0 0.0
        %2006 = vmatprep.subr.mxu0 0.0
        %2007 = vmatpush2.msra.mxu0 0.0
        %2008 = vmatprep.mubr.f32.mxu0 0.0
        %v2009 = vand.u32 %v1635, 4294901760
        %v2010 = vsub.f32 %v1635, %v2009
        %2011 = vmatmul.mubr.f32.gmra.mxu0 %v2010
        %v2012 = vpop.f32.mrf.mxu0
        %v2013 = vadd.f32 %v1903, %v2012
        %v2014 = vpop.f32.mrf.mxu0
        %2015 = vmatprep.mubr.f32.mxu0 0.0
        %v2016 = vand.u32 %v1636, 4294901760
        %v2017 = vsub.f32 %v1636, %v2016
        %2018 = vmatmul.mubr.f32.gmra.mxu0 %v2017
        %v2019 = vpop.f32.mrf.mxu0
        %v2020 = vadd.f32 %v1909, %v2019
        %v2021 = vpop.f32.mrf.mxu0
        %2022 = vdwg.mxu0
        %2023 = vmatprep.subr.mxu0 0.0
        %v2024 = vand.u32 %v1653, 4294901760
        %2025 = vmatpush1.msra.mxu0 %v2024
        %2026 = vmatprep.subr.mxu0 0.0
        %v2027 = vand.u32 %v1652, 4294901760
        %2028 = vmatpush1.msra.mxu0 %v2027
        %2029 = vmatprep.subr.mxu0 0.0
        %v2030 = vand.u32 %v1651, 4294901760
        %2031 = vmatpush1.msra.mxu0 %v2030
        %2032 = vmatprep.subr.mxu0 0.0
        %v2033 = vand.u32 %v1650, 4294901760
        %2034 = vmatpush1.msra.mxu0 %v2033
        %2035 = vmatprep.subr.mxu0 0.0
        %v2036 = vand.u32 %v1649, 4294901760
        %2037 = vmatpush1.msra.mxu0 %v2036
        %2038 = vmatprep.subr.mxu0 0.0
        %v2039 = vand.u32 %v1648, 4294901760
        %2040 = vmatpush1.msra.mxu0 %v2039
        %2041 = vmatprep.subr.mxu0 0.0
        %v2042 = vand.u32 %v1647, 4294901760
        %2043 = vmatpush1.msra.mxu0 %v2042
        %2044 = vmatprep.subr.mxu0 0.0
        %v2045 = vand.u32 %v1646, 4294901760
        %2046 = vmatpush1.msra.mxu0 %v2045
        %2047 = vmatprep.subr.mxu0 0.0
        %v2048 = vand.u32 %v1645, 4294901760
        %2049 = vmatpush1.msra.mxu0 %v2048
        %2050 = vmatprep.subr.mxu0 0.0
        %v2051 = vand.u32 %v1644, 4294901760
        %2052 = vmatpush1.msra.mxu0 %v2051
        %2053 = vmatprep.subr.mxu0 0.0
        %v2054 = vand.u32 %v1643, 4294901760
        %2055 = vmatpush1.msra.mxu0 %v2054
        %2056 = vmatprep.subr.mxu0 0.0
        %v2057 = vand.u32 %v1642, 4294901760
        %2058 = vmatpush1.msra.mxu0 %v2057
        %2059 = vmatprep.subr.mxu0 0.0
        %v2060 = vand.u32 %v1641, 4294901760
        %2061 = vmatpush1.msra.mxu0 %v2060
        %2062 = vmatprep.subr.mxu0 0.0
        %v2063 = vand.u32 %v1640, 4294901760
        %2064 = vmatpush1.msra.mxu0 %v2063
        %2065 = vmatprep.subr.mxu0 0.0
        %v2066 = vand.u32 %v1639, 4294901760
        %2067 = vmatpush1.msra.mxu0 %v2066
        %2068 = vmatprep.subr.mxu0 0.0
        %v2069 = vand.u32 %v1638, 4294901760
        %2070 = vmatpush1.msra.mxu0 %v2069
        %2071 = vmatprep.subr.mxu0 0.0
        %2072 = vmatpush2.msra.mxu0 0.0
        %2073 = vmatprep.subr.mxu0 0.0
        %2074 = vmatpush2.msra.mxu0 0.0
        %2075 = vmatprep.subr.mxu0 0.0
        %2076 = vmatpush2.msra.mxu0 0.0
        %2077 = vmatprep.subr.mxu0 0.0
        %2078 = vmatpush2.msra.mxu0 0.0
        %2079 = vmatprep.subr.mxu0 0.0
        %2080 = vmatpush2.msra.mxu0 0.0
        %2081 = vmatprep.subr.mxu0 0.0
        %2082 = vmatpush2.msra.mxu0 0.0
        %2083 = vmatprep.subr.mxu0 0.0
        %2084 = vmatpush2.msra.mxu0 0.0
        %2085 = vmatprep.subr.mxu0 0.0
        %2086 = vmatpush2.msra.mxu0 0.0
        %2087 = vmatprep.subr.mxu0 0.0
        %2088 = vmatpush2.msra.mxu0 0.0
        %2089 = vmatprep.subr.mxu0 0.0
        %2090 = vmatpush2.msra.mxu0 0.0
        %2091 = vmatprep.subr.mxu0 0.0
        %2092 = vmatpush2.msra.mxu0 0.0
        %2093 = vmatprep.subr.mxu0 0.0
        %2094 = vmatpush2.msra.mxu0 0.0
        %2095 = vmatprep.subr.mxu0 0.0
        %2096 = vmatpush2.msra.mxu0 0.0
        %2097 = vmatprep.subr.mxu0 0.0
        %2098 = vmatpush2.msra.mxu0 0.0
        %2099 = vmatprep.subr.mxu0 0.0
        %2100 = vmatpush2.msra.mxu0 0.0
        %2101 = vmatprep.subr.mxu0 0.0
        %2102 = vmatpush2.msra.mxu0 0.0
        %2103 = vmatprep.mubr.f32.mxu0 0.0
        %v2104 = vand.u32 %v1635, 4294901760
        %v2105 = vsub.f32 %v1635, %v2104
        %v2106 = vand.u32 %v2105, 4294901760
        %2107 = vmatmul.mubr.f32.gmra.mxu0 %v2106
        %v2108 = vpop.f32.mrf.mxu0
        %v2109 = vadd.f32 %v2013, %v2108
        %v2110 = vpop.f32.mrf.mxu0
        %2111 = vmatprep.mubr.f32.mxu0 0.0
        %v2112 = vand.u32 %v1636, 4294901760
        %v2113 = vsub.f32 %v1636, %v2112
        %v2114 = vand.u32 %v2113, 4294901760
        %2115 = vmatmul.mubr.f32.gmra.mxu0 %v2114
        %v2116 = vpop.f32.mrf.mxu0
        %v2117 = vadd.f32 %v2020, %v2116
        %v2118 = vpop.f32.mrf.mxu0
        %2119 = vdwg.mxu0
        %2120 = vmatprep.subr.mxu0 0.0
        %v2121 = vand.u32 %v1653, 4294901760
        %v2122 = vsub.f32 %v1653, %v2121
        %v2123 = vand.u32 %v2122, 4294901760
        %2124 = vmatpush1.msra.mxu0 %v2123
        %2125 = vmatprep.subr.mxu0 0.0
        %v2126 = vand.u32 %v1652, 4294901760
        %v2127 = vsub.f32 %v1652, %v2126
        %v2128 = vand.u32 %v2127, 4294901760
        %2129 = vmatpush1.msra.mxu0 %v2128
        %2130 = vmatprep.subr.mxu0 0.0
        %v2131 = vand.u32 %v1651, 4294901760
        %v2132 = vsub.f32 %v1651, %v2131
        %v2133 = vand.u32 %v2132, 4294901760
        %2134 = vmatpush1.msra.mxu0 %v2133
        %2135 = vmatprep.subr.mxu0 0.0
        %v2136 = vand.u32 %v1650, 4294901760
        %v2137 = vsub.f32 %v1650, %v2136
        %v2138 = vand.u32 %v2137, 4294901760
        %2139 = vmatpush1.msra.mxu0 %v2138
        %2140 = vmatprep.subr.mxu0 0.0
        %v2141 = vand.u32 %v1649, 4294901760
        %v2142 = vsub.f32 %v1649, %v2141
        %v2143 = vand.u32 %v2142, 4294901760
        %2144 = vmatpush1.msra.mxu0 %v2143
        %2145 = vmatprep.subr.mxu0 0.0
        %v2146 = vand.u32 %v1648, 4294901760
        %v2147 = vsub.f32 %v1648, %v2146
        %v2148 = vand.u32 %v2147, 4294901760
        %2149 = vmatpush1.msra.mxu0 %v2148
        %2150 = vmatprep.subr.mxu0 0.0
        %v2151 = vand.u32 %v1647, 4294901760
        %v2152 = vsub.f32 %v1647, %v2151
        %v2153 = vand.u32 %v2152, 4294901760
        %2154 = vmatpush1.msra.mxu0 %v2153
        %2155 = vmatprep.subr.mxu0 0.0
        %v2156 = vand.u32 %v1646, 4294901760
        %v2157 = vsub.f32 %v1646, %v2156
        %v2158 = vand.u32 %v2157, 4294901760
        %2159 = vmatpush1.msra.mxu0 %v2158
        %2160 = vmatprep.subr.mxu0 0.0
        %v2161 = vand.u32 %v1645, 4294901760
        %v2162 = vsub.f32 %v1645, %v2161
        %v2163 = vand.u32 %v2162, 4294901760
        %2164 = vmatpush1.msra.mxu0 %v2163
        %2165 = vmatprep.subr.mxu0 0.0
        %v2166 = vand.u32 %v1644, 4294901760
        %v2167 = vsub.f32 %v1644, %v2166
        %v2168 = vand.u32 %v2167, 4294901760
        %2169 = vmatpush1.msra.mxu0 %v2168
        %2170 = vmatprep.subr.mxu0 0.0
        %v2171 = vand.u32 %v1643, 4294901760
        %v2172 = vsub.f32 %v1643, %v2171
        %v2173 = vand.u32 %v2172, 4294901760
        %2174 = vmatpush1.msra.mxu0 %v2173
        %2175 = vmatprep.subr.mxu0 0.0
        %v2176 = vand.u32 %v1642, 4294901760
        %v2177 = vsub.f32 %v1642, %v2176
        %v2178 = vand.u32 %v2177, 4294901760
        %2179 = vmatpush1.msra.mxu0 %v2178
        %2180 = vmatprep.subr.mxu0 0.0
        %v2181 = vand.u32 %v1641, 4294901760
        %v2182 = vsub.f32 %v1641, %v2181
        %v2183 = vand.u32 %v2182, 4294901760
        %2184 = vmatpush1.msra.mxu0 %v2183
        %2185 = vmatprep.subr.mxu0 0.0
        %v2186 = vand.u32 %v1640, 4294901760
        %v2187 = vsub.f32 %v1640, %v2186
        %v2188 = vand.u32 %v2187, 4294901760
        %2189 = vmatpush1.msra.mxu0 %v2188
        %2190 = vmatprep.subr.mxu0 0.0
        %v2191 = vand.u32 %v1639, 4294901760
        %v2192 = vsub.f32 %v1639, %v2191
        %v2193 = vand.u32 %v2192, 4294901760
        %2194 = vmatpush1.msra.mxu0 %v2193
        %2195 = vmatprep.subr.mxu0 0.0
        %v2196 = vand.u32 %v1638, 4294901760
        %v2197 = vsub.f32 %v1638, %v2196
        %v2198 = vand.u32 %v2197, 4294901760
        %2199 = vmatpush1.msra.mxu0 %v2198
        %2200 = vmatprep.subr.mxu0 0.0
        %2201 = vmatpush2.msra.mxu0 0.0
        %2202 = vmatprep.subr.mxu0 0.0
        %2203 = vmatpush2.msra.mxu0 0.0
        %2204 = vmatprep.subr.mxu0 0.0
        %2205 = vmatpush2.msra.mxu0 0.0
        %2206 = vmatprep.subr.mxu0 0.0
        %2207 = vmatpush2.msra.mxu0 0.0
        %2208 = vmatprep.subr.mxu0 0.0
        %2209 = vmatpush2.msra.mxu0 0.0
        %2210 = vmatprep.subr.mxu0 0.0
        %2211 = vmatpush2.msra.mxu0 0.0
        %2212 = vmatprep.subr.mxu0 0.0
        %2213 = vmatpush2.msra.mxu0 0.0
        %2214 = vmatprep.subr.mxu0 0.0
        %2215 = vmatpush2.msra.mxu0 0.0
        %2216 = vmatprep.subr.mxu0 0.0
        %2217 = vmatpush2.msra.mxu0 0.0
        %2218 = vmatprep.subr.mxu0 0.0
        %2219 = vmatpush2.msra.mxu0 0.0
        %2220 = vmatprep.subr.mxu0 0.0
        %2221 = vmatpush2.msra.mxu0 0.0
        %2222 = vmatprep.subr.mxu0 0.0
        %2223 = vmatpush2.msra.mxu0 0.0
        %2224 = vmatprep.subr.mxu0 0.0
        %2225 = vmatpush2.msra.mxu0 0.0
        %2226 = vmatprep.subr.mxu0 0.0
        %2227 = vmatpush2.msra.mxu0 0.0
        %2228 = vmatprep.subr.mxu0 0.0
        %2229 = vmatpush2.msra.mxu0 0.0
        %2230 = vmatprep.subr.mxu0 0.0
        %2231 = vmatpush2.msra.mxu0 0.0
        %2232 = vmatprep.mubr.f32.mxu0 0.0
        %v2233 = vand.u32 %v1635, 4294901760
        %2234 = vmatmul.mubr.f32.gmra.mxu0 %v2233
        %v2235 = vpop.f32.mrf.mxu0
        %v2236 = vadd.f32 %v2109, %v2235
        %v2237 = vpop.f32.mrf.mxu0
        %2238 = vmatprep.mubr.f32.mxu0 0.0
        %v2239 = vand.u32 %v1636, 4294901760
        %2240 = vmatmul.mubr.f32.gmra.mxu0 %v2239
        %v2241 = vpop.f32.mrf.mxu0
        %v2242 = vadd.f32 %v2117, %v2241
        %v2243 = vpop.f32.mrf.mxu0
        %2244 = vdwg.mxu0
        %2245 = vmatprep.subr.mxu0 0.0
        %v2246 = vand.u32 %v1653, 4294901760
        %2247 = vmatpush1.msra.mxu0 %v2246
        %2248 = vmatprep.subr.mxu0 0.0
        %v2249 = vand.u32 %v1652, 4294901760
        %2250 = vmatpush1.msra.mxu0 %v2249
        %2251 = vmatprep.subr.mxu0 0.0
        %v2252 = vand.u32 %v1651, 4294901760
        %2253 = vmatpush1.msra.mxu0 %v2252
        %2254 = vmatprep.subr.mxu0 0.0
        %v2255 = vand.u32 %v1650, 4294901760
        %2256 = vmatpush1.msra.mxu0 %v2255
        %2257 = vmatprep.subr.mxu0 0.0
        %v2258 = vand.u32 %v1649, 4294901760
        %2259 = vmatpush1.msra.mxu0 %v2258
        %2260 = vmatprep.subr.mxu0 0.0
        %v2261 = vand.u32 %v1648, 4294901760
        %2262 = vmatpush1.msra.mxu0 %v2261
        %2263 = vmatprep.subr.mxu0 0.0
        %v2264 = vand.u32 %v1647, 4294901760
        %2265 = vmatpush1.msra.mxu0 %v2264
        %2266 = vmatprep.subr.mxu0 0.0
        %v2267 = vand.u32 %v1646, 4294901760
        %2268 = vmatpush1.msra.mxu0 %v2267
        %2269 = vmatprep.subr.mxu0 0.0
        %v2270 = vand.u32 %v1645, 4294901760
        %2271 = vmatpush1.msra.mxu0 %v2270
        %2272 = vmatprep.subr.mxu0 0.0
        %v2273 = vand.u32 %v1644, 4294901760
        %2274 = vmatpush1.msra.mxu0 %v2273
        %2275 = vmatprep.subr.mxu0 0.0
        %v2276 = vand.u32 %v1643, 4294901760
        %2277 = vmatpush1.msra.mxu0 %v2276
        %2278 = vmatprep.subr.mxu0 0.0
        %v2279 = vand.u32 %v1642, 4294901760
        %2280 = vmatpush1.msra.mxu0 %v2279
        %2281 = vmatprep.subr.mxu0 0.0
        %v2282 = vand.u32 %v1641, 4294901760
        %2283 = vmatpush1.msra.mxu0 %v2282
        %2284 = vmatprep.subr.mxu0 0.0
        %v2285 = vand.u32 %v1640, 4294901760
        %2286 = vmatpush1.msra.mxu0 %v2285
        %2287 = vmatprep.subr.mxu0 0.0
        %v2288 = vand.u32 %v1639, 4294901760
        %2289 = vmatpush1.msra.mxu0 %v2288
        %2290 = vmatprep.subr.mxu0 0.0
        %v2291 = vand.u32 %v1638, 4294901760
        %2292 = vmatpush1.msra.mxu0 %v2291
        %2293 = vmatprep.subr.mxu0 0.0
        %2294 = vmatpush2.msra.mxu0 0.0
        %2295 = vmatprep.subr.mxu0 0.0
        %2296 = vmatpush2.msra.mxu0 0.0
        %2297 = vmatprep.subr.mxu0 0.0
        %2298 = vmatpush2.msra.mxu0 0.0
        %2299 = vmatprep.subr.mxu0 0.0
        %2300 = vmatpush2.msra.mxu0 0.0
        %2301 = vmatprep.subr.mxu0 0.0
        %2302 = vmatpush2.msra.mxu0 0.0
        %2303 = vmatprep.subr.mxu0 0.0
        %2304 = vmatpush2.msra.mxu0 0.0
        %2305 = vmatprep.subr.mxu0 0.0
        %2306 = vmatpush2.msra.mxu0 0.0
        %2307 = vmatprep.subr.mxu0 0.0
        %2308 = vmatpush2.msra.mxu0 0.0
        %2309 = vmatprep.subr.mxu0 0.0
        %2310 = vmatpush2.msra.mxu0 0.0
        %2311 = vmatprep.subr.mxu0 0.0
        %2312 = vmatpush2.msra.mxu0 0.0
        %2313 = vmatprep.subr.mxu0 0.0
        %2314 = vmatpush2.msra.mxu0 0.0
        %2315 = vmatprep.subr.mxu0 0.0
        %2316 = vmatpush2.msra.mxu0 0.0
        %2317 = vmatprep.subr.mxu0 0.0
        %2318 = vmatpush2.msra.mxu0 0.0
        %2319 = vmatprep.subr.mxu0 0.0
        %2320 = vmatpush2.msra.mxu0 0.0
        %2321 = vmatprep.subr.mxu0 0.0
        %2322 = vmatpush2.msra.mxu0 0.0
        %2323 = vmatprep.subr.mxu0 0.0
        %2324 = vmatpush2.msra.mxu0 0.0
        %2325 = vmatprep.mubr.f32.mxu0 0.0
        %v2326 = vand.u32 %v1635, 4294901760
        %2327 = vmatmul.mubr.f32.gmra.mxu0 %v2326
        %v2328 = vpop.f32.mrf.mxu0
        %v2329 = vadd.f32 %v2236, %v2328
        %v2330 = vpop.f32.mrf.mxu0
        %2331 = vmatprep.mubr.f32.mxu0 0.0
        %v2332 = vand.u32 %v1636, 4294901760
        %2333 = vmatmul.mubr.f32.gmra.mxu0 %v2332
        %v2334 = vpop.f32.mrf.mxu0
        %v2335 = vadd.f32 %v2242, %v2334
        %v2336 = vpop.f32.mrf.mxu0
        %2337 = vdwg.mxu0
        %v2338 = vadd.f32 %v1621, %v2329
        %v2339 = vadd.f32 %v1627, %v2335
        %v2340 = vld [vmem:[%s3] sm:$0x1]
        %v2342 = vlaneseq
        %v2343 = vshrl.u32 %v2342, 7
        %v2344 = vsub.s32 0, %v2343
        %v2345 = vrot.slane %v2340, %v2344
        %v2347 = vadd.f32 %v2338, %v2345
        %v2348 = vadd.f32 %v2339, %v2345
        %v2349 = vmax.f32 %v2347, 0.0
        %v2350 = vmax.f32 %v2348, 0.0
        %v2351 = vrot.slane %v2349, 7
        %v2352 = vrot.slane %v2350, 7
        %v2353 = vsel %vm224, %v2351, %v2352
        %v2354 = vsel %vm224, %v2352, %v2351
        %v2355 = vsel %vm216, %v2354, 0.0
        %v2356 = vsel %vm217, %v2353, 0.0
        %v2357 = vld [vmem:[#allocation2] sm:$0xff]
        %v2358 = vld [vmem:[#allocation2 + $0x8] sm:$0xff]
        %v2359 = vld [vmem:[#allocation2 + $0x10] sm:$0xff]
        %v2360 = vld [vmem:[#allocation2 + $0x18] sm:$0xff]
        %v2361 = vld [vmem:[#allocation2 + $0x20] sm:$0xff]
        %v2362 = vld [vmem:[#allocation2 + $0x28] sm:$0xff]
        %v2363 = vld [vmem:[#allocation2 + $0x30] sm:$0xff]
        %v2364 = vld [vmem:[#allocation2 + $0x38] sm:$0xff]
        %v2365 = vld [vmem:[#allocation2 + $0x40] sm:$0xff]
        %v2366 = vld [vmem:[#allocation2 + $0x48] sm:$0xff]
        %v2367 = vld [vmem:[#allocation2 + $0x50] sm:$0xff]
        %v2368 = vld [vmem:[#allocation2 + $0x58] sm:$0xff]
        %v2369 = vld [vmem:[#allocation2 + $0x60] sm:$0xff]
        %v2370 = vld [vmem:[#allocation2 + $0x68] sm:$0xff]
        %v2371 = vld [vmem:[#allocation2 + $0x70] sm:$0xff]
        %v2372 = vld [vmem:[#allocation2 + $0x78] sm:$0xff]
        %s2373 = scalar_lea.vmem [#allocation2], 128
        %v2374 = vld [vmem:[%s2373] sm:$0xff]
        %v2375 = vld [vmem:[%s2373 + $0x8] sm:$0xff]
        %v2376 = vld [vmem:[%s2373 + $0x10] sm:$0xff]
        %v2377 = vld [vmem:[%s2373 + $0x18] sm:$0xff]
        %v2378 = vld [vmem:[%s2373 + $0x20] sm:$0xff]
        %v2379 = vld [vmem:[%s2373 + $0x28] sm:$0xff]
        %v2380 = vld [vmem:[%s2373 + $0x30] sm:$0xff]
        %v2381 = vld [vmem:[%s2373 + $0x38] sm:$0xff]
        %v2382 = vld [vmem:[%s2373 + $0x40] sm:$0xff]
        %v2383 = vld [vmem:[%s2373 + $0x48] sm:$0xff]
        %v2384 = vld [vmem:[%s2373 + $0x50] sm:$0xff]
        %v2385 = vld [vmem:[%s2373 + $0x58] sm:$0xff]
        %v2386 = vld [vmem:[%s2373 + $0x60] sm:$0xff]
        %v2387 = vld [vmem:[%s2373 + $0x68] sm:$0xff]
        %v2388 = vld [vmem:[%s2373 + $0x70] sm:$0xff]
        %v2389 = vld [vmem:[%s2373 + $0x78] sm:$0xff]
        %2390 = vmatprep.subr.mxu0 0.0
        %v2391 = vand.u32 %v2389, 4294901760
        %2392 = vmatpush1.msra.mxu0 %v2391
        %2393 = vmatprep.subr.mxu0 0.0
        %v2394 = vand.u32 %v2388, 4294901760
        %2395 = vmatpush1.msra.mxu0 %v2394
        %2396 = vmatprep.subr.mxu0 0.0
        %v2397 = vand.u32 %v2387, 4294901760
        %2398 = vmatpush1.msra.mxu0 %v2397
        %2399 = vmatprep.subr.mxu0 0.0
        %v2400 = vand.u32 %v2386, 4294901760
        %2401 = vmatpush1.msra.mxu0 %v2400
        %2402 = vmatprep.subr.mxu0 0.0
        %v2403 = vand.u32 %v2385, 4294901760
        %2404 = vmatpush1.msra.mxu0 %v2403
        %2405 = vmatprep.subr.mxu0 0.0
        %v2406 = vand.u32 %v2384, 4294901760
        %2407 = vmatpush1.msra.mxu0 %v2406
        %2408 = vmatprep.subr.mxu0 0.0
        %v2409 = vand.u32 %v2383, 4294901760
        %2410 = vmatpush1.msra.mxu0 %v2409
        %2411 = vmatprep.subr.mxu0 0.0
        %v2412 = vand.u32 %v2382, 4294901760
        %2413 = vmatpush1.msra.mxu0 %v2412
        %2414 = vmatprep.subr.mxu0 0.0
        %v2415 = vand.u32 %v2381, 4294901760
        %2416 = vmatpush1.msra.mxu0 %v2415
        %2417 = vmatprep.subr.mxu0 0.0
        %v2418 = vand.u32 %v2380, 4294901760
        %2419 = vmatpush1.msra.mxu0 %v2418
        %2420 = vmatprep.subr.mxu0 0.0
        %v2421 = vand.u32 %v2379, 4294901760
        %2422 = vmatpush1.msra.mxu0 %v2421
        %2423 = vmatprep.subr.mxu0 0.0
        %v2424 = vand.u32 %v2378, 4294901760
        %2425 = vmatpush1.msra.mxu0 %v2424
        %2426 = vmatprep.subr.mxu0 0.0
        %v2427 = vand.u32 %v2377, 4294901760
        %2428 = vmatpush1.msra.mxu0 %v2427
        %2429 = vmatprep.subr.mxu0 0.0
        %v2430 = vand.u32 %v2376, 4294901760
        %2431 = vmatpush1.msra.mxu0 %v2430
        %2432 = vmatprep.subr.mxu0 0.0
        %v2433 = vand.u32 %v2375, 4294901760
        %2434 = vmatpush1.msra.mxu0 %v2433
        %2435 = vmatprep.subr.mxu0 0.0
        %v2436 = vand.u32 %v2374, 4294901760
        %2437 = vmatpush1.msra.mxu0 %v2436
        %2438 = vmatprep.subr.mxu0 0.0
        %2439 = vmatpush2.msra.mxu0 0.0
        %2440 = vmatprep.subr.mxu0 0.0
        %2441 = vmatpush2.msra.mxu0 0.0
        %2442 = vmatprep.subr.mxu0 0.0
        %2443 = vmatpush2.msra.mxu0 0.0
        %2444 = vmatprep.subr.mxu0 0.0
        %2445 = vmatpush2.msra.mxu0 0.0
        %2446 = vmatprep.subr.mxu0 0.0
        %2447 = vmatpush2.msra.mxu0 0.0
        %2448 = vmatprep.subr.mxu0 0.0
        %2449 = vmatpush2.msra.mxu0 0.0
        %2450 = vmatprep.subr.mxu0 0.0
        %2451 = vmatpush2.msra.mxu0 0.0
        %2452 = vmatprep.subr.mxu0 0.0
        %2453 = vmatpush2.msra.mxu0 0.0
        %2454 = vmatprep.subr.mxu0 0.0
        %2455 = vmatpush2.msra.mxu0 0.0
        %2456 = vmatprep.subr.mxu0 0.0
        %2457 = vmatpush2.msra.mxu0 0.0
        %2458 = vmatprep.subr.mxu0 0.0
        %2459 = vmatpush2.msra.mxu0 0.0
        %2460 = vmatprep.subr.mxu0 0.0
        %2461 = vmatpush2.msra.mxu0 0.0
        %2462 = vmatprep.subr.mxu0 0.0
        %2463 = vmatpush2.msra.mxu0 0.0
        %2464 = vmatprep.subr.mxu0 0.0
        %2465 = vmatpush2.msra.mxu0 0.0
        %2466 = vmatprep.subr.mxu0 0.0
        %2467 = vmatpush2.msra.mxu0 0.0
        %2468 = vmatprep.subr.mxu0 0.0
        %2469 = vmatpush2.msra.mxu0 0.0
        %2470 = vmatprep.mubr.f32.mxu0 0.0
        %v2471 = vand.u32 %v2349, 4294901760
        %v2472 = vsub.f32 %v2349, %v2471
        %v2473 = vand.u32 %v2472, 4294901760
        %v2474 = vsub.f32 %v2472, %v2473
        %v2475 = vand.u32 %v2474, 4294901760
        %2476 = vmatmul.mubr.f32.gmra.mxu0 %v2475
        %v2477 = vpop.f32.mrf.mxu0
        %v2478 = vadd.f32 0.0, %v2477
        %v2479 = vpop.f32.mrf.mxu0
        %2480 = vmatprep.mubr.f32.mxu0 0.0
        %v2481 = vand.u32 %v2350, 4294901760
        %v2482 = vsub.f32 %v2350, %v2481
        %v2483 = vand.u32 %v2482, 4294901760
        %v2484 = vsub.f32 %v2482, %v2483
        %v2485 = vand.u32 %v2484, 4294901760
        %2486 = vmatmul.mubr.f32.gmra.mxu0 %v2485
        %v2487 = vpop.f32.mrf.mxu0
        %v2488 = vadd.f32 0.0, %v2487
        %v2489 = vpop.f32.mrf.mxu0
        %2490 = vdwg.mxu0
        %2491 = vmatprep.subr.mxu0 0.0
        %v2492 = vand.u32 %v2389, 4294901760
        %v2493 = vsub.f32 %v2389, %v2492
        %v2494 = vand.u32 %v2493, 4294901760
        %v2495 = vsub.f32 %v2493, %v2494
        %v2496 = vand.u32 %v2495, 4294901760
        %2497 = vmatpush1.msra.mxu0 %v2496
        %2498 = vmatprep.subr.mxu0 0.0
        %v2499 = vand.u32 %v2388, 4294901760
        %v2500 = vsub.f32 %v2388, %v2499
        %v2501 = vand.u32 %v2500, 4294901760
        %v2502 = vsub.f32 %v2500, %v2501
        %v2503 = vand.u32 %v2502, 4294901760
        %2504 = vmatpush1.msra.mxu0 %v2503
        %2505 = vmatprep.subr.mxu0 0.0
        %v2506 = vand.u32 %v2387, 4294901760
        %v2507 = vsub.f32 %v2387, %v2506
        %v2508 = vand.u32 %v2507, 4294901760
        %v2509 = vsub.f32 %v2507, %v2508
        %v2510 = vand.u32 %v2509, 4294901760
        %2511 = vmatpush1.msra.mxu0 %v2510
        %2512 = vmatprep.subr.mxu0 0.0
        %v2513 = vand.u32 %v2386, 4294901760
        %v2514 = vsub.f32 %v2386, %v2513
        %v2515 = vand.u32 %v2514, 4294901760
        %v2516 = vsub.f32 %v2514, %v2515
        %v2517 = vand.u32 %v2516, 4294901760
        %2518 = vmatpush1.msra.mxu0 %v2517
        %2519 = vmatprep.subr.mxu0 0.0
        %v2520 = vand.u32 %v2385, 4294901760
        %v2521 = vsub.f32 %v2385, %v2520
        %v2522 = vand.u32 %v2521, 4294901760
        %v2523 = vsub.f32 %v2521, %v2522
        %v2524 = vand.u32 %v2523, 4294901760
        %2525 = vmatpush1.msra.mxu0 %v2524
        %2526 = vmatprep.subr.mxu0 0.0
        %v2527 = vand.u32 %v2384, 4294901760
        %v2528 = vsub.f32 %v2384, %v2527
        %v2529 = vand.u32 %v2528, 4294901760
        %v2530 = vsub.f32 %v2528, %v2529
        %v2531 = vand.u32 %v2530, 4294901760
        %2532 = vmatpush1.msra.mxu0 %v2531
        %2533 = vmatprep.subr.mxu0 0.0
        %v2534 = vand.u32 %v2383, 4294901760
        %v2535 = vsub.f32 %v2383, %v2534
        %v2536 = vand.u32 %v2535, 4294901760
        %v2537 = vsub.f32 %v2535, %v2536
        %v2538 = vand.u32 %v2537, 4294901760
        %2539 = vmatpush1.msra.mxu0 %v2538
        %2540 = vmatprep.subr.mxu0 0.0
        %v2541 = vand.u32 %v2382, 4294901760
        %v2542 = vsub.f32 %v2382, %v2541
        %v2543 = vand.u32 %v2542, 4294901760
        %v2544 = vsub.f32 %v2542, %v2543
        %v2545 = vand.u32 %v2544, 4294901760
        %2546 = vmatpush1.msra.mxu0 %v2545
        %2547 = vmatprep.subr.mxu0 0.0
        %v2548 = vand.u32 %v2381, 4294901760
        %v2549 = vsub.f32 %v2381, %v2548
        %v2550 = vand.u32 %v2549, 4294901760
        %v2551 = vsub.f32 %v2549, %v2550
        %v2552 = vand.u32 %v2551, 4294901760
        %2553 = vmatpush1.msra.mxu0 %v2552
        %2554 = vmatprep.subr.mxu0 0.0
        %v2555 = vand.u32 %v2380, 4294901760
        %v2556 = vsub.f32 %v2380, %v2555
        %v2557 = vand.u32 %v2556, 4294901760
        %v2558 = vsub.f32 %v2556, %v2557
        %v2559 = vand.u32 %v2558, 4294901760
        %2560 = vmatpush1.msra.mxu0 %v2559
        %2561 = vmatprep.subr.mxu0 0.0
        %v2562 = vand.u32 %v2379, 4294901760
        %v2563 = vsub.f32 %v2379, %v2562
        %v2564 = vand.u32 %v2563, 4294901760
        %v2565 = vsub.f32 %v2563, %v2564
        %v2566 = vand.u32 %v2565, 4294901760
        %2567 = vmatpush1.msra.mxu0 %v2566
        %2568 = vmatprep.subr.mxu0 0.0
        %v2569 = vand.u32 %v2378, 4294901760
        %v2570 = vsub.f32 %v2378, %v2569
        %v2571 = vand.u32 %v2570, 4294901760
        %v2572 = vsub.f32 %v2570, %v2571
        %v2573 = vand.u32 %v2572, 4294901760
        %2574 = vmatpush1.msra.mxu0 %v2573
        %2575 = vmatprep.subr.mxu0 0.0
        %v2576 = vand.u32 %v2377, 4294901760
        %v2577 = vsub.f32 %v2377, %v2576
        %v2578 = vand.u32 %v2577, 4294901760
        %v2579 = vsub.f32 %v2577, %v2578
        %v2580 = vand.u32 %v2579, 4294901760
        %2581 = vmatpush1.msra.mxu0 %v2580
        %2582 = vmatprep.subr.mxu0 0.0
        %v2583 = vand.u32 %v2376, 4294901760
        %v2584 = vsub.f32 %v2376, %v2583
        %v2585 = vand.u32 %v2584, 4294901760
        %v2586 = vsub.f32 %v2584, %v2585
        %v2587 = vand.u32 %v2586, 4294901760
        %2588 = vmatpush1.msra.mxu0 %v2587
        %2589 = vmatprep.subr.mxu0 0.0
        %v2590 = vand.u32 %v2375, 4294901760
        %v2591 = vsub.f32 %v2375, %v2590
        %v2592 = vand.u32 %v2591, 4294901760
        %v2593 = vsub.f32 %v2591, %v2592
        %v2594 = vand.u32 %v2593, 4294901760
        %2595 = vmatpush1.msra.mxu0 %v2594
        %2596 = vmatprep.subr.mxu0 0.0
        %v2597 = vand.u32 %v2374, 4294901760
        %v2598 = vsub.f32 %v2374, %v2597
        %v2599 = vand.u32 %v2598, 4294901760
        %v2600 = vsub.f32 %v2598, %v2599
        %v2601 = vand.u32 %v2600, 4294901760
        %2602 = vmatpush1.msra.mxu0 %v2601
        %2603 = vmatprep.subr.mxu0 0.0
        %2604 = vmatpush2.msra.mxu0 0.0
        %2605 = vmatprep.subr.mxu0 0.0
        %2606 = vmatpush2.msra.mxu0 0.0
        %2607 = vmatprep.subr.mxu0 0.0
        %2608 = vmatpush2.msra.mxu0 0.0
        %2609 = vmatprep.subr.mxu0 0.0
        %2610 = vmatpush2.msra.mxu0 0.0
        %2611 = vmatprep.subr.mxu0 0.0
        %2612 = vmatpush2.msra.mxu0 0.0
        %2613 = vmatprep.subr.mxu0 0.0
        %2614 = vmatpush2.msra.mxu0 0.0
        %2615 = vmatprep.subr.mxu0 0.0
        %2616 = vmatpush2.msra.mxu0 0.0
        %2617 = vmatprep.subr.mxu0 0.0
        %2618 = vmatpush2.msra.mxu0 0.0
        %2619 = vmatprep.subr.mxu0 0.0
        %2620 = vmatpush2.msra.mxu0 0.0
        %2621 = vmatprep.subr.mxu0 0.0
        %2622 = vmatpush2.msra.mxu0 0.0
        %2623 = vmatprep.subr.mxu0 0.0
        %2624 = vmatpush2.msra.mxu0 0.0
        %2625 = vmatprep.subr.mxu0 0.0
        %2626 = vmatpush2.msra.mxu0 0.0
        %2627 = vmatprep.subr.mxu0 0.0
        %2628 = vmatpush2.msra.mxu0 0.0
        %2629 = vmatprep.subr.mxu0 0.0
        %2630 = vmatpush2.msra.mxu0 0.0
        %2631 = vmatprep.subr.mxu0 0.0
        %2632 = vmatpush2.msra.mxu0 0.0
        %2633 = vmatprep.subr.mxu0 0.0
        %2634 = vmatpush2.msra.mxu0 0.0
        %2635 = vmatprep.mubr.f32.mxu0 0.0
        %v2636 = vand.u32 %v2349, 4294901760
        %2637 = vmatmul.mubr.f32.gmra.mxu0 %v2636
        %v2638 = vpop.f32.mrf.mxu0
        %v2639 = vadd.f32 %v2478, %v2638
        %v2640 = vpop.f32.mrf.mxu0
        %2641 = vmatprep.mubr.f32.mxu0 0.0
        %v2642 = vand.u32 %v2350, 4294901760
        %2643 = vmatmul.mubr.f32.gmra.mxu0 %v2642
        %v2644 = vpop.f32.mrf.mxu0
        %v2645 = vadd.f32 %v2488, %v2644
        %v2646 = vpop.f32.mrf.mxu0
        %2647 = vdwg.mxu0
        %2648 = vmatprep.subr.mxu0 0.0
        %v2649 = vand.u32 %v2389, 4294901760
        %v2650 = vsub.f32 %v2389, %v2649
        %2651 = vmatpush1.msra.mxu0 %v2650
        %2652 = vmatprep.subr.mxu0 0.0
        %v2653 = vand.u32 %v2388, 4294901760
        %v2654 = vsub.f32 %v2388, %v2653
        %2655 = vmatpush1.msra.mxu0 %v2654
        %2656 = vmatprep.subr.mxu0 0.0
        %v2657 = vand.u32 %v2387, 4294901760
        %v2658 = vsub.f32 %v2387, %v2657
        %2659 = vmatpush1.msra.mxu0 %v2658
        %2660 = vmatprep.subr.mxu0 0.0
        %v2661 = vand.u32 %v2386, 4294901760
        %v2662 = vsub.f32 %v2386, %v2661
        %2663 = vmatpush1.msra.mxu0 %v2662
        %2664 = vmatprep.subr.mxu0 0.0
        %v2665 = vand.u32 %v2385, 4294901760
        %v2666 = vsub.f32 %v2385, %v2665
        %2667 = vmatpush1.msra.mxu0 %v2666
        %2668 = vmatprep.subr.mxu0 0.0
        %v2669 = vand.u32 %v2384, 4294901760
        %v2670 = vsub.f32 %v2384, %v2669
        %2671 = vmatpush1.msra.mxu0 %v2670
        %2672 = vmatprep.subr.mxu0 0.0
        %v2673 = vand.u32 %v2383, 4294901760
        %v2674 = vsub.f32 %v2383, %v2673
        %2675 = vmatpush1.msra.mxu0 %v2674
        %2676 = vmatprep.subr.mxu0 0.0
        %v2677 = vand.u32 %v2382, 4294901760
        %v2678 = vsub.f32 %v2382, %v2677
        %2679 = vmatpush1.msra.mxu0 %v2678
        %2680 = vmatprep.subr.mxu0 0.0
        %v2681 = vand.u32 %v2381, 4294901760
        %v2682 = vsub.f32 %v2381, %v2681
        %2683 = vmatpush1.msra.mxu0 %v2682
        %2684 = vmatprep.subr.mxu0 0.0
        %v2685 = vand.u32 %v2380, 4294901760
        %v2686 = vsub.f32 %v2380, %v2685
        %2687 = vmatpush1.msra.mxu0 %v2686
        %2688 = vmatprep.subr.mxu0 0.0
        %v2689 = vand.u32 %v2379, 4294901760
        %v2690 = vsub.f32 %v2379, %v2689
        %2691 = vmatpush1.msra.mxu0 %v2690
        %2692 = vmatprep.subr.mxu0 0.0
        %v2693 = vand.u32 %v2378, 4294901760
        %v2694 = vsub.f32 %v2378, %v2693
        %2695 = vmatpush1.msra.mxu0 %v2694
        %2696 = vmatprep.subr.mxu0 0.0
        %v2697 = vand.u32 %v2377, 4294901760
        %v2698 = vsub.f32 %v2377, %v2697
        %2699 = vmatpush1.msra.mxu0 %v2698
        %2700 = vmatprep.subr.mxu0 0.0
        %v2701 = vand.u32 %v2376, 4294901760
        %v2702 = vsub.f32 %v2376, %v2701
        %2703 = vmatpush1.msra.mxu0 %v2702
        %2704 = vmatprep.subr.mxu0 0.0
        %v2705 = vand.u32 %v2375, 4294901760
        %v2706 = vsub.f32 %v2375, %v2705
        %2707 = vmatpush1.msra.mxu0 %v2706
        %2708 = vmatprep.subr.mxu0 0.0
        %v2709 = vand.u32 %v2374, 4294901760
        %v2710 = vsub.f32 %v2374, %v2709
        %2711 = vmatpush1.msra.mxu0 %v2710
        %2712 = vmatprep.subr.mxu0 0.0
        %2713 = vmatpush2.msra.mxu0 0.0
        %2714 = vmatprep.subr.mxu0 0.0
        %2715 = vmatpush2.msra.mxu0 0.0
        %2716 = vmatprep.subr.mxu0 0.0
        %2717 = vmatpush2.msra.mxu0 0.0
        %2718 = vmatprep.subr.mxu0 0.0
        %2719 = vmatpush2.msra.mxu0 0.0
        %2720 = vmatprep.subr.mxu0 0.0
        %2721 = vmatpush2.msra.mxu0 0.0
        %2722 = vmatprep.subr.mxu0 0.0
        %2723 = vmatpush2.msra.mxu0 0.0
        %2724 = vmatprep.subr.mxu0 0.0
        %2725 = vmatpush2.msra.mxu0 0.0
        %2726 = vmatprep.subr.mxu0 0.0
        %2727 = vmatpush2.msra.mxu0 0.0
        %2728 = vmatprep.subr.mxu0 0.0
        %2729 = vmatpush2.msra.mxu0 0.0
        %2730 = vmatprep.subr.mxu0 0.0
        %2731 = vmatpush2.msra.mxu0 0.0
        %2732 = vmatprep.subr.mxu0 0.0
        %2733 = vmatpush2.msra.mxu0 0.0
        %2734 = vmatprep.subr.mxu0 0.0
        %2735 = vmatpush2.msra.mxu0 0.0
        %2736 = vmatprep.subr.mxu0 0.0
        %2737 = vmatpush2.msra.mxu0 0.0
        %2738 = vmatprep.subr.mxu0 0.0
        %2739 = vmatpush2.msra.mxu0 0.0
        %2740 = vmatprep.subr.mxu0 0.0
        %2741 = vmatpush2.msra.mxu0 0.0
        %2742 = vmatprep.subr.mxu0 0.0
        %2743 = vmatpush2.msra.mxu0 0.0
        %2744 = vmatprep.mubr.f32.mxu0 0.0
        %v2745 = vand.u32 %v2349, 4294901760
        %v2746 = vsub.f32 %v2349, %v2745
        %2747 = vmatmul.mubr.f32.gmra.mxu0 %v2746
        %v2748 = vpop.f32.mrf.mxu0
        %v2749 = vadd.f32 %v2639, %v2748
        %v2750 = vpop.f32.mrf.mxu0
        %2751 = vmatprep.mubr.f32.mxu0 0.0
        %v2752 = vand.u32 %v2350, 4294901760
        %v2753 = vsub.f32 %v2350, %v2752
        %2754 = vmatmul.mubr.f32.gmra.mxu0 %v2753
        %v2755 = vpop.f32.mrf.mxu0
        %v2756 = vadd.f32 %v2645, %v2755
        %v2757 = vpop.f32.mrf.mxu0
        %2758 = vdwg.mxu0
        %2759 = vmatprep.subr.mxu0 0.0
        %v2760 = vand.u32 %v2389, 4294901760
        %2761 = vmatpush1.msra.mxu0 %v2760
        %2762 = vmatprep.subr.mxu0 0.0
        %v2763 = vand.u32 %v2388, 4294901760
        %2764 = vmatpush1.msra.mxu0 %v2763
        %2765 = vmatprep.subr.mxu0 0.0
        %v2766 = vand.u32 %v2387, 4294901760
        %2767 = vmatpush1.msra.mxu0 %v2766
        %2768 = vmatprep.subr.mxu0 0.0
        %v2769 = vand.u32 %v2386, 4294901760
        %2770 = vmatpush1.msra.mxu0 %v2769
        %2771 = vmatprep.subr.mxu0 0.0
        %v2772 = vand.u32 %v2385, 4294901760
        %2773 = vmatpush1.msra.mxu0 %v2772
        %2774 = vmatprep.subr.mxu0 0.0
        %v2775 = vand.u32 %v2384, 4294901760
        %2776 = vmatpush1.msra.mxu0 %v2775
        %2777 = vmatprep.subr.mxu0 0.0
        %v2778 = vand.u32 %v2383, 4294901760
        %2779 = vmatpush1.msra.mxu0 %v2778
        %2780 = vmatprep.subr.mxu0 0.0
        %v2781 = vand.u32 %v2382, 4294901760
        %2782 = vmatpush1.msra.mxu0 %v2781
        %2783 = vmatprep.subr.mxu0 0.0
        %v2784 = vand.u32 %v2381, 4294901760
        %2785 = vmatpush1.msra.mxu0 %v2784
        %2786 = vmatprep.subr.mxu0 0.0
        %v2787 = vand.u32 %v2380, 4294901760
        %2788 = vmatpush1.msra.mxu0 %v2787
        %2789 = vmatprep.subr.mxu0 0.0
        %v2790 = vand.u32 %v2379, 4294901760
        %2791 = vmatpush1.msra.mxu0 %v2790
        %2792 = vmatprep.subr.mxu0 0.0
        %v2793 = vand.u32 %v2378, 4294901760
        %2794 = vmatpush1.msra.mxu0 %v2793
        %2795 = vmatprep.subr.mxu0 0.0
        %v2796 = vand.u32 %v2377, 4294901760
        %2797 = vmatpush1.msra.mxu0 %v2796
        %2798 = vmatprep.subr.mxu0 0.0
        %v2799 = vand.u32 %v2376, 4294901760
        %2800 = vmatpush1.msra.mxu0 %v2799
        %2801 = vmatprep.subr.mxu0 0.0
        %v2802 = vand.u32 %v2375, 4294901760
        %2803 = vmatpush1.msra.mxu0 %v2802
        %2804 = vmatprep.subr.mxu0 0.0
        %v2805 = vand.u32 %v2374, 4294901760
        %2806 = vmatpush1.msra.mxu0 %v2805
        %2807 = vmatprep.subr.mxu0 0.0
        %2808 = vmatpush2.msra.mxu0 0.0
        %2809 = vmatprep.subr.mxu0 0.0
        %2810 = vmatpush2.msra.mxu0 0.0
        %2811 = vmatprep.subr.mxu0 0.0
        %2812 = vmatpush2.msra.mxu0 0.0
        %2813 = vmatprep.subr.mxu0 0.0
        %2814 = vmatpush2.msra.mxu0 0.0
        %2815 = vmatprep.subr.mxu0 0.0
        %2816 = vmatpush2.msra.mxu0 0.0
        %2817 = vmatprep.subr.mxu0 0.0
        %2818 = vmatpush2.msra.mxu0 0.0
        %2819 = vmatprep.subr.mxu0 0.0
        %2820 = vmatpush2.msra.mxu0 0.0
        %2821 = vmatprep.subr.mxu0 0.0
        %2822 = vmatpush2.msra.mxu0 0.0
        %2823 = vmatprep.subr.mxu0 0.0
        %2824 = vmatpush2.msra.mxu0 0.0
        %2825 = vmatprep.subr.mxu0 0.0
        %2826 = vmatpush2.msra.mxu0 0.0
        %2827 = vmatprep.subr.mxu0 0.0
        %2828 = vmatpush2.msra.mxu0 0.0
        %2829 = vmatprep.subr.mxu0 0.0
        %2830 = vmatpush2.msra.mxu0 0.0
        %2831 = vmatprep.subr.mxu0 0.0
        %2832 = vmatpush2.msra.mxu0 0.0
        %2833 = vmatprep.subr.mxu0 0.0
        %2834 = vmatpush2.msra.mxu0 0.0
        %2835 = vmatprep.subr.mxu0 0.0
        %2836 = vmatpush2.msra.mxu0 0.0
        %2837 = vmatprep.subr.mxu0 0.0
        %2838 = vmatpush2.msra.mxu0 0.0
        %2839 = vmatprep.mubr.f32.mxu0 0.0
        %v2840 = vand.u32 %v2349, 4294901760
        %v2841 = vsub.f32 %v2349, %v2840
        %v2842 = vand.u32 %v2841, 4294901760
        %2843 = vmatmul.mubr.f32.gmra.mxu0 %v2842
        %v2844 = vpop.f32.mrf.mxu0
        %v2845 = vadd.f32 %v2749, %v2844
        %v2846 = vpop.f32.mrf.mxu0
        %2847 = vmatprep.mubr.f32.mxu0 0.0
        %v2848 = vand.u32 %v2350, 4294901760
        %v2849 = vsub.f32 %v2350, %v2848
        %v2850 = vand.u32 %v2849, 4294901760
        %2851 = vmatmul.mubr.f32.gmra.mxu0 %v2850
        %v2852 = vpop.f32.mrf.mxu0
        %v2853 = vadd.f32 %v2756, %v2852
        %v2854 = vpop.f32.mrf.mxu0
        %2855 = vdwg.mxu0
        %2856 = vmatprep.subr.mxu0 0.0
        %v2857 = vand.u32 %v2389, 4294901760
        %v2858 = vsub.f32 %v2389, %v2857
        %v2859 = vand.u32 %v2858, 4294901760
        %2860 = vmatpush1.msra.mxu0 %v2859
        %2861 = vmatprep.subr.mxu0 0.0
        %v2862 = vand.u32 %v2388, 4294901760
        %v2863 = vsub.f32 %v2388, %v2862
        %v2864 = vand.u32 %v2863, 4294901760
        %2865 = vmatpush1.msra.mxu0 %v2864
        %2866 = vmatprep.subr.mxu0 0.0
        %v2867 = vand.u32 %v2387, 4294901760
        %v2868 = vsub.f32 %v2387, %v2867
        %v2869 = vand.u32 %v2868, 4294901760
        %2870 = vmatpush1.msra.mxu0 %v2869
        %2871 = vmatprep.subr.mxu0 0.0
        %v2872 = vand.u32 %v2386, 4294901760
        %v2873 = vsub.f32 %v2386, %v2872
        %v2874 = vand.u32 %v2873, 4294901760
        %2875 = vmatpush1.msra.mxu0 %v2874
        %2876 = vmatprep.subr.mxu0 0.0
        %v2877 = vand.u32 %v2385, 4294901760
        %v2878 = vsub.f32 %v2385, %v2877
        %v2879 = vand.u32 %v2878, 4294901760
        %2880 = vmatpush1.msra.mxu0 %v2879
        %2881 = vmatprep.subr.mxu0 0.0
        %v2882 = vand.u32 %v2384, 4294901760
        %v2883 = vsub.f32 %v2384, %v2882
        %v2884 = vand.u32 %v2883, 4294901760
        %2885 = vmatpush1.msra.mxu0 %v2884
        %2886 = vmatprep.subr.mxu0 0.0
        %v2887 = vand.u32 %v2383, 4294901760
        %v2888 = vsub.f32 %v2383, %v2887
        %v2889 = vand.u32 %v2888, 4294901760
        %2890 = vmatpush1.msra.mxu0 %v2889
        %2891 = vmatprep.subr.mxu0 0.0
        %v2892 = vand.u32 %v2382, 4294901760
        %v2893 = vsub.f32 %v2382, %v2892
        %v2894 = vand.u32 %v2893, 4294901760
        %2895 = vmatpush1.msra.mxu0 %v2894
        %2896 = vmatprep.subr.mxu0 0.0
        %v2897 = vand.u32 %v2381, 4294901760
        %v2898 = vsub.f32 %v2381, %v2897
        %v2899 = vand.u32 %v2898, 4294901760
        %2900 = vmatpush1.msra.mxu0 %v2899
        %2901 = vmatprep.subr.mxu0 0.0
        %v2902 = vand.u32 %v2380, 4294901760
        %v2903 = vsub.f32 %v2380, %v2902
        %v2904 = vand.u32 %v2903, 4294901760
        %2905 = vmatpush1.msra.mxu0 %v2904
        %2906 = vmatprep.subr.mxu0 0.0
        %v2907 = vand.u32 %v2379, 4294901760
        %v2908 = vsub.f32 %v2379, %v2907
        %v2909 = vand.u32 %v2908, 4294901760
        %2910 = vmatpush1.msra.mxu0 %v2909
        %2911 = vmatprep.subr.mxu0 0.0
        %v2912 = vand.u32 %v2378, 4294901760
        %v2913 = vsub.f32 %v2378, %v2912
        %v2914 = vand.u32 %v2913, 4294901760
        %2915 = vmatpush1.msra.mxu0 %v2914
        %2916 = vmatprep.subr.mxu0 0.0
        %v2917 = vand.u32 %v2377, 4294901760
        %v2918 = vsub.f32 %v2377, %v2917
        %v2919 = vand.u32 %v2918, 4294901760
        %2920 = vmatpush1.msra.mxu0 %v2919
        %2921 = vmatprep.subr.mxu0 0.0
        %v2922 = vand.u32 %v2376, 4294901760
        %v2923 = vsub.f32 %v2376, %v2922
        %v2924 = vand.u32 %v2923, 4294901760
        %2925 = vmatpush1.msra.mxu0 %v2924
        %2926 = vmatprep.subr.mxu0 0.0
        %v2927 = vand.u32 %v2375, 4294901760
        %v2928 = vsub.f32 %v2375, %v2927
        %v2929 = vand.u32 %v2928, 4294901760
        %2930 = vmatpush1.msra.mxu0 %v2929
        %2931 = vmatprep.subr.mxu0 0.0
        %v2932 = vand.u32 %v2374, 4294901760
        %v2933 = vsub.f32 %v2374, %v2932
        %v2934 = vand.u32 %v2933, 4294901760
        %2935 = vmatpush1.msra.mxu0 %v2934
        %2936 = vmatprep.subr.mxu0 0.0
        %2937 = vmatpush2.msra.mxu0 0.0
        %2938 = vmatprep.subr.mxu0 0.0
        %2939 = vmatpush2.msra.mxu0 0.0
        %2940 = vmatprep.subr.mxu0 0.0
        %2941 = vmatpush2.msra.mxu0 0.0
        %2942 = vmatprep.subr.mxu0 0.0
        %2943 = vmatpush2.msra.mxu0 0.0
        %2944 = vmatprep.subr.mxu0 0.0
        %2945 = vmatpush2.msra.mxu0 0.0
        %2946 = vmatprep.subr.mxu0 0.0
        %2947 = vmatpush2.msra.mxu0 0.0
        %2948 = vmatprep.subr.mxu0 0.0
        %2949 = vmatpush2.msra.mxu0 0.0
        %2950 = vmatprep.subr.mxu0 0.0
        %2951 = vmatpush2.msra.mxu0 0.0
        %2952 = vmatprep.subr.mxu0 0.0
        %2953 = vmatpush2.msra.mxu0 0.0
        %2954 = vmatprep.subr.mxu0 0.0
        %2955 = vmatpush2.msra.mxu0 0.0
        %2956 = vmatprep.subr.mxu0 0.0
        %2957 = vmatpush2.msra.mxu0 0.0
        %2958 = vmatprep.subr.mxu0 0.0
        %2959 = vmatpush2.msra.mxu0 0.0
        %2960 = vmatprep.subr.mxu0 0.0
        %2961 = vmatpush2.msra.mxu0 0.0
        %2962 = vmatprep.subr.mxu0 0.0
        %2963 = vmatpush2.msra.mxu0 0.0
        %2964 = vmatprep.subr.mxu0 0.0
        %2965 = vmatpush2.msra.mxu0 0.0
        %2966 = vmatprep.subr.mxu0 0.0
        %2967 = vmatpush2.msra.mxu0 0.0
        %2968 = vmatprep.mubr.f32.mxu0 0.0
        %v2969 = vand.u32 %v2349, 4294901760
        %2970 = vmatmul.mubr.f32.gmra.mxu0 %v2969
        %v2971 = vpop.f32.mrf.mxu0
        %v2972 = vadd.f32 %v2845, %v2971
        %v2973 = vpop.f32.mrf.mxu0
        %2974 = vmatprep.mubr.f32.mxu0 0.0
        %v2975 = vand.u32 %v2350, 4294901760
        %2976 = vmatmul.mubr.f32.gmra.mxu0 %v2975
        %v2977 = vpop.f32.mrf.mxu0
        %v2978 = vadd.f32 %v2853, %v2977
        %v2979 = vpop.f32.mrf.mxu0
        %2980 = vdwg.mxu0
        %2981 = vmatprep.subr.mxu0 0.0
        %v2982 = vand.u32 %v2389, 4294901760
        %2983 = vmatpush1.msra.mxu0 %v2982
        %2984 = vmatprep.subr.mxu0 0.0
        %v2985 = vand.u32 %v2388, 4294901760
        %2986 = vmatpush1.msra.mxu0 %v2985
        %2987 = vmatprep.subr.mxu0 0.0
        %v2988 = vand.u32 %v2387, 4294901760
        %2989 = vmatpush1.msra.mxu0 %v2988
        %2990 = vmatprep.subr.mxu0 0.0
        %v2991 = vand.u32 %v2386, 4294901760
        %2992 = vmatpush1.msra.mxu0 %v2991
        %2993 = vmatprep.subr.mxu0 0.0
        %v2994 = vand.u32 %v2385, 4294901760
        %2995 = vmatpush1.msra.mxu0 %v2994
        %2996 = vmatprep.subr.mxu0 0.0
        %v2997 = vand.u32 %v2384, 4294901760
        %2998 = vmatpush1.msra.mxu0 %v2997
        %2999 = vmatprep.subr.mxu0 0.0
        %v3000 = vand.u32 %v2383, 4294901760
        %3001 = vmatpush1.msra.mxu0 %v3000
        %3002 = vmatprep.subr.mxu0 0.0
        %v3003 = vand.u32 %v2382, 4294901760
        %3004 = vmatpush1.msra.mxu0 %v3003
        %3005 = vmatprep.subr.mxu0 0.0
        %v3006 = vand.u32 %v2381, 4294901760
        %3007 = vmatpush1.msra.mxu0 %v3006
        %3008 = vmatprep.subr.mxu0 0.0
        %v3009 = vand.u32 %v2380, 4294901760
        %3010 = vmatpush1.msra.mxu0 %v3009
        %3011 = vmatprep.subr.mxu0 0.0
        %v3012 = vand.u32 %v2379, 4294901760
        %3013 = vmatpush1.msra.mxu0 %v3012
        %3014 = vmatprep.subr.mxu0 0.0
        %v3015 = vand.u32 %v2378, 4294901760
        %3016 = vmatpush1.msra.mxu0 %v3015
        %3017 = vmatprep.subr.mxu0 0.0
        %v3018 = vand.u32 %v2377, 4294901760
        %3019 = vmatpush1.msra.mxu0 %v3018
        %3020 = vmatprep.subr.mxu0 0.0
        %v3021 = vand.u32 %v2376, 4294901760
        %3022 = vmatpush1.msra.mxu0 %v3021
        %3023 = vmatprep.subr.mxu0 0.0
        %v3024 = vand.u32 %v2375, 4294901760
        %3025 = vmatpush1.msra.mxu0 %v3024
        %3026 = vmatprep.subr.mxu0 0.0
        %v3027 = vand.u32 %v2374, 4294901760
        %3028 = vmatpush1.msra.mxu0 %v3027
        %3029 = vmatprep.subr.mxu0 0.0
        %3030 = vmatpush2.msra.mxu0 0.0
        %3031 = vmatprep.subr.mxu0 0.0
        %3032 = vmatpush2.msra.mxu0 0.0
        %3033 = vmatprep.subr.mxu0 0.0
        %3034 = vmatpush2.msra.mxu0 0.0
        %3035 = vmatprep.subr.mxu0 0.0
        %3036 = vmatpush2.msra.mxu0 0.0
        %3037 = vmatprep.subr.mxu0 0.0
        %3038 = vmatpush2.msra.mxu0 0.0
        %3039 = vmatprep.subr.mxu0 0.0
        %3040 = vmatpush2.msra.mxu0 0.0
        %3041 = vmatprep.subr.mxu0 0.0
        %3042 = vmatpush2.msra.mxu0 0.0
        %3043 = vmatprep.subr.mxu0 0.0
        %3044 = vmatpush2.msra.mxu0 0.0
        %3045 = vmatprep.subr.mxu0 0.0
        %3046 = vmatpush2.msra.mxu0 0.0
        %3047 = vmatprep.subr.mxu0 0.0
        %3048 = vmatpush2.msra.mxu0 0.0
        %3049 = vmatprep.subr.mxu0 0.0
        %3050 = vmatpush2.msra.mxu0 0.0
        %3051 = vmatprep.subr.mxu0 0.0
        %3052 = vmatpush2.msra.mxu0 0.0
        %3053 = vmatprep.subr.mxu0 0.0
        %3054 = vmatpush2.msra.mxu0 0.0
        %3055 = vmatprep.subr.mxu0 0.0
        %3056 = vmatpush2.msra.mxu0 0.0
        %3057 = vmatprep.subr.mxu0 0.0
        %3058 = vmatpush2.msra.mxu0 0.0
        %3059 = vmatprep.subr.mxu0 0.0
        %3060 = vmatpush2.msra.mxu0 0.0
        %3061 = vmatprep.mubr.f32.mxu0 0.0
        %v3062 = vand.u32 %v2349, 4294901760
        %3063 = vmatmul.mubr.f32.gmra.mxu0 %v3062
        %v3064 = vpop.f32.mrf.mxu0
        %v3065 = vadd.f32 %v2972, %v3064
        %v3066 = vpop.f32.mrf.mxu0
        %3067 = vmatprep.mubr.f32.mxu0 0.0
        %v3068 = vand.u32 %v2350, 4294901760
        %3069 = vmatmul.mubr.f32.gmra.mxu0 %v3068
        %v3070 = vpop.f32.mrf.mxu0
        %v3071 = vadd.f32 %v2978, %v3070
        %v3072 = vpop.f32.mrf.mxu0
        %3073 = vdwg.mxu0
        %3074 = vmatprep.subr.mxu0 0.0
        %v3075 = vand.u32 %v2372, 4294901760
        %3076 = vmatpush1.msra.mxu0 %v3075
        %3077 = vmatprep.subr.mxu0 0.0
        %v3078 = vand.u32 %v2371, 4294901760
        %3079 = vmatpush1.msra.mxu0 %v3078
        %3080 = vmatprep.subr.mxu0 0.0
        %v3081 = vand.u32 %v2370, 4294901760
        %3082 = vmatpush1.msra.mxu0 %v3081
        %3083 = vmatprep.subr.mxu0 0.0
        %v3084 = vand.u32 %v2369, 4294901760
        %3085 = vmatpush1.msra.mxu0 %v3084
        %3086 = vmatprep.subr.mxu0 0.0
        %v3087 = vand.u32 %v2368, 4294901760
        %3088 = vmatpush1.msra.mxu0 %v3087
        %3089 = vmatprep.subr.mxu0 0.0
        %v3090 = vand.u32 %v2367, 4294901760
        %3091 = vmatpush1.msra.mxu0 %v3090
        %3092 = vmatprep.subr.mxu0 0.0
        %v3093 = vand.u32 %v2366, 4294901760
        %3094 = vmatpush1.msra.mxu0 %v3093
        %3095 = vmatprep.subr.mxu0 0.0
        %v3096 = vand.u32 %v2365, 4294901760
        %3097 = vmatpush1.msra.mxu0 %v3096
        %3098 = vmatprep.subr.mxu0 0.0
        %v3099 = vand.u32 %v2364, 4294901760
        %3100 = vmatpush1.msra.mxu0 %v3099
        %3101 = vmatprep.subr.mxu0 0.0
        %v3102 = vand.u32 %v2363, 4294901760
        %3103 = vmatpush1.msra.mxu0 %v3102
        %3104 = vmatprep.subr.mxu0 0.0
        %v3105 = vand.u32 %v2362, 4294901760
        %3106 = vmatpush1.msra.mxu0 %v3105
        %3107 = vmatprep.subr.mxu0 0.0
        %v3108 = vand.u32 %v2361, 4294901760
        %3109 = vmatpush1.msra.mxu0 %v3108
        %3110 = vmatprep.subr.mxu0 0.0
        %v3111 = vand.u32 %v2360, 4294901760
        %3112 = vmatpush1.msra.mxu0 %v3111
        %3113 = vmatprep.subr.mxu0 0.0
        %v3114 = vand.u32 %v2359, 4294901760
        %3115 = vmatpush1.msra.mxu0 %v3114
        %3116 = vmatprep.subr.mxu0 0.0
        %v3117 = vand.u32 %v2358, 4294901760
        %3118 = vmatpush1.msra.mxu0 %v3117
        %3119 = vmatprep.subr.mxu0 0.0
        %v3120 = vand.u32 %v2357, 4294901760
        %3121 = vmatpush1.msra.mxu0 %v3120
        %3122 = vmatprep.subr.mxu0 0.0
        %3123 = vmatpush2.msra.mxu0 0.0
        %3124 = vmatprep.subr.mxu0 0.0
        %3125 = vmatpush2.msra.mxu0 0.0
        %3126 = vmatprep.subr.mxu0 0.0
        %3127 = vmatpush2.msra.mxu0 0.0
        %3128 = vmatprep.subr.mxu0 0.0
        %3129 = vmatpush2.msra.mxu0 0.0
        %3130 = vmatprep.subr.mxu0 0.0
        %3131 = vmatpush2.msra.mxu0 0.0
        %3132 = vmatprep.subr.mxu0 0.0
        %3133 = vmatpush2.msra.mxu0 0.0
        %3134 = vmatprep.subr.mxu0 0.0
        %3135 = vmatpush2.msra.mxu0 0.0
        %3136 = vmatprep.subr.mxu0 0.0
        %3137 = vmatpush2.msra.mxu0 0.0
        %3138 = vmatprep.subr.mxu0 0.0
        %3139 = vmatpush2.msra.mxu0 0.0
        %3140 = vmatprep.subr.mxu0 0.0
        %3141 = vmatpush2.msra.mxu0 0.0
        %3142 = vmatprep.subr.mxu0 0.0
        %3143 = vmatpush2.msra.mxu0 0.0
        %3144 = vmatprep.subr.mxu0 0.0
        %3145 = vmatpush2.msra.mxu0 0.0
        %3146 = vmatprep.subr.mxu0 0.0
        %3147 = vmatpush2.msra.mxu0 0.0
        %3148 = vmatprep.subr.mxu0 0.0
        %3149 = vmatpush2.msra.mxu0 0.0
        %3150 = vmatprep.subr.mxu0 0.0
        %3151 = vmatpush2.msra.mxu0 0.0
        %3152 = vmatprep.subr.mxu0 0.0
        %3153 = vmatpush2.msra.mxu0 0.0
        %3154 = vmatprep.mubr.f32.mxu0 0.0
        %v3155 = vand.u32 %v2355, 4294901760
        %v3156 = vsub.f32 %v2355, %v3155
        %v3157 = vand.u32 %v3156, 4294901760
        %v3158 = vsub.f32 %v3156, %v3157
        %v3159 = vand.u32 %v3158, 4294901760
        %3160 = vmatmul.mubr.f32.gmra.mxu0 %v3159
        %v3161 = vpop.f32.mrf.mxu0
        %v3162 = vadd.f32 %v3065, %v3161
        %v3163 = vpop.f32.mrf.mxu0
        %3164 = vmatprep.mubr.f32.mxu0 0.0
        %v3165 = vand.u32 %v2356, 4294901760
        %v3166 = vsub.f32 %v2356, %v3165
        %v3167 = vand.u32 %v3166, 4294901760
        %v3168 = vsub.f32 %v3166, %v3167
        %v3169 = vand.u32 %v3168, 4294901760
        %3170 = vmatmul.mubr.f32.gmra.mxu0 %v3169
        %v3171 = vpop.f32.mrf.mxu0
        %v3172 = vadd.f32 %v3071, %v3171
        %v3173 = vpop.f32.mrf.mxu0
        %3174 = vdwg.mxu0
        %3175 = vmatprep.subr.mxu0 0.0
        %v3176 = vand.u32 %v2372, 4294901760
        %v3177 = vsub.f32 %v2372, %v3176
        %v3178 = vand.u32 %v3177, 4294901760
        %v3179 = vsub.f32 %v3177, %v3178
        %v3180 = vand.u32 %v3179, 4294901760
        %3181 = vmatpush1.msra.mxu0 %v3180
        %3182 = vmatprep.subr.mxu0 0.0
        %v3183 = vand.u32 %v2371, 4294901760
        %v3184 = vsub.f32 %v2371, %v3183
        %v3185 = vand.u32 %v3184, 4294901760
        %v3186 = vsub.f32 %v3184, %v3185
        %v3187 = vand.u32 %v3186, 4294901760
        %3188 = vmatpush1.msra.mxu0 %v3187
        %3189 = vmatprep.subr.mxu0 0.0
        %v3190 = vand.u32 %v2370, 4294901760
        %v3191 = vsub.f32 %v2370, %v3190
        %v3192 = vand.u32 %v3191, 4294901760
        %v3193 = vsub.f32 %v3191, %v3192
        %v3194 = vand.u32 %v3193, 4294901760
        %3195 = vmatpush1.msra.mxu0 %v3194
        %3196 = vmatprep.subr.mxu0 0.0
        %v3197 = vand.u32 %v2369, 4294901760
        %v3198 = vsub.f32 %v2369, %v3197
        %v3199 = vand.u32 %v3198, 4294901760
        %v3200 = vsub.f32 %v3198, %v3199
        %v3201 = vand.u32 %v3200, 4294901760
        %3202 = vmatpush1.msra.mxu0 %v3201
        %3203 = vmatprep.subr.mxu0 0.0
        %v3204 = vand.u32 %v2368, 4294901760
        %v3205 = vsub.f32 %v2368, %v3204
        %v3206 = vand.u32 %v3205, 4294901760
        %v3207 = vsub.f32 %v3205, %v3206
        %v3208 = vand.u32 %v3207, 4294901760
        %3209 = vmatpush1.msra.mxu0 %v3208
        %3210 = vmatprep.subr.mxu0 0.0
        %v3211 = vand.u32 %v2367, 4294901760
        %v3212 = vsub.f32 %v2367, %v3211
        %v3213 = vand.u32 %v3212, 4294901760
        %v3214 = vsub.f32 %v3212, %v3213
        %v3215 = vand.u32 %v3214, 4294901760
        %3216 = vmatpush1.msra.mxu0 %v3215
        %3217 = vmatprep.subr.mxu0 0.0
        %v3218 = vand.u32 %v2366, 4294901760
        %v3219 = vsub.f32 %v2366, %v3218
        %v3220 = vand.u32 %v3219, 4294901760
        %v3221 = vsub.f32 %v3219, %v3220
        %v3222 = vand.u32 %v3221, 4294901760
        %3223 = vmatpush1.msra.mxu0 %v3222
        %3224 = vmatprep.subr.mxu0 0.0
        %v3225 = vand.u32 %v2365, 4294901760
        %v3226 = vsub.f32 %v2365, %v3225
        %v3227 = vand.u32 %v3226, 4294901760
        %v3228 = vsub.f32 %v3226, %v3227
        %v3229 = vand.u32 %v3228, 4294901760
        %3230 = vmatpush1.msra.mxu0 %v3229
        %3231 = vmatprep.subr.mxu0 0.0
        %v3232 = vand.u32 %v2364, 4294901760
        %v3233 = vsub.f32 %v2364, %v3232
        %v3234 = vand.u32 %v3233, 4294901760
        %v3235 = vsub.f32 %v3233, %v3234
        %v3236 = vand.u32 %v3235, 4294901760
        %3237 = vmatpush1.msra.mxu0 %v3236
        %3238 = vmatprep.subr.mxu0 0.0
        %v3239 = vand.u32 %v2363, 4294901760
        %v3240 = vsub.f32 %v2363, %v3239
        %v3241 = vand.u32 %v3240, 4294901760
        %v3242 = vsub.f32 %v3240, %v3241
        %v3243 = vand.u32 %v3242, 4294901760
        %3244 = vmatpush1.msra.mxu0 %v3243
        %3245 = vmatprep.subr.mxu0 0.0
        %v3246 = vand.u32 %v2362, 4294901760
        %v3247 = vsub.f32 %v2362, %v3246
        %v3248 = vand.u32 %v3247, 4294901760
        %v3249 = vsub.f32 %v3247, %v3248
        %v3250 = vand.u32 %v3249, 4294901760
        %3251 = vmatpush1.msra.mxu0 %v3250
        %3252 = vmatprep.subr.mxu0 0.0
        %v3253 = vand.u32 %v2361, 4294901760
        %v3254 = vsub.f32 %v2361, %v3253
        %v3255 = vand.u32 %v3254, 4294901760
        %v3256 = vsub.f32 %v3254, %v3255
        %v3257 = vand.u32 %v3256, 4294901760
        %3258 = vmatpush1.msra.mxu0 %v3257
        %3259 = vmatprep.subr.mxu0 0.0
        %v3260 = vand.u32 %v2360, 4294901760
        %v3261 = vsub.f32 %v2360, %v3260
        %v3262 = vand.u32 %v3261, 4294901760
        %v3263 = vsub.f32 %v3261, %v3262
        %v3264 = vand.u32 %v3263, 4294901760
        %3265 = vmatpush1.msra.mxu0 %v3264
        %3266 = vmatprep.subr.mxu0 0.0
        %v3267 = vand.u32 %v2359, 4294901760
        %v3268 = vsub.f32 %v2359, %v3267
        %v3269 = vand.u32 %v3268, 4294901760
        %v3270 = vsub.f32 %v3268, %v3269
        %v3271 = vand.u32 %v3270, 4294901760
        %3272 = vmatpush1.msra.mxu0 %v3271
        %3273 = vmatprep.subr.mxu0 0.0
        %v3274 = vand.u32 %v2358, 4294901760
        %v3275 = vsub.f32 %v2358, %v3274
        %v3276 = vand.u32 %v3275, 4294901760
        %v3277 = vsub.f32 %v3275, %v3276
        %v3278 = vand.u32 %v3277, 4294901760
        %3279 = vmatpush1.msra.mxu0 %v3278
        %3280 = vmatprep.subr.mxu0 0.0
        %v3281 = vand.u32 %v2357, 4294901760
        %v3282 = vsub.f32 %v2357, %v3281
        %v3283 = vand.u32 %v3282, 4294901760
        %v3284 = vsub.f32 %v3282, %v3283
        %v3285 = vand.u32 %v3284, 4294901760
        %3286 = vmatpush1.msra.mxu0 %v3285
        %3287 = vmatprep.subr.mxu0 0.0
        %3288 = vmatpush2.msra.mxu0 0.0
        %3289 = vmatprep.subr.mxu0 0.0
        %3290 = vmatpush2.msra.mxu0 0.0
        %3291 = vmatprep.subr.mxu0 0.0
        %3292 = vmatpush2.msra.mxu0 0.0
        %3293 = vmatprep.subr.mxu0 0.0
        %3294 = vmatpush2.msra.mxu0 0.0
        %3295 = vmatprep.subr.mxu0 0.0
        %3296 = vmatpush2.msra.mxu0 0.0
        %3297 = vmatprep.subr.mxu0 0.0
        %3298 = vmatpush2.msra.mxu0 0.0
        %3299 = vmatprep.subr.mxu0 0.0
        %3300 = vmatpush2.msra.mxu0 0.0
        %3301 = vmatprep.subr.mxu0 0.0
        %3302 = vmatpush2.msra.mxu0 0.0
        %3303 = vmatprep.subr.mxu0 0.0
        %3304 = vmatpush2.msra.mxu0 0.0
        %3305 = vmatprep.subr.mxu0 0.0
        %3306 = vmatpush2.msra.mxu0 0.0
        %3307 = vmatprep.subr.mxu0 0.0
        %3308 = vmatpush2.msra.mxu0 0.0
        %3309 = vmatprep.subr.mxu0 0.0
        %3310 = vmatpush2.msra.mxu0 0.0
        %3311 = vmatprep.subr.mxu0 0.0
        %3312 = vmatpush2.msra.mxu0 0.0
        %3313 = vmatprep.subr.mxu0 0.0
        %3314 = vmatpush2.msra.mxu0 0.0
        %3315 = vmatprep.subr.mxu0 0.0
        %3316 = vmatpush2.msra.mxu0 0.0
        %3317 = vmatprep.subr.mxu0 0.0
        %3318 = vmatpush2.msra.mxu0 0.0
        %3319 = vmatprep.mubr.f32.mxu0 0.0
        %v3320 = vand.u32 %v2355, 4294901760
        %3321 = vmatmul.mubr.f32.gmra.mxu0 %v3320
        %v3322 = vpop.f32.mrf.mxu0
        %v3323 = vadd.f32 %v3162, %v3322
        %v3324 = vpop.f32.mrf.mxu0
        %3325 = vmatprep.mubr.f32.mxu0 0.0
        %v3326 = vand.u32 %v2356, 4294901760
        %3327 = vmatmul.mubr.f32.gmra.mxu0 %v3326
        %v3328 = vpop.f32.mrf.mxu0
        %v3329 = vadd.f32 %v3172, %v3328
        %v3330 = vpop.f32.mrf.mxu0
        %3331 = vdwg.mxu0
        %3332 = vmatprep.subr.mxu0 0.0
        %v3333 = vand.u32 %v2372, 4294901760
        %v3334 = vsub.f32 %v2372, %v3333
        %3335 = vmatpush1.msra.mxu0 %v3334
        %3336 = vmatprep.subr.mxu0 0.0
        %v3337 = vand.u32 %v2371, 4294901760
        %v3338 = vsub.f32 %v2371, %v3337
        %3339 = vmatpush1.msra.mxu0 %v3338
        %3340 = vmatprep.subr.mxu0 0.0
        %v3341 = vand.u32 %v2370, 4294901760
        %v3342 = vsub.f32 %v2370, %v3341
        %3343 = vmatpush1.msra.mxu0 %v3342
        %3344 = vmatprep.subr.mxu0 0.0
        %v3345 = vand.u32 %v2369, 4294901760
        %v3346 = vsub.f32 %v2369, %v3345
        %3347 = vmatpush1.msra.mxu0 %v3346
        %3348 = vmatprep.subr.mxu0 0.0
        %v3349 = vand.u32 %v2368, 4294901760
        %v3350 = vsub.f32 %v2368, %v3349
        %3351 = vmatpush1.msra.mxu0 %v3350
        %3352 = vmatprep.subr.mxu0 0.0
        %v3353 = vand.u32 %v2367, 4294901760
        %v3354 = vsub.f32 %v2367, %v3353
        %3355 = vmatpush1.msra.mxu0 %v3354
        %3356 = vmatprep.subr.mxu0 0.0
        %v3357 = vand.u32 %v2366, 4294901760
        %v3358 = vsub.f32 %v2366, %v3357
        %3359 = vmatpush1.msra.mxu0 %v3358
        %3360 = vmatprep.subr.mxu0 0.0
        %v3361 = vand.u32 %v2365, 4294901760
        %v3362 = vsub.f32 %v2365, %v3361
        %3363 = vmatpush1.msra.mxu0 %v3362
        %3364 = vmatprep.subr.mxu0 0.0
        %v3365 = vand.u32 %v2364, 4294901760
        %v3366 = vsub.f32 %v2364, %v3365
        %3367 = vmatpush1.msra.mxu0 %v3366
        %3368 = vmatprep.subr.mxu0 0.0
        %v3369 = vand.u32 %v2363, 4294901760
        %v3370 = vsub.f32 %v2363, %v3369
        %3371 = vmatpush1.msra.mxu0 %v3370
        %3372 = vmatprep.subr.mxu0 0.0
        %v3373 = vand.u32 %v2362, 4294901760
        %v3374 = vsub.f32 %v2362, %v3373
        %3375 = vmatpush1.msra.mxu0 %v3374
        %3376 = vmatprep.subr.mxu0 0.0
        %v3377 = vand.u32 %v2361, 4294901760
        %v3378 = vsub.f32 %v2361, %v3377
        %3379 = vmatpush1.msra.mxu0 %v3378
        %3380 = vmatprep.subr.mxu0 0.0
        %v3381 = vand.u32 %v2360, 4294901760
        %v3382 = vsub.f32 %v2360, %v3381
        %3383 = vmatpush1.msra.mxu0 %v3382
        %3384 = vmatprep.subr.mxu0 0.0
        %v3385 = vand.u32 %v2359, 4294901760
        %v3386 = vsub.f32 %v2359, %v3385
        %3387 = vmatpush1.msra.mxu0 %v3386
        %3388 = vmatprep.subr.mxu0 0.0
        %v3389 = vand.u32 %v2358, 4294901760
        %v3390 = vsub.f32 %v2358, %v3389
        %3391 = vmatpush1.msra.mxu0 %v3390
        %3392 = vmatprep.subr.mxu0 0.0
        %v3393 = vand.u32 %v2357, 4294901760
        %v3394 = vsub.f32 %v2357, %v3393
        %3395 = vmatpush1.msra.mxu0 %v3394
        %3396 = vmatprep.subr.mxu0 0.0
        %3397 = vmatpush2.msra.mxu0 0.0
        %3398 = vmatprep.subr.mxu0 0.0
        %3399 = vmatpush2.msra.mxu0 0.0
        %3400 = vmatprep.subr.mxu0 0.0
        %3401 = vmatpush2.msra.mxu0 0.0
        %3402 = vmatprep.subr.mxu0 0.0
        %3403 = vmatpush2.msra.mxu0 0.0
        %3404 = vmatprep.subr.mxu0 0.0
        %3405 = vmatpush2.msra.mxu0 0.0
        %3406 = vmatprep.subr.mxu0 0.0
        %3407 = vmatpush2.msra.mxu0 0.0
        %3408 = vmatprep.subr.mxu0 0.0
        %3409 = vmatpush2.msra.mxu0 0.0
        %3410 = vmatprep.subr.mxu0 0.0
        %3411 = vmatpush2.msra.mxu0 0.0
        %3412 = vmatprep.subr.mxu0 0.0
        %3413 = vmatpush2.msra.mxu0 0.0
        %3414 = vmatprep.subr.mxu0 0.0
        %3415 = vmatpush2.msra.mxu0 0.0
        %3416 = vmatprep.subr.mxu0 0.0
        %3417 = vmatpush2.msra.mxu0 0.0
        %3418 = vmatprep.subr.mxu0 0.0
        %3419 = vmatpush2.msra.mxu0 0.0
        %3420 = vmatprep.subr.mxu0 0.0
        %3421 = vmatpush2.msra.mxu0 0.0
        %3422 = vmatprep.subr.mxu0 0.0
        %3423 = vmatpush2.msra.mxu0 0.0
        %3424 = vmatprep.subr.mxu0 0.0
        %3425 = vmatpush2.msra.mxu0 0.0
        %3426 = vmatprep.subr.mxu0 0.0
        %3427 = vmatpush2.msra.mxu0 0.0
        %3428 = vmatprep.mubr.f32.mxu0 0.0
        %v3429 = vand.u32 %v2355, 4294901760
        %v3430 = vsub.f32 %v2355, %v3429
        %3431 = vmatmul.mubr.f32.gmra.mxu0 %v3430
        %v3432 = vpop.f32.mrf.mxu0
        %v3433 = vadd.f32 %v3323, %v3432
        %v3434 = vpop.f32.mrf.mxu0
        %3435 = vmatprep.mubr.f32.mxu0 0.0
        %v3436 = vand.u32 %v2356, 4294901760
        %v3437 = vsub.f32 %v2356, %v3436
        %3438 = vmatmul.mubr.f32.gmra.mxu0 %v3437
        %v3439 = vpop.f32.mrf.mxu0
        %v3440 = vadd.f32 %v3329, %v3439
        %v3441 = vpop.f32.mrf.mxu0
        %3442 = vdwg.mxu0
        %3443 = vmatprep.subr.mxu0 0.0
        %v3444 = vand.u32 %v2372, 4294901760
        %3445 = vmatpush1.msra.mxu0 %v3444
        %3446 = vmatprep.subr.mxu0 0.0
        %v3447 = vand.u32 %v2371, 4294901760
        %3448 = vmatpush1.msra.mxu0 %v3447
        %3449 = vmatprep.subr.mxu0 0.0
        %v3450 = vand.u32 %v2370, 4294901760
        %3451 = vmatpush1.msra.mxu0 %v3450
        %3452 = vmatprep.subr.mxu0 0.0
        %v3453 = vand.u32 %v2369, 4294901760
        %3454 = vmatpush1.msra.mxu0 %v3453
        %3455 = vmatprep.subr.mxu0 0.0
        %v3456 = vand.u32 %v2368, 4294901760
        %3457 = vmatpush1.msra.mxu0 %v3456
        %3458 = vmatprep.subr.mxu0 0.0
        %v3459 = vand.u32 %v2367, 4294901760
        %3460 = vmatpush1.msra.mxu0 %v3459
        %3461 = vmatprep.subr.mxu0 0.0
        %v3462 = vand.u32 %v2366, 4294901760
        %3463 = vmatpush1.msra.mxu0 %v3462
        %3464 = vmatprep.subr.mxu0 0.0
        %v3465 = vand.u32 %v2365, 4294901760
        %3466 = vmatpush1.msra.mxu0 %v3465
        %3467 = vmatprep.subr.mxu0 0.0
        %v3468 = vand.u32 %v2364, 4294901760
        %3469 = vmatpush1.msra.mxu0 %v3468
        %3470 = vmatprep.subr.mxu0 0.0
        %v3471 = vand.u32 %v2363, 4294901760
        %3472 = vmatpush1.msra.mxu0 %v3471
        %3473 = vmatprep.subr.mxu0 0.0
        %v3474 = vand.u32 %v2362, 4294901760
        %3475 = vmatpush1.msra.mxu0 %v3474
        %3476 = vmatprep.subr.mxu0 0.0
        %v3477 = vand.u32 %v2361, 4294901760
        %3478 = vmatpush1.msra.mxu0 %v3477
        %3479 = vmatprep.subr.mxu0 0.0
        %v3480 = vand.u32 %v2360, 4294901760
        %3481 = vmatpush1.msra.mxu0 %v3480
        %3482 = vmatprep.subr.mxu0 0.0
        %v3483 = vand.u32 %v2359, 4294901760
        %3484 = vmatpush1.msra.mxu0 %v3483
        %3485 = vmatprep.subr.mxu0 0.0
        %v3486 = vand.u32 %v2358, 4294901760
        %3487 = vmatpush1.msra.mxu0 %v3486
        %3488 = vmatprep.subr.mxu0 0.0
        %v3489 = vand.u32 %v2357, 4294901760
        %3490 = vmatpush1.msra.mxu0 %v3489
        %3491 = vmatprep.subr.mxu0 0.0
        %3492 = vmatpush2.msra.mxu0 0.0
        %3493 = vmatprep.subr.mxu0 0.0
        %3494 = vmatpush2.msra.mxu0 0.0
        %3495 = vmatprep.subr.mxu0 0.0
        %3496 = vmatpush2.msra.mxu0 0.0
        %3497 = vmatprep.subr.mxu0 0.0
        %3498 = vmatpush2.msra.mxu0 0.0
        %3499 = vmatprep.subr.mxu0 0.0
        %3500 = vmatpush2.msra.mxu0 0.0
        %3501 = vmatprep.subr.mxu0 0.0
        %3502 = vmatpush2.msra.mxu0 0.0
        %3503 = vmatprep.subr.mxu0 0.0
        %3504 = vmatpush2.msra.mxu0 0.0
        %3505 = vmatprep.subr.mxu0 0.0
        %3506 = vmatpush2.msra.mxu0 0.0
        %3507 = vmatprep.subr.mxu0 0.0
        %3508 = vmatpush2.msra.mxu0 0.0
        %3509 = vmatprep.subr.mxu0 0.0
        %3510 = vmatpush2.msra.mxu0 0.0
        %3511 = vmatprep.subr.mxu0 0.0
        %3512 = vmatpush2.msra.mxu0 0.0
        %3513 = vmatprep.subr.mxu0 0.0
        %3514 = vmatpush2.msra.mxu0 0.0
        %3515 = vmatprep.subr.mxu0 0.0
        %3516 = vmatpush2.msra.mxu0 0.0
        %3517 = vmatprep.subr.mxu0 0.0
        %3518 = vmatpush2.msra.mxu0 0.0
        %3519 = vmatprep.subr.mxu0 0.0
        %3520 = vmatpush2.msra.mxu0 0.0
        %3521 = vmatprep.subr.mxu0 0.0
        %3522 = vmatpush2.msra.mxu0 0.0
        %3523 = vmatprep.mubr.f32.mxu0 0.0
        %v3524 = vand.u32 %v2355, 4294901760
        %v3525 = vsub.f32 %v2355, %v3524
        %v3526 = vand.u32 %v3525, 4294901760
        %3527 = vmatmul.mubr.f32.gmra.mxu0 %v3526
        %v3528 = vpop.f32.mrf.mxu0
        %v3529 = vadd.f32 %v3433, %v3528
        %v3530 = vpop.f32.mrf.mxu0
        %3531 = vmatprep.mubr.f32.mxu0 0.0
        %v3532 = vand.u32 %v2356, 4294901760
        %v3533 = vsub.f32 %v2356, %v3532
        %v3534 = vand.u32 %v3533, 4294901760
        %3535 = vmatmul.mubr.f32.gmra.mxu0 %v3534
        %v3536 = vpop.f32.mrf.mxu0
        %v3537 = vadd.f32 %v3440, %v3536
        %v3538 = vpop.f32.mrf.mxu0
        %3539 = vdwg.mxu0
        %3540 = vmatprep.subr.mxu0 0.0
        %v3541 = vand.u32 %v2372, 4294901760
        %v3542 = vsub.f32 %v2372, %v3541
        %v3543 = vand.u32 %v3542, 4294901760
        %3544 = vmatpush1.msra.mxu0 %v3543
        %3545 = vmatprep.subr.mxu0 0.0
        %v3546 = vand.u32 %v2371, 4294901760
        %v3547 = vsub.f32 %v2371, %v3546
        %v3548 = vand.u32 %v3547, 4294901760
        %3549 = vmatpush1.msra.mxu0 %v3548
        %3550 = vmatprep.subr.mxu0 0.0
        %v3551 = vand.u32 %v2370, 4294901760
        %v3552 = vsub.f32 %v2370, %v3551
        %v3553 = vand.u32 %v3552, 4294901760
        %3554 = vmatpush1.msra.mxu0 %v3553
        %3555 = vmatprep.subr.mxu0 0.0
        %v3556 = vand.u32 %v2369, 4294901760
        %v3557 = vsub.f32 %v2369, %v3556
        %v3558 = vand.u32 %v3557, 4294901760
        %3559 = vmatpush1.msra.mxu0 %v3558
        %3560 = vmatprep.subr.mxu0 0.0
        %v3561 = vand.u32 %v2368, 4294901760
        %v3562 = vsub.f32 %v2368, %v3561
        %v3563 = vand.u32 %v3562, 4294901760
        %3564 = vmatpush1.msra.mxu0 %v3563
        %3565 = vmatprep.subr.mxu0 0.0
        %v3566 = vand.u32 %v2367, 4294901760
        %v3567 = vsub.f32 %v2367, %v3566
        %v3568 = vand.u32 %v3567, 4294901760
        %3569 = vmatpush1.msra.mxu0 %v3568
        %3570 = vmatprep.subr.mxu0 0.0
        %v3571 = vand.u32 %v2366, 4294901760
        %v3572 = vsub.f32 %v2366, %v3571
        %v3573 = vand.u32 %v3572, 4294901760
        %3574 = vmatpush1.msra.mxu0 %v3573
        %3575 = vmatprep.subr.mxu0 0.0
        %v3576 = vand.u32 %v2365, 4294901760
        %v3577 = vsub.f32 %v2365, %v3576
        %v3578 = vand.u32 %v3577, 4294901760
        %3579 = vmatpush1.msra.mxu0 %v3578
        %3580 = vmatprep.subr.mxu0 0.0
        %v3581 = vand.u32 %v2364, 4294901760
        %v3582 = vsub.f32 %v2364, %v3581
        %v3583 = vand.u32 %v3582, 4294901760
        %3584 = vmatpush1.msra.mxu0 %v3583
        %3585 = vmatprep.subr.mxu0 0.0
        %v3586 = vand.u32 %v2363, 4294901760
        %v3587 = vsub.f32 %v2363, %v3586
        %v3588 = vand.u32 %v3587, 4294901760
        %3589 = vmatpush1.msra.mxu0 %v3588
        %3590 = vmatprep.subr.mxu0 0.0
        %v3591 = vand.u32 %v2362, 4294901760
        %v3592 = vsub.f32 %v2362, %v3591
        %v3593 = vand.u32 %v3592, 4294901760
        %3594 = vmatpush1.msra.mxu0 %v3593
        %3595 = vmatprep.subr.mxu0 0.0
        %v3596 = vand.u32 %v2361, 4294901760
        %v3597 = vsub.f32 %v2361, %v3596
        %v3598 = vand.u32 %v3597, 4294901760
        %3599 = vmatpush1.msra.mxu0 %v3598
        %3600 = vmatprep.subr.mxu0 0.0
        %v3601 = vand.u32 %v2360, 4294901760
        %v3602 = vsub.f32 %v2360, %v3601
        %v3603 = vand.u32 %v3602, 4294901760
        %3604 = vmatpush1.msra.mxu0 %v3603
        %3605 = vmatprep.subr.mxu0 0.0
        %v3606 = vand.u32 %v2359, 4294901760
        %v3607 = vsub.f32 %v2359, %v3606
        %v3608 = vand.u32 %v3607, 4294901760
        %3609 = vmatpush1.msra.mxu0 %v3608
        %3610 = vmatprep.subr.mxu0 0.0
        %v3611 = vand.u32 %v2358, 4294901760
        %v3612 = vsub.f32 %v2358, %v3611
        %v3613 = vand.u32 %v3612, 4294901760
        %3614 = vmatpush1.msra.mxu0 %v3613
        %3615 = vmatprep.subr.mxu0 0.0
        %v3616 = vand.u32 %v2357, 4294901760
        %v3617 = vsub.f32 %v2357, %v3616
        %v3618 = vand.u32 %v3617, 4294901760
        %3619 = vmatpush1.msra.mxu0 %v3618
        %3620 = vmatprep.subr.mxu0 0.0
        %3621 = vmatpush2.msra.mxu0 0.0
        %3622 = vmatprep.subr.mxu0 0.0
        %3623 = vmatpush2.msra.mxu0 0.0
        %3624 = vmatprep.subr.mxu0 0.0
        %3625 = vmatpush2.msra.mxu0 0.0
        %3626 = vmatprep.subr.mxu0 0.0
        %3627 = vmatpush2.msra.mxu0 0.0
        %3628 = vmatprep.subr.mxu0 0.0
        %3629 = vmatpush2.msra.mxu0 0.0
        %3630 = vmatprep.subr.mxu0 0.0
        %3631 = vmatpush2.msra.mxu0 0.0
        %3632 = vmatprep.subr.mxu0 0.0
        %3633 = vmatpush2.msra.mxu0 0.0
        %3634 = vmatprep.subr.mxu0 0.0
        %3635 = vmatpush2.msra.mxu0 0.0
        %3636 = vmatprep.subr.mxu0 0.0
        %3637 = vmatpush2.msra.mxu0 0.0
        %3638 = vmatprep.subr.mxu0 0.0
        %3639 = vmatpush2.msra.mxu0 0.0
        %3640 = vmatprep.subr.mxu0 0.0
        %3641 = vmatpush2.msra.mxu0 0.0
        %3642 = vmatprep.subr.mxu0 0.0
        %3643 = vmatpush2.msra.mxu0 0.0
        %3644 = vmatprep.subr.mxu0 0.0
        %3645 = vmatpush2.msra.mxu0 0.0
        %3646 = vmatprep.subr.mxu0 0.0
        %3647 = vmatpush2.msra.mxu0 0.0
        %3648 = vmatprep.subr.mxu0 0.0
        %3649 = vmatpush2.msra.mxu0 0.0
        %3650 = vmatprep.subr.mxu0 0.0
        %3651 = vmatpush2.msra.mxu0 0.0
        %3652 = vmatprep.mubr.f32.mxu0 0.0
        %v3653 = vand.u32 %v2355, 4294901760
        %3654 = vmatmul.mubr.f32.gmra.mxu0 %v3653
        %v3655 = vpop.f32.mrf.mxu0
        %v3656 = vadd.f32 %v3529, %v3655
        %v3657 = vpop.f32.mrf.mxu0
        %3658 = vmatprep.mubr.f32.mxu0 0.0
        %v3659 = vand.u32 %v2356, 4294901760
        %3660 = vmatmul.mubr.f32.gmra.mxu0 %v3659
        %v3661 = vpop.f32.mrf.mxu0
        %v3662 = vadd.f32 %v3537, %v3661
        %v3663 = vpop.f32.mrf.mxu0
        %3664 = vdwg.mxu0
        %3665 = vmatprep.subr.mxu0 0.0
        %v3666 = vand.u32 %v2372, 4294901760
        %3667 = vmatpush1.msra.mxu0 %v3666
        %3668 = vmatprep.subr.mxu0 0.0
        %v3669 = vand.u32 %v2371, 4294901760
        %3670 = vmatpush1.msra.mxu0 %v3669
        %3671 = vmatprep.subr.mxu0 0.0
        %v3672 = vand.u32 %v2370, 4294901760
        %3673 = vmatpush1.msra.mxu0 %v3672
        %3674 = vmatprep.subr.mxu0 0.0
        %v3675 = vand.u32 %v2369, 4294901760
        %3676 = vmatpush1.msra.mxu0 %v3675
        %3677 = vmatprep.subr.mxu0 0.0
        %v3678 = vand.u32 %v2368, 4294901760
        %3679 = vmatpush1.msra.mxu0 %v3678
        %3680 = vmatprep.subr.mxu0 0.0
        %v3681 = vand.u32 %v2367, 4294901760
        %3682 = vmatpush1.msra.mxu0 %v3681
        %3683 = vmatprep.subr.mxu0 0.0
        %v3684 = vand.u32 %v2366, 4294901760
        %3685 = vmatpush1.msra.mxu0 %v3684
        %3686 = vmatprep.subr.mxu0 0.0
        %v3687 = vand.u32 %v2365, 4294901760
        %3688 = vmatpush1.msra.mxu0 %v3687
        %3689 = vmatprep.subr.mxu0 0.0
        %v3690 = vand.u32 %v2364, 4294901760
        %3691 = vmatpush1.msra.mxu0 %v3690
        %3692 = vmatprep.subr.mxu0 0.0
        %v3693 = vand.u32 %v2363, 4294901760
        %3694 = vmatpush1.msra.mxu0 %v3693
        %3695 = vmatprep.subr.mxu0 0.0
        %v3696 = vand.u32 %v2362, 4294901760
        %3697 = vmatpush1.msra.mxu0 %v3696
        %3698 = vmatprep.subr.mxu0 0.0
        %v3699 = vand.u32 %v2361, 4294901760
        %3700 = vmatpush1.msra.mxu0 %v3699
        %3701 = vmatprep.subr.mxu0 0.0
        %v3702 = vand.u32 %v2360, 4294901760
        %3703 = vmatpush1.msra.mxu0 %v3702
        %3704 = vmatprep.subr.mxu0 0.0
        %v3705 = vand.u32 %v2359, 4294901760
        %3706 = vmatpush1.msra.mxu0 %v3705
        %3707 = vmatprep.subr.mxu0 0.0
        %v3708 = vand.u32 %v2358, 4294901760
        %3709 = vmatpush1.msra.mxu0 %v3708
        %3710 = vmatprep.subr.mxu0 0.0
        %v3711 = vand.u32 %v2357, 4294901760
        %3712 = vmatpush1.msra.mxu0 %v3711
        %3713 = vmatprep.subr.mxu0 0.0
        %3714 = vmatpush2.msra.mxu0 0.0
        %3715 = vmatprep.subr.mxu0 0.0
        %3716 = vmatpush2.msra.mxu0 0.0
        %3717 = vmatprep.subr.mxu0 0.0
        %3718 = vmatpush2.msra.mxu0 0.0
        %3719 = vmatprep.subr.mxu0 0.0
        %3720 = vmatpush2.msra.mxu0 0.0
        %3721 = vmatprep.subr.mxu0 0.0
        %3722 = vmatpush2.msra.mxu0 0.0
        %3723 = vmatprep.subr.mxu0 0.0
        %3724 = vmatpush2.msra.mxu0 0.0
        %3725 = vmatprep.subr.mxu0 0.0
        %3726 = vmatpush2.msra.mxu0 0.0
        %3727 = vmatprep.subr.mxu0 0.0
        %3728 = vmatpush2.msra.mxu0 0.0
        %3729 = vmatprep.subr.mxu0 0.0
        %3730 = vmatpush2.msra.mxu0 0.0
        %3731 = vmatprep.subr.mxu0 0.0
        %3732 = vmatpush2.msra.mxu0 0.0
        %3733 = vmatprep.subr.mxu0 0.0
        %3734 = vmatpush2.msra.mxu0 0.0
        %3735 = vmatprep.subr.mxu0 0.0
        %3736 = vmatpush2.msra.mxu0 0.0
        %3737 = vmatprep.subr.mxu0 0.0
        %3738 = vmatpush2.msra.mxu0 0.0
        %3739 = vmatprep.subr.mxu0 0.0
        %3740 = vmatpush2.msra.mxu0 0.0
        %3741 = vmatprep.subr.mxu0 0.0
        %3742 = vmatpush2.msra.mxu0 0.0
        %3743 = vmatprep.subr.mxu0 0.0
        %3744 = vmatpush2.msra.mxu0 0.0
        %3745 = vmatprep.mubr.f32.mxu0 0.0
        %v3746 = vand.u32 %v2355, 4294901760
        %3747 = vmatmul.mubr.f32.gmra.mxu0 %v3746
        %v3748 = vpop.f32.mrf.mxu0
        %v3749 = vadd.f32 %v3656, %v3748
        %v3750 = vpop.f32.mrf.mxu0
        %3751 = vmatprep.mubr.f32.mxu0 0.0
        %v3752 = vand.u32 %v2356, 4294901760
        %3753 = vmatmul.mubr.f32.gmra.mxu0 %v3752
        %v3754 = vpop.f32.mrf.mxu0
        %v3755 = vadd.f32 %v3662, %v3754
        %v3756 = vpop.f32.mrf.mxu0
        %3757 = vdwg.mxu0
        %v3758 = vrot.slane %v2349, 1
        %v3759 = vrot.slane %v2350, 1
        %v3760 = vsel %vm1632, %v3758, %v3759
        %v3761 = vsel %vm1632, %v3759, %v3758
        %v3762 = vsel %vm218, %v3760, 0.0
        %v3763 = vsel %vm219, %v3761, 0.0
        %s3764 = scalar_lea.vmem [#allocation2], 256
        %v3765 = vld [vmem:[%s3764] sm:$0xff]
        %v3766 = vld [vmem:[%s3764 + $0x8] sm:$0xff]
        %v3767 = vld [vmem:[%s3764 + $0x10] sm:$0xff]
        %v3768 = vld [vmem:[%s3764 + $0x18] sm:$0xff]
        %v3769 = vld [vmem:[%s3764 + $0x20] sm:$0xff]
        %v3770 = vld [vmem:[%s3764 + $0x28] sm:$0xff]
        %v3771 = vld [vmem:[%s3764 + $0x30] sm:$0xff]
        %v3772 = vld [vmem:[%s3764 + $0x38] sm:$0xff]
        %v3773 = vld [vmem:[%s3764 + $0x40] sm:$0xff]
        %v3774 = vld [vmem:[%s3764 + $0x48] sm:$0xff]
        %v3775 = vld [vmem:[%s3764 + $0x50] sm:$0xff]
        %v3776 = vld [vmem:[%s3764 + $0x58] sm:$0xff]
        %v3777 = vld [vmem:[%s3764 + $0x60] sm:$0xff]
        %v3778 = vld [vmem:[%s3764 + $0x68] sm:$0xff]
        %v3779 = vld [vmem:[%s3764 + $0x70] sm:$0xff]
        %v3780 = vld [vmem:[%s3764 + $0x78] sm:$0xff]
        %3781 = vmatprep.subr.mxu0 0.0
        %v3782 = vand.u32 %v3780, 4294901760
        %3783 = vmatpush1.msra.mxu0 %v3782
        %3784 = vmatprep.subr.mxu0 0.0
        %v3785 = vand.u32 %v3779, 4294901760
        %3786 = vmatpush1.msra.mxu0 %v3785
        %3787 = vmatprep.subr.mxu0 0.0
        %v3788 = vand.u32 %v3778, 4294901760
        %3789 = vmatpush1.msra.mxu0 %v3788
        %3790 = vmatprep.subr.mxu0 0.0
        %v3791 = vand.u32 %v3777, 4294901760
        %3792 = vmatpush1.msra.mxu0 %v3791
        %3793 = vmatprep.subr.mxu0 0.0
        %v3794 = vand.u32 %v3776, 4294901760
        %3795 = vmatpush1.msra.mxu0 %v3794
        %3796 = vmatprep.subr.mxu0 0.0
        %v3797 = vand.u32 %v3775, 4294901760
        %3798 = vmatpush1.msra.mxu0 %v3797
        %3799 = vmatprep.subr.mxu0 0.0
        %v3800 = vand.u32 %v3774, 4294901760
        %3801 = vmatpush1.msra.mxu0 %v3800
        %3802 = vmatprep.subr.mxu0 0.0
        %v3803 = vand.u32 %v3773, 4294901760
        %3804 = vmatpush1.msra.mxu0 %v3803
        %3805 = vmatprep.subr.mxu0 0.0
        %v3806 = vand.u32 %v3772, 4294901760
        %3807 = vmatpush1.msra.mxu0 %v3806
        %3808 = vmatprep.subr.mxu0 0.0
        %v3809 = vand.u32 %v3771, 4294901760
        %3810 = vmatpush1.msra.mxu0 %v3809
        %3811 = vmatprep.subr.mxu0 0.0
        %v3812 = vand.u32 %v3770, 4294901760
        %3813 = vmatpush1.msra.mxu0 %v3812
        %3814 = vmatprep.subr.mxu0 0.0
        %v3815 = vand.u32 %v3769, 4294901760
        %3816 = vmatpush1.msra.mxu0 %v3815
        %3817 = vmatprep.subr.mxu0 0.0
        %v3818 = vand.u32 %v3768, 4294901760
        %3819 = vmatpush1.msra.mxu0 %v3818
        %3820 = vmatprep.subr.mxu0 0.0
        %v3821 = vand.u32 %v3767, 4294901760
        %3822 = vmatpush1.msra.mxu0 %v3821
        %3823 = vmatprep.subr.mxu0 0.0
        %v3824 = vand.u32 %v3766, 4294901760
        %3825 = vmatpush1.msra.mxu0 %v3824
        %3826 = vmatprep.subr.mxu0 0.0
        %v3827 = vand.u32 %v3765, 4294901760
        %3828 = vmatpush1.msra.mxu0 %v3827
        %3829 = vmatprep.subr.mxu0 0.0
        %3830 = vmatpush2.msra.mxu0 0.0
        %3831 = vmatprep.subr.mxu0 0.0
        %3832 = vmatpush2.msra.mxu0 0.0
        %3833 = vmatprep.subr.mxu0 0.0
        %3834 = vmatpush2.msra.mxu0 0.0
        %3835 = vmatprep.subr.mxu0 0.0
        %3836 = vmatpush2.msra.mxu0 0.0
        %3837 = vmatprep.subr.mxu0 0.0
        %3838 = vmatpush2.msra.mxu0 0.0
        %3839 = vmatprep.subr.mxu0 0.0
        %3840 = vmatpush2.msra.mxu0 0.0
        %3841 = vmatprep.subr.mxu0 0.0
        %3842 = vmatpush2.msra.mxu0 0.0
        %3843 = vmatprep.subr.mxu0 0.0
        %3844 = vmatpush2.msra.mxu0 0.0
        %3845 = vmatprep.subr.mxu0 0.0
        %3846 = vmatpush2.msra.mxu0 0.0
        %3847 = vmatprep.subr.mxu0 0.0
        %3848 = vmatpush2.msra.mxu0 0.0
        %3849 = vmatprep.subr.mxu0 0.0
        %3850 = vmatpush2.msra.mxu0 0.0
        %3851 = vmatprep.subr.mxu0 0.0
        %3852 = vmatpush2.msra.mxu0 0.0
        %3853 = vmatprep.subr.mxu0 0.0
        %3854 = vmatpush2.msra.mxu0 0.0
        %3855 = vmatprep.subr.mxu0 0.0
        %3856 = vmatpush2.msra.mxu0 0.0
        %3857 = vmatprep.subr.mxu0 0.0
        %3858 = vmatpush2.msra.mxu0 0.0
        %3859 = vmatprep.subr.mxu0 0.0
        %3860 = vmatpush2.msra.mxu0 0.0
        %3861 = vmatprep.mubr.f32.mxu0 0.0
        %v3862 = vand.u32 %v3762, 4294901760
        %v3863 = vsub.f32 %v3762, %v3862
        %v3864 = vand.u32 %v3863, 4294901760
        %v3865 = vsub.f32 %v3863, %v3864
        %v3866 = vand.u32 %v3865, 4294901760
        %3867 = vmatmul.mubr.f32.gmra.mxu0 %v3866
        %v3868 = vpop.f32.mrf.mxu0
        %v3869 = vadd.f32 0.0, %v3868
        %v3870 = vpop.f32.mrf.mxu0
        %3871 = vmatprep.mubr.f32.mxu0 0.0
        %v3872 = vand.u32 %v3763, 4294901760
        %v3873 = vsub.f32 %v3763, %v3872
        %v3874 = vand.u32 %v3873, 4294901760
        %v3875 = vsub.f32 %v3873, %v3874
        %v3876 = vand.u32 %v3875, 4294901760
        %3877 = vmatmul.mubr.f32.gmra.mxu0 %v3876
        %v3878 = vpop.f32.mrf.mxu0
        %v3879 = vadd.f32 0.0, %v3878
        %v3880 = vpop.f32.mrf.mxu0
        %3881 = vdwg.mxu0
        %3882 = vmatprep.subr.mxu0 0.0
        %v3883 = vand.u32 %v3780, 4294901760
        %v3884 = vsub.f32 %v3780, %v3883
        %v3885 = vand.u32 %v3884, 4294901760
        %v3886 = vsub.f32 %v3884, %v3885
        %v3887 = vand.u32 %v3886, 4294901760
        %3888 = vmatpush1.msra.mxu0 %v3887
        %3889 = vmatprep.subr.mxu0 0.0
        %v3890 = vand.u32 %v3779, 4294901760
        %v3891 = vsub.f32 %v3779, %v3890
        %v3892 = vand.u32 %v3891, 4294901760
        %v3893 = vsub.f32 %v3891, %v3892
        %v3894 = vand.u32 %v3893, 4294901760
        %3895 = vmatpush1.msra.mxu0 %v3894
        %3896 = vmatprep.subr.mxu0 0.0
        %v3897 = vand.u32 %v3778, 4294901760
        %v3898 = vsub.f32 %v3778, %v3897
        %v3899 = vand.u32 %v3898, 4294901760
        %v3900 = vsub.f32 %v3898, %v3899
        %v3901 = vand.u32 %v3900, 4294901760
        %3902 = vmatpush1.msra.mxu0 %v3901
        %3903 = vmatprep.subr.mxu0 0.0
        %v3904 = vand.u32 %v3777, 4294901760
        %v3905 = vsub.f32 %v3777, %v3904
        %v3906 = vand.u32 %v3905, 4294901760
        %v3907 = vsub.f32 %v3905, %v3906
        %v3908 = vand.u32 %v3907, 4294901760
        %3909 = vmatpush1.msra.mxu0 %v3908
        %3910 = vmatprep.subr.mxu0 0.0
        %v3911 = vand.u32 %v3776, 4294901760
        %v3912 = vsub.f32 %v3776, %v3911
        %v3913 = vand.u32 %v3912, 4294901760
        %v3914 = vsub.f32 %v3912, %v3913
        %v3915 = vand.u32 %v3914, 4294901760
        %3916 = vmatpush1.msra.mxu0 %v3915
        %3917 = vmatprep.subr.mxu0 0.0
        %v3918 = vand.u32 %v3775, 4294901760
        %v3919 = vsub.f32 %v3775, %v3918
        %v3920 = vand.u32 %v3919, 4294901760
        %v3921 = vsub.f32 %v3919, %v3920
        %v3922 = vand.u32 %v3921, 4294901760
        %3923 = vmatpush1.msra.mxu0 %v3922
        %3924 = vmatprep.subr.mxu0 0.0
        %v3925 = vand.u32 %v3774, 4294901760
        %v3926 = vsub.f32 %v3774, %v3925
        %v3927 = vand.u32 %v3926, 4294901760
        %v3928 = vsub.f32 %v3926, %v3927
        %v3929 = vand.u32 %v3928, 4294901760
        %3930 = vmatpush1.msra.mxu0 %v3929
        %3931 = vmatprep.subr.mxu0 0.0
        %v3932 = vand.u32 %v3773, 4294901760
        %v3933 = vsub.f32 %v3773, %v3932
        %v3934 = vand.u32 %v3933, 4294901760
        %v3935 = vsub.f32 %v3933, %v3934
        %v3936 = vand.u32 %v3935, 4294901760
        %3937 = vmatpush1.msra.mxu0 %v3936
        %3938 = vmatprep.subr.mxu0 0.0
        %v3939 = vand.u32 %v3772, 4294901760
        %v3940 = vsub.f32 %v3772, %v3939
        %v3941 = vand.u32 %v3940, 4294901760
        %v3942 = vsub.f32 %v3940, %v3941
        %v3943 = vand.u32 %v3942, 4294901760
        %3944 = vmatpush1.msra.mxu0 %v3943
        %3945 = vmatprep.subr.mxu0 0.0
        %v3946 = vand.u32 %v3771, 4294901760
        %v3947 = vsub.f32 %v3771, %v3946
        %v3948 = vand.u32 %v3947, 4294901760
        %v3949 = vsub.f32 %v3947, %v3948
        %v3950 = vand.u32 %v3949, 4294901760
        %3951 = vmatpush1.msra.mxu0 %v3950
        %3952 = vmatprep.subr.mxu0 0.0
        %v3953 = vand.u32 %v3770, 4294901760
        %v3954 = vsub.f32 %v3770, %v3953
        %v3955 = vand.u32 %v3954, 4294901760
        %v3956 = vsub.f32 %v3954, %v3955
        %v3957 = vand.u32 %v3956, 4294901760
        %3958 = vmatpush1.msra.mxu0 %v3957
        %3959 = vmatprep.subr.mxu0 0.0
        %v3960 = vand.u32 %v3769, 4294901760
        %v3961 = vsub.f32 %v3769, %v3960
        %v3962 = vand.u32 %v3961, 4294901760
        %v3963 = vsub.f32 %v3961, %v3962
        %v3964 = vand.u32 %v3963, 4294901760
        %3965 = vmatpush1.msra.mxu0 %v3964
        %3966 = vmatprep.subr.mxu0 0.0
        %v3967 = vand.u32 %v3768, 4294901760
        %v3968 = vsub.f32 %v3768, %v3967
        %v3969 = vand.u32 %v3968, 4294901760
        %v3970 = vsub.f32 %v3968, %v3969
        %v3971 = vand.u32 %v3970, 4294901760
        %3972 = vmatpush1.msra.mxu0 %v3971
        %3973 = vmatprep.subr.mxu0 0.0
        %v3974 = vand.u32 %v3767, 4294901760
        %v3975 = vsub.f32 %v3767, %v3974
        %v3976 = vand.u32 %v3975, 4294901760
        %v3977 = vsub.f32 %v3975, %v3976
        %v3978 = vand.u32 %v3977, 4294901760
        %3979 = vmatpush1.msra.mxu0 %v3978
        %3980 = vmatprep.subr.mxu0 0.0
        %v3981 = vand.u32 %v3766, 4294901760
        %v3982 = vsub.f32 %v3766, %v3981
        %v3983 = vand.u32 %v3982, 4294901760
        %v3984 = vsub.f32 %v3982, %v3983
        %v3985 = vand.u32 %v3984, 4294901760
        %3986 = vmatpush1.msra.mxu0 %v3985
        %3987 = vmatprep.subr.mxu0 0.0
        %v3988 = vand.u32 %v3765, 4294901760
        %v3989 = vsub.f32 %v3765, %v3988
        %v3990 = vand.u32 %v3989, 4294901760
        %v3991 = vsub.f32 %v3989, %v3990
        %v3992 = vand.u32 %v3991, 4294901760
        %3993 = vmatpush1.msra.mxu0 %v3992
        %3994 = vmatprep.subr.mxu0 0.0
        %3995 = vmatpush2.msra.mxu0 0.0
        %3996 = vmatprep.subr.mxu0 0.0
        %3997 = vmatpush2.msra.mxu0 0.0
        %3998 = vmatprep.subr.mxu0 0.0
        %3999 = vmatpush2.msra.mxu0 0.0
        %4000 = vmatprep.subr.mxu0 0.0
        %4001 = vmatpush2.msra.mxu0 0.0
        %4002 = vmatprep.subr.mxu0 0.0
        %4003 = vmatpush2.msra.mxu0 0.0
        %4004 = vmatprep.subr.mxu0 0.0
        %4005 = vmatpush2.msra.mxu0 0.0
        %4006 = vmatprep.subr.mxu0 0.0
        %4007 = vmatpush2.msra.mxu0 0.0
        %4008 = vmatprep.subr.mxu0 0.0
        %4009 = vmatpush2.msra.mxu0 0.0
        %4010 = vmatprep.subr.mxu0 0.0
        %4011 = vmatpush2.msra.mxu0 0.0
        %4012 = vmatprep.subr.mxu0 0.0
        %4013 = vmatpush2.msra.mxu0 0.0
        %4014 = vmatprep.subr.mxu0 0.0
        %4015 = vmatpush2.msra.mxu0 0.0
        %4016 = vmatprep.subr.mxu0 0.0
        %4017 = vmatpush2.msra.mxu0 0.0
        %4018 = vmatprep.subr.mxu0 0.0
        %4019 = vmatpush2.msra.mxu0 0.0
        %4020 = vmatprep.subr.mxu0 0.0
        %4021 = vmatpush2.msra.mxu0 0.0
        %4022 = vmatprep.subr.mxu0 0.0
        %4023 = vmatpush2.msra.mxu0 0.0
        %4024 = vmatprep.subr.mxu0 0.0
        %4025 = vmatpush2.msra.mxu0 0.0
        %4026 = vmatprep.mubr.f32.mxu0 0.0
        %v4027 = vand.u32 %v3762, 4294901760
        %4028 = vmatmul.mubr.f32.gmra.mxu0 %v4027
        %v4029 = vpop.f32.mrf.mxu0
        %v4030 = vadd.f32 %v3869, %v4029
        %v4031 = vpop.f32.mrf.mxu0
        %4032 = vmatprep.mubr.f32.mxu0 0.0
        %v4033 = vand.u32 %v3763, 4294901760
        %4034 = vmatmul.mubr.f32.gmra.mxu0 %v4033
        %v4035 = vpop.f32.mrf.mxu0
        %v4036 = vadd.f32 %v3879, %v4035
        %v4037 = vpop.f32.mrf.mxu0
        %4038 = vdwg.mxu0
        %4039 = vmatprep.subr.mxu0 0.0
        %v4040 = vand.u32 %v3780, 4294901760
        %v4041 = vsub.f32 %v3780, %v4040
        %4042 = vmatpush1.msra.mxu0 %v4041
        %4043 = vmatprep.subr.mxu0 0.0
        %v4044 = vand.u32 %v3779, 4294901760
        %v4045 = vsub.f32 %v3779, %v4044
        %4046 = vmatpush1.msra.mxu0 %v4045
        %4047 = vmatprep.subr.mxu0 0.0
        %v4048 = vand.u32 %v3778, 4294901760
        %v4049 = vsub.f32 %v3778, %v4048
        %4050 = vmatpush1.msra.mxu0 %v4049
        %4051 = vmatprep.subr.mxu0 0.0
        %v4052 = vand.u32 %v3777, 4294901760
        %v4053 = vsub.f32 %v3777, %v4052
        %4054 = vmatpush1.msra.mxu0 %v4053
        %4055 = vmatprep.subr.mxu0 0.0
        %v4056 = vand.u32 %v3776, 4294901760
        %v4057 = vsub.f32 %v3776, %v4056
        %4058 = vmatpush1.msra.mxu0 %v4057
        %4059 = vmatprep.subr.mxu0 0.0
        %v4060 = vand.u32 %v3775, 4294901760
        %v4061 = vsub.f32 %v3775, %v4060
        %4062 = vmatpush1.msra.mxu0 %v4061
        %4063 = vmatprep.subr.mxu0 0.0
        %v4064 = vand.u32 %v3774, 4294901760
        %v4065 = vsub.f32 %v3774, %v4064
        %4066 = vmatpush1.msra.mxu0 %v4065
        %4067 = vmatprep.subr.mxu0 0.0
        %v4068 = vand.u32 %v3773, 4294901760
        %v4069 = vsub.f32 %v3773, %v4068
        %4070 = vmatpush1.msra.mxu0 %v4069
        %4071 = vmatprep.subr.mxu0 0.0
        %v4072 = vand.u32 %v3772, 4294901760
        %v4073 = vsub.f32 %v3772, %v4072
        %4074 = vmatpush1.msra.mxu0 %v4073
        %4075 = vmatprep.subr.mxu0 0.0
        %v4076 = vand.u32 %v3771, 4294901760
        %v4077 = vsub.f32 %v3771, %v4076
        %4078 = vmatpush1.msra.mxu0 %v4077
        %4079 = vmatprep.subr.mxu0 0.0
        %v4080 = vand.u32 %v3770, 4294901760
        %v4081 = vsub.f32 %v3770, %v4080
        %4082 = vmatpush1.msra.mxu0 %v4081
        %4083 = vmatprep.subr.mxu0 0.0
        %v4084 = vand.u32 %v3769, 4294901760
        %v4085 = vsub.f32 %v3769, %v4084
        %4086 = vmatpush1.msra.mxu0 %v4085
        %4087 = vmatprep.subr.mxu0 0.0
        %v4088 = vand.u32 %v3768, 4294901760
        %v4089 = vsub.f32 %v3768, %v4088
        %4090 = vmatpush1.msra.mxu0 %v4089
        %4091 = vmatprep.subr.mxu0 0.0
        %v4092 = vand.u32 %v3767, 4294901760
        %v4093 = vsub.f32 %v3767, %v4092
        %4094 = vmatpush1.msra.mxu0 %v4093
        %4095 = vmatprep.subr.mxu0 0.0
        %v4096 = vand.u32 %v3766, 4294901760
        %v4097 = vsub.f32 %v3766, %v4096
        %4098 = vmatpush1.msra.mxu0 %v4097
        %4099 = vmatprep.subr.mxu0 0.0
        %v4100 = vand.u32 %v3765, 4294901760
        %v4101 = vsub.f32 %v3765, %v4100
        %4102 = vmatpush1.msra.mxu0 %v4101
        %4103 = vmatprep.subr.mxu0 0.0
        %4104 = vmatpush2.msra.mxu0 0.0
        %4105 = vmatprep.subr.mxu0 0.0
        %4106 = vmatpush2.msra.mxu0 0.0
        %4107 = vmatprep.subr.mxu0 0.0
        %4108 = vmatpush2.msra.mxu0 0.0
        %4109 = vmatprep.subr.mxu0 0.0
        %4110 = vmatpush2.msra.mxu0 0.0
        %4111 = vmatprep.subr.mxu0 0.0
        %4112 = vmatpush2.msra.mxu0 0.0
        %4113 = vmatprep.subr.mxu0 0.0
        %4114 = vmatpush2.msra.mxu0 0.0
        %4115 = vmatprep.subr.mxu0 0.0
        %4116 = vmatpush2.msra.mxu0 0.0
        %4117 = vmatprep.subr.mxu0 0.0
        %4118 = vmatpush2.msra.mxu0 0.0
        %4119 = vmatprep.subr.mxu0 0.0
        %4120 = vmatpush2.msra.mxu0 0.0
        %4121 = vmatprep.subr.mxu0 0.0
        %4122 = vmatpush2.msra.mxu0 0.0
        %4123 = vmatprep.subr.mxu0 0.0
        %4124 = vmatpush2.msra.mxu0 0.0
        %4125 = vmatprep.subr.mxu0 0.0
        %4126 = vmatpush2.msra.mxu0 0.0
        %4127 = vmatprep.subr.mxu0 0.0
        %4128 = vmatpush2.msra.mxu0 0.0
        %4129 = vmatprep.subr.mxu0 0.0
        %4130 = vmatpush2.msra.mxu0 0.0
        %4131 = vmatprep.subr.mxu0 0.0
        %4132 = vmatpush2.msra.mxu0 0.0
        %4133 = vmatprep.subr.mxu0 0.0
        %4134 = vmatpush2.msra.mxu0 0.0
        %4135 = vmatprep.mubr.f32.mxu0 0.0
        %v4136 = vand.u32 %v3762, 4294901760
        %v4137 = vsub.f32 %v3762, %v4136
        %4138 = vmatmul.mubr.f32.gmra.mxu0 %v4137
        %v4139 = vpop.f32.mrf.mxu0
        %v4140 = vadd.f32 %v4030, %v4139
        %v4141 = vpop.f32.mrf.mxu0
        %4142 = vmatprep.mubr.f32.mxu0 0.0
        %v4143 = vand.u32 %v3763, 4294901760
        %v4144 = vsub.f32 %v3763, %v4143
        %4145 = vmatmul.mubr.f32.gmra.mxu0 %v4144
        %v4146 = vpop.f32.mrf.mxu0
        %v4147 = vadd.f32 %v4036, %v4146
        %v4148 = vpop.f32.mrf.mxu0
        %4149 = vdwg.mxu0
        %4150 = vmatprep.subr.mxu0 0.0
        %v4151 = vand.u32 %v3780, 4294901760
        %4152 = vmatpush1.msra.mxu0 %v4151
        %4153 = vmatprep.subr.mxu0 0.0
        %v4154 = vand.u32 %v3779, 4294901760
        %4155 = vmatpush1.msra.mxu0 %v4154
        %4156 = vmatprep.subr.mxu0 0.0
        %v4157 = vand.u32 %v3778, 4294901760
        %4158 = vmatpush1.msra.mxu0 %v4157
        %4159 = vmatprep.subr.mxu0 0.0
        %v4160 = vand.u32 %v3777, 4294901760
        %4161 = vmatpush1.msra.mxu0 %v4160
        %4162 = vmatprep.subr.mxu0 0.0
        %v4163 = vand.u32 %v3776, 4294901760
        %4164 = vmatpush1.msra.mxu0 %v4163
        %4165 = vmatprep.subr.mxu0 0.0
        %v4166 = vand.u32 %v3775, 4294901760
        %4167 = vmatpush1.msra.mxu0 %v4166
        %4168 = vmatprep.subr.mxu0 0.0
        %v4169 = vand.u32 %v3774, 4294901760
        %4170 = vmatpush1.msra.mxu0 %v4169
        %4171 = vmatprep.subr.mxu0 0.0
        %v4172 = vand.u32 %v3773, 4294901760
        %4173 = vmatpush1.msra.mxu0 %v4172
        %4174 = vmatprep.subr.mxu0 0.0
        %v4175 = vand.u32 %v3772, 4294901760
        %4176 = vmatpush1.msra.mxu0 %v4175
        %4177 = vmatprep.subr.mxu0 0.0
        %v4178 = vand.u32 %v3771, 4294901760
        %4179 = vmatpush1.msra.mxu0 %v4178
        %4180 = vmatprep.subr.mxu0 0.0
        %v4181 = vand.u32 %v3770, 4294901760
        %4182 = vmatpush1.msra.mxu0 %v4181
        %4183 = vmatprep.subr.mxu0 0.0
        %v4184 = vand.u32 %v3769, 4294901760
        %4185 = vmatpush1.msra.mxu0 %v4184
        %4186 = vmatprep.subr.mxu0 0.0
        %v4187 = vand.u32 %v3768, 4294901760
        %4188 = vmatpush1.msra.mxu0 %v4187
        %4189 = vmatprep.subr.mxu0 0.0
        %v4190 = vand.u32 %v3767, 4294901760
        %4191 = vmatpush1.msra.mxu0 %v4190
        %4192 = vmatprep.subr.mxu0 0.0
        %v4193 = vand.u32 %v3766, 4294901760
        %4194 = vmatpush1.msra.mxu0 %v4193
        %4195 = vmatprep.subr.mxu0 0.0
        %v4196 = vand.u32 %v3765, 4294901760
        %4197 = vmatpush1.msra.mxu0 %v4196
        %4198 = vmatprep.subr.mxu0 0.0
        %4199 = vmatpush2.msra.mxu0 0.0
        %4200 = vmatprep.subr.mxu0 0.0
        %4201 = vmatpush2.msra.mxu0 0.0
        %4202 = vmatprep.subr.mxu0 0.0
        %4203 = vmatpush2.msra.mxu0 0.0
        %4204 = vmatprep.subr.mxu0 0.0
        %4205 = vmatpush2.msra.mxu0 0.0
        %4206 = vmatprep.subr.mxu0 0.0
        %4207 = vmatpush2.msra.mxu0 0.0
        %4208 = vmatprep.subr.mxu0 0.0
        %4209 = vmatpush2.msra.mxu0 0.0
        %4210 = vmatprep.subr.mxu0 0.0
        %4211 = vmatpush2.msra.mxu0 0.0
        %4212 = vmatprep.subr.mxu0 0.0
        %4213 = vmatpush2.msra.mxu0 0.0
        %4214 = vmatprep.subr.mxu0 0.0
        %4215 = vmatpush2.msra.mxu0 0.0
        %4216 = vmatprep.subr.mxu0 0.0
        %4217 = vmatpush2.msra.mxu0 0.0
        %4218 = vmatprep.subr.mxu0 0.0
        %4219 = vmatpush2.msra.mxu0 0.0
        %4220 = vmatprep.subr.mxu0 0.0
        %4221 = vmatpush2.msra.mxu0 0.0
        %4222 = vmatprep.subr.mxu0 0.0
        %4223 = vmatpush2.msra.mxu0 0.0
        %4224 = vmatprep.subr.mxu0 0.0
        %4225 = vmatpush2.msra.mxu0 0.0
        %4226 = vmatprep.subr.mxu0 0.0
        %4227 = vmatpush2.msra.mxu0 0.0
        %4228 = vmatprep.subr.mxu0 0.0
        %4229 = vmatpush2.msra.mxu0 0.0
        %4230 = vmatprep.mubr.f32.mxu0 0.0
        %v4231 = vand.u32 %v3762, 4294901760
        %v4232 = vsub.f32 %v3762, %v4231
        %v4233 = vand.u32 %v4232, 4294901760
        %4234 = vmatmul.mubr.f32.gmra.mxu0 %v4233
        %v4235 = vpop.f32.mrf.mxu0
        %v4236 = vadd.f32 %v4140, %v4235
        %v4237 = vpop.f32.mrf.mxu0
        %4238 = vmatprep.mubr.f32.mxu0 0.0
        %v4239 = vand.u32 %v3763, 4294901760
        %v4240 = vsub.f32 %v3763, %v4239
        %v4241 = vand.u32 %v4240, 4294901760
        %4242 = vmatmul.mubr.f32.gmra.mxu0 %v4241
        %v4243 = vpop.f32.mrf.mxu0
        %v4244 = vadd.f32 %v4147, %v4243
        %v4245 = vpop.f32.mrf.mxu0
        %4246 = vdwg.mxu0
        %4247 = vmatprep.subr.mxu0 0.0
        %v4248 = vand.u32 %v3780, 4294901760
        %v4249 = vsub.f32 %v3780, %v4248
        %v4250 = vand.u32 %v4249, 4294901760
        %4251 = vmatpush1.msra.mxu0 %v4250
        %4252 = vmatprep.subr.mxu0 0.0
        %v4253 = vand.u32 %v3779, 4294901760
        %v4254 = vsub.f32 %v3779, %v4253
        %v4255 = vand.u32 %v4254, 4294901760
        %4256 = vmatpush1.msra.mxu0 %v4255
        %4257 = vmatprep.subr.mxu0 0.0
        %v4258 = vand.u32 %v3778, 4294901760
        %v4259 = vsub.f32 %v3778, %v4258
        %v4260 = vand.u32 %v4259, 4294901760
        %4261 = vmatpush1.msra.mxu0 %v4260
        %4262 = vmatprep.subr.mxu0 0.0
        %v4263 = vand.u32 %v3777, 4294901760
        %v4264 = vsub.f32 %v3777, %v4263
        %v4265 = vand.u32 %v4264, 4294901760
        %4266 = vmatpush1.msra.mxu0 %v4265
        %4267 = vmatprep.subr.mxu0 0.0
        %v4268 = vand.u32 %v3776, 4294901760
        %v4269 = vsub.f32 %v3776, %v4268
        %v4270 = vand.u32 %v4269, 4294901760
        %4271 = vmatpush1.msra.mxu0 %v4270
        %4272 = vmatprep.subr.mxu0 0.0
        %v4273 = vand.u32 %v3775, 4294901760
        %v4274 = vsub.f32 %v3775, %v4273
        %v4275 = vand.u32 %v4274, 4294901760
        %4276 = vmatpush1.msra.mxu0 %v4275
        %4277 = vmatprep.subr.mxu0 0.0
        %v4278 = vand.u32 %v3774, 4294901760
        %v4279 = vsub.f32 %v3774, %v4278
        %v4280 = vand.u32 %v4279, 4294901760
        %4281 = vmatpush1.msra.mxu0 %v4280
        %4282 = vmatprep.subr.mxu0 0.0
        %v4283 = vand.u32 %v3773, 4294901760
        %v4284 = vsub.f32 %v3773, %v4283
        %v4285 = vand.u32 %v4284, 4294901760
        %4286 = vmatpush1.msra.mxu0 %v4285
        %4287 = vmatprep.subr.mxu0 0.0
        %v4288 = vand.u32 %v3772, 4294901760
        %v4289 = vsub.f32 %v3772, %v4288
        %v4290 = vand.u32 %v4289, 4294901760
        %4291 = vmatpush1.msra.mxu0 %v4290
        %4292 = vmatprep.subr.mxu0 0.0
        %v4293 = vand.u32 %v3771, 4294901760
        %v4294 = vsub.f32 %v3771, %v4293
        %v4295 = vand.u32 %v4294, 4294901760
        %4296 = vmatpush1.msra.mxu0 %v4295
        %4297 = vmatprep.subr.mxu0 0.0
        %v4298 = vand.u32 %v3770, 4294901760
        %v4299 = vsub.f32 %v3770, %v4298
        %v4300 = vand.u32 %v4299, 4294901760
        %4301 = vmatpush1.msra.mxu0 %v4300
        %4302 = vmatprep.subr.mxu0 0.0
        %v4303 = vand.u32 %v3769, 4294901760
        %v4304 = vsub.f32 %v3769, %v4303
        %v4305 = vand.u32 %v4304, 4294901760
        %4306 = vmatpush1.msra.mxu0 %v4305
        %4307 = vmatprep.subr.mxu0 0.0
        %v4308 = vand.u32 %v3768, 4294901760
        %v4309 = vsub.f32 %v3768, %v4308
        %v4310 = vand.u32 %v4309, 4294901760
        %4311 = vmatpush1.msra.mxu0 %v4310
        %4312 = vmatprep.subr.mxu0 0.0
        %v4313 = vand.u32 %v3767, 4294901760
        %v4314 = vsub.f32 %v3767, %v4313
        %v4315 = vand.u32 %v4314, 4294901760
        %4316 = vmatpush1.msra.mxu0 %v4315
        %4317 = vmatprep.subr.mxu0 0.0
        %v4318 = vand.u32 %v3766, 4294901760
        %v4319 = vsub.f32 %v3766, %v4318
        %v4320 = vand.u32 %v4319, 4294901760
        %4321 = vmatpush1.msra.mxu0 %v4320
        %4322 = vmatprep.subr.mxu0 0.0
        %v4323 = vand.u32 %v3765, 4294901760
        %v4324 = vsub.f32 %v3765, %v4323
        %v4325 = vand.u32 %v4324, 4294901760
        %4326 = vmatpush1.msra.mxu0 %v4325
        %4327 = vmatprep.subr.mxu0 0.0
        %4328 = vmatpush2.msra.mxu0 0.0
        %4329 = vmatprep.subr.mxu0 0.0
        %4330 = vmatpush2.msra.mxu0 0.0
        %4331 = vmatprep.subr.mxu0 0.0
        %4332 = vmatpush2.msra.mxu0 0.0
        %4333 = vmatprep.subr.mxu0 0.0
        %4334 = vmatpush2.msra.mxu0 0.0
        %4335 = vmatprep.subr.mxu0 0.0
        %4336 = vmatpush2.msra.mxu0 0.0
        %4337 = vmatprep.subr.mxu0 0.0
        %4338 = vmatpush2.msra.mxu0 0.0
        %4339 = vmatprep.subr.mxu0 0.0
        %4340 = vmatpush2.msra.mxu0 0.0
        %4341 = vmatprep.subr.mxu0 0.0
        %4342 = vmatpush2.msra.mxu0 0.0
        %4343 = vmatprep.subr.mxu0 0.0
        %4344 = vmatpush2.msra.mxu0 0.0
        %4345 = vmatprep.subr.mxu0 0.0
        %4346 = vmatpush2.msra.mxu0 0.0
        %4347 = vmatprep.subr.mxu0 0.0
        %4348 = vmatpush2.msra.mxu0 0.0
        %4349 = vmatprep.subr.mxu0 0.0
        %4350 = vmatpush2.msra.mxu0 0.0
        %4351 = vmatprep.subr.mxu0 0.0
        %4352 = vmatpush2.msra.mxu0 0.0
        %4353 = vmatprep.subr.mxu0 0.0
        %4354 = vmatpush2.msra.mxu0 0.0
        %4355 = vmatprep.subr.mxu0 0.0
        %4356 = vmatpush2.msra.mxu0 0.0
        %4357 = vmatprep.subr.mxu0 0.0
        %4358 = vmatpush2.msra.mxu0 0.0
        %4359 = vmatprep.mubr.f32.mxu0 0.0
        %v4360 = vand.u32 %v3762, 4294901760
        %4361 = vmatmul.mubr.f32.gmra.mxu0 %v4360
        %v4362 = vpop.f32.mrf.mxu0
        %v4363 = vadd.f32 %v4236, %v4362
        %v4364 = vpop.f32.mrf.mxu0
        %4365 = vmatprep.mubr.f32.mxu0 0.0
        %v4366 = vand.u32 %v3763, 4294901760
        %4367 = vmatmul.mubr.f32.gmra.mxu0 %v4366
        %v4368 = vpop.f32.mrf.mxu0
        %v4369 = vadd.f32 %v4244, %v4368
        %v4370 = vpop.f32.mrf.mxu0
        %4371 = vdwg.mxu0
        %4372 = vmatprep.subr.mxu0 0.0
        %v4373 = vand.u32 %v3780, 4294901760
        %4374 = vmatpush1.msra.mxu0 %v4373
        %4375 = vmatprep.subr.mxu0 0.0
        %v4376 = vand.u32 %v3779, 4294901760
        %4377 = vmatpush1.msra.mxu0 %v4376
        %4378 = vmatprep.subr.mxu0 0.0
        %v4379 = vand.u32 %v3778, 4294901760
        %4380 = vmatpush1.msra.mxu0 %v4379
        %4381 = vmatprep.subr.mxu0 0.0
        %v4382 = vand.u32 %v3777, 4294901760
        %4383 = vmatpush1.msra.mxu0 %v4382
        %4384 = vmatprep.subr.mxu0 0.0
        %v4385 = vand.u32 %v3776, 4294901760
        %4386 = vmatpush1.msra.mxu0 %v4385
        %4387 = vmatprep.subr.mxu0 0.0
        %v4388 = vand.u32 %v3775, 4294901760
        %4389 = vmatpush1.msra.mxu0 %v4388
        %4390 = vmatprep.subr.mxu0 0.0
        %v4391 = vand.u32 %v3774, 4294901760
        %4392 = vmatpush1.msra.mxu0 %v4391
        %4393 = vmatprep.subr.mxu0 0.0
        %v4394 = vand.u32 %v3773, 4294901760
        %4395 = vmatpush1.msra.mxu0 %v4394
        %4396 = vmatprep.subr.mxu0 0.0
        %v4397 = vand.u32 %v3772, 4294901760
        %4398 = vmatpush1.msra.mxu0 %v4397
        %4399 = vmatprep.subr.mxu0 0.0
        %v4400 = vand.u32 %v3771, 4294901760
        %4401 = vmatpush1.msra.mxu0 %v4400
        %4402 = vmatprep.subr.mxu0 0.0
        %v4403 = vand.u32 %v3770, 4294901760
        %4404 = vmatpush1.msra.mxu0 %v4403
        %4405 = vmatprep.subr.mxu0 0.0
        %v4406 = vand.u32 %v3769, 4294901760
        %4407 = vmatpush1.msra.mxu0 %v4406
        %4408 = vmatprep.subr.mxu0 0.0
        %v4409 = vand.u32 %v3768, 4294901760
        %4410 = vmatpush1.msra.mxu0 %v4409
        %4411 = vmatprep.subr.mxu0 0.0
        %v4412 = vand.u32 %v3767, 4294901760
        %4413 = vmatpush1.msra.mxu0 %v4412
        %4414 = vmatprep.subr.mxu0 0.0
        %v4415 = vand.u32 %v3766, 4294901760
        %4416 = vmatpush1.msra.mxu0 %v4415
        %4417 = vmatprep.subr.mxu0 0.0
        %v4418 = vand.u32 %v3765, 4294901760
        %4419 = vmatpush1.msra.mxu0 %v4418
        %4420 = vmatprep.subr.mxu0 0.0
        %4421 = vmatpush2.msra.mxu0 0.0
        %4422 = vmatprep.subr.mxu0 0.0
        %4423 = vmatpush2.msra.mxu0 0.0
        %4424 = vmatprep.subr.mxu0 0.0
        %4425 = vmatpush2.msra.mxu0 0.0
        %4426 = vmatprep.subr.mxu0 0.0
        %4427 = vmatpush2.msra.mxu0 0.0
        %4428 = vmatprep.subr.mxu0 0.0
        %4429 = vmatpush2.msra.mxu0 0.0
        %4430 = vmatprep.subr.mxu0 0.0
        %4431 = vmatpush2.msra.mxu0 0.0
        %4432 = vmatprep.subr.mxu0 0.0
        %4433 = vmatpush2.msra.mxu0 0.0
        %4434 = vmatprep.subr.mxu0 0.0
        %4435 = vmatpush2.msra.mxu0 0.0
        %4436 = vmatprep.subr.mxu0 0.0
        %4437 = vmatpush2.msra.mxu0 0.0
        %4438 = vmatprep.subr.mxu0 0.0
        %4439 = vmatpush2.msra.mxu0 0.0
        %4440 = vmatprep.subr.mxu0 0.0
        %4441 = vmatpush2.msra.mxu0 0.0
        %4442 = vmatprep.subr.mxu0 0.0
        %4443 = vmatpush2.msra.mxu0 0.0
        %4444 = vmatprep.subr.mxu0 0.0
        %4445 = vmatpush2.msra.mxu0 0.0
        %4446 = vmatprep.subr.mxu0 0.0
        %4447 = vmatpush2.msra.mxu0 0.0
        %4448 = vmatprep.subr.mxu0 0.0
        %4449 = vmatpush2.msra.mxu0 0.0
        %4450 = vmatprep.subr.mxu0 0.0
        %4451 = vmatpush2.msra.mxu0 0.0
        %4452 = vmatprep.mubr.f32.mxu0 0.0
        %v4453 = vand.u32 %v3762, 4294901760
        %4454 = vmatmul.mubr.f32.gmra.mxu0 %v4453
        %v4455 = vpop.f32.mrf.mxu0
        %v4456 = vadd.f32 %v4363, %v4455
        %v4457 = vpop.f32.mrf.mxu0
        %4458 = vmatprep.mubr.f32.mxu0 0.0
        %v4459 = vand.u32 %v3763, 4294901760
        %4460 = vmatmul.mubr.f32.gmra.mxu0 %v4459
        %v4461 = vpop.f32.mrf.mxu0
        %v4462 = vadd.f32 %v4369, %v4461
        %v4463 = vpop.f32.mrf.mxu0
        %4464 = vdwg.mxu0
        %v4465 = vadd.f32 %v3749, %v4456
        %v4466 = vadd.f32 %v3755, %v4462
        %s4467 = scalar_lea.vmem %s3, 1
        %v4468 = vld [vmem:[%s4467] sm:$0x1]
        %v4470 = vlaneseq
        %v4471 = vshrl.u32 %v4470, 7
        %v4472 = vsub.s32 0, %v4471
        %v4473 = vrot.slane %v4468, %v4472
        %v4475 = vadd.f32 %v4465, %v4473
        %v4476 = vadd.f32 %v4466, %v4473
        %v4477 = vmul.f32 %v4475, 0.1
        %v4478 = vmul.f32 %v4476, 0.1
        %v4479 = vadd.f32 %v220, %v4477
        %v4480 = vadd.f32 %v221, %v4478
        %v4481 = vrot.slane %v4479, 7
        %v4482 = vrot.slane %v4480, 7
        %v4483 = vsel %vm224, %v4481, %v4482
        %v4484 = vsel %vm224, %v4482, %v4481
        %v4485 = vsel %vm216, %v4484, 0.0
        %v4486 = vsel %vm217, %v4483, 0.0
        %s4487 = scalar_lea.vmem %s1, 384
        %v4488 = vld [vmem:[%s4487] sm:$0xff]
        %v4489 = vld [vmem:[%s4487 + $0x8] sm:$0xff]
        %v4490 = vld [vmem:[%s4487 + $0x10] sm:$0xff]
        %v4491 = vld [vmem:[%s4487 + $0x18] sm:$0xff]
        %v4492 = vld [vmem:[%s4487 + $0x20] sm:$0xff]
        %v4493 = vld [vmem:[%s4487 + $0x28] sm:$0xff]
        %v4494 = vld [vmem:[%s4487 + $0x30] sm:$0xff]
        %v4495 = vld [vmem:[%s4487 + $0x38] sm:$0xff]
        %v4496 = vld [vmem:[%s4487 + $0x40] sm:$0xff]
        %v4497 = vld [vmem:[%s4487 + $0x48] sm:$0xff]
        %v4498 = vld [vmem:[%s4487 + $0x50] sm:$0xff]
        %v4499 = vld [vmem:[%s4487 + $0x58] sm:$0xff]
        %v4500 = vld [vmem:[%s4487 + $0x60] sm:$0xff]
        %v4501 = vld [vmem:[%s4487 + $0x68] sm:$0xff]
        %v4502 = vld [vmem:[%s4487 + $0x70] sm:$0xff]
        %v4503 = vld [vmem:[%s4487 + $0x78] sm:$0xff]
        %s4504 = scalar_lea.vmem %s1, 512
        %v4505 = vld [vmem:[%s4504] sm:$0xff]
        %v4506 = vld [vmem:[%s4504 + $0x8] sm:$0xff]
        %v4507 = vld [vmem:[%s4504 + $0x10] sm:$0xff]
        %v4508 = vld [vmem:[%s4504 + $0x18] sm:$0xff]
        %v4509 = vld [vmem:[%s4504 + $0x20] sm:$0xff]
        %v4510 = vld [vmem:[%s4504 + $0x28] sm:$0xff]
        %v4511 = vld [vmem:[%s4504 + $0x30] sm:$0xff]
        %v4512 = vld [vmem:[%s4504 + $0x38] sm:$0xff]
        %v4513 = vld [vmem:[%s4504 + $0x40] sm:$0xff]
        %v4514 = vld [vmem:[%s4504 + $0x48] sm:$0xff]
        %v4515 = vld [vmem:[%s4504 + $0x50] sm:$0xff]
        %v4516 = vld [vmem:[%s4504 + $0x58] sm:$0xff]
        %v4517 = vld [vmem:[%s4504 + $0x60] sm:$0xff]
        %v4518 = vld [vmem:[%s4504 + $0x68] sm:$0xff]
        %v4519 = vld [vmem:[%s4504 + $0x70] sm:$0xff]
        %v4520 = vld [vmem:[%s4504 + $0x78] sm:$0xff]
        %4521 = vmatprep.subr.mxu0 0.0
        %v4522 = vand.u32 %v4520, 4294901760
        %4523 = vmatpush1.msra.mxu0 %v4522
        %4524 = vmatprep.subr.mxu0 0.0
        %v4525 = vand.u32 %v4519, 4294901760
        %4526 = vmatpush1.msra.mxu0 %v4525
        %4527 = vmatprep.subr.mxu0 0.0
        %v4528 = vand.u32 %v4518, 4294901760
        %4529 = vmatpush1.msra.mxu0 %v4528
        %4530 = vmatprep.subr.mxu0 0.0
        %v4531 = vand.u32 %v4517, 4294901760
        %4532 = vmatpush1.msra.mxu0 %v4531
        %4533 = vmatprep.subr.mxu0 0.0
        %v4534 = vand.u32 %v4516, 4294901760
        %4535 = vmatpush1.msra.mxu0 %v4534
        %4536 = vmatprep.subr.mxu0 0.0
        %v4537 = vand.u32 %v4515, 4294901760
        %4538 = vmatpush1.msra.mxu0 %v4537
        %4539 = vmatprep.subr.mxu0 0.0
        %v4540 = vand.u32 %v4514, 4294901760
        %4541 = vmatpush1.msra.mxu0 %v4540
        %4542 = vmatprep.subr.mxu0 0.0
        %v4543 = vand.u32 %v4513, 4294901760
        %4544 = vmatpush1.msra.mxu0 %v4543
        %4545 = vmatprep.subr.mxu0 0.0
        %v4546 = vand.u32 %v4512, 4294901760
        %4547 = vmatpush1.msra.mxu0 %v4546
        %4548 = vmatprep.subr.mxu0 0.0
        %v4549 = vand.u32 %v4511, 4294901760
        %4550 = vmatpush1.msra.mxu0 %v4549
        %4551 = vmatprep.subr.mxu0 0.0
        %v4552 = vand.u32 %v4510, 4294901760
        %4553 = vmatpush1.msra.mxu0 %v4552
        %4554 = vmatprep.subr.mxu0 0.0
        %v4555 = vand.u32 %v4509, 4294901760
        %4556 = vmatpush1.msra.mxu0 %v4555
        %4557 = vmatprep.subr.mxu0 0.0
        %v4558 = vand.u32 %v4508, 4294901760
        %4559 = vmatpush1.msra.mxu0 %v4558
        %4560 = vmatprep.subr.mxu0 0.0
        %v4561 = vand.u32 %v4507, 4294901760
        %4562 = vmatpush1.msra.mxu0 %v4561
        %4563 = vmatprep.subr.mxu0 0.0
        %v4564 = vand.u32 %v4506, 4294901760
        %4565 = vmatpush1.msra.mxu0 %v4564
        %4566 = vmatprep.subr.mxu0 0.0
        %v4567 = vand.u32 %v4505, 4294901760
        %4568 = vmatpush1.msra.mxu0 %v4567
        %4569 = vmatprep.subr.mxu0 0.0
        %4570 = vmatpush2.msra.mxu0 0.0
        %4571 = vmatprep.subr.mxu0 0.0
        %4572 = vmatpush2.msra.mxu0 0.0
        %4573 = vmatprep.subr.mxu0 0.0
        %4574 = vmatpush2.msra.mxu0 0.0
        %4575 = vmatprep.subr.mxu0 0.0
        %4576 = vmatpush2.msra.mxu0 0.0
        %4577 = vmatprep.subr.mxu0 0.0
        %4578 = vmatpush2.msra.mxu0 0.0
        %4579 = vmatprep.subr.mxu0 0.0
        %4580 = vmatpush2.msra.mxu0 0.0
        %4581 = vmatprep.subr.mxu0 0.0
        %4582 = vmatpush2.msra.mxu0 0.0
        %4583 = vmatprep.subr.mxu0 0.0
        %4584 = vmatpush2.msra.mxu0 0.0
        %4585 = vmatprep.subr.mxu0 0.0
        %4586 = vmatpush2.msra.mxu0 0.0
        %4587 = vmatprep.subr.mxu0 0.0
        %4588 = vmatpush2.msra.mxu0 0.0
        %4589 = vmatprep.subr.mxu0 0.0
        %4590 = vmatpush2.msra.mxu0 0.0
        %4591 = vmatprep.subr.mxu0 0.0
        %4592 = vmatpush2.msra.mxu0 0.0
        %4593 = vmatprep.subr.mxu0 0.0
        %4594 = vmatpush2.msra.mxu0 0.0
        %4595 = vmatprep.subr.mxu0 0.0
        %4596 = vmatpush2.msra.mxu0 0.0
        %4597 = vmatprep.subr.mxu0 0.0
        %4598 = vmatpush2.msra.mxu0 0.0
        %4599 = vmatprep.subr.mxu0 0.0
        %4600 = vmatpush2.msra.mxu0 0.0
        %4601 = vmatprep.mubr.f32.mxu0 0.0
        %v4602 = vand.u32 %v4479, 4294901760
        %v4603 = vsub.f32 %v4479, %v4602
        %v4604 = vand.u32 %v4603, 4294901760
        %v4605 = vsub.f32 %v4603, %v4604
        %v4606 = vand.u32 %v4605, 4294901760
        %4607 = vmatmul.mubr.f32.gmra.mxu0 %v4606
        %v4608 = vpop.f32.mrf.mxu0
        %v4609 = vadd.f32 0.0, %v4608
        %v4610 = vpop.f32.mrf.mxu0
        %4611 = vmatprep.mubr.f32.mxu0 0.0
        %v4612 = vand.u32 %v4480, 4294901760
        %v4613 = vsub.f32 %v4480, %v4612
        %v4614 = vand.u32 %v4613, 4294901760
        %v4615 = vsub.f32 %v4613, %v4614
        %v4616 = vand.u32 %v4615, 4294901760
        %4617 = vmatmul.mubr.f32.gmra.mxu0 %v4616
        %v4618 = vpop.f32.mrf.mxu0
        %v4619 = vadd.f32 0.0, %v4618
        %v4620 = vpop.f32.mrf.mxu0
        %4621 = vdwg.mxu0
        %4622 = vmatprep.subr.mxu0 0.0
        %v4623 = vand.u32 %v4520, 4294901760
        %v4624 = vsub.f32 %v4520, %v4623
        %v4625 = vand.u32 %v4624, 4294901760
        %v4626 = vsub.f32 %v4624, %v4625
        %v4627 = vand.u32 %v4626, 4294901760
        %4628 = vmatpush1.msra.mxu0 %v4627
        %4629 = vmatprep.subr.mxu0 0.0
        %v4630 = vand.u32 %v4519, 4294901760
        %v4631 = vsub.f32 %v4519, %v4630
        %v4632 = vand.u32 %v4631, 4294901760
        %v4633 = vsub.f32 %v4631, %v4632
        %v4634 = vand.u32 %v4633, 4294901760
        %4635 = vmatpush1.msra.mxu0 %v4634
        %4636 = vmatprep.subr.mxu0 0.0
        %v4637 = vand.u32 %v4518, 4294901760
        %v4638 = vsub.f32 %v4518, %v4637
        %v4639 = vand.u32 %v4638, 4294901760
        %v4640 = vsub.f32 %v4638, %v4639
        %v4641 = vand.u32 %v4640, 4294901760
        %4642 = vmatpush1.msra.mxu0 %v4641
        %4643 = vmatprep.subr.mxu0 0.0
        %v4644 = vand.u32 %v4517, 4294901760
        %v4645 = vsub.f32 %v4517, %v4644
        %v4646 = vand.u32 %v4645, 4294901760
        %v4647 = vsub.f32 %v4645, %v4646
        %v4648 = vand.u32 %v4647, 4294901760
        %4649 = vmatpush1.msra.mxu0 %v4648
        %4650 = vmatprep.subr.mxu0 0.0
        %v4651 = vand.u32 %v4516, 4294901760
        %v4652 = vsub.f32 %v4516, %v4651
        %v4653 = vand.u32 %v4652, 4294901760
        %v4654 = vsub.f32 %v4652, %v4653
        %v4655 = vand.u32 %v4654, 4294901760
        %4656 = vmatpush1.msra.mxu0 %v4655
        %4657 = vmatprep.subr.mxu0 0.0
        %v4658 = vand.u32 %v4515, 4294901760
        %v4659 = vsub.f32 %v4515, %v4658
        %v4660 = vand.u32 %v4659, 4294901760
        %v4661 = vsub.f32 %v4659, %v4660
        %v4662 = vand.u32 %v4661, 4294901760
        %4663 = vmatpush1.msra.mxu0 %v4662
        %4664 = vmatprep.subr.mxu0 0.0
        %v4665 = vand.u32 %v4514, 4294901760
        %v4666 = vsub.f32 %v4514, %v4665
        %v4667 = vand.u32 %v4666, 4294901760
        %v4668 = vsub.f32 %v4666, %v4667
        %v4669 = vand.u32 %v4668, 4294901760
        %4670 = vmatpush1.msra.mxu0 %v4669
        %4671 = vmatprep.subr.mxu0 0.0
        %v4672 = vand.u32 %v4513, 4294901760
        %v4673 = vsub.f32 %v4513, %v4672
        %v4674 = vand.u32 %v4673, 4294901760
        %v4675 = vsub.f32 %v4673, %v4674
        %v4676 = vand.u32 %v4675, 4294901760
        %4677 = vmatpush1.msra.mxu0 %v4676
        %4678 = vmatprep.subr.mxu0 0.0
        %v4679 = vand.u32 %v4512, 4294901760
        %v4680 = vsub.f32 %v4512, %v4679
        %v4681 = vand.u32 %v4680, 4294901760
        %v4682 = vsub.f32 %v4680, %v4681
        %v4683 = vand.u32 %v4682, 4294901760
        %4684 = vmatpush1.msra.mxu0 %v4683
        %4685 = vmatprep.subr.mxu0 0.0
        %v4686 = vand.u32 %v4511, 4294901760
        %v4687 = vsub.f32 %v4511, %v4686
        %v4688 = vand.u32 %v4687, 4294901760
        %v4689 = vsub.f32 %v4687, %v4688
        %v4690 = vand.u32 %v4689, 4294901760
        %4691 = vmatpush1.msra.mxu0 %v4690
        %4692 = vmatprep.subr.mxu0 0.0
        %v4693 = vand.u32 %v4510, 4294901760
        %v4694 = vsub.f32 %v4510, %v4693
        %v4695 = vand.u32 %v4694, 4294901760
        %v4696 = vsub.f32 %v4694, %v4695
        %v4697 = vand.u32 %v4696, 4294901760
        %4698 = vmatpush1.msra.mxu0 %v4697
        %4699 = vmatprep.subr.mxu0 0.0
        %v4700 = vand.u32 %v4509, 4294901760
        %v4701 = vsub.f32 %v4509, %v4700
        %v4702 = vand.u32 %v4701, 4294901760
        %v4703 = vsub.f32 %v4701, %v4702
        %v4704 = vand.u32 %v4703, 4294901760
        %4705 = vmatpush1.msra.mxu0 %v4704
        %4706 = vmatprep.subr.mxu0 0.0
        %v4707 = vand.u32 %v4508, 4294901760
        %v4708 = vsub.f32 %v4508, %v4707
        %v4709 = vand.u32 %v4708, 4294901760
        %v4710 = vsub.f32 %v4708, %v4709
        %v4711 = vand.u32 %v4710, 4294901760
        %4712 = vmatpush1.msra.mxu0 %v4711
        %4713 = vmatprep.subr.mxu0 0.0
        %v4714 = vand.u32 %v4507, 4294901760
        %v4715 = vsub.f32 %v4507, %v4714
        %v4716 = vand.u32 %v4715, 4294901760
        %v4717 = vsub.f32 %v4715, %v4716
        %v4718 = vand.u32 %v4717, 4294901760
        %4719 = vmatpush1.msra.mxu0 %v4718
        %4720 = vmatprep.subr.mxu0 0.0
        %v4721 = vand.u32 %v4506, 4294901760
        %v4722 = vsub.f32 %v4506, %v4721
        %v4723 = vand.u32 %v4722, 4294901760
        %v4724 = vsub.f32 %v4722, %v4723
        %v4725 = vand.u32 %v4724, 4294901760
        %4726 = vmatpush1.msra.mxu0 %v4725
        %4727 = vmatprep.subr.mxu0 0.0
        %v4728 = vand.u32 %v4505, 4294901760
        %v4729 = vsub.f32 %v4505, %v4728
        %v4730 = vand.u32 %v4729, 4294901760
        %v4731 = vsub.f32 %v4729, %v4730
        %v4732 = vand.u32 %v4731, 4294901760
        %4733 = vmatpush1.msra.mxu0 %v4732
        %4734 = vmatprep.subr.mxu0 0.0
        %4735 = vmatpush2.msra.mxu0 0.0
        %4736 = vmatprep.subr.mxu0 0.0
        %4737 = vmatpush2.msra.mxu0 0.0
        %4738 = vmatprep.subr.mxu0 0.0
        %4739 = vmatpush2.msra.mxu0 0.0
        %4740 = vmatprep.subr.mxu0 0.0
        %4741 = vmatpush2.msra.mxu0 0.0
        %4742 = vmatprep.subr.mxu0 0.0
        %4743 = vmatpush2.msra.mxu0 0.0
        %4744 = vmatprep.subr.mxu0 0.0
        %4745 = vmatpush2.msra.mxu0 0.0
        %4746 = vmatprep.subr.mxu0 0.0
        %4747 = vmatpush2.msra.mxu0 0.0
        %4748 = vmatprep.subr.mxu0 0.0
        %4749 = vmatpush2.msra.mxu0 0.0
        %4750 = vmatprep.subr.mxu0 0.0
        %4751 = vmatpush2.msra.mxu0 0.0
        %4752 = vmatprep.subr.mxu0 0.0
        %4753 = vmatpush2.msra.mxu0 0.0
        %4754 = vmatprep.subr.mxu0 0.0
        %4755 = vmatpush2.msra.mxu0 0.0
        %4756 = vmatprep.subr.mxu0 0.0
        %4757 = vmatpush2.msra.mxu0 0.0
        %4758 = vmatprep.subr.mxu0 0.0
        %4759 = vmatpush2.msra.mxu0 0.0
        %4760 = vmatprep.subr.mxu0 0.0
        %4761 = vmatpush2.msra.mxu0 0.0
        %4762 = vmatprep.subr.mxu0 0.0
        %4763 = vmatpush2.msra.mxu0 0.0
        %4764 = vmatprep.subr.mxu0 0.0
        %4765 = vmatpush2.msra.mxu0 0.0
        %4766 = vmatprep.mubr.f32.mxu0 0.0
        %v4767 = vand.u32 %v4479, 4294901760
        %4768 = vmatmul.mubr.f32.gmra.mxu0 %v4767
        %v4769 = vpop.f32.mrf.mxu0
        %v4770 = vadd.f32 %v4609, %v4769
        %v4771 = vpop.f32.mrf.mxu0
        %4772 = vmatprep.mubr.f32.mxu0 0.0
        %v4773 = vand.u32 %v4480, 4294901760
        %4774 = vmatmul.mubr.f32.gmra.mxu0 %v4773
        %v4775 = vpop.f32.mrf.mxu0
        %v4776 = vadd.f32 %v4619, %v4775
        %v4777 = vpop.f32.mrf.mxu0
        %4778 = vdwg.mxu0
        %4779 = vmatprep.subr.mxu0 0.0
        %v4780 = vand.u32 %v4520, 4294901760
        %v4781 = vsub.f32 %v4520, %v4780
        %4782 = vmatpush1.msra.mxu0 %v4781
        %4783 = vmatprep.subr.mxu0 0.0
        %v4784 = vand.u32 %v4519, 4294901760
        %v4785 = vsub.f32 %v4519, %v4784
        %4786 = vmatpush1.msra.mxu0 %v4785
        %4787 = vmatprep.subr.mxu0 0.0
        %v4788 = vand.u32 %v4518, 4294901760
        %v4789 = vsub.f32 %v4518, %v4788
        %4790 = vmatpush1.msra.mxu0 %v4789
        %4791 = vmatprep.subr.mxu0 0.0
        %v4792 = vand.u32 %v4517, 4294901760
        %v4793 = vsub.f32 %v4517, %v4792
        %4794 = vmatpush1.msra.mxu0 %v4793
        %4795 = vmatprep.subr.mxu0 0.0
        %v4796 = vand.u32 %v4516, 4294901760
        %v4797 = vsub.f32 %v4516, %v4796
        %4798 = vmatpush1.msra.mxu0 %v4797
        %4799 = vmatprep.subr.mxu0 0.0
        %v4800 = vand.u32 %v4515, 4294901760
        %v4801 = vsub.f32 %v4515, %v4800
        %4802 = vmatpush1.msra.mxu0 %v4801
        %4803 = vmatprep.subr.mxu0 0.0
        %v4804 = vand.u32 %v4514, 4294901760
        %v4805 = vsub.f32 %v4514, %v4804
        %4806 = vmatpush1.msra.mxu0 %v4805
        %4807 = vmatprep.subr.mxu0 0.0
        %v4808 = vand.u32 %v4513, 4294901760
        %v4809 = vsub.f32 %v4513, %v4808
        %4810 = vmatpush1.msra.mxu0 %v4809
        %4811 = vmatprep.subr.mxu0 0.0
        %v4812 = vand.u32 %v4512, 4294901760
        %v4813 = vsub.f32 %v4512, %v4812
        %4814 = vmatpush1.msra.mxu0 %v4813
        %4815 = vmatprep.subr.mxu0 0.0
        %v4816 = vand.u32 %v4511, 4294901760
        %v4817 = vsub.f32 %v4511, %v4816
        %4818 = vmatpush1.msra.mxu0 %v4817
        %4819 = vmatprep.subr.mxu0 0.0
        %v4820 = vand.u32 %v4510, 4294901760
        %v4821 = vsub.f32 %v4510, %v4820
        %4822 = vmatpush1.msra.mxu0 %v4821
        %4823 = vmatprep.subr.mxu0 0.0
        %v4824 = vand.u32 %v4509, 4294901760
        %v4825 = vsub.f32 %v4509, %v4824
        %4826 = vmatpush1.msra.mxu0 %v4825
        %4827 = vmatprep.subr.mxu0 0.0
        %v4828 = vand.u32 %v4508, 4294901760
        %v4829 = vsub.f32 %v4508, %v4828
        %4830 = vmatpush1.msra.mxu0 %v4829
        %4831 = vmatprep.subr.mxu0 0.0
        %v4832 = vand.u32 %v4507, 4294901760
        %v4833 = vsub.f32 %v4507, %v4832
        %4834 = vmatpush1.msra.mxu0 %v4833
        %4835 = vmatprep.subr.mxu0 0.0
        %v4836 = vand.u32 %v4506, 4294901760
        %v4837 = vsub.f32 %v4506, %v4836
        %4838 = vmatpush1.msra.mxu0 %v4837
        %4839 = vmatprep.subr.mxu0 0.0
        %v4840 = vand.u32 %v4505, 4294901760
        %v4841 = vsub.f32 %v4505, %v4840
        %4842 = vmatpush1.msra.mxu0 %v4841
        %4843 = vmatprep.subr.mxu0 0.0
        %4844 = vmatpush2.msra.mxu0 0.0
        %4845 = vmatprep.subr.mxu0 0.0
        %4846 = vmatpush2.msra.mxu0 0.0
        %4847 = vmatprep.subr.mxu0 0.0
        %4848 = vmatpush2.msra.mxu0 0.0
        %4849 = vmatprep.subr.mxu0 0.0
        %4850 = vmatpush2.msra.mxu0 0.0
        %4851 = vmatprep.subr.mxu0 0.0
        %4852 = vmatpush2.msra.mxu0 0.0
        %4853 = vmatprep.subr.mxu0 0.0
        %4854 = vmatpush2.msra.mxu0 0.0
        %4855 = vmatprep.subr.mxu0 0.0
        %4856 = vmatpush2.msra.mxu0 0.0
        %4857 = vmatprep.subr.mxu0 0.0
        %4858 = vmatpush2.msra.mxu0 0.0
        %4859 = vmatprep.subr.mxu0 0.0
        %4860 = vmatpush2.msra.mxu0 0.0
        %4861 = vmatprep.subr.mxu0 0.0
        %4862 = vmatpush2.msra.mxu0 0.0
        %4863 = vmatprep.subr.mxu0 0.0
        %4864 = vmatpush2.msra.mxu0 0.0
        %4865 = vmatprep.subr.mxu0 0.0
        %4866 = vmatpush2.msra.mxu0 0.0
        %4867 = vmatprep.subr.mxu0 0.0
        %4868 = vmatpush2.msra.mxu0 0.0
        %4869 = vmatprep.subr.mxu0 0.0
        %4870 = vmatpush2.msra.mxu0 0.0
        %4871 = vmatprep.subr.mxu0 0.0
        %4872 = vmatpush2.msra.mxu0 0.0
        %4873 = vmatprep.subr.mxu0 0.0
        %4874 = vmatpush2.msra.mxu0 0.0
        %4875 = vmatprep.mubr.f32.mxu0 0.0
        %v4876 = vand.u32 %v4479, 4294901760
        %v4877 = vsub.f32 %v4479, %v4876
        %4878 = vmatmul.mubr.f32.gmra.mxu0 %v4877
        %v4879 = vpop.f32.mrf.mxu0
        %v4880 = vadd.f32 %v4770, %v4879
        %v4881 = vpop.f32.mrf.mxu0
        %4882 = vmatprep.mubr.f32.mxu0 0.0
        %v4883 = vand.u32 %v4480, 4294901760
        %v4884 = vsub.f32 %v4480, %v4883
        %4885 = vmatmul.mubr.f32.gmra.mxu0 %v4884
        %v4886 = vpop.f32.mrf.mxu0
        %v4887 = vadd.f32 %v4776, %v4886
        %v4888 = vpop.f32.mrf.mxu0
        %4889 = vdwg.mxu0
        %4890 = vmatprep.subr.mxu0 0.0
        %v4891 = vand.u32 %v4520, 4294901760
        %4892 = vmatpush1.msra.mxu0 %v4891
        %4893 = vmatprep.subr.mxu0 0.0
        %v4894 = vand.u32 %v4519, 4294901760
        %4895 = vmatpush1.msra.mxu0 %v4894
        %4896 = vmatprep.subr.mxu0 0.0
        %v4897 = vand.u32 %v4518, 4294901760
        %4898 = vmatpush1.msra.mxu0 %v4897
        %4899 = vmatprep.subr.mxu0 0.0
        %v4900 = vand.u32 %v4517, 4294901760
        %4901 = vmatpush1.msra.mxu0 %v4900
        %4902 = vmatprep.subr.mxu0 0.0
        %v4903 = vand.u32 %v4516, 4294901760
        %4904 = vmatpush1.msra.mxu0 %v4903
        %4905 = vmatprep.subr.mxu0 0.0
        %v4906 = vand.u32 %v4515, 4294901760
        %4907 = vmatpush1.msra.mxu0 %v4906
        %4908 = vmatprep.subr.mxu0 0.0
        %v4909 = vand.u32 %v4514, 4294901760
        %4910 = vmatpush1.msra.mxu0 %v4909
        %4911 = vmatprep.subr.mxu0 0.0
        %v4912 = vand.u32 %v4513, 4294901760
        %4913 = vmatpush1.msra.mxu0 %v4912
        %4914 = vmatprep.subr.mxu0 0.0
        %v4915 = vand.u32 %v4512, 4294901760
        %4916 = vmatpush1.msra.mxu0 %v4915
        %4917 = vmatprep.subr.mxu0 0.0
        %v4918 = vand.u32 %v4511, 4294901760
        %4919 = vmatpush1.msra.mxu0 %v4918
        %4920 = vmatprep.subr.mxu0 0.0
        %v4921 = vand.u32 %v4510, 4294901760
        %4922 = vmatpush1.msra.mxu0 %v4921
        %4923 = vmatprep.subr.mxu0 0.0
        %v4924 = vand.u32 %v4509, 4294901760
        %4925 = vmatpush1.msra.mxu0 %v4924
        %4926 = vmatprep.subr.mxu0 0.0
        %v4927 = vand.u32 %v4508, 4294901760
        %4928 = vmatpush1.msra.mxu0 %v4927
        %4929 = vmatprep.subr.mxu0 0.0
        %v4930 = vand.u32 %v4507, 4294901760
        %4931 = vmatpush1.msra.mxu0 %v4930
        %4932 = vmatprep.subr.mxu0 0.0
        %v4933 = vand.u32 %v4506, 4294901760
        %4934 = vmatpush1.msra.mxu0 %v4933
        %4935 = vmatprep.subr.mxu0 0.0
        %v4936 = vand.u32 %v4505, 4294901760
        %4937 = vmatpush1.msra.mxu0 %v4936
        %4938 = vmatprep.subr.mxu0 0.0
        %4939 = vmatpush2.msra.mxu0 0.0
        %4940 = vmatprep.subr.mxu0 0.0
        %4941 = vmatpush2.msra.mxu0 0.0
        %4942 = vmatprep.subr.mxu0 0.0
        %4943 = vmatpush2.msra.mxu0 0.0
        %4944 = vmatprep.subr.mxu0 0.0
        %4945 = vmatpush2.msra.mxu0 0.0
        %4946 = vmatprep.subr.mxu0 0.0
        %4947 = vmatpush2.msra.mxu0 0.0
        %4948 = vmatprep.subr.mxu0 0.0
        %4949 = vmatpush2.msra.mxu0 0.0
        %4950 = vmatprep.subr.mxu0 0.0
        %4951 = vmatpush2.msra.mxu0 0.0
        %4952 = vmatprep.subr.mxu0 0.0
        %4953 = vmatpush2.msra.mxu0 0.0
        %4954 = vmatprep.subr.mxu0 0.0
        %4955 = vmatpush2.msra.mxu0 0.0
        %4956 = vmatprep.subr.mxu0 0.0
        %4957 = vmatpush2.msra.mxu0 0.0
        %4958 = vmatprep.subr.mxu0 0.0
        %4959 = vmatpush2.msra.mxu0 0.0
        %4960 = vmatprep.subr.mxu0 0.0
        %4961 = vmatpush2.msra.mxu0 0.0
        %4962 = vmatprep.subr.mxu0 0.0
        %4963 = vmatpush2.msra.mxu0 0.0
        %4964 = vmatprep.subr.mxu0 0.0
        %4965 = vmatpush2.msra.mxu0 0.0
        %4966 = vmatprep.subr.mxu0 0.0
        %4967 = vmatpush2.msra.mxu0 0.0
        %4968 = vmatprep.subr.mxu0 0.0
        %4969 = vmatpush2.msra.mxu0 0.0
        %4970 = vmatprep.mubr.f32.mxu0 0.0
        %v4971 = vand.u32 %v4479, 4294901760
        %v4972 = vsub.f32 %v4479, %v4971
        %v4973 = vand.u32 %v4972, 4294901760
        %4974 = vmatmul.mubr.f32.gmra.mxu0 %v4973
        %v4975 = vpop.f32.mrf.mxu0
        %v4976 = vadd.f32 %v4880, %v4975
        %v4977 = vpop.f32.mrf.mxu0
        %4978 = vmatprep.mubr.f32.mxu0 0.0
        %v4979 = vand.u32 %v4480, 4294901760
        %v4980 = vsub.f32 %v4480, %v4979
        %v4981 = vand.u32 %v4980, 4294901760
        %4982 = vmatmul.mubr.f32.gmra.mxu0 %v4981
        %v4983 = vpop.f32.mrf.mxu0
        %v4984 = vadd.f32 %v4887, %v4983
        %v4985 = vpop.f32.mrf.mxu0
        %4986 = vdwg.mxu0
        %4987 = vmatprep.subr.mxu0 0.0
        %v4988 = vand.u32 %v4520, 4294901760
        %v4989 = vsub.f32 %v4520, %v4988
        %v4990 = vand.u32 %v4989, 4294901760
        %4991 = vmatpush1.msra.mxu0 %v4990
        %4992 = vmatprep.subr.mxu0 0.0
        %v4993 = vand.u32 %v4519, 4294901760
        %v4994 = vsub.f32 %v4519, %v4993
        %v4995 = vand.u32 %v4994, 4294901760
        %4996 = vmatpush1.msra.mxu0 %v4995
        %4997 = vmatprep.subr.mxu0 0.0
        %v4998 = vand.u32 %v4518, 4294901760
        %v4999 = vsub.f32 %v4518, %v4998
        %v5000 = vand.u32 %v4999, 4294901760
        %5001 = vmatpush1.msra.mxu0 %v5000
        %5002 = vmatprep.subr.mxu0 0.0
        %v5003 = vand.u32 %v4517, 4294901760
        %v5004 = vsub.f32 %v4517, %v5003
        %v5005 = vand.u32 %v5004, 4294901760
        %5006 = vmatpush1.msra.mxu0 %v5005
        %5007 = vmatprep.subr.mxu0 0.0
        %v5008 = vand.u32 %v4516, 4294901760
        %v5009 = vsub.f32 %v4516, %v5008
        %v5010 = vand.u32 %v5009, 4294901760
        %5011 = vmatpush1.msra.mxu0 %v5010
        %5012 = vmatprep.subr.mxu0 0.0
        %v5013 = vand.u32 %v4515, 4294901760
        %v5014 = vsub.f32 %v4515, %v5013
        %v5015 = vand.u32 %v5014, 4294901760
        %5016 = vmatpush1.msra.mxu0 %v5015
        %5017 = vmatprep.subr.mxu0 0.0
        %v5018 = vand.u32 %v4514, 4294901760
        %v5019 = vsub.f32 %v4514, %v5018
        %v5020 = vand.u32 %v5019, 4294901760
        %5021 = vmatpush1.msra.mxu0 %v5020
        %5022 = vmatprep.subr.mxu0 0.0
        %v5023 = vand.u32 %v4513, 4294901760
        %v5024 = vsub.f32 %v4513, %v5023
        %v5025 = vand.u32 %v5024, 4294901760
        %5026 = vmatpush1.msra.mxu0 %v5025
        %5027 = vmatprep.subr.mxu0 0.0
        %v5028 = vand.u32 %v4512, 4294901760
        %v5029 = vsub.f32 %v4512, %v5028
        %v5030 = vand.u32 %v5029, 4294901760
        %5031 = vmatpush1.msra.mxu0 %v5030
        %5032 = vmatprep.subr.mxu0 0.0
        %v5033 = vand.u32 %v4511, 4294901760
        %v5034 = vsub.f32 %v4511, %v5033
        %v5035 = vand.u32 %v5034, 4294901760
        %5036 = vmatpush1.msra.mxu0 %v5035
        %5037 = vmatprep.subr.mxu0 0.0
        %v5038 = vand.u32 %v4510, 4294901760
        %v5039 = vsub.f32 %v4510, %v5038
        %v5040 = vand.u32 %v5039, 4294901760
        %5041 = vmatpush1.msra.mxu0 %v5040
        %5042 = vmatprep.subr.mxu0 0.0
        %v5043 = vand.u32 %v4509, 4294901760
        %v5044 = vsub.f32 %v4509, %v5043
        %v5045 = vand.u32 %v5044, 4294901760
        %5046 = vmatpush1.msra.mxu0 %v5045
        %5047 = vmatprep.subr.mxu0 0.0
        %v5048 = vand.u32 %v4508, 4294901760
        %v5049 = vsub.f32 %v4508, %v5048
        %v5050 = vand.u32 %v5049, 4294901760
        %5051 = vmatpush1.msra.mxu0 %v5050
        %5052 = vmatprep.subr.mxu0 0.0
        %v5053 = vand.u32 %v4507, 4294901760
        %v5054 = vsub.f32 %v4507, %v5053
        %v5055 = vand.u32 %v5054, 4294901760
        %5056 = vmatpush1.msra.mxu0 %v5055
        %5057 = vmatprep.subr.mxu0 0.0
        %v5058 = vand.u32 %v4506, 4294901760
        %v5059 = vsub.f32 %v4506, %v5058
        %v5060 = vand.u32 %v5059, 4294901760
        %5061 = vmatpush1.msra.mxu0 %v5060
        %5062 = vmatprep.subr.mxu0 0.0
        %v5063 = vand.u32 %v4505, 4294901760
        %v5064 = vsub.f32 %v4505, %v5063
        %v5065 = vand.u32 %v5064, 4294901760
        %5066 = vmatpush1.msra.mxu0 %v5065
        %5067 = vmatprep.subr.mxu0 0.0
        %5068 = vmatpush2.msra.mxu0 0.0
        %5069 = vmatprep.subr.mxu0 0.0
        %5070 = vmatpush2.msra.mxu0 0.0
        %5071 = vmatprep.subr.mxu0 0.0
        %5072 = vmatpush2.msra.mxu0 0.0
        %5073 = vmatprep.subr.mxu0 0.0
        %5074 = vmatpush2.msra.mxu0 0.0
        %5075 = vmatprep.subr.mxu0 0.0
        %5076 = vmatpush2.msra.mxu0 0.0
        %5077 = vmatprep.subr.mxu0 0.0
        %5078 = vmatpush2.msra.mxu0 0.0
        %5079 = vmatprep.subr.mxu0 0.0
        %5080 = vmatpush2.msra.mxu0 0.0
        %5081 = vmatprep.subr.mxu0 0.0
        %5082 = vmatpush2.msra.mxu0 0.0
        %5083 = vmatprep.subr.mxu0 0.0
        %5084 = vmatpush2.msra.mxu0 0.0
        %5085 = vmatprep.subr.mxu0 0.0
        %5086 = vmatpush2.msra.mxu0 0.0
        %5087 = vmatprep.subr.mxu0 0.0
        %5088 = vmatpush2.msra.mxu0 0.0
        %5089 = vmatprep.subr.mxu0 0.0
        %5090 = vmatpush2.msra.mxu0 0.0
        %5091 = vmatprep.subr.mxu0 0.0
        %5092 = vmatpush2.msra.mxu0 0.0
        %5093 = vmatprep.subr.mxu0 0.0
        %5094 = vmatpush2.msra.mxu0 0.0
        %5095 = vmatprep.subr.mxu0 0.0
        %5096 = vmatpush2.msra.mxu0 0.0
        %5097 = vmatprep.subr.mxu0 0.0
        %5098 = vmatpush2.msra.mxu0 0.0
        %5099 = vmatprep.mubr.f32.mxu0 0.0
        %v5100 = vand.u32 %v4479, 4294901760
        %5101 = vmatmul.mubr.f32.gmra.mxu0 %v5100
        %v5102 = vpop.f32.mrf.mxu0
        %v5103 = vadd.f32 %v4976, %v5102
        %v5104 = vpop.f32.mrf.mxu0
        %5105 = vmatprep.mubr.f32.mxu0 0.0
        %v5106 = vand.u32 %v4480, 4294901760
        %5107 = vmatmul.mubr.f32.gmra.mxu0 %v5106
        %v5108 = vpop.f32.mrf.mxu0
        %v5109 = vadd.f32 %v4984, %v5108
        %v5110 = vpop.f32.mrf.mxu0
        %5111 = vdwg.mxu0
        %5112 = vmatprep.subr.mxu0 0.0
        %v5113 = vand.u32 %v4520, 4294901760
        %5114 = vmatpush1.msra.mxu0 %v5113
        %5115 = vmatprep.subr.mxu0 0.0
        %v5116 = vand.u32 %v4519, 4294901760
        %5117 = vmatpush1.msra.mxu0 %v5116
        %5118 = vmatprep.subr.mxu0 0.0
        %v5119 = vand.u32 %v4518, 4294901760
        %5120 = vmatpush1.msra.mxu0 %v5119
        %5121 = vmatprep.subr.mxu0 0.0
        %v5122 = vand.u32 %v4517, 4294901760
        %5123 = vmatpush1.msra.mxu0 %v5122
        %5124 = vmatprep.subr.mxu0 0.0
        %v5125 = vand.u32 %v4516, 4294901760
        %5126 = vmatpush1.msra.mxu0 %v5125
        %5127 = vmatprep.subr.mxu0 0.0
        %v5128 = vand.u32 %v4515, 4294901760
        %5129 = vmatpush1.msra.mxu0 %v5128
        %5130 = vmatprep.subr.mxu0 0.0
        %v5131 = vand.u32 %v4514, 4294901760
        %5132 = vmatpush1.msra.mxu0 %v5131
        %5133 = vmatprep.subr.mxu0 0.0
        %v5134 = vand.u32 %v4513, 4294901760
        %5135 = vmatpush1.msra.mxu0 %v5134
        %5136 = vmatprep.subr.mxu0 0.0
        %v5137 = vand.u32 %v4512, 4294901760
        %5138 = vmatpush1.msra.mxu0 %v5137
        %5139 = vmatprep.subr.mxu0 0.0
        %v5140 = vand.u32 %v4511, 4294901760
        %5141 = vmatpush1.msra.mxu0 %v5140
        %5142 = vmatprep.subr.mxu0 0.0
        %v5143 = vand.u32 %v4510, 4294901760
        %5144 = vmatpush1.msra.mxu0 %v5143
        %5145 = vmatprep.subr.mxu0 0.0
        %v5146 = vand.u32 %v4509, 4294901760
        %5147 = vmatpush1.msra.mxu0 %v5146
        %5148 = vmatprep.subr.mxu0 0.0
        %v5149 = vand.u32 %v4508, 4294901760
        %5150 = vmatpush1.msra.mxu0 %v5149
        %5151 = vmatprep.subr.mxu0 0.0
        %v5152 = vand.u32 %v4507, 4294901760
        %5153 = vmatpush1.msra.mxu0 %v5152
        %5154 = vmatprep.subr.mxu0 0.0
        %v5155 = vand.u32 %v4506, 4294901760
        %5156 = vmatpush1.msra.mxu0 %v5155
        %5157 = vmatprep.subr.mxu0 0.0
        %v5158 = vand.u32 %v4505, 4294901760
        %5159 = vmatpush1.msra.mxu0 %v5158
        %5160 = vmatprep.subr.mxu0 0.0
        %5161 = vmatpush2.msra.mxu0 0.0
        %5162 = vmatprep.subr.mxu0 0.0
        %5163 = vmatpush2.msra.mxu0 0.0
        %5164 = vmatprep.subr.mxu0 0.0
        %5165 = vmatpush2.msra.mxu0 0.0
        %5166 = vmatprep.subr.mxu0 0.0
        %5167 = vmatpush2.msra.mxu0 0.0
        %5168 = vmatprep.subr.mxu0 0.0
        %5169 = vmatpush2.msra.mxu0 0.0
        %5170 = vmatprep.subr.mxu0 0.0
        %5171 = vmatpush2.msra.mxu0 0.0
        %5172 = vmatprep.subr.mxu0 0.0
        %5173 = vmatpush2.msra.mxu0 0.0
        %5174 = vmatprep.subr.mxu0 0.0
        %5175 = vmatpush2.msra.mxu0 0.0
        %5176 = vmatprep.subr.mxu0 0.0
        %5177 = vmatpush2.msra.mxu0 0.0
        %5178 = vmatprep.subr.mxu0 0.0
        %5179 = vmatpush2.msra.mxu0 0.0
        %5180 = vmatprep.subr.mxu0 0.0
        %5181 = vmatpush2.msra.mxu0 0.0
        %5182 = vmatprep.subr.mxu0 0.0
        %5183 = vmatpush2.msra.mxu0 0.0
        %5184 = vmatprep.subr.mxu0 0.0
        %5185 = vmatpush2.msra.mxu0 0.0
        %5186 = vmatprep.subr.mxu0 0.0
        %5187 = vmatpush2.msra.mxu0 0.0
        %5188 = vmatprep.subr.mxu0 0.0
        %5189 = vmatpush2.msra.mxu0 0.0
        %5190 = vmatprep.subr.mxu0 0.0
        %5191 = vmatpush2.msra.mxu0 0.0
        %5192 = vmatprep.mubr.f32.mxu0 0.0
        %v5193 = vand.u32 %v4479, 4294901760
        %5194 = vmatmul.mubr.f32.gmra.mxu0 %v5193
        %v5195 = vpop.f32.mrf.mxu0
        %v5196 = vadd.f32 %v5103, %v5195
        %v5197 = vpop.f32.mrf.mxu0
        %5198 = vmatprep.mubr.f32.mxu0 0.0
        %v5199 = vand.u32 %v4480, 4294901760
        %5200 = vmatmul.mubr.f32.gmra.mxu0 %v5199
        %v5201 = vpop.f32.mrf.mxu0
        %v5202 = vadd.f32 %v5109, %v5201
        %v5203 = vpop.f32.mrf.mxu0
        %5204 = vdwg.mxu0
        %5205 = vmatprep.subr.mxu0 0.0
        %v5206 = vand.u32 %v4503, 4294901760
        %5207 = vmatpush1.msra.mxu0 %v5206
        %5208 = vmatprep.subr.mxu0 0.0
        %v5209 = vand.u32 %v4502, 4294901760
        %5210 = vmatpush1.msra.mxu0 %v5209
        %5211 = vmatprep.subr.mxu0 0.0
        %v5212 = vand.u32 %v4501, 4294901760
        %5213 = vmatpush1.msra.mxu0 %v5212
        %5214 = vmatprep.subr.mxu0 0.0
        %v5215 = vand.u32 %v4500, 4294901760
        %5216 = vmatpush1.msra.mxu0 %v5215
        %5217 = vmatprep.subr.mxu0 0.0
        %v5218 = vand.u32 %v4499, 4294901760
        %5219 = vmatpush1.msra.mxu0 %v5218
        %5220 = vmatprep.subr.mxu0 0.0
        %v5221 = vand.u32 %v4498, 4294901760
        %5222 = vmatpush1.msra.mxu0 %v5221
        %5223 = vmatprep.subr.mxu0 0.0
        %v5224 = vand.u32 %v4497, 4294901760
        %5225 = vmatpush1.msra.mxu0 %v5224
        %5226 = vmatprep.subr.mxu0 0.0
        %v5227 = vand.u32 %v4496, 4294901760
        %5228 = vmatpush1.msra.mxu0 %v5227
        %5229 = vmatprep.subr.mxu0 0.0
        %v5230 = vand.u32 %v4495, 4294901760
        %5231 = vmatpush1.msra.mxu0 %v5230
        %5232 = vmatprep.subr.mxu0 0.0
        %v5233 = vand.u32 %v4494, 4294901760
        %5234 = vmatpush1.msra.mxu0 %v5233
        %5235 = vmatprep.subr.mxu0 0.0
        %v5236 = vand.u32 %v4493, 4294901760
        %5237 = vmatpush1.msra.mxu0 %v5236
        %5238 = vmatprep.subr.mxu0 0.0
        %v5239 = vand.u32 %v4492, 4294901760
        %5240 = vmatpush1.msra.mxu0 %v5239
        %5241 = vmatprep.subr.mxu0 0.0
        %v5242 = vand.u32 %v4491, 4294901760
        %5243 = vmatpush1.msra.mxu0 %v5242
        %5244 = vmatprep.subr.mxu0 0.0
        %v5245 = vand.u32 %v4490, 4294901760
        %5246 = vmatpush1.msra.mxu0 %v5245
        %5247 = vmatprep.subr.mxu0 0.0
        %v5248 = vand.u32 %v4489, 4294901760
        %5249 = vmatpush1.msra.mxu0 %v5248
        %5250 = vmatprep.subr.mxu0 0.0
        %v5251 = vand.u32 %v4488, 4294901760
        %5252 = vmatpush1.msra.mxu0 %v5251
        %5253 = vmatprep.subr.mxu0 0.0
        %5254 = vmatpush2.msra.mxu0 0.0
        %5255 = vmatprep.subr.mxu0 0.0
        %5256 = vmatpush2.msra.mxu0 0.0
        %5257 = vmatprep.subr.mxu0 0.0
        %5258 = vmatpush2.msra.mxu0 0.0
        %5259 = vmatprep.subr.mxu0 0.0
        %5260 = vmatpush2.msra.mxu0 0.0
        %5261 = vmatprep.subr.mxu0 0.0
        %5262 = vmatpush2.msra.mxu0 0.0
        %5263 = vmatprep.subr.mxu0 0.0
        %5264 = vmatpush2.msra.mxu0 0.0
        %5265 = vmatprep.subr.mxu0 0.0
        %5266 = vmatpush2.msra.mxu0 0.0
        %5267 = vmatprep.subr.mxu0 0.0
        %5268 = vmatpush2.msra.mxu0 0.0
        %5269 = vmatprep.subr.mxu0 0.0
        %5270 = vmatpush2.msra.mxu0 0.0
        %5271 = vmatprep.subr.mxu0 0.0
        %5272 = vmatpush2.msra.mxu0 0.0
        %5273 = vmatprep.subr.mxu0 0.0
        %5274 = vmatpush2.msra.mxu0 0.0
        %5275 = vmatprep.subr.mxu0 0.0
        %5276 = vmatpush2.msra.mxu0 0.0
        %5277 = vmatprep.subr.mxu0 0.0
        %5278 = vmatpush2.msra.mxu0 0.0
        %5279 = vmatprep.subr.mxu0 0.0
        %5280 = vmatpush2.msra.mxu0 0.0
        %5281 = vmatprep.subr.mxu0 0.0
        %5282 = vmatpush2.msra.mxu0 0.0
        %5283 = vmatprep.subr.mxu0 0.0
        %5284 = vmatpush2.msra.mxu0 0.0
        %5285 = vmatprep.mubr.f32.mxu0 0.0
        %v5286 = vand.u32 %v4485, 4294901760
        %v5287 = vsub.f32 %v4485, %v5286
        %v5288 = vand.u32 %v5287, 4294901760
        %v5289 = vsub.f32 %v5287, %v5288
        %v5290 = vand.u32 %v5289, 4294901760
        %5291 = vmatmul.mubr.f32.gmra.mxu0 %v5290
        %v5292 = vpop.f32.mrf.mxu0
        %v5293 = vadd.f32 %v5196, %v5292
        %v5294 = vpop.f32.mrf.mxu0
        %5295 = vmatprep.mubr.f32.mxu0 0.0
        %v5296 = vand.u32 %v4486, 4294901760
        %v5297 = vsub.f32 %v4486, %v5296
        %v5298 = vand.u32 %v5297, 4294901760
        %v5299 = vsub.f32 %v5297, %v5298
        %v5300 = vand.u32 %v5299, 4294901760
        %5301 = vmatmul.mubr.f32.gmra.mxu0 %v5300
        %v5302 = vpop.f32.mrf.mxu0
        %v5303 = vadd.f32 %v5202, %v5302
        %v5304 = vpop.f32.mrf.mxu0
        %5305 = vdwg.mxu0
        %5306 = vmatprep.subr.mxu0 0.0
        %v5307 = vand.u32 %v4503, 4294901760
        %v5308 = vsub.f32 %v4503, %v5307
        %v5309 = vand.u32 %v5308, 4294901760
        %v5310 = vsub.f32 %v5308, %v5309
        %v5311 = vand.u32 %v5310, 4294901760
        %5312 = vmatpush1.msra.mxu0 %v5311
        %5313 = vmatprep.subr.mxu0 0.0
        %v5314 = vand.u32 %v4502, 4294901760
        %v5315 = vsub.f32 %v4502, %v5314
        %v5316 = vand.u32 %v5315, 4294901760
        %v5317 = vsub.f32 %v5315, %v5316
        %v5318 = vand.u32 %v5317, 4294901760
        %5319 = vmatpush1.msra.mxu0 %v5318
        %5320 = vmatprep.subr.mxu0 0.0
        %v5321 = vand.u32 %v4501, 4294901760
        %v5322 = vsub.f32 %v4501, %v5321
        %v5323 = vand.u32 %v5322, 4294901760
        %v5324 = vsub.f32 %v5322, %v5323
        %v5325 = vand.u32 %v5324, 4294901760
        %5326 = vmatpush1.msra.mxu0 %v5325
        %5327 = vmatprep.subr.mxu0 0.0
        %v5328 = vand.u32 %v4500, 4294901760
        %v5329 = vsub.f32 %v4500, %v5328
        %v5330 = vand.u32 %v5329, 4294901760
        %v5331 = vsub.f32 %v5329, %v5330
        %v5332 = vand.u32 %v5331, 4294901760
        %5333 = vmatpush1.msra.mxu0 %v5332
        %5334 = vmatprep.subr.mxu0 0.0
        %v5335 = vand.u32 %v4499, 4294901760
        %v5336 = vsub.f32 %v4499, %v5335
        %v5337 = vand.u32 %v5336, 4294901760
        %v5338 = vsub.f32 %v5336, %v5337
        %v5339 = vand.u32 %v5338, 4294901760
        %5340 = vmatpush1.msra.mxu0 %v5339
        %5341 = vmatprep.subr.mxu0 0.0
        %v5342 = vand.u32 %v4498, 4294901760
        %v5343 = vsub.f32 %v4498, %v5342
        %v5344 = vand.u32 %v5343, 4294901760
        %v5345 = vsub.f32 %v5343, %v5344
        %v5346 = vand.u32 %v5345, 4294901760
        %5347 = vmatpush1.msra.mxu0 %v5346
        %5348 = vmatprep.subr.mxu0 0.0
        %v5349 = vand.u32 %v4497, 4294901760
        %v5350 = vsub.f32 %v4497, %v5349
        %v5351 = vand.u32 %v5350, 4294901760
        %v5352 = vsub.f32 %v5350, %v5351
        %v5353 = vand.u32 %v5352, 4294901760
        %5354 = vmatpush1.msra.mxu0 %v5353
        %5355 = vmatprep.subr.mxu0 0.0
        %v5356 = vand.u32 %v4496, 4294901760
        %v5357 = vsub.f32 %v4496, %v5356
        %v5358 = vand.u32 %v5357, 4294901760
        %v5359 = vsub.f32 %v5357, %v5358
        %v5360 = vand.u32 %v5359, 4294901760
        %5361 = vmatpush1.msra.mxu0 %v5360
        %5362 = vmatprep.subr.mxu0 0.0
        %v5363 = vand.u32 %v4495, 4294901760
        %v5364 = vsub.f32 %v4495, %v5363
        %v5365 = vand.u32 %v5364, 4294901760
        %v5366 = vsub.f32 %v5364, %v5365
        %v5367 = vand.u32 %v5366, 4294901760
        %5368 = vmatpush1.msra.mxu0 %v5367
        %5369 = vmatprep.subr.mxu0 0.0
        %v5370 = vand.u32 %v4494, 4294901760
        %v5371 = vsub.f32 %v4494, %v5370
        %v5372 = vand.u32 %v5371, 4294901760
        %v5373 = vsub.f32 %v5371, %v5372
        %v5374 = vand.u32 %v5373, 4294901760
        %5375 = vmatpush1.msra.mxu0 %v5374
        %5376 = vmatprep.subr.mxu0 0.0
        %v5377 = vand.u32 %v4493, 4294901760
        %v5378 = vsub.f32 %v4493, %v5377
        %v5379 = vand.u32 %v5378, 4294901760
        %v5380 = vsub.f32 %v5378, %v5379
        %v5381 = vand.u32 %v5380, 4294901760
        %5382 = vmatpush1.msra.mxu0 %v5381
        %5383 = vmatprep.subr.mxu0 0.0
        %v5384 = vand.u32 %v4492, 4294901760
        %v5385 = vsub.f32 %v4492, %v5384
        %v5386 = vand.u32 %v5385, 4294901760
        %v5387 = vsub.f32 %v5385, %v5386
        %v5388 = vand.u32 %v5387, 4294901760
        %5389 = vmatpush1.msra.mxu0 %v5388
        %5390 = vmatprep.subr.mxu0 0.0
        %v5391 = vand.u32 %v4491, 4294901760
        %v5392 = vsub.f32 %v4491, %v5391
        %v5393 = vand.u32 %v5392, 4294901760
        %v5394 = vsub.f32 %v5392, %v5393
        %v5395 = vand.u32 %v5394, 4294901760
        %5396 = vmatpush1.msra.mxu0 %v5395
        %5397 = vmatprep.subr.mxu0 0.0
        %v5398 = vand.u32 %v4490, 4294901760
        %v5399 = vsub.f32 %v4490, %v5398
        %v5400 = vand.u32 %v5399, 4294901760
        %v5401 = vsub.f32 %v5399, %v5400
        %v5402 = vand.u32 %v5401, 4294901760
        %5403 = vmatpush1.msra.mxu0 %v5402
        %5404 = vmatprep.subr.mxu0 0.0
        %v5405 = vand.u32 %v4489, 4294901760
        %v5406 = vsub.f32 %v4489, %v5405
        %v5407 = vand.u32 %v5406, 4294901760
        %v5408 = vsub.f32 %v5406, %v5407
        %v5409 = vand.u32 %v5408, 4294901760
        %5410 = vmatpush1.msra.mxu0 %v5409
        %5411 = vmatprep.subr.mxu0 0.0
        %v5412 = vand.u32 %v4488, 4294901760
        %v5413 = vsub.f32 %v4488, %v5412
        %v5414 = vand.u32 %v5413, 4294901760
        %v5415 = vsub.f32 %v5413, %v5414
        %v5416 = vand.u32 %v5415, 4294901760
        %5417 = vmatpush1.msra.mxu0 %v5416
        %5418 = vmatprep.subr.mxu0 0.0
        %5419 = vmatpush2.msra.mxu0 0.0
        %5420 = vmatprep.subr.mxu0 0.0
        %5421 = vmatpush2.msra.mxu0 0.0
        %5422 = vmatprep.subr.mxu0 0.0
        %5423 = vmatpush2.msra.mxu0 0.0
        %5424 = vmatprep.subr.mxu0 0.0
        %5425 = vmatpush2.msra.mxu0 0.0
        %5426 = vmatprep.subr.mxu0 0.0
        %5427 = vmatpush2.msra.mxu0 0.0
        %5428 = vmatprep.subr.mxu0 0.0
        %5429 = vmatpush2.msra.mxu0 0.0
        %5430 = vmatprep.subr.mxu0 0.0
        %5431 = vmatpush2.msra.mxu0 0.0
        %5432 = vmatprep.subr.mxu0 0.0
        %5433 = vmatpush2.msra.mxu0 0.0
        %5434 = vmatprep.subr.mxu0 0.0
        %5435 = vmatpush2.msra.mxu0 0.0
        %5436 = vmatprep.subr.mxu0 0.0
        %5437 = vmatpush2.msra.mxu0 0.0
        %5438 = vmatprep.subr.mxu0 0.0
        %5439 = vmatpush2.msra.mxu0 0.0
        %5440 = vmatprep.subr.mxu0 0.0
        %5441 = vmatpush2.msra.mxu0 0.0
        %5442 = vmatprep.subr.mxu0 0.0
        %5443 = vmatpush2.msra.mxu0 0.0
        %5444 = vmatprep.subr.mxu0 0.0
        %5445 = vmatpush2.msra.mxu0 0.0
        %5446 = vmatprep.subr.mxu0 0.0
        %5447 = vmatpush2.msra.mxu0 0.0
        %5448 = vmatprep.subr.mxu0 0.0
        %5449 = vmatpush2.msra.mxu0 0.0
        %5450 = vmatprep.mubr.f32.mxu0 0.0
        %v5451 = vand.u32 %v4485, 4294901760
        %5452 = vmatmul.mubr.f32.gmra.mxu0 %v5451
        %v5453 = vpop.f32.mrf.mxu0
        %v5454 = vadd.f32 %v5293, %v5453
        %v5455 = vpop.f32.mrf.mxu0
        %5456 = vmatprep.mubr.f32.mxu0 0.0
        %v5457 = vand.u32 %v4486, 4294901760
        %5458 = vmatmul.mubr.f32.gmra.mxu0 %v5457
        %v5459 = vpop.f32.mrf.mxu0
        %v5460 = vadd.f32 %v5303, %v5459
        %v5461 = vpop.f32.mrf.mxu0
        %5462 = vdwg.mxu0
        %5463 = vmatprep.subr.mxu0 0.0
        %v5464 = vand.u32 %v4503, 4294901760
        %v5465 = vsub.f32 %v4503, %v5464
        %5466 = vmatpush1.msra.mxu0 %v5465
        %5467 = vmatprep.subr.mxu0 0.0
        %v5468 = vand.u32 %v4502, 4294901760
        %v5469 = vsub.f32 %v4502, %v5468
        %5470 = vmatpush1.msra.mxu0 %v5469
        %5471 = vmatprep.subr.mxu0 0.0
        %v5472 = vand.u32 %v4501, 4294901760
        %v5473 = vsub.f32 %v4501, %v5472
        %5474 = vmatpush1.msra.mxu0 %v5473
        %5475 = vmatprep.subr.mxu0 0.0
        %v5476 = vand.u32 %v4500, 4294901760
        %v5477 = vsub.f32 %v4500, %v5476
        %5478 = vmatpush1.msra.mxu0 %v5477
        %5479 = vmatprep.subr.mxu0 0.0
        %v5480 = vand.u32 %v4499, 4294901760
        %v5481 = vsub.f32 %v4499, %v5480
        %5482 = vmatpush1.msra.mxu0 %v5481
        %5483 = vmatprep.subr.mxu0 0.0
        %v5484 = vand.u32 %v4498, 4294901760
        %v5485 = vsub.f32 %v4498, %v5484
        %5486 = vmatpush1.msra.mxu0 %v5485
        %5487 = vmatprep.subr.mxu0 0.0
        %v5488 = vand.u32 %v4497, 4294901760
        %v5489 = vsub.f32 %v4497, %v5488
        %5490 = vmatpush1.msra.mxu0 %v5489
        %5491 = vmatprep.subr.mxu0 0.0
        %v5492 = vand.u32 %v4496, 4294901760
        %v5493 = vsub.f32 %v4496, %v5492
        %5494 = vmatpush1.msra.mxu0 %v5493
        %5495 = vmatprep.subr.mxu0 0.0
        %v5496 = vand.u32 %v4495, 4294901760
        %v5497 = vsub.f32 %v4495, %v5496
        %5498 = vmatpush1.msra.mxu0 %v5497
        %5499 = vmatprep.subr.mxu0 0.0
        %v5500 = vand.u32 %v4494, 4294901760
        %v5501 = vsub.f32 %v4494, %v5500
        %5502 = vmatpush1.msra.mxu0 %v5501
        %5503 = vmatprep.subr.mxu0 0.0
        %v5504 = vand.u32 %v4493, 4294901760
        %v5505 = vsub.f32 %v4493, %v5504
        %5506 = vmatpush1.msra.mxu0 %v5505
        %5507 = vmatprep.subr.mxu0 0.0
        %v5508 = vand.u32 %v4492, 4294901760
        %v5509 = vsub.f32 %v4492, %v5508
        %5510 = vmatpush1.msra.mxu0 %v5509
        %5511 = vmatprep.subr.mxu0 0.0
        %v5512 = vand.u32 %v4491, 4294901760
        %v5513 = vsub.f32 %v4491, %v5512
        %5514 = vmatpush1.msra.mxu0 %v5513
        %5515 = vmatprep.subr.mxu0 0.0
        %v5516 = vand.u32 %v4490, 4294901760
        %v5517 = vsub.f32 %v4490, %v5516
        %5518 = vmatpush1.msra.mxu0 %v5517
        %5519 = vmatprep.subr.mxu0 0.0
        %v5520 = vand.u32 %v4489, 4294901760
        %v5521 = vsub.f32 %v4489, %v5520
        %5522 = vmatpush1.msra.mxu0 %v5521
        %5523 = vmatprep.subr.mxu0 0.0
        %v5524 = vand.u32 %v4488, 4294901760
        %v5525 = vsub.f32 %v4488, %v5524
        %5526 = vmatpush1.msra.mxu0 %v5525
        %5527 = vmatprep.subr.mxu0 0.0
        %5528 = vmatpush2.msra.mxu0 0.0
        %5529 = vmatprep.subr.mxu0 0.0
        %5530 = vmatpush2.msra.mxu0 0.0
        %5531 = vmatprep.subr.mxu0 0.0
        %5532 = vmatpush2.msra.mxu0 0.0
        %5533 = vmatprep.subr.mxu0 0.0
        %5534 = vmatpush2.msra.mxu0 0.0
        %5535 = vmatprep.subr.mxu0 0.0
        %5536 = vmatpush2.msra.mxu0 0.0
        %5537 = vmatprep.subr.mxu0 0.0
        %5538 = vmatpush2.msra.mxu0 0.0
        %5539 = vmatprep.subr.mxu0 0.0
        %5540 = vmatpush2.msra.mxu0 0.0
        %5541 = vmatprep.subr.mxu0 0.0
        %5542 = vmatpush2.msra.mxu0 0.0
        %5543 = vmatprep.subr.mxu0 0.0
        %5544 = vmatpush2.msra.mxu0 0.0
        %5545 = vmatprep.subr.mxu0 0.0
        %5546 = vmatpush2.msra.mxu0 0.0
        %5547 = vmatprep.subr.mxu0 0.0
        %5548 = vmatpush2.msra.mxu0 0.0
        %5549 = vmatprep.subr.mxu0 0.0
        %5550 = vmatpush2.msra.mxu0 0.0
        %5551 = vmatprep.subr.mxu0 0.0
        %5552 = vmatpush2.msra.mxu0 0.0
        %5553 = vmatprep.subr.mxu0 0.0
        %5554 = vmatpush2.msra.mxu0 0.0
        %5555 = vmatprep.subr.mxu0 0.0
        %5556 = vmatpush2.msra.mxu0 0.0
        %5557 = vmatprep.subr.mxu0 0.0
        %5558 = vmatpush2.msra.mxu0 0.0
        %5559 = vmatprep.mubr.f32.mxu0 0.0
        %v5560 = vand.u32 %v4485, 4294901760
        %v5561 = vsub.f32 %v4485, %v5560
        %5562 = vmatmul.mubr.f32.gmra.mxu0 %v5561
        %v5563 = vpop.f32.mrf.mxu0
        %v5564 = vadd.f32 %v5454, %v5563
        %v5565 = vpop.f32.mrf.mxu0
        %5566 = vmatprep.mubr.f32.mxu0 0.0
        %v5567 = vand.u32 %v4486, 4294901760
        %v5568 = vsub.f32 %v4486, %v5567
        %5569 = vmatmul.mubr.f32.gmra.mxu0 %v5568
        %v5570 = vpop.f32.mrf.mxu0
        %v5571 = vadd.f32 %v5460, %v5570
        %v5572 = vpop.f32.mrf.mxu0
        %5573 = vdwg.mxu0
        %5574 = vmatprep.subr.mxu0 0.0
        %v5575 = vand.u32 %v4503, 4294901760
        %5576 = vmatpush1.msra.mxu0 %v5575
        %5577 = vmatprep.subr.mxu0 0.0
        %v5578 = vand.u32 %v4502, 4294901760
        %5579 = vmatpush1.msra.mxu0 %v5578
        %5580 = vmatprep.subr.mxu0 0.0
        %v5581 = vand.u32 %v4501, 4294901760
        %5582 = vmatpush1.msra.mxu0 %v5581
        %5583 = vmatprep.subr.mxu0 0.0
        %v5584 = vand.u32 %v4500, 4294901760
        %5585 = vmatpush1.msra.mxu0 %v5584
        %5586 = vmatprep.subr.mxu0 0.0
        %v5587 = vand.u32 %v4499, 4294901760
        %5588 = vmatpush1.msra.mxu0 %v5587
        %5589 = vmatprep.subr.mxu0 0.0
        %v5590 = vand.u32 %v4498, 4294901760
        %5591 = vmatpush1.msra.mxu0 %v5590
        %5592 = vmatprep.subr.mxu0 0.0
        %v5593 = vand.u32 %v4497, 4294901760
        %5594 = vmatpush1.msra.mxu0 %v5593
        %5595 = vmatprep.subr.mxu0 0.0
        %v5596 = vand.u32 %v4496, 4294901760
        %5597 = vmatpush1.msra.mxu0 %v5596
        %5598 = vmatprep.subr.mxu0 0.0
        %v5599 = vand.u32 %v4495, 4294901760
        %5600 = vmatpush1.msra.mxu0 %v5599
        %5601 = vmatprep.subr.mxu0 0.0
        %v5602 = vand.u32 %v4494, 4294901760
        %5603 = vmatpush1.msra.mxu0 %v5602
        %5604 = vmatprep.subr.mxu0 0.0
        %v5605 = vand.u32 %v4493, 4294901760
        %5606 = vmatpush1.msra.mxu0 %v5605
        %5607 = vmatprep.subr.mxu0 0.0
        %v5608 = vand.u32 %v4492, 4294901760
        %5609 = vmatpush1.msra.mxu0 %v5608
        %5610 = vmatprep.subr.mxu0 0.0
        %v5611 = vand.u32 %v4491, 4294901760
        %5612 = vmatpush1.msra.mxu0 %v5611
        %5613 = vmatprep.subr.mxu0 0.0
        %v5614 = vand.u32 %v4490, 4294901760
        %5615 = vmatpush1.msra.mxu0 %v5614
        %5616 = vmatprep.subr.mxu0 0.0
        %v5617 = vand.u32 %v4489, 4294901760
        %5618 = vmatpush1.msra.mxu0 %v5617
        %5619 = vmatprep.subr.mxu0 0.0
        %v5620 = vand.u32 %v4488, 4294901760
        %5621 = vmatpush1.msra.mxu0 %v5620
        %5622 = vmatprep.subr.mxu0 0.0
        %5623 = vmatpush2.msra.mxu0 0.0
        %5624 = vmatprep.subr.mxu0 0.0
        %5625 = vmatpush2.msra.mxu0 0.0
        %5626 = vmatprep.subr.mxu0 0.0
        %5627 = vmatpush2.msra.mxu0 0.0
        %5628 = vmatprep.subr.mxu0 0.0
        %5629 = vmatpush2.msra.mxu0 0.0
        %5630 = vmatprep.subr.mxu0 0.0
        %5631 = vmatpush2.msra.mxu0 0.0
        %5632 = vmatprep.subr.mxu0 0.0
        %5633 = vmatpush2.msra.mxu0 0.0
        %5634 = vmatprep.subr.mxu0 0.0
        %5635 = vmatpush2.msra.mxu0 0.0
        %5636 = vmatprep.subr.mxu0 0.0
        %5637 = vmatpush2.msra.mxu0 0.0
        %5638 = vmatprep.subr.mxu0 0.0
        %5639 = vmatpush2.msra.mxu0 0.0
        %5640 = vmatprep.subr.mxu0 0.0
        %5641 = vmatpush2.msra.mxu0 0.0
        %5642 = vmatprep.subr.mxu0 0.0
        %5643 = vmatpush2.msra.mxu0 0.0
        %5644 = vmatprep.subr.mxu0 0.0
        %5645 = vmatpush2.msra.mxu0 0.0
        %5646 = vmatprep.subr.mxu0 0.0
        %5647 = vmatpush2.msra.mxu0 0.0
        %5648 = vmatprep.subr.mxu0 0.0
        %5649 = vmatpush2.msra.mxu0 0.0
        %5650 = vmatprep.subr.mxu0 0.0
        %5651 = vmatpush2.msra.mxu0 0.0
        %5652 = vmatprep.subr.mxu0 0.0
        %5653 = vmatpush2.msra.mxu0 0.0
        %5654 = vmatprep.mubr.f32.mxu0 0.0
        %v5655 = vand.u32 %v4485, 4294901760
        %v5656 = vsub.f32 %v4485, %v5655
        %v5657 = vand.u32 %v5656, 4294901760
        %5658 = vmatmul.mubr.f32.gmra.mxu0 %v5657
        %v5659 = vpop.f32.mrf.mxu0
        %v5660 = vadd.f32 %v5564, %v5659
        %v5661 = vpop.f32.mrf.mxu0
        %5662 = vmatprep.mubr.f32.mxu0 0.0
        %v5663 = vand.u32 %v4486, 4294901760
        %v5664 = vsub.f32 %v4486, %v5663
        %v5665 = vand.u32 %v5664, 4294901760
        %5666 = vmatmul.mubr.f32.gmra.mxu0 %v5665
        %v5667 = vpop.f32.mrf.mxu0
        %v5668 = vadd.f32 %v5571, %v5667
        %v5669 = vpop.f32.mrf.mxu0
        %5670 = vdwg.mxu0
        %5671 = vmatprep.subr.mxu0 0.0
        %v5672 = vand.u32 %v4503, 4294901760
        %v5673 = vsub.f32 %v4503, %v5672
        %v5674 = vand.u32 %v5673, 4294901760
        %5675 = vmatpush1.msra.mxu0 %v5674
        %5676 = vmatprep.subr.mxu0 0.0
        %v5677 = vand.u32 %v4502, 4294901760
        %v5678 = vsub.f32 %v4502, %v5677
        %v5679 = vand.u32 %v5678, 4294901760
        %5680 = vmatpush1.msra.mxu0 %v5679
        %5681 = vmatprep.subr.mxu0 0.0
        %v5682 = vand.u32 %v4501, 4294901760
        %v5683 = vsub.f32 %v4501, %v5682
        %v5684 = vand.u32 %v5683, 4294901760
        %5685 = vmatpush1.msra.mxu0 %v5684
        %5686 = vmatprep.subr.mxu0 0.0
        %v5687 = vand.u32 %v4500, 4294901760
        %v5688 = vsub.f32 %v4500, %v5687
        %v5689 = vand.u32 %v5688, 4294901760
        %5690 = vmatpush1.msra.mxu0 %v5689
        %5691 = vmatprep.subr.mxu0 0.0
        %v5692 = vand.u32 %v4499, 4294901760
        %v5693 = vsub.f32 %v4499, %v5692
        %v5694 = vand.u32 %v5693, 4294901760
        %5695 = vmatpush1.msra.mxu0 %v5694
        %5696 = vmatprep.subr.mxu0 0.0
        %v5697 = vand.u32 %v4498, 4294901760
        %v5698 = vsub.f32 %v4498, %v5697
        %v5699 = vand.u32 %v5698, 4294901760
        %5700 = vmatpush1.msra.mxu0 %v5699
        %5701 = vmatprep.subr.mxu0 0.0
        %v5702 = vand.u32 %v4497, 4294901760
        %v5703 = vsub.f32 %v4497, %v5702
        %v5704 = vand.u32 %v5703, 4294901760
        %5705 = vmatpush1.msra.mxu0 %v5704
        %5706 = vmatprep.subr.mxu0 0.0
        %v5707 = vand.u32 %v4496, 4294901760
        %v5708 = vsub.f32 %v4496, %v5707
        %v5709 = vand.u32 %v5708, 4294901760
        %5710 = vmatpush1.msra.mxu0 %v5709
        %5711 = vmatprep.subr.mxu0 0.0
        %v5712 = vand.u32 %v4495, 4294901760
        %v5713 = vsub.f32 %v4495, %v5712
        %v5714 = vand.u32 %v5713, 4294901760
        %5715 = vmatpush1.msra.mxu0 %v5714
        %5716 = vmatprep.subr.mxu0 0.0
        %v5717 = vand.u32 %v4494, 4294901760
        %v5718 = vsub.f32 %v4494, %v5717
        %v5719 = vand.u32 %v5718, 4294901760
        %5720 = vmatpush1.msra.mxu0 %v5719
        %5721 = vmatprep.subr.mxu0 0.0
        %v5722 = vand.u32 %v4493, 4294901760
        %v5723 = vsub.f32 %v4493, %v5722
        %v5724 = vand.u32 %v5723, 4294901760
        %5725 = vmatpush1.msra.mxu0 %v5724
        %5726 = vmatprep.subr.mxu0 0.0
        %v5727 = vand.u32 %v4492, 4294901760
        %v5728 = vsub.f32 %v4492, %v5727
        %v5729 = vand.u32 %v5728, 4294901760
        %5730 = vmatpush1.msra.mxu0 %v5729
        %5731 = vmatprep.subr.mxu0 0.0
        %v5732 = vand.u32 %v4491, 4294901760
        %v5733 = vsub.f32 %v4491, %v5732
        %v5734 = vand.u32 %v5733, 4294901760
        %5735 = vmatpush1.msra.mxu0 %v5734
        %5736 = vmatprep.subr.mxu0 0.0
        %v5737 = vand.u32 %v4490, 4294901760
        %v5738 = vsub.f32 %v4490, %v5737
        %v5739 = vand.u32 %v5738, 4294901760
        %5740 = vmatpush1.msra.mxu0 %v5739
        %5741 = vmatprep.subr.mxu0 0.0
        %v5742 = vand.u32 %v4489, 4294901760
        %v5743 = vsub.f32 %v4489, %v5742
        %v5744 = vand.u32 %v5743, 4294901760
        %5745 = vmatpush1.msra.mxu0 %v5744
        %5746 = vmatprep.subr.mxu0 0.0
        %v5747 = vand.u32 %v4488, 4294901760
        %v5748 = vsub.f32 %v4488, %v5747
        %v5749 = vand.u32 %v5748, 4294901760
        %5750 = vmatpush1.msra.mxu0 %v5749
        %5751 = vmatprep.subr.mxu0 0.0
        %5752 = vmatpush2.msra.mxu0 0.0
        %5753 = vmatprep.subr.mxu0 0.0
        %5754 = vmatpush2.msra.mxu0 0.0
        %5755 = vmatprep.subr.mxu0 0.0
        %5756 = vmatpush2.msra.mxu0 0.0
        %5757 = vmatprep.subr.mxu0 0.0
        %5758 = vmatpush2.msra.mxu0 0.0
        %5759 = vmatprep.subr.mxu0 0.0
        %5760 = vmatpush2.msra.mxu0 0.0
        %5761 = vmatprep.subr.mxu0 0.0
        %5762 = vmatpush2.msra.mxu0 0.0
        %5763 = vmatprep.subr.mxu0 0.0
        %5764 = vmatpush2.msra.mxu0 0.0
        %5765 = vmatprep.subr.mxu0 0.0
        %5766 = vmatpush2.msra.mxu0 0.0
        %5767 = vmatprep.subr.mxu0 0.0
        %5768 = vmatpush2.msra.mxu0 0.0
        %5769 = vmatprep.subr.mxu0 0.0
        %5770 = vmatpush2.msra.mxu0 0.0
        %5771 = vmatprep.subr.mxu0 0.0
        %5772 = vmatpush2.msra.mxu0 0.0
        %5773 = vmatprep.subr.mxu0 0.0
        %5774 = vmatpush2.msra.mxu0 0.0
        %5775 = vmatprep.subr.mxu0 0.0
        %5776 = vmatpush2.msra.mxu0 0.0
        %5777 = vmatprep.subr.mxu0 0.0
        %5778 = vmatpush2.msra.mxu0 0.0
        %5779 = vmatprep.subr.mxu0 0.0
        %5780 = vmatpush2.msra.mxu0 0.0
        %5781 = vmatprep.subr.mxu0 0.0
        %5782 = vmatpush2.msra.mxu0 0.0
        %5783 = vmatprep.mubr.f32.mxu0 0.0
        %v5784 = vand.u32 %v4485, 4294901760
        %5785 = vmatmul.mubr.f32.gmra.mxu0 %v5784
        %v5786 = vpop.f32.mrf.mxu0
        %v5787 = vadd.f32 %v5660, %v5786
        %v5788 = vpop.f32.mrf.mxu0
        %5789 = vmatprep.mubr.f32.mxu0 0.0
        %v5790 = vand.u32 %v4486, 4294901760
        %5791 = vmatmul.mubr.f32.gmra.mxu0 %v5790
        %v5792 = vpop.f32.mrf.mxu0
        %v5793 = vadd.f32 %v5668, %v5792
        %v5794 = vpop.f32.mrf.mxu0
        %5795 = vdwg.mxu0
        %5796 = vmatprep.subr.mxu0 0.0
        %v5797 = vand.u32 %v4503, 4294901760
        %5798 = vmatpush1.msra.mxu0 %v5797
        %5799 = vmatprep.subr.mxu0 0.0
        %v5800 = vand.u32 %v4502, 4294901760
        %5801 = vmatpush1.msra.mxu0 %v5800
        %5802 = vmatprep.subr.mxu0 0.0
        %v5803 = vand.u32 %v4501, 4294901760
        %5804 = vmatpush1.msra.mxu0 %v5803
        %5805 = vmatprep.subr.mxu0 0.0
        %v5806 = vand.u32 %v4500, 4294901760
        %5807 = vmatpush1.msra.mxu0 %v5806
        %5808 = vmatprep.subr.mxu0 0.0
        %v5809 = vand.u32 %v4499, 4294901760
        %5810 = vmatpush1.msra.mxu0 %v5809
        %5811 = vmatprep.subr.mxu0 0.0
        %v5812 = vand.u32 %v4498, 4294901760
        %5813 = vmatpush1.msra.mxu0 %v5812
        %5814 = vmatprep.subr.mxu0 0.0
        %v5815 = vand.u32 %v4497, 4294901760
        %5816 = vmatpush1.msra.mxu0 %v5815
        %5817 = vmatprep.subr.mxu0 0.0
        %v5818 = vand.u32 %v4496, 4294901760
        %5819 = vmatpush1.msra.mxu0 %v5818
        %5820 = vmatprep.subr.mxu0 0.0
        %v5821 = vand.u32 %v4495, 4294901760
        %5822 = vmatpush1.msra.mxu0 %v5821
        %5823 = vmatprep.subr.mxu0 0.0
        %v5824 = vand.u32 %v4494, 4294901760
        %5825 = vmatpush1.msra.mxu0 %v5824
        %5826 = vmatprep.subr.mxu0 0.0
        %v5827 = vand.u32 %v4493, 4294901760
        %5828 = vmatpush1.msra.mxu0 %v5827
        %5829 = vmatprep.subr.mxu0 0.0
        %v5830 = vand.u32 %v4492, 4294901760
        %5831 = vmatpush1.msra.mxu0 %v5830
        %5832 = vmatprep.subr.mxu0 0.0
        %v5833 = vand.u32 %v4491, 4294901760
        %5834 = vmatpush1.msra.mxu0 %v5833
        %5835 = vmatprep.subr.mxu0 0.0
        %v5836 = vand.u32 %v4490, 4294901760
        %5837 = vmatpush1.msra.mxu0 %v5836
        %5838 = vmatprep.subr.mxu0 0.0
        %v5839 = vand.u32 %v4489, 4294901760
        %5840 = vmatpush1.msra.mxu0 %v5839
        %5841 = vmatprep.subr.mxu0 0.0
        %v5842 = vand.u32 %v4488, 4294901760
        %5843 = vmatpush1.msra.mxu0 %v5842
        %5844 = vmatprep.subr.mxu0 0.0
        %5845 = vmatpush2.msra.mxu0 0.0
        %5846 = vmatprep.subr.mxu0 0.0
        %5847 = vmatpush2.msra.mxu0 0.0
        %5848 = vmatprep.subr.mxu0 0.0
        %5849 = vmatpush2.msra.mxu0 0.0
        %5850 = vmatprep.subr.mxu0 0.0
        %5851 = vmatpush2.msra.mxu0 0.0
        %5852 = vmatprep.subr.mxu0 0.0
        %5853 = vmatpush2.msra.mxu0 0.0
        %5854 = vmatprep.subr.mxu0 0.0
        %5855 = vmatpush2.msra.mxu0 0.0
        %5856 = vmatprep.subr.mxu0 0.0
        %5857 = vmatpush2.msra.mxu0 0.0
        %5858 = vmatprep.subr.mxu0 0.0
        %5859 = vmatpush2.msra.mxu0 0.0
        %5860 = vmatprep.subr.mxu0 0.0
        %5861 = vmatpush2.msra.mxu0 0.0
        %5862 = vmatprep.subr.mxu0 0.0
        %5863 = vmatpush2.msra.mxu0 0.0
        %5864 = vmatprep.subr.mxu0 0.0
        %5865 = vmatpush2.msra.mxu0 0.0
        %5866 = vmatprep.subr.mxu0 0.0
        %5867 = vmatpush2.msra.mxu0 0.0
        %5868 = vmatprep.subr.mxu0 0.0
        %5869 = vmatpush2.msra.mxu0 0.0
        %5870 = vmatprep.subr.mxu0 0.0
        %5871 = vmatpush2.msra.mxu0 0.0
        %5872 = vmatprep.subr.mxu0 0.0
        %5873 = vmatpush2.msra.mxu0 0.0
        %5874 = vmatprep.subr.mxu0 0.0
        %5875 = vmatpush2.msra.mxu0 0.0
        %5876 = vmatprep.mubr.f32.mxu0 0.0
        %v5877 = vand.u32 %v4485, 4294901760
        %5878 = vmatmul.mubr.f32.gmra.mxu0 %v5877
        %v5879 = vpop.f32.mrf.mxu0
        %v5880 = vadd.f32 %v5787, %v5879
        %v5881 = vpop.f32.mrf.mxu0
        %5882 = vmatprep.mubr.f32.mxu0 0.0
        %v5883 = vand.u32 %v4486, 4294901760
        %5884 = vmatmul.mubr.f32.gmra.mxu0 %v5883
        %v5885 = vpop.f32.mrf.mxu0
        %v5886 = vadd.f32 %v5793, %v5885
        %v5887 = vpop.f32.mrf.mxu0
        %5888 = vdwg.mxu0
        %v5889 = vrot.slane %v4479, 1
        %v5890 = vrot.slane %v4480, 1
        %v5891 = vsel %vm1632, %v5889, %v5890
        %v5892 = vsel %vm1632, %v5890, %v5889
        %v5893 = vsel %vm218, %v5891, 0.0
        %v5894 = vsel %vm219, %v5892, 0.0
        %s5895 = scalar_lea.vmem %s1, 640
        %v5896 = vld [vmem:[%s5895] sm:$0xff]
        %v5897 = vld [vmem:[%s5895 + $0x8] sm:$0xff]
        %v5898 = vld [vmem:[%s5895 + $0x10] sm:$0xff]
        %v5899 = vld [vmem:[%s5895 + $0x18] sm:$0xff]
        %v5900 = vld [vmem:[%s5895 + $0x20] sm:$0xff]
        %v5901 = vld [vmem:[%s5895 + $0x28] sm:$0xff]
        %v5902 = vld [vmem:[%s5895 + $0x30] sm:$0xff]
        %v5903 = vld [vmem:[%s5895 + $0x38] sm:$0xff]
        %v5904 = vld [vmem:[%s5895 + $0x40] sm:$0xff]
        %v5905 = vld [vmem:[%s5895 + $0x48] sm:$0xff]
        %v5906 = vld [vmem:[%s5895 + $0x50] sm:$0xff]
        %v5907 = vld [vmem:[%s5895 + $0x58] sm:$0xff]
        %v5908 = vld [vmem:[%s5895 + $0x60] sm:$0xff]
        %v5909 = vld [vmem:[%s5895 + $0x68] sm:$0xff]
        %v5910 = vld [vmem:[%s5895 + $0x70] sm:$0xff]
        %v5911 = vld [vmem:[%s5895 + $0x78] sm:$0xff]
        %5912 = vmatprep.subr.mxu0 0.0
        %v5913 = vand.u32 %v5911, 4294901760
        %5914 = vmatpush1.msra.mxu0 %v5913
        %5915 = vmatprep.subr.mxu0 0.0
        %v5916 = vand.u32 %v5910, 4294901760
        %5917 = vmatpush1.msra.mxu0 %v5916
        %5918 = vmatprep.subr.mxu0 0.0
        %v5919 = vand.u32 %v5909, 4294901760
        %5920 = vmatpush1.msra.mxu0 %v5919
        %5921 = vmatprep.subr.mxu0 0.0
        %v5922 = vand.u32 %v5908, 4294901760
        %5923 = vmatpush1.msra.mxu0 %v5922
        %5924 = vmatprep.subr.mxu0 0.0
        %v5925 = vand.u32 %v5907, 4294901760
        %5926 = vmatpush1.msra.mxu0 %v5925
        %5927 = vmatprep.subr.mxu0 0.0
        %v5928 = vand.u32 %v5906, 4294901760
        %5929 = vmatpush1.msra.mxu0 %v5928
        %5930 = vmatprep.subr.mxu0 0.0
        %v5931 = vand.u32 %v5905, 4294901760
        %5932 = vmatpush1.msra.mxu0 %v5931
        %5933 = vmatprep.subr.mxu0 0.0
        %v5934 = vand.u32 %v5904, 4294901760
        %5935 = vmatpush1.msra.mxu0 %v5934
        %5936 = vmatprep.subr.mxu0 0.0
        %v5937 = vand.u32 %v5903, 4294901760
        %5938 = vmatpush1.msra.mxu0 %v5937
        %5939 = vmatprep.subr.mxu0 0.0
        %v5940 = vand.u32 %v5902, 4294901760
        %5941 = vmatpush1.msra.mxu0 %v5940
        %5942 = vmatprep.subr.mxu0 0.0
        %v5943 = vand.u32 %v5901, 4294901760
        %5944 = vmatpush1.msra.mxu0 %v5943
        %5945 = vmatprep.subr.mxu0 0.0
        %v5946 = vand.u32 %v5900, 4294901760
        %5947 = vmatpush1.msra.mxu0 %v5946
        %5948 = vmatprep.subr.mxu0 0.0
        %v5949 = vand.u32 %v5899, 4294901760
        %5950 = vmatpush1.msra.mxu0 %v5949
        %5951 = vmatprep.subr.mxu0 0.0
        %v5952 = vand.u32 %v5898, 4294901760
        %5953 = vmatpush1.msra.mxu0 %v5952
        %5954 = vmatprep.subr.mxu0 0.0
        %v5955 = vand.u32 %v5897, 4294901760
        %5956 = vmatpush1.msra.mxu0 %v5955
        %5957 = vmatprep.subr.mxu0 0.0
        %v5958 = vand.u32 %v5896, 4294901760
        %5959 = vmatpush1.msra.mxu0 %v5958
        %5960 = vmatprep.subr.mxu0 0.0
        %5961 = vmatpush2.msra.mxu0 0.0
        %5962 = vmatprep.subr.mxu0 0.0
        %5963 = vmatpush2.msra.mxu0 0.0
        %5964 = vmatprep.subr.mxu0 0.0
        %5965 = vmatpush2.msra.mxu0 0.0
        %5966 = vmatprep.subr.mxu0 0.0
        %5967 = vmatpush2.msra.mxu0 0.0
        %5968 = vmatprep.subr.mxu0 0.0
        %5969 = vmatpush2.msra.mxu0 0.0
        %5970 = vmatprep.subr.mxu0 0.0
        %5971 = vmatpush2.msra.mxu0 0.0
        %5972 = vmatprep.subr.mxu0 0.0
        %5973 = vmatpush2.msra.mxu0 0.0
        %5974 = vmatprep.subr.mxu0 0.0
        %5975 = vmatpush2.msra.mxu0 0.0
        %5976 = vmatprep.subr.mxu0 0.0
        %5977 = vmatpush2.msra.mxu0 0.0
        %5978 = vmatprep.subr.mxu0 0.0
        %5979 = vmatpush2.msra.mxu0 0.0
        %5980 = vmatprep.subr.mxu0 0.0
        %5981 = vmatpush2.msra.mxu0 0.0
        %5982 = vmatprep.subr.mxu0 0.0
        %5983 = vmatpush2.msra.mxu0 0.0
        %5984 = vmatprep.subr.mxu0 0.0
        %5985 = vmatpush2.msra.mxu0 0.0
        %5986 = vmatprep.subr.mxu0 0.0
        %5987 = vmatpush2.msra.mxu0 0.0
        %5988 = vmatprep.subr.mxu0 0.0
        %5989 = vmatpush2.msra.mxu0 0.0
        %5990 = vmatprep.subr.mxu0 0.0
        %5991 = vmatpush2.msra.mxu0 0.0
        %5992 = vmatprep.mubr.f32.mxu0 0.0
        %v5993 = vand.u32 %v5893, 4294901760
        %v5994 = vsub.f32 %v5893, %v5993
        %v5995 = vand.u32 %v5994, 4294901760
        %v5996 = vsub.f32 %v5994, %v5995
        %v5997 = vand.u32 %v5996, 4294901760
        %5998 = vmatmul.mubr.f32.gmra.mxu0 %v5997
        %v5999 = vpop.f32.mrf.mxu0
        %v6000 = vadd.f32 0.0, %v5999
        %v6001 = vpop.f32.mrf.mxu0
        %6002 = vmatprep.mubr.f32.mxu0 0.0
        %v6003 = vand.u32 %v5894, 4294901760
        %v6004 = vsub.f32 %v5894, %v6003
        %v6005 = vand.u32 %v6004, 4294901760
        %v6006 = vsub.f32 %v6004, %v6005
        %v6007 = vand.u32 %v6006, 4294901760
        %6008 = vmatmul.mubr.f32.gmra.mxu0 %v6007
        %v6009 = vpop.f32.mrf.mxu0
        %v6010 = vadd.f32 0.0, %v6009
        %v6011 = vpop.f32.mrf.mxu0
        %6012 = vdwg.mxu0
        %6013 = vmatprep.subr.mxu0 0.0
        %v6014 = vand.u32 %v5911, 4294901760
        %v6015 = vsub.f32 %v5911, %v6014
        %v6016 = vand.u32 %v6015, 4294901760
        %v6017 = vsub.f32 %v6015, %v6016
        %v6018 = vand.u32 %v6017, 4294901760
        %6019 = vmatpush1.msra.mxu0 %v6018
        %6020 = vmatprep.subr.mxu0 0.0
        %v6021 = vand.u32 %v5910, 4294901760
        %v6022 = vsub.f32 %v5910, %v6021
        %v6023 = vand.u32 %v6022, 4294901760
        %v6024 = vsub.f32 %v6022, %v6023
        %v6025 = vand.u32 %v6024, 4294901760
        %6026 = vmatpush1.msra.mxu0 %v6025
        %6027 = vmatprep.subr.mxu0 0.0
        %v6028 = vand.u32 %v5909, 4294901760
        %v6029 = vsub.f32 %v5909, %v6028
        %v6030 = vand.u32 %v6029, 4294901760
        %v6031 = vsub.f32 %v6029, %v6030
        %v6032 = vand.u32 %v6031, 4294901760
        %6033 = vmatpush1.msra.mxu0 %v6032
        %6034 = vmatprep.subr.mxu0 0.0
        %v6035 = vand.u32 %v5908, 4294901760
        %v6036 = vsub.f32 %v5908, %v6035
        %v6037 = vand.u32 %v6036, 4294901760
        %v6038 = vsub.f32 %v6036, %v6037
        %v6039 = vand.u32 %v6038, 4294901760
        %6040 = vmatpush1.msra.mxu0 %v6039
        %6041 = vmatprep.subr.mxu0 0.0
        %v6042 = vand.u32 %v5907, 4294901760
        %v6043 = vsub.f32 %v5907, %v6042
        %v6044 = vand.u32 %v6043, 4294901760
        %v6045 = vsub.f32 %v6043, %v6044
        %v6046 = vand.u32 %v6045, 4294901760
        %6047 = vmatpush1.msra.mxu0 %v6046
        %6048 = vmatprep.subr.mxu0 0.0
        %v6049 = vand.u32 %v5906, 4294901760
        %v6050 = vsub.f32 %v5906, %v6049
        %v6051 = vand.u32 %v6050, 4294901760
        %v6052 = vsub.f32 %v6050, %v6051
        %v6053 = vand.u32 %v6052, 4294901760
        %6054 = vmatpush1.msra.mxu0 %v6053
        %6055 = vmatprep.subr.mxu0 0.0
        %v6056 = vand.u32 %v5905, 4294901760
        %v6057 = vsub.f32 %v5905, %v6056
        %v6058 = vand.u32 %v6057, 4294901760
        %v6059 = vsub.f32 %v6057, %v6058
        %v6060 = vand.u32 %v6059, 4294901760
        %6061 = vmatpush1.msra.mxu0 %v6060
        %6062 = vmatprep.subr.mxu0 0.0
        %v6063 = vand.u32 %v5904, 4294901760
        %v6064 = vsub.f32 %v5904, %v6063
        %v6065 = vand.u32 %v6064, 4294901760
        %v6066 = vsub.f32 %v6064, %v6065
        %v6067 = vand.u32 %v6066, 4294901760
        %6068 = vmatpush1.msra.mxu0 %v6067
        %6069 = vmatprep.subr.mxu0 0.0
        %v6070 = vand.u32 %v5903, 4294901760
        %v6071 = vsub.f32 %v5903, %v6070
        %v6072 = vand.u32 %v6071, 4294901760
        %v6073 = vsub.f32 %v6071, %v6072
        %v6074 = vand.u32 %v6073, 4294901760
        %6075 = vmatpush1.msra.mxu0 %v6074
        %6076 = vmatprep.subr.mxu0 0.0
        %v6077 = vand.u32 %v5902, 4294901760
        %v6078 = vsub.f32 %v5902, %v6077
        %v6079 = vand.u32 %v6078, 4294901760
        %v6080 = vsub.f32 %v6078, %v6079
        %v6081 = vand.u32 %v6080, 4294901760
        %6082 = vmatpush1.msra.mxu0 %v6081
        %6083 = vmatprep.subr.mxu0 0.0
        %v6084 = vand.u32 %v5901, 4294901760
        %v6085 = vsub.f32 %v5901, %v6084
        %v6086 = vand.u32 %v6085, 4294901760
        %v6087 = vsub.f32 %v6085, %v6086
        %v6088 = vand.u32 %v6087, 4294901760
        %6089 = vmatpush1.msra.mxu0 %v6088
        %6090 = vmatprep.subr.mxu0 0.0
        %v6091 = vand.u32 %v5900, 4294901760
        %v6092 = vsub.f32 %v5900, %v6091
        %v6093 = vand.u32 %v6092, 4294901760
        %v6094 = vsub.f32 %v6092, %v6093
        %v6095 = vand.u32 %v6094, 4294901760
        %6096 = vmatpush1.msra.mxu0 %v6095
        %6097 = vmatprep.subr.mxu0 0.0
        %v6098 = vand.u32 %v5899, 4294901760
        %v6099 = vsub.f32 %v5899, %v6098
        %v6100 = vand.u32 %v6099, 4294901760
        %v6101 = vsub.f32 %v6099, %v6100
        %v6102 = vand.u32 %v6101, 4294901760
        %6103 = vmatpush1.msra.mxu0 %v6102
        %6104 = vmatprep.subr.mxu0 0.0
        %v6105 = vand.u32 %v5898, 4294901760
        %v6106 = vsub.f32 %v5898, %v6105
        %v6107 = vand.u32 %v6106, 4294901760
        %v6108 = vsub.f32 %v6106, %v6107
        %v6109 = vand.u32 %v6108, 4294901760
        %6110 = vmatpush1.msra.mxu0 %v6109
        %6111 = vmatprep.subr.mxu0 0.0
        %v6112 = vand.u32 %v5897, 4294901760
        %v6113 = vsub.f32 %v5897, %v6112
        %v6114 = vand.u32 %v6113, 4294901760
        %v6115 = vsub.f32 %v6113, %v6114
        %v6116 = vand.u32 %v6115, 4294901760
        %6117 = vmatpush1.msra.mxu0 %v6116
        %6118 = vmatprep.subr.mxu0 0.0
        %v6119 = vand.u32 %v5896, 4294901760
        %v6120 = vsub.f32 %v5896, %v6119
        %v6121 = vand.u32 %v6120, 4294901760
        %v6122 = vsub.f32 %v6120, %v6121
        %v6123 = vand.u32 %v6122, 4294901760
        %6124 = vmatpush1.msra.mxu0 %v6123
        %6125 = vmatprep.subr.mxu0 0.0
        %6126 = vmatpush2.msra.mxu0 0.0
        %6127 = vmatprep.subr.mxu0 0.0
        %6128 = vmatpush2.msra.mxu0 0.0
        %6129 = vmatprep.subr.mxu0 0.0
        %6130 = vmatpush2.msra.mxu0 0.0
        %6131 = vmatprep.subr.mxu0 0.0
        %6132 = vmatpush2.msra.mxu0 0.0
        %6133 = vmatprep.subr.mxu0 0.0
        %6134 = vmatpush2.msra.mxu0 0.0
        %6135 = vmatprep.subr.mxu0 0.0
        %6136 = vmatpush2.msra.mxu0 0.0
        %6137 = vmatprep.subr.mxu0 0.0
        %6138 = vmatpush2.msra.mxu0 0.0
        %6139 = vmatprep.subr.mxu0 0.0
        %6140 = vmatpush2.msra.mxu0 0.0
        %6141 = vmatprep.subr.mxu0 0.0
        %6142 = vmatpush2.msra.mxu0 0.0
        %6143 = vmatprep.subr.mxu0 0.0
        %6144 = vmatpush2.msra.mxu0 0.0
        %6145 = vmatprep.subr.mxu0 0.0
        %6146 = vmatpush2.msra.mxu0 0.0
        %6147 = vmatprep.subr.mxu0 0.0
        %6148 = vmatpush2.msra.mxu0 0.0
        %6149 = vmatprep.subr.mxu0 0.0
        %6150 = vmatpush2.msra.mxu0 0.0
        %6151 = vmatprep.subr.mxu0 0.0
        %6152 = vmatpush2.msra.mxu0 0.0
        %6153 = vmatprep.subr.mxu0 0.0
        %6154 = vmatpush2.msra.mxu0 0.0
        %6155 = vmatprep.subr.mxu0 0.0
        %6156 = vmatpush2.msra.mxu0 0.0
        %6157 = vmatprep.mubr.f32.mxu0 0.0
        %v6158 = vand.u32 %v5893, 4294901760
        %6159 = vmatmul.mubr.f32.gmra.mxu0 %v6158
        %v6160 = vpop.f32.mrf.mxu0
        %v6161 = vadd.f32 %v6000, %v6160
        %v6162 = vpop.f32.mrf.mxu0
        %6163 = vmatprep.mubr.f32.mxu0 0.0
        %v6164 = vand.u32 %v5894, 4294901760
        %6165 = vmatmul.mubr.f32.gmra.mxu0 %v6164
        %v6166 = vpop.f32.mrf.mxu0
        %v6167 = vadd.f32 %v6010, %v6166
        %v6168 = vpop.f32.mrf.mxu0
        %6169 = vdwg.mxu0
        %6170 = vmatprep.subr.mxu0 0.0
        %v6171 = vand.u32 %v5911, 4294901760
        %v6172 = vsub.f32 %v5911, %v6171
        %6173 = vmatpush1.msra.mxu0 %v6172
        %6174 = vmatprep.subr.mxu0 0.0
        %v6175 = vand.u32 %v5910, 4294901760
        %v6176 = vsub.f32 %v5910, %v6175
        %6177 = vmatpush1.msra.mxu0 %v6176
        %6178 = vmatprep.subr.mxu0 0.0
        %v6179 = vand.u32 %v5909, 4294901760
        %v6180 = vsub.f32 %v5909, %v6179
        %6181 = vmatpush1.msra.mxu0 %v6180
        %6182 = vmatprep.subr.mxu0 0.0
        %v6183 = vand.u32 %v5908, 4294901760
        %v6184 = vsub.f32 %v5908, %v6183
        %6185 = vmatpush1.msra.mxu0 %v6184
        %6186 = vmatprep.subr.mxu0 0.0
        %v6187 = vand.u32 %v5907, 4294901760
        %v6188 = vsub.f32 %v5907, %v6187
        %6189 = vmatpush1.msra.mxu0 %v6188
        %6190 = vmatprep.subr.mxu0 0.0
        %v6191 = vand.u32 %v5906, 4294901760
        %v6192 = vsub.f32 %v5906, %v6191
        %6193 = vmatpush1.msra.mxu0 %v6192
        %6194 = vmatprep.subr.mxu0 0.0
        %v6195 = vand.u32 %v5905, 4294901760
        %v6196 = vsub.f32 %v5905, %v6195
        %6197 = vmatpush1.msra.mxu0 %v6196
        %6198 = vmatprep.subr.mxu0 0.0
        %v6199 = vand.u32 %v5904, 4294901760
        %v6200 = vsub.f32 %v5904, %v6199
        %6201 = vmatpush1.msra.mxu0 %v6200
        %6202 = vmatprep.subr.mxu0 0.0
        %v6203 = vand.u32 %v5903, 4294901760
        %v6204 = vsub.f32 %v5903, %v6203
        %6205 = vmatpush1.msra.mxu0 %v6204
        %6206 = vmatprep.subr.mxu0 0.0
        %v6207 = vand.u32 %v5902, 4294901760
        %v6208 = vsub.f32 %v5902, %v6207
        %6209 = vmatpush1.msra.mxu0 %v6208
        %6210 = vmatprep.subr.mxu0 0.0
        %v6211 = vand.u32 %v5901, 4294901760
        %v6212 = vsub.f32 %v5901, %v6211
        %6213 = vmatpush1.msra.mxu0 %v6212
        %6214 = vmatprep.subr.mxu0 0.0
        %v6215 = vand.u32 %v5900, 4294901760
        %v6216 = vsub.f32 %v5900, %v6215
        %6217 = vmatpush1.msra.mxu0 %v6216
        %6218 = vmatprep.subr.mxu0 0.0
        %v6219 = vand.u32 %v5899, 4294901760
        %v6220 = vsub.f32 %v5899, %v6219
        %6221 = vmatpush1.msra.mxu0 %v6220
        %6222 = vmatprep.subr.mxu0 0.0
        %v6223 = vand.u32 %v5898, 4294901760
        %v6224 = vsub.f32 %v5898, %v6223
        %6225 = vmatpush1.msra.mxu0 %v6224
        %6226 = vmatprep.subr.mxu0 0.0
        %v6227 = vand.u32 %v5897, 4294901760
        %v6228 = vsub.f32 %v5897, %v6227
        %6229 = vmatpush1.msra.mxu0 %v6228
        %6230 = vmatprep.subr.mxu0 0.0
        %v6231 = vand.u32 %v5896, 4294901760
        %v6232 = vsub.f32 %v5896, %v6231
        %6233 = vmatpush1.msra.mxu0 %v6232
        %6234 = vmatprep.subr.mxu0 0.0
        %6235 = vmatpush2.msra.mxu0 0.0
        %6236 = vmatprep.subr.mxu0 0.0
        %6237 = vmatpush2.msra.mxu0 0.0
        %6238 = vmatprep.subr.mxu0 0.0
        %6239 = vmatpush2.msra.mxu0 0.0
        %6240 = vmatprep.subr.mxu0 0.0
        %6241 = vmatpush2.msra.mxu0 0.0
        %6242 = vmatprep.subr.mxu0 0.0
        %6243 = vmatpush2.msra.mxu0 0.0
        %6244 = vmatprep.subr.mxu0 0.0
        %6245 = vmatpush2.msra.mxu0 0.0
        %6246 = vmatprep.subr.mxu0 0.0
        %6247 = vmatpush2.msra.mxu0 0.0
        %6248 = vmatprep.subr.mxu0 0.0
        %6249 = vmatpush2.msra.mxu0 0.0
        %6250 = vmatprep.subr.mxu0 0.0
        %6251 = vmatpush2.msra.mxu0 0.0
        %6252 = vmatprep.subr.mxu0 0.0
        %6253 = vmatpush2.msra.mxu0 0.0
        %6254 = vmatprep.subr.mxu0 0.0
        %6255 = vmatpush2.msra.mxu0 0.0
        %6256 = vmatprep.subr.mxu0 0.0
        %6257 = vmatpush2.msra.mxu0 0.0
        %6258 = vmatprep.subr.mxu0 0.0
        %6259 = vmatpush2.msra.mxu0 0.0
        %6260 = vmatprep.subr.mxu0 0.0
        %6261 = vmatpush2.msra.mxu0 0.0
        %6262 = vmatprep.subr.mxu0 0.0
        %6263 = vmatpush2.msra.mxu0 0.0
        %6264 = vmatprep.subr.mxu0 0.0
        %6265 = vmatpush2.msra.mxu0 0.0
        %6266 = vmatprep.mubr.f32.mxu0 0.0
        %v6267 = vand.u32 %v5893, 4294901760
        %v6268 = vsub.f32 %v5893, %v6267
        %6269 = vmatmul.mubr.f32.gmra.mxu0 %v6268
        %v6270 = vpop.f32.mrf.mxu0
        %v6271 = vadd.f32 %v6161, %v6270
        %v6272 = vpop.f32.mrf.mxu0
        %6273 = vmatprep.mubr.f32.mxu0 0.0
        %v6274 = vand.u32 %v5894, 4294901760
        %v6275 = vsub.f32 %v5894, %v6274
        %6276 = vmatmul.mubr.f32.gmra.mxu0 %v6275
        %v6277 = vpop.f32.mrf.mxu0
        %v6278 = vadd.f32 %v6167, %v6277
        %v6279 = vpop.f32.mrf.mxu0
        %6280 = vdwg.mxu0
        %6281 = vmatprep.subr.mxu0 0.0
        %v6282 = vand.u32 %v5911, 4294901760
        %6283 = vmatpush1.msra.mxu0 %v6282
        %6284 = vmatprep.subr.mxu0 0.0
        %v6285 = vand.u32 %v5910, 4294901760
        %6286 = vmatpush1.msra.mxu0 %v6285
        %6287 = vmatprep.subr.mxu0 0.0
        %v6288 = vand.u32 %v5909, 4294901760
        %6289 = vmatpush1.msra.mxu0 %v6288
        %6290 = vmatprep.subr.mxu0 0.0
        %v6291 = vand.u32 %v5908, 4294901760
        %6292 = vmatpush1.msra.mxu0 %v6291
        %6293 = vmatprep.subr.mxu0 0.0
        %v6294 = vand.u32 %v5907, 4294901760
        %6295 = vmatpush1.msra.mxu0 %v6294
        %6296 = vmatprep.subr.mxu0 0.0
        %v6297 = vand.u32 %v5906, 4294901760
        %6298 = vmatpush1.msra.mxu0 %v6297
        %6299 = vmatprep.subr.mxu0 0.0
        %v6300 = vand.u32 %v5905, 4294901760
        %6301 = vmatpush1.msra.mxu0 %v6300
        %6302 = vmatprep.subr.mxu0 0.0
        %v6303 = vand.u32 %v5904, 4294901760
        %6304 = vmatpush1.msra.mxu0 %v6303
        %6305 = vmatprep.subr.mxu0 0.0
        %v6306 = vand.u32 %v5903, 4294901760
        %6307 = vmatpush1.msra.mxu0 %v6306
        %6308 = vmatprep.subr.mxu0 0.0
        %v6309 = vand.u32 %v5902, 4294901760
        %6310 = vmatpush1.msra.mxu0 %v6309
        %6311 = vmatprep.subr.mxu0 0.0
        %v6312 = vand.u32 %v5901, 4294901760
        %6313 = vmatpush1.msra.mxu0 %v6312
        %6314 = vmatprep.subr.mxu0 0.0
        %v6315 = vand.u32 %v5900, 4294901760
        %6316 = vmatpush1.msra.mxu0 %v6315
        %6317 = vmatprep.subr.mxu0 0.0
        %v6318 = vand.u32 %v5899, 4294901760
        %6319 = vmatpush1.msra.mxu0 %v6318
        %6320 = vmatprep.subr.mxu0 0.0
        %v6321 = vand.u32 %v5898, 4294901760
        %6322 = vmatpush1.msra.mxu0 %v6321
        %6323 = vmatprep.subr.mxu0 0.0
        %v6324 = vand.u32 %v5897, 4294901760
        %6325 = vmatpush1.msra.mxu0 %v6324
        %6326 = vmatprep.subr.mxu0 0.0
        %v6327 = vand.u32 %v5896, 4294901760
        %6328 = vmatpush1.msra.mxu0 %v6327
        %6329 = vmatprep.subr.mxu0 0.0
        %6330 = vmatpush2.msra.mxu0 0.0
        %6331 = vmatprep.subr.mxu0 0.0
        %6332 = vmatpush2.msra.mxu0 0.0
        %6333 = vmatprep.subr.mxu0 0.0
        %6334 = vmatpush2.msra.mxu0 0.0
        %6335 = vmatprep.subr.mxu0 0.0
        %6336 = vmatpush2.msra.mxu0 0.0
        %6337 = vmatprep.subr.mxu0 0.0
        %6338 = vmatpush2.msra.mxu0 0.0
        %6339 = vmatprep.subr.mxu0 0.0
        %6340 = vmatpush2.msra.mxu0 0.0
        %6341 = vmatprep.subr.mxu0 0.0
        %6342 = vmatpush2.msra.mxu0 0.0
        %6343 = vmatprep.subr.mxu0 0.0
        %6344 = vmatpush2.msra.mxu0 0.0
        %6345 = vmatprep.subr.mxu0 0.0
        %6346 = vmatpush2.msra.mxu0 0.0
        %6347 = vmatprep.subr.mxu0 0.0
        %6348 = vmatpush2.msra.mxu0 0.0
        %6349 = vmatprep.subr.mxu0 0.0
        %6350 = vmatpush2.msra.mxu0 0.0
        %6351 = vmatprep.subr.mxu0 0.0
        %6352 = vmatpush2.msra.mxu0 0.0
        %6353 = vmatprep.subr.mxu0 0.0
        %6354 = vmatpush2.msra.mxu0 0.0
        %6355 = vmatprep.subr.mxu0 0.0
        %6356 = vmatpush2.msra.mxu0 0.0
        %6357 = vmatprep.subr.mxu0 0.0
        %6358 = vmatpush2.msra.mxu0 0.0
        %6359 = vmatprep.subr.mxu0 0.0
        %6360 = vmatpush2.msra.mxu0 0.0
        %6361 = vmatprep.mubr.f32.mxu0 0.0
        %v6362 = vand.u32 %v5893, 4294901760
        %v6363 = vsub.f32 %v5893, %v6362
        %v6364 = vand.u32 %v6363, 4294901760
        %6365 = vmatmul.mubr.f32.gmra.mxu0 %v6364
        %v6366 = vpop.f32.mrf.mxu0
        %v6367 = vadd.f32 %v6271, %v6366
        %v6368 = vpop.f32.mrf.mxu0
        %6369 = vmatprep.mubr.f32.mxu0 0.0
        %v6370 = vand.u32 %v5894, 4294901760
        %v6371 = vsub.f32 %v5894, %v6370
        %v6372 = vand.u32 %v6371, 4294901760
        %6373 = vmatmul.mubr.f32.gmra.mxu0 %v6372
        %v6374 = vpop.f32.mrf.mxu0
        %v6375 = vadd.f32 %v6278, %v6374
        %v6376 = vpop.f32.mrf.mxu0
        %6377 = vdwg.mxu0
        %6378 = vmatprep.subr.mxu0 0.0
        %v6379 = vand.u32 %v5911, 4294901760
        %v6380 = vsub.f32 %v5911, %v6379
        %v6381 = vand.u32 %v6380, 4294901760
        %6382 = vmatpush1.msra.mxu0 %v6381
        %6383 = vmatprep.subr.mxu0 0.0
        %v6384 = vand.u32 %v5910, 4294901760
        %v6385 = vsub.f32 %v5910, %v6384
        %v6386 = vand.u32 %v6385, 4294901760
        %6387 = vmatpush1.msra.mxu0 %v6386
        %6388 = vmatprep.subr.mxu0 0.0
        %v6389 = vand.u32 %v5909, 4294901760
        %v6390 = vsub.f32 %v5909, %v6389
        %v6391 = vand.u32 %v6390, 4294901760
        %6392 = vmatpush1.msra.mxu0 %v6391
        %6393 = vmatprep.subr.mxu0 0.0
        %v6394 = vand.u32 %v5908, 4294901760
        %v6395 = vsub.f32 %v5908, %v6394
        %v6396 = vand.u32 %v6395, 4294901760
        %6397 = vmatpush1.msra.mxu0 %v6396
        %6398 = vmatprep.subr.mxu0 0.0
        %v6399 = vand.u32 %v5907, 4294901760
        %v6400 = vsub.f32 %v5907, %v6399
        %v6401 = vand.u32 %v6400, 4294901760
        %6402 = vmatpush1.msra.mxu0 %v6401
        %6403 = vmatprep.subr.mxu0 0.0
        %v6404 = vand.u32 %v5906, 4294901760
        %v6405 = vsub.f32 %v5906, %v6404
        %v6406 = vand.u32 %v6405, 4294901760
        %6407 = vmatpush1.msra.mxu0 %v6406
        %6408 = vmatprep.subr.mxu0 0.0
        %v6409 = vand.u32 %v5905, 4294901760
        %v6410 = vsub.f32 %v5905, %v6409
        %v6411 = vand.u32 %v6410, 4294901760
        %6412 = vmatpush1.msra.mxu0 %v6411
        %6413 = vmatprep.subr.mxu0 0.0
        %v6414 = vand.u32 %v5904, 4294901760
        %v6415 = vsub.f32 %v5904, %v6414
        %v6416 = vand.u32 %v6415, 4294901760
        %6417 = vmatpush1.msra.mxu0 %v6416
        %6418 = vmatprep.subr.mxu0 0.0
        %v6419 = vand.u32 %v5903, 4294901760
        %v6420 = vsub.f32 %v5903, %v6419
        %v6421 = vand.u32 %v6420, 4294901760
        %6422 = vmatpush1.msra.mxu0 %v6421
        %6423 = vmatprep.subr.mxu0 0.0
        %v6424 = vand.u32 %v5902, 4294901760
        %v6425 = vsub.f32 %v5902, %v6424
        %v6426 = vand.u32 %v6425, 4294901760
        %6427 = vmatpush1.msra.mxu0 %v6426
        %6428 = vmatprep.subr.mxu0 0.0
        %v6429 = vand.u32 %v5901, 4294901760
        %v6430 = vsub.f32 %v5901, %v6429
        %v6431 = vand.u32 %v6430, 4294901760
        %6432 = vmatpush1.msra.mxu0 %v6431
        %6433 = vmatprep.subr.mxu0 0.0
        %v6434 = vand.u32 %v5900, 4294901760
        %v6435 = vsub.f32 %v5900, %v6434
        %v6436 = vand.u32 %v6435, 4294901760
        %6437 = vmatpush1.msra.mxu0 %v6436
        %6438 = vmatprep.subr.mxu0 0.0
        %v6439 = vand.u32 %v5899, 4294901760
        %v6440 = vsub.f32 %v5899, %v6439
        %v6441 = vand.u32 %v6440, 4294901760
        %6442 = vmatpush1.msra.mxu0 %v6441
        %6443 = vmatprep.subr.mxu0 0.0
        %v6444 = vand.u32 %v5898, 4294901760
        %v6445 = vsub.f32 %v5898, %v6444
        %v6446 = vand.u32 %v6445, 4294901760
        %6447 = vmatpush1.msra.mxu0 %v6446
        %6448 = vmatprep.subr.mxu0 0.0
        %v6449 = vand.u32 %v5897, 4294901760
        %v6450 = vsub.f32 %v5897, %v6449
        %v6451 = vand.u32 %v6450, 4294901760
        %6452 = vmatpush1.msra.mxu0 %v6451
        %6453 = vmatprep.subr.mxu0 0.0
        %v6454 = vand.u32 %v5896, 4294901760
        %v6455 = vsub.f32 %v5896, %v6454
        %v6456 = vand.u32 %v6455, 4294901760
        %6457 = vmatpush1.msra.mxu0 %v6456
        %6458 = vmatprep.subr.mxu0 0.0
        %6459 = vmatpush2.msra.mxu0 0.0
        %6460 = vmatprep.subr.mxu0 0.0
        %6461 = vmatpush2.msra.mxu0 0.0
        %6462 = vmatprep.subr.mxu0 0.0
        %6463 = vmatpush2.msra.mxu0 0.0
        %6464 = vmatprep.subr.mxu0 0.0
        %6465 = vmatpush2.msra.mxu0 0.0
        %6466 = vmatprep.subr.mxu0 0.0
        %6467 = vmatpush2.msra.mxu0 0.0
        %6468 = vmatprep.subr.mxu0 0.0
        %6469 = vmatpush2.msra.mxu0 0.0
        %6470 = vmatprep.subr.mxu0 0.0
        %6471 = vmatpush2.msra.mxu0 0.0
        %6472 = vmatprep.subr.mxu0 0.0
        %6473 = vmatpush2.msra.mxu0 0.0
        %6474 = vmatprep.subr.mxu0 0.0
        %6475 = vmatpush2.msra.mxu0 0.0
        %6476 = vmatprep.subr.mxu0 0.0
        %6477 = vmatpush2.msra.mxu0 0.0
        %6478 = vmatprep.subr.mxu0 0.0
        %6479 = vmatpush2.msra.mxu0 0.0
        %6480 = vmatprep.subr.mxu0 0.0
        %6481 = vmatpush2.msra.mxu0 0.0
        %6482 = vmatprep.subr.mxu0 0.0
        %6483 = vmatpush2.msra.mxu0 0.0
        %6484 = vmatprep.subr.mxu0 0.0
        %6485 = vmatpush2.msra.mxu0 0.0
        %6486 = vmatprep.subr.mxu0 0.0
        %6487 = vmatpush2.msra.mxu0 0.0
        %6488 = vmatprep.subr.mxu0 0.0
        %6489 = vmatpush2.msra.mxu0 0.0
        %6490 = vmatprep.mubr.f32.mxu0 0.0
        %v6491 = vand.u32 %v5893, 4294901760
        %6492 = vmatmul.mubr.f32.gmra.mxu0 %v6491
        %v6493 = vpop.f32.mrf.mxu0
        %v6494 = vadd.f32 %v6367, %v6493
        %v6495 = vpop.f32.mrf.mxu0
        %6496 = vmatprep.mubr.f32.mxu0 0.0
        %v6497 = vand.u32 %v5894, 4294901760
        %6498 = vmatmul.mubr.f32.gmra.mxu0 %v6497
        %v6499 = vpop.f32.mrf.mxu0
        %v6500 = vadd.f32 %v6375, %v6499
        %v6501 = vpop.f32.mrf.mxu0
        %6502 = vdwg.mxu0
        %6503 = vmatprep.subr.mxu0 0.0
        %v6504 = vand.u32 %v5911, 4294901760
        %6505 = vmatpush1.msra.mxu0 %v6504
        %6506 = vmatprep.subr.mxu0 0.0
        %v6507 = vand.u32 %v5910, 4294901760
        %6508 = vmatpush1.msra.mxu0 %v6507
        %6509 = vmatprep.subr.mxu0 0.0
        %v6510 = vand.u32 %v5909, 4294901760
        %6511 = vmatpush1.msra.mxu0 %v6510
        %6512 = vmatprep.subr.mxu0 0.0
        %v6513 = vand.u32 %v5908, 4294901760
        %6514 = vmatpush1.msra.mxu0 %v6513
        %6515 = vmatprep.subr.mxu0 0.0
        %v6516 = vand.u32 %v5907, 4294901760
        %6517 = vmatpush1.msra.mxu0 %v6516
        %6518 = vmatprep.subr.mxu0 0.0
        %v6519 = vand.u32 %v5906, 4294901760
        %6520 = vmatpush1.msra.mxu0 %v6519
        %6521 = vmatprep.subr.mxu0 0.0
        %v6522 = vand.u32 %v5905, 4294901760
        %6523 = vmatpush1.msra.mxu0 %v6522
        %6524 = vmatprep.subr.mxu0 0.0
        %v6525 = vand.u32 %v5904, 4294901760
        %6526 = vmatpush1.msra.mxu0 %v6525
        %6527 = vmatprep.subr.mxu0 0.0
        %v6528 = vand.u32 %v5903, 4294901760
        %6529 = vmatpush1.msra.mxu0 %v6528
        %6530 = vmatprep.subr.mxu0 0.0
        %v6531 = vand.u32 %v5902, 4294901760
        %6532 = vmatpush1.msra.mxu0 %v6531
        %6533 = vmatprep.subr.mxu0 0.0
        %v6534 = vand.u32 %v5901, 4294901760
        %6535 = vmatpush1.msra.mxu0 %v6534
        %6536 = vmatprep.subr.mxu0 0.0
        %v6537 = vand.u32 %v5900, 4294901760
        %6538 = vmatpush1.msra.mxu0 %v6537
        %6539 = vmatprep.subr.mxu0 0.0
        %v6540 = vand.u32 %v5899, 4294901760
        %6541 = vmatpush1.msra.mxu0 %v6540
        %6542 = vmatprep.subr.mxu0 0.0
        %v6543 = vand.u32 %v5898, 4294901760
        %6544 = vmatpush1.msra.mxu0 %v6543
        %6545 = vmatprep.subr.mxu0 0.0
        %v6546 = vand.u32 %v5897, 4294901760
        %6547 = vmatpush1.msra.mxu0 %v6546
        %6548 = vmatprep.subr.mxu0 0.0
        %v6549 = vand.u32 %v5896, 4294901760
        %6550 = vmatpush1.msra.mxu0 %v6549
        %6551 = vmatprep.subr.mxu0 0.0
        %6552 = vmatpush2.msra.mxu0 0.0
        %6553 = vmatprep.subr.mxu0 0.0
        %6554 = vmatpush2.msra.mxu0 0.0
        %6555 = vmatprep.subr.mxu0 0.0
        %6556 = vmatpush2.msra.mxu0 0.0
        %6557 = vmatprep.subr.mxu0 0.0
        %6558 = vmatpush2.msra.mxu0 0.0
        %6559 = vmatprep.subr.mxu0 0.0
        %6560 = vmatpush2.msra.mxu0 0.0
        %6561 = vmatprep.subr.mxu0 0.0
        %6562 = vmatpush2.msra.mxu0 0.0
        %6563 = vmatprep.subr.mxu0 0.0
        %6564 = vmatpush2.msra.mxu0 0.0
        %6565 = vmatprep.subr.mxu0 0.0
        %6566 = vmatpush2.msra.mxu0 0.0
        %6567 = vmatprep.subr.mxu0 0.0
        %6568 = vmatpush2.msra.mxu0 0.0
        %6569 = vmatprep.subr.mxu0 0.0
        %6570 = vmatpush2.msra.mxu0 0.0
        %6571 = vmatprep.subr.mxu0 0.0
        %6572 = vmatpush2.msra.mxu0 0.0
        %6573 = vmatprep.subr.mxu0 0.0
        %6574 = vmatpush2.msra.mxu0 0.0
        %6575 = vmatprep.subr.mxu0 0.0
        %6576 = vmatpush2.msra.mxu0 0.0
        %6577 = vmatprep.subr.mxu0 0.0
        %6578 = vmatpush2.msra.mxu0 0.0
        %6579 = vmatprep.subr.mxu0 0.0
        %6580 = vmatpush2.msra.mxu0 0.0
        %6581 = vmatprep.subr.mxu0 0.0
        %6582 = vmatpush2.msra.mxu0 0.0
        %6583 = vmatprep.mubr.f32.mxu0 0.0
        %v6584 = vand.u32 %v5893, 4294901760
        %6585 = vmatmul.mubr.f32.gmra.mxu0 %v6584
        %v6586 = vpop.f32.mrf.mxu0
        %v6587 = vadd.f32 %v6494, %v6586
        %v6588 = vpop.f32.mrf.mxu0
        %6589 = vmatprep.mubr.f32.mxu0 0.0
        %v6590 = vand.u32 %v5894, 4294901760
        %6591 = vmatmul.mubr.f32.gmra.mxu0 %v6590
        %v6592 = vpop.f32.mrf.mxu0
        %v6593 = vadd.f32 %v6500, %v6592
        %v6594 = vpop.f32.mrf.mxu0
        %6595 = vdwg.mxu0
        %v6596 = vadd.f32 %v5880, %v6587
        %v6597 = vadd.f32 %v5886, %v6593
        %s6598 = scalar_lea.vmem %s3, 2
        %v6599 = vld [vmem:[%s6598] sm:$0x1]
        %v6601 = vlaneseq
        %v6602 = vshrl.u32 %v6601, 7
        %v6603 = vsub.s32 0, %v6602
        %v6604 = vrot.slane %v6599, %v6603
        %v6606 = vadd.f32 %v6596, %v6604
        %v6607 = vadd.f32 %v6597, %v6604
        %v6608 = vmax.f32 %v6606, 0.0
        %v6609 = vmax.f32 %v6607, 0.0
        %v6610 = vrot.slane %v6608, 7
        %v6611 = vrot.slane %v6609, 7
        %v6612 = vsel %vm224, %v6610, %v6611
        %v6613 = vsel %vm224, %v6611, %v6610
        %v6614 = vsel %vm216, %v6613, 0.0
        %v6615 = vsel %vm217, %v6612, 0.0
        %s6616 = scalar_lea.vmem [#allocation2], 384
        %v6617 = vld [vmem:[%s6616] sm:$0xff]
        %v6618 = vld [vmem:[%s6616 + $0x8] sm:$0xff]
        %v6619 = vld [vmem:[%s6616 + $0x10] sm:$0xff]
        %v6620 = vld [vmem:[%s6616 + $0x18] sm:$0xff]
        %v6621 = vld [vmem:[%s6616 + $0x20] sm:$0xff]
        %v6622 = vld [vmem:[%s6616 + $0x28] sm:$0xff]
        %v6623 = vld [vmem:[%s6616 + $0x30] sm:$0xff]
        %v6624 = vld [vmem:[%s6616 + $0x38] sm:$0xff]
        %v6625 = vld [vmem:[%s6616 + $0x40] sm:$0xff]
        %v6626 = vld [vmem:[%s6616 + $0x48] sm:$0xff]
        %v6627 = vld [vmem:[%s6616 + $0x50] sm:$0xff]
        %v6628 = vld [vmem:[%s6616 + $0x58] sm:$0xff]
        %v6629 = vld [vmem:[%s6616 + $0x60] sm:$0xff]
        %v6630 = vld [vmem:[%s6616 + $0x68] sm:$0xff]
        %v6631 = vld [vmem:[%s6616 + $0x70] sm:$0xff]
        %v6632 = vld [vmem:[%s6616 + $0x78] sm:$0xff]
        %s6633 = scalar_lea.vmem [#allocation2], 512
        %v6634 = vld [vmem:[%s6633] sm:$0xff]
        %v6635 = vld [vmem:[%s6633 + $0x8] sm:$0xff]
        %v6636 = vld [vmem:[%s6633 + $0x10] sm:$0xff]
        %v6637 = vld [vmem:[%s6633 + $0x18] sm:$0xff]
        %v6638 = vld [vmem:[%s6633 + $0x20] sm:$0xff]
        %v6639 = vld [vmem:[%s6633 + $0x28] sm:$0xff]
        %v6640 = vld [vmem:[%s6633 + $0x30] sm:$0xff]
        %v6641 = vld [vmem:[%s6633 + $0x38] sm:$0xff]
        %v6642 = vld [vmem:[%s6633 + $0x40] sm:$0xff]
        %v6643 = vld [vmem:[%s6633 + $0x48] sm:$0xff]
        %v6644 = vld [vmem:[%s6633 + $0x50] sm:$0xff]
        %v6645 = vld [vmem:[%s6633 + $0x58] sm:$0xff]
        %v6646 = vld [vmem:[%s6633 + $0x60] sm:$0xff]
        %v6647 = vld [vmem:[%s6633 + $0x68] sm:$0xff]
        %v6648 = vld [vmem:[%s6633 + $0x70] sm:$0xff]
        %v6649 = vld [vmem:[%s6633 + $0x78] sm:$0xff]
        %6650 = vmatprep.subr.mxu0 0.0
        %v6651 = vand.u32 %v6649, 4294901760
        %6652 = vmatpush1.msra.mxu0 %v6651
        %6653 = vmatprep.subr.mxu0 0.0
        %v6654 = vand.u32 %v6648, 4294901760
        %6655 = vmatpush1.msra.mxu0 %v6654
        %6656 = vmatprep.subr.mxu0 0.0
        %v6657 = vand.u32 %v6647, 4294901760
        %6658 = vmatpush1.msra.mxu0 %v6657
        %6659 = vmatprep.subr.mxu0 0.0
        %v6660 = vand.u32 %v6646, 4294901760
        %6661 = vmatpush1.msra.mxu0 %v6660
        %6662 = vmatprep.subr.mxu0 0.0
        %v6663 = vand.u32 %v6645, 4294901760
        %6664 = vmatpush1.msra.mxu0 %v6663
        %6665 = vmatprep.subr.mxu0 0.0
        %v6666 = vand.u32 %v6644, 4294901760
        %6667 = vmatpush1.msra.mxu0 %v6666
        %6668 = vmatprep.subr.mxu0 0.0
        %v6669 = vand.u32 %v6643, 4294901760
        %6670 = vmatpush1.msra.mxu0 %v6669
        %6671 = vmatprep.subr.mxu0 0.0
        %v6672 = vand.u32 %v6642, 4294901760
        %6673 = vmatpush1.msra.mxu0 %v6672
        %6674 = vmatprep.subr.mxu0 0.0
        %v6675 = vand.u32 %v6641, 4294901760
        %6676 = vmatpush1.msra.mxu0 %v6675
        %6677 = vmatprep.subr.mxu0 0.0
        %v6678 = vand.u32 %v6640, 4294901760
        %6679 = vmatpush1.msra.mxu0 %v6678
        %6680 = vmatprep.subr.mxu0 0.0
        %v6681 = vand.u32 %v6639, 4294901760
        %6682 = vmatpush1.msra.mxu0 %v6681
        %6683 = vmatprep.subr.mxu0 0.0
        %v6684 = vand.u32 %v6638, 4294901760
        %6685 = vmatpush1.msra.mxu0 %v6684
        %6686 = vmatprep.subr.mxu0 0.0
        %v6687 = vand.u32 %v6637, 4294901760
        %6688 = vmatpush1.msra.mxu0 %v6687
        %6689 = vmatprep.subr.mxu0 0.0
        %v6690 = vand.u32 %v6636, 4294901760
        %6691 = vmatpush1.msra.mxu0 %v6690
        %6692 = vmatprep.subr.mxu0 0.0
        %v6693 = vand.u32 %v6635, 4294901760
        %6694 = vmatpush1.msra.mxu0 %v6693
        %6695 = vmatprep.subr.mxu0 0.0
        %v6696 = vand.u32 %v6634, 4294901760
        %6697 = vmatpush1.msra.mxu0 %v6696
        %6698 = vmatprep.subr.mxu0 0.0
        %6699 = vmatpush2.msra.mxu0 0.0
        %6700 = vmatprep.subr.mxu0 0.0
        %6701 = vmatpush2.msra.mxu0 0.0
        %6702 = vmatprep.subr.mxu0 0.0
        %6703 = vmatpush2.msra.mxu0 0.0
        %6704 = vmatprep.subr.mxu0 0.0
        %6705 = vmatpush2.msra.mxu0 0.0
        %6706 = vmatprep.subr.mxu0 0.0
        %6707 = vmatpush2.msra.mxu0 0.0
        %6708 = vmatprep.subr.mxu0 0.0
        %6709 = vmatpush2.msra.mxu0 0.0
        %6710 = vmatprep.subr.mxu0 0.0
        %6711 = vmatpush2.msra.mxu0 0.0
        %6712 = vmatprep.subr.mxu0 0.0
        %6713 = vmatpush2.msra.mxu0 0.0
        %6714 = vmatprep.subr.mxu0 0.0
        %6715 = vmatpush2.msra.mxu0 0.0
        %6716 = vmatprep.subr.mxu0 0.0
        %6717 = vmatpush2.msra.mxu0 0.0
        %6718 = vmatprep.subr.mxu0 0.0
        %6719 = vmatpush2.msra.mxu0 0.0
        %6720 = vmatprep.subr.mxu0 0.0
        %6721 = vmatpush2.msra.mxu0 0.0
        %6722 = vmatprep.subr.mxu0 0.0
        %6723 = vmatpush2.msra.mxu0 0.0
        %6724 = vmatprep.subr.mxu0 0.0
        %6725 = vmatpush2.msra.mxu0 0.0
        %6726 = vmatprep.subr.mxu0 0.0
        %6727 = vmatpush2.msra.mxu0 0.0
        %6728 = vmatprep.subr.mxu0 0.0
        %6729 = vmatpush2.msra.mxu0 0.0
        %6730 = vmatprep.mubr.f32.mxu0 0.0
        %v6731 = vand.u32 %v6608, 4294901760
        %v6732 = vsub.f32 %v6608, %v6731
        %v6733 = vand.u32 %v6732, 4294901760
        %v6734 = vsub.f32 %v6732, %v6733
        %v6735 = vand.u32 %v6734, 4294901760
        %6736 = vmatmul.mubr.f32.gmra.mxu0 %v6735
        %v6737 = vpop.f32.mrf.mxu0
        %v6738 = vadd.f32 0.0, %v6737
        %v6739 = vpop.f32.mrf.mxu0
        %6740 = vmatprep.mubr.f32.mxu0 0.0
        %v6741 = vand.u32 %v6609, 4294901760
        %v6742 = vsub.f32 %v6609, %v6741
        %v6743 = vand.u32 %v6742, 4294901760
        %v6744 = vsub.f32 %v6742, %v6743
        %v6745 = vand.u32 %v6744, 4294901760
        %6746 = vmatmul.mubr.f32.gmra.mxu0 %v6745
        %v6747 = vpop.f32.mrf.mxu0
        %v6748 = vadd.f32 0.0, %v6747
        %v6749 = vpop.f32.mrf.mxu0
        %6750 = vdwg.mxu0
        %6751 = vmatprep.subr.mxu0 0.0
        %v6752 = vand.u32 %v6649, 4294901760
        %v6753 = vsub.f32 %v6649, %v6752
        %v6754 = vand.u32 %v6753, 4294901760
        %v6755 = vsub.f32 %v6753, %v6754
        %v6756 = vand.u32 %v6755, 4294901760
        %6757 = vmatpush1.msra.mxu0 %v6756
        %6758 = vmatprep.subr.mxu0 0.0
        %v6759 = vand.u32 %v6648, 4294901760
        %v6760 = vsub.f32 %v6648, %v6759
        %v6761 = vand.u32 %v6760, 4294901760
        %v6762 = vsub.f32 %v6760, %v6761
        %v6763 = vand.u32 %v6762, 4294901760
        %6764 = vmatpush1.msra.mxu0 %v6763
        %6765 = vmatprep.subr.mxu0 0.0
        %v6766 = vand.u32 %v6647, 4294901760
        %v6767 = vsub.f32 %v6647, %v6766
        %v6768 = vand.u32 %v6767, 4294901760
        %v6769 = vsub.f32 %v6767, %v6768
        %v6770 = vand.u32 %v6769, 4294901760
        %6771 = vmatpush1.msra.mxu0 %v6770
        %6772 = vmatprep.subr.mxu0 0.0
        %v6773 = vand.u32 %v6646, 4294901760
        %v6774 = vsub.f32 %v6646, %v6773
        %v6775 = vand.u32 %v6774, 4294901760
        %v6776 = vsub.f32 %v6774, %v6775
        %v6777 = vand.u32 %v6776, 4294901760
        %6778 = vmatpush1.msra.mxu0 %v6777
        %6779 = vmatprep.subr.mxu0 0.0
        %v6780 = vand.u32 %v6645, 4294901760
        %v6781 = vsub.f32 %v6645, %v6780
        %v6782 = vand.u32 %v6781, 4294901760
        %v6783 = vsub.f32 %v6781, %v6782
        %v6784 = vand.u32 %v6783, 4294901760
        %6785 = vmatpush1.msra.mxu0 %v6784
        %6786 = vmatprep.subr.mxu0 0.0
        %v6787 = vand.u32 %v6644, 4294901760
        %v6788 = vsub.f32 %v6644, %v6787
        %v6789 = vand.u32 %v6788, 4294901760
        %v6790 = vsub.f32 %v6788, %v6789
        %v6791 = vand.u32 %v6790, 4294901760
        %6792 = vmatpush1.msra.mxu0 %v6791
        %6793 = vmatprep.subr.mxu0 0.0
        %v6794 = vand.u32 %v6643, 4294901760
        %v6795 = vsub.f32 %v6643, %v6794
        %v6796 = vand.u32 %v6795, 4294901760
        %v6797 = vsub.f32 %v6795, %v6796
        %v6798 = vand.u32 %v6797, 4294901760
        %6799 = vmatpush1.msra.mxu0 %v6798
        %6800 = vmatprep.subr.mxu0 0.0
        %v6801 = vand.u32 %v6642, 4294901760
        %v6802 = vsub.f32 %v6642, %v6801
        %v6803 = vand.u32 %v6802, 4294901760
        %v6804 = vsub.f32 %v6802, %v6803
        %v6805 = vand.u32 %v6804, 4294901760
        %6806 = vmatpush1.msra.mxu0 %v6805
        %6807 = vmatprep.subr.mxu0 0.0
        %v6808 = vand.u32 %v6641, 4294901760
        %v6809 = vsub.f32 %v6641, %v6808
        %v6810 = vand.u32 %v6809, 4294901760
        %v6811 = vsub.f32 %v6809, %v6810
        %v6812 = vand.u32 %v6811, 4294901760
        %6813 = vmatpush1.msra.mxu0 %v6812
        %6814 = vmatprep.subr.mxu0 0.0
        %v6815 = vand.u32 %v6640, 4294901760
        %v6816 = vsub.f32 %v6640, %v6815
        %v6817 = vand.u32 %v6816, 4294901760
        %v6818 = vsub.f32 %v6816, %v6817
        %v6819 = vand.u32 %v6818, 4294901760
        %6820 = vmatpush1.msra.mxu0 %v6819
        %6821 = vmatprep.subr.mxu0 0.0
        %v6822 = vand.u32 %v6639, 4294901760
        %v6823 = vsub.f32 %v6639, %v6822
        %v6824 = vand.u32 %v6823, 4294901760
        %v6825 = vsub.f32 %v6823, %v6824
        %v6826 = vand.u32 %v6825, 4294901760
        %6827 = vmatpush1.msra.mxu0 %v6826
        %6828 = vmatprep.subr.mxu0 0.0
        %v6829 = vand.u32 %v6638, 4294901760
        %v6830 = vsub.f32 %v6638, %v6829
        %v6831 = vand.u32 %v6830, 4294901760
        %v6832 = vsub.f32 %v6830, %v6831
        %v6833 = vand.u32 %v6832, 4294901760
        %6834 = vmatpush1.msra.mxu0 %v6833
        %6835 = vmatprep.subr.mxu0 0.0
        %v6836 = vand.u32 %v6637, 4294901760
        %v6837 = vsub.f32 %v6637, %v6836
        %v6838 = vand.u32 %v6837, 4294901760
        %v6839 = vsub.f32 %v6837, %v6838
        %v6840 = vand.u32 %v6839, 4294901760
        %6841 = vmatpush1.msra.mxu0 %v6840
        %6842 = vmatprep.subr.mxu0 0.0
        %v6843 = vand.u32 %v6636, 4294901760
        %v6844 = vsub.f32 %v6636, %v6843
        %v6845 = vand.u32 %v6844, 4294901760
        %v6846 = vsub.f32 %v6844, %v6845
        %v6847 = vand.u32 %v6846, 4294901760
        %6848 = vmatpush1.msra.mxu0 %v6847
        %6849 = vmatprep.subr.mxu0 0.0
        %v6850 = vand.u32 %v6635, 4294901760
        %v6851 = vsub.f32 %v6635, %v6850
        %v6852 = vand.u32 %v6851, 4294901760
        %v6853 = vsub.f32 %v6851, %v6852
        %v6854 = vand.u32 %v6853, 4294901760
        %6855 = vmatpush1.msra.mxu0 %v6854
        %6856 = vmatprep.subr.mxu0 0.0
        %v6857 = vand.u32 %v6634, 4294901760
        %v6858 = vsub.f32 %v6634, %v6857
        %v6859 = vand.u32 %v6858, 4294901760
        %v6860 = vsub.f32 %v6858, %v6859
        %v6861 = vand.u32 %v6860, 4294901760
        %6862 = vmatpush1.msra.mxu0 %v6861
        %6863 = vmatprep.subr.mxu0 0.0
        %6864 = vmatpush2.msra.mxu0 0.0
        %6865 = vmatprep.subr.mxu0 0.0
        %6866 = vmatpush2.msra.mxu0 0.0
        %6867 = vmatprep.subr.mxu0 0.0
        %6868 = vmatpush2.msra.mxu0 0.0
        %6869 = vmatprep.subr.mxu0 0.0
        %6870 = vmatpush2.msra.mxu0 0.0
        %6871 = vmatprep.subr.mxu0 0.0
        %6872 = vmatpush2.msra.mxu0 0.0
        %6873 = vmatprep.subr.mxu0 0.0
        %6874 = vmatpush2.msra.mxu0 0.0
        %6875 = vmatprep.subr.mxu0 0.0
        %6876 = vmatpush2.msra.mxu0 0.0
        %6877 = vmatprep.subr.mxu0 0.0
        %6878 = vmatpush2.msra.mxu0 0.0
        %6879 = vmatprep.subr.mxu0 0.0
        %6880 = vmatpush2.msra.mxu0 0.0
        %6881 = vmatprep.subr.mxu0 0.0
        %6882 = vmatpush2.msra.mxu0 0.0
        %6883 = vmatprep.subr.mxu0 0.0
        %6884 = vmatpush2.msra.mxu0 0.0
        %6885 = vmatprep.subr.mxu0 0.0
        %6886 = vmatpush2.msra.mxu0 0.0
        %6887 = vmatprep.subr.mxu0 0.0
        %6888 = vmatpush2.msra.mxu0 0.0
        %6889 = vmatprep.subr.mxu0 0.0
        %6890 = vmatpush2.msra.mxu0 0.0
        %6891 = vmatprep.subr.mxu0 0.0
        %6892 = vmatpush2.msra.mxu0 0.0
        %6893 = vmatprep.subr.mxu0 0.0
        %6894 = vmatpush2.msra.mxu0 0.0
        %6895 = vmatprep.mubr.f32.mxu0 0.0
        %v6896 = vand.u32 %v6608, 4294901760
        %6897 = vmatmul.mubr.f32.gmra.mxu0 %v6896
        %v6898 = vpop.f32.mrf.mxu0
        %v6899 = vadd.f32 %v6738, %v6898
        %v6900 = vpop.f32.mrf.mxu0
        %6901 = vmatprep.mubr.f32.mxu0 0.0
        %v6902 = vand.u32 %v6609, 4294901760
        %6903 = vmatmul.mubr.f32.gmra.mxu0 %v6902
        %v6904 = vpop.f32.mrf.mxu0
        %v6905 = vadd.f32 %v6748, %v6904
        %v6906 = vpop.f32.mrf.mxu0
        %6907 = vdwg.mxu0
        %6908 = vmatprep.subr.mxu0 0.0
        %v6909 = vand.u32 %v6649, 4294901760
        %v6910 = vsub.f32 %v6649, %v6909
        %6911 = vmatpush1.msra.mxu0 %v6910
        %6912 = vmatprep.subr.mxu0 0.0
        %v6913 = vand.u32 %v6648, 4294901760
        %v6914 = vsub.f32 %v6648, %v6913
        %6915 = vmatpush1.msra.mxu0 %v6914
        %6916 = vmatprep.subr.mxu0 0.0
        %v6917 = vand.u32 %v6647, 4294901760
        %v6918 = vsub.f32 %v6647, %v6917
        %6919 = vmatpush1.msra.mxu0 %v6918
        %6920 = vmatprep.subr.mxu0 0.0
        %v6921 = vand.u32 %v6646, 4294901760
        %v6922 = vsub.f32 %v6646, %v6921
        %6923 = vmatpush1.msra.mxu0 %v6922
        %6924 = vmatprep.subr.mxu0 0.0
        %v6925 = vand.u32 %v6645, 4294901760
        %v6926 = vsub.f32 %v6645, %v6925
        %6927 = vmatpush1.msra.mxu0 %v6926
        %6928 = vmatprep.subr.mxu0 0.0
        %v6929 = vand.u32 %v6644, 4294901760
        %v6930 = vsub.f32 %v6644, %v6929
        %6931 = vmatpush1.msra.mxu0 %v6930
        %6932 = vmatprep.subr.mxu0 0.0
        %v6933 = vand.u32 %v6643, 4294901760
        %v6934 = vsub.f32 %v6643, %v6933
        %6935 = vmatpush1.msra.mxu0 %v6934
        %6936 = vmatprep.subr.mxu0 0.0
        %v6937 = vand.u32 %v6642, 4294901760
        %v6938 = vsub.f32 %v6642, %v6937
        %6939 = vmatpush1.msra.mxu0 %v6938
        %6940 = vmatprep.subr.mxu0 0.0
        %v6941 = vand.u32 %v6641, 4294901760
        %v6942 = vsub.f32 %v6641, %v6941
        %6943 = vmatpush1.msra.mxu0 %v6942
        %6944 = vmatprep.subr.mxu0 0.0
        %v6945 = vand.u32 %v6640, 4294901760
        %v6946 = vsub.f32 %v6640, %v6945
        %6947 = vmatpush1.msra.mxu0 %v6946
        %6948 = vmatprep.subr.mxu0 0.0
        %v6949 = vand.u32 %v6639, 4294901760
        %v6950 = vsub.f32 %v6639, %v6949
        %6951 = vmatpush1.msra.mxu0 %v6950
        %6952 = vmatprep.subr.mxu0 0.0
        %v6953 = vand.u32 %v6638, 4294901760
        %v6954 = vsub.f32 %v6638, %v6953
        %6955 = vmatpush1.msra.mxu0 %v6954
        %6956 = vmatprep.subr.mxu0 0.0
        %v6957 = vand.u32 %v6637, 4294901760
        %v6958 = vsub.f32 %v6637, %v6957
        %6959 = vmatpush1.msra.mxu0 %v6958
        %6960 = vmatprep.subr.mxu0 0.0
        %v6961 = vand.u32 %v6636, 4294901760
        %v6962 = vsub.f32 %v6636, %v6961
        %6963 = vmatpush1.msra.mxu0 %v6962
        %6964 = vmatprep.subr.mxu0 0.0
        %v6965 = vand.u32 %v6635, 4294901760
        %v6966 = vsub.f32 %v6635, %v6965
        %6967 = vmatpush1.msra.mxu0 %v6966
        %6968 = vmatprep.subr.mxu0 0.0
        %v6969 = vand.u32 %v6634, 4294901760
        %v6970 = vsub.f32 %v6634, %v6969
        %6971 = vmatpush1.msra.mxu0 %v6970
        %6972 = vmatprep.subr.mxu0 0.0
        %6973 = vmatpush2.msra.mxu0 0.0
        %6974 = vmatprep.subr.mxu0 0.0
        %6975 = vmatpush2.msra.mxu0 0.0
        %6976 = vmatprep.subr.mxu0 0.0
        %6977 = vmatpush2.msra.mxu0 0.0
        %6978 = vmatprep.subr.mxu0 0.0
        %6979 = vmatpush2.msra.mxu0 0.0
        %6980 = vmatprep.subr.mxu0 0.0
        %6981 = vmatpush2.msra.mxu0 0.0
        %6982 = vmatprep.subr.mxu0 0.0
        %6983 = vmatpush2.msra.mxu0 0.0
        %6984 = vmatprep.subr.mxu0 0.0
        %6985 = vmatpush2.msra.mxu0 0.0
        %6986 = vmatprep.subr.mxu0 0.0
        %6987 = vmatpush2.msra.mxu0 0.0
        %6988 = vmatprep.subr.mxu0 0.0
        %6989 = vmatpush2.msra.mxu0 0.0
        %6990 = vmatprep.subr.mxu0 0.0
        %6991 = vmatpush2.msra.mxu0 0.0
        %6992 = vmatprep.subr.mxu0 0.0
        %6993 = vmatpush2.msra.mxu0 0.0
        %6994 = vmatprep.subr.mxu0 0.0
        %6995 = vmatpush2.msra.mxu0 0.0
        %6996 = vmatprep.subr.mxu0 0.0
        %6997 = vmatpush2.msra.mxu0 0.0
        %6998 = vmatprep.subr.mxu0 0.0
        %6999 = vmatpush2.msra.mxu0 0.0
        %7000 = vmatprep.subr.mxu0 0.0
        %7001 = vmatpush2.msra.mxu0 0.0
        %7002 = vmatprep.subr.mxu0 0.0
        %7003 = vmatpush2.msra.mxu0 0.0
        %7004 = vmatprep.mubr.f32.mxu0 0.0
        %v7005 = vand.u32 %v6608, 4294901760
        %v7006 = vsub.f32 %v6608, %v7005
        %7007 = vmatmul.mubr.f32.gmra.mxu0 %v7006
        %v7008 = vpop.f32.mrf.mxu0
        %v7009 = vadd.f32 %v6899, %v7008
        %v7010 = vpop.f32.mrf.mxu0
        %7011 = vmatprep.mubr.f32.mxu0 0.0
        %v7012 = vand.u32 %v6609, 4294901760
        %v7013 = vsub.f32 %v6609, %v7012
        %7014 = vmatmul.mubr.f32.gmra.mxu0 %v7013
        %v7015 = vpop.f32.mrf.mxu0
        %v7016 = vadd.f32 %v6905, %v7015
        %v7017 = vpop.f32.mrf.mxu0
        %7018 = vdwg.mxu0
        %7019 = vmatprep.subr.mxu0 0.0
        %v7020 = vand.u32 %v6649, 4294901760
        %7021 = vmatpush1.msra.mxu0 %v7020
        %7022 = vmatprep.subr.mxu0 0.0
        %v7023 = vand.u32 %v6648, 4294901760
        %7024 = vmatpush1.msra.mxu0 %v7023
        %7025 = vmatprep.subr.mxu0 0.0
        %v7026 = vand.u32 %v6647, 4294901760
        %7027 = vmatpush1.msra.mxu0 %v7026
        %7028 = vmatprep.subr.mxu0 0.0
        %v7029 = vand.u32 %v6646, 4294901760
        %7030 = vmatpush1.msra.mxu0 %v7029
        %7031 = vmatprep.subr.mxu0 0.0
        %v7032 = vand.u32 %v6645, 4294901760
        %7033 = vmatpush1.msra.mxu0 %v7032
        %7034 = vmatprep.subr.mxu0 0.0
        %v7035 = vand.u32 %v6644, 4294901760
        %7036 = vmatpush1.msra.mxu0 %v7035
        %7037 = vmatprep.subr.mxu0 0.0
        %v7038 = vand.u32 %v6643, 4294901760
        %7039 = vmatpush1.msra.mxu0 %v7038
        %7040 = vmatprep.subr.mxu0 0.0
        %v7041 = vand.u32 %v6642, 4294901760
        %7042 = vmatpush1.msra.mxu0 %v7041
        %7043 = vmatprep.subr.mxu0 0.0
        %v7044 = vand.u32 %v6641, 4294901760
        %7045 = vmatpush1.msra.mxu0 %v7044
        %7046 = vmatprep.subr.mxu0 0.0
        %v7047 = vand.u32 %v6640, 4294901760
        %7048 = vmatpush1.msra.mxu0 %v7047
        %7049 = vmatprep.subr.mxu0 0.0
        %v7050 = vand.u32 %v6639, 4294901760
        %7051 = vmatpush1.msra.mxu0 %v7050
        %7052 = vmatprep.subr.mxu0 0.0
        %v7053 = vand.u32 %v6638, 4294901760
        %7054 = vmatpush1.msra.mxu0 %v7053
        %7055 = vmatprep.subr.mxu0 0.0
        %v7056 = vand.u32 %v6637, 4294901760
        %7057 = vmatpush1.msra.mxu0 %v7056
        %7058 = vmatprep.subr.mxu0 0.0
        %v7059 = vand.u32 %v6636, 4294901760
        %7060 = vmatpush1.msra.mxu0 %v7059
        %7061 = vmatprep.subr.mxu0 0.0
        %v7062 = vand.u32 %v6635, 4294901760
        %7063 = vmatpush1.msra.mxu0 %v7062
        %7064 = vmatprep.subr.mxu0 0.0
        %v7065 = vand.u32 %v6634, 4294901760
        %7066 = vmatpush1.msra.mxu0 %v7065
        %7067 = vmatprep.subr.mxu0 0.0
        %7068 = vmatpush2.msra.mxu0 0.0
        %7069 = vmatprep.subr.mxu0 0.0
        %7070 = vmatpush2.msra.mxu0 0.0
        %7071 = vmatprep.subr.mxu0 0.0
        %7072 = vmatpush2.msra.mxu0 0.0
        %7073 = vmatprep.subr.mxu0 0.0
        %7074 = vmatpush2.msra.mxu0 0.0
        %7075 = vmatprep.subr.mxu0 0.0
        %7076 = vmatpush2.msra.mxu0 0.0
        %7077 = vmatprep.subr.mxu0 0.0
        %7078 = vmatpush2.msra.mxu0 0.0
        %7079 = vmatprep.subr.mxu0 0.0
        %7080 = vmatpush2.msra.mxu0 0.0
        %7081 = vmatprep.subr.mxu0 0.0
        %7082 = vmatpush2.msra.mxu0 0.0
        %7083 = vmatprep.subr.mxu0 0.0
        %7084 = vmatpush2.msra.mxu0 0.0
        %7085 = vmatprep.subr.mxu0 0.0
        %7086 = vmatpush2.msra.mxu0 0.0
        %7087 = vmatprep.subr.mxu0 0.0
        %7088 = vmatpush2.msra.mxu0 0.0
        %7089 = vmatprep.subr.mxu0 0.0
        %7090 = vmatpush2.msra.mxu0 0.0
        %7091 = vmatprep.subr.mxu0 0.0
        %7092 = vmatpush2.msra.mxu0 0.0
        %7093 = vmatprep.subr.mxu0 0.0
        %7094 = vmatpush2.msra.mxu0 0.0
        %7095 = vmatprep.subr.mxu0 0.0
        %7096 = vmatpush2.msra.mxu0 0.0
        %7097 = vmatprep.subr.mxu0 0.0
        %7098 = vmatpush2.msra.mxu0 0.0
        %7099 = vmatprep.mubr.f32.mxu0 0.0
        %v7100 = vand.u32 %v6608, 4294901760
        %v7101 = vsub.f32 %v6608, %v7100
        %v7102 = vand.u32 %v7101, 4294901760
        %7103 = vmatmul.mubr.f32.gmra.mxu0 %v7102
        %v7104 = vpop.f32.mrf.mxu0
        %v7105 = vadd.f32 %v7009, %v7104
        %v7106 = vpop.f32.mrf.mxu0
        %7107 = vmatprep.mubr.f32.mxu0 0.0
        %v7108 = vand.u32 %v6609, 4294901760
        %v7109 = vsub.f32 %v6609, %v7108
        %v7110 = vand.u32 %v7109, 4294901760
        %7111 = vmatmul.mubr.f32.gmra.mxu0 %v7110
        %v7112 = vpop.f32.mrf.mxu0
        %v7113 = vadd.f32 %v7016, %v7112
        %v7114 = vpop.f32.mrf.mxu0
        %7115 = vdwg.mxu0
        %7116 = vmatprep.subr.mxu0 0.0
        %v7117 = vand.u32 %v6649, 4294901760
        %v7118 = vsub.f32 %v6649, %v7117
        %v7119 = vand.u32 %v7118, 4294901760
        %7120 = vmatpush1.msra.mxu0 %v7119
        %7121 = vmatprep.subr.mxu0 0.0
        %v7122 = vand.u32 %v6648, 4294901760
        %v7123 = vsub.f32 %v6648, %v7122
        %v7124 = vand.u32 %v7123, 4294901760
        %7125 = vmatpush1.msra.mxu0 %v7124
        %7126 = vmatprep.subr.mxu0 0.0
        %v7127 = vand.u32 %v6647, 4294901760
        %v7128 = vsub.f32 %v6647, %v7127
        %v7129 = vand.u32 %v7128, 4294901760
        %7130 = vmatpush1.msra.mxu0 %v7129
        %7131 = vmatprep.subr.mxu0 0.0
        %v7132 = vand.u32 %v6646, 4294901760
        %v7133 = vsub.f32 %v6646, %v7132
        %v7134 = vand.u32 %v7133, 4294901760
        %7135 = vmatpush1.msra.mxu0 %v7134
        %7136 = vmatprep.subr.mxu0 0.0
        %v7137 = vand.u32 %v6645, 4294901760
        %v7138 = vsub.f32 %v6645, %v7137
        %v7139 = vand.u32 %v7138, 4294901760
        %7140 = vmatpush1.msra.mxu0 %v7139
        %7141 = vmatprep.subr.mxu0 0.0
        %v7142 = vand.u32 %v6644, 4294901760
        %v7143 = vsub.f32 %v6644, %v7142
        %v7144 = vand.u32 %v7143, 4294901760
        %7145 = vmatpush1.msra.mxu0 %v7144
        %7146 = vmatprep.subr.mxu0 0.0
        %v7147 = vand.u32 %v6643, 4294901760
        %v7148 = vsub.f32 %v6643, %v7147
        %v7149 = vand.u32 %v7148, 4294901760
        %7150 = vmatpush1.msra.mxu0 %v7149
        %7151 = vmatprep.subr.mxu0 0.0
        %v7152 = vand.u32 %v6642, 4294901760
        %v7153 = vsub.f32 %v6642, %v7152
        %v7154 = vand.u32 %v7153, 4294901760
        %7155 = vmatpush1.msra.mxu0 %v7154
        %7156 = vmatprep.subr.mxu0 0.0
        %v7157 = vand.u32 %v6641, 4294901760
        %v7158 = vsub.f32 %v6641, %v7157
        %v7159 = vand.u32 %v7158, 4294901760
        %7160 = vmatpush1.msra.mxu0 %v7159
        %7161 = vmatprep.subr.mxu0 0.0
        %v7162 = vand.u32 %v6640, 4294901760
        %v7163 = vsub.f32 %v6640, %v7162
        %v7164 = vand.u32 %v7163, 4294901760
        %7165 = vmatpush1.msra.mxu0 %v7164
        %7166 = vmatprep.subr.mxu0 0.0
        %v7167 = vand.u32 %v6639, 4294901760
        %v7168 = vsub.f32 %v6639, %v7167
        %v7169 = vand.u32 %v7168, 4294901760
        %7170 = vmatpush1.msra.mxu0 %v7169
        %7171 = vmatprep.subr.mxu0 0.0
        %v7172 = vand.u32 %v6638, 4294901760
        %v7173 = vsub.f32 %v6638, %v7172
        %v7174 = vand.u32 %v7173, 4294901760
        %7175 = vmatpush1.msra.mxu0 %v7174
        %7176 = vmatprep.subr.mxu0 0.0
        %v7177 = vand.u32 %v6637, 4294901760
        %v7178 = vsub.f32 %v6637, %v7177
        %v7179 = vand.u32 %v7178, 4294901760
        %7180 = vmatpush1.msra.mxu0 %v7179
        %7181 = vmatprep.subr.mxu0 0.0
        %v7182 = vand.u32 %v6636, 4294901760
        %v7183 = vsub.f32 %v6636, %v7182
        %v7184 = vand.u32 %v7183, 4294901760
        %7185 = vmatpush1.msra.mxu0 %v7184
        %7186 = vmatprep.subr.mxu0 0.0
        %v7187 = vand.u32 %v6635, 4294901760
        %v7188 = vsub.f32 %v6635, %v7187
        %v7189 = vand.u32 %v7188, 4294901760
        %7190 = vmatpush1.msra.mxu0 %v7189
        %7191 = vmatprep.subr.mxu0 0.0
        %v7192 = vand.u32 %v6634, 4294901760
        %v7193 = vsub.f32 %v6634, %v7192
        %v7194 = vand.u32 %v7193, 4294901760
        %7195 = vmatpush1.msra.mxu0 %v7194
        %7196 = vmatprep.subr.mxu0 0.0
        %7197 = vmatpush2.msra.mxu0 0.0
        %7198 = vmatprep.subr.mxu0 0.0
        %7199 = vmatpush2.msra.mxu0 0.0
        %7200 = vmatprep.subr.mxu0 0.0
        %7201 = vmatpush2.msra.mxu0 0.0
        %7202 = vmatprep.subr.mxu0 0.0
        %7203 = vmatpush2.msra.mxu0 0.0
        %7204 = vmatprep.subr.mxu0 0.0
        %7205 = vmatpush2.msra.mxu0 0.0
        %7206 = vmatprep.subr.mxu0 0.0
        %7207 = vmatpush2.msra.mxu0 0.0
        %7208 = vmatprep.subr.mxu0 0.0
        %7209 = vmatpush2.msra.mxu0 0.0
        %7210 = vmatprep.subr.mxu0 0.0
        %7211 = vmatpush2.msra.mxu0 0.0
        %7212 = vmatprep.subr.mxu0 0.0
        %7213 = vmatpush2.msra.mxu0 0.0
        %7214 = vmatprep.subr.mxu0 0.0
        %7215 = vmatpush2.msra.mxu0 0.0
        %7216 = vmatprep.subr.mxu0 0.0
        %7217 = vmatpush2.msra.mxu0 0.0
        %7218 = vmatprep.subr.mxu0 0.0
        %7219 = vmatpush2.msra.mxu0 0.0
        %7220 = vmatprep.subr.mxu0 0.0
        %7221 = vmatpush2.msra.mxu0 0.0
        %7222 = vmatprep.subr.mxu0 0.0
        %7223 = vmatpush2.msra.mxu0 0.0
        %7224 = vmatprep.subr.mxu0 0.0
        %7225 = vmatpush2.msra.mxu0 0.0
        %7226 = vmatprep.subr.mxu0 0.0
        %7227 = vmatpush2.msra.mxu0 0.0
        %7228 = vmatprep.mubr.f32.mxu0 0.0
        %v7229 = vand.u32 %v6608, 4294901760
        %7230 = vmatmul.mubr.f32.gmra.mxu0 %v7229
        %v7231 = vpop.f32.mrf.mxu0
        %v7232 = vadd.f32 %v7105, %v7231
        %v7233 = vpop.f32.mrf.mxu0
        %7234 = vmatprep.mubr.f32.mxu0 0.0
        %v7235 = vand.u32 %v6609, 4294901760
        %7236 = vmatmul.mubr.f32.gmra.mxu0 %v7235
        %v7237 = vpop.f32.mrf.mxu0
        %v7238 = vadd.f32 %v7113, %v7237
        %v7239 = vpop.f32.mrf.mxu0
        %7240 = vdwg.mxu0
        %7241 = vmatprep.subr.mxu0 0.0
        %v7242 = vand.u32 %v6649, 4294901760
        %7243 = vmatpush1.msra.mxu0 %v7242
        %7244 = vmatprep.subr.mxu0 0.0
        %v7245 = vand.u32 %v6648, 4294901760
        %7246 = vmatpush1.msra.mxu0 %v7245
        %7247 = vmatprep.subr.mxu0 0.0
        %v7248 = vand.u32 %v6647, 4294901760
        %7249 = vmatpush1.msra.mxu0 %v7248
        %7250 = vmatprep.subr.mxu0 0.0
        %v7251 = vand.u32 %v6646, 4294901760
        %7252 = vmatpush1.msra.mxu0 %v7251
        %7253 = vmatprep.subr.mxu0 0.0
        %v7254 = vand.u32 %v6645, 4294901760
        %7255 = vmatpush1.msra.mxu0 %v7254
        %7256 = vmatprep.subr.mxu0 0.0
        %v7257 = vand.u32 %v6644, 4294901760
        %7258 = vmatpush1.msra.mxu0 %v7257
        %7259 = vmatprep.subr.mxu0 0.0
        %v7260 = vand.u32 %v6643, 4294901760
        %7261 = vmatpush1.msra.mxu0 %v7260
        %7262 = vmatprep.subr.mxu0 0.0
        %v7263 = vand.u32 %v6642, 4294901760
        %7264 = vmatpush1.msra.mxu0 %v7263
        %7265 = vmatprep.subr.mxu0 0.0
        %v7266 = vand.u32 %v6641, 4294901760
        %7267 = vmatpush1.msra.mxu0 %v7266
        %7268 = vmatprep.subr.mxu0 0.0
        %v7269 = vand.u32 %v6640, 4294901760
        %7270 = vmatpush1.msra.mxu0 %v7269
        %7271 = vmatprep.subr.mxu0 0.0
        %v7272 = vand.u32 %v6639, 4294901760
        %7273 = vmatpush1.msra.mxu0 %v7272
        %7274 = vmatprep.subr.mxu0 0.0
        %v7275 = vand.u32 %v6638, 4294901760
        %7276 = vmatpush1.msra.mxu0 %v7275
        %7277 = vmatprep.subr.mxu0 0.0
        %v7278 = vand.u32 %v6637, 4294901760
        %7279 = vmatpush1.msra.mxu0 %v7278
        %7280 = vmatprep.subr.mxu0 0.0
        %v7281 = vand.u32 %v6636, 4294901760
        %7282 = vmatpush1.msra.mxu0 %v7281
        %7283 = vmatprep.subr.mxu0 0.0
        %v7284 = vand.u32 %v6635, 4294901760
        %7285 = vmatpush1.msra.mxu0 %v7284
        %7286 = vmatprep.subr.mxu0 0.0
        %v7287 = vand.u32 %v6634, 4294901760
        %7288 = vmatpush1.msra.mxu0 %v7287
        %7289 = vmatprep.subr.mxu0 0.0
        %7290 = vmatpush2.msra.mxu0 0.0
        %7291 = vmatprep.subr.mxu0 0.0
        %7292 = vmatpush2.msra.mxu0 0.0
        %7293 = vmatprep.subr.mxu0 0.0
        %7294 = vmatpush2.msra.mxu0 0.0
        %7295 = vmatprep.subr.mxu0 0.0
        %7296 = vmatpush2.msra.mxu0 0.0
        %7297 = vmatprep.subr.mxu0 0.0
        %7298 = vmatpush2.msra.mxu0 0.0
        %7299 = vmatprep.subr.mxu0 0.0
        %7300 = vmatpush2.msra.mxu0 0.0
        %7301 = vmatprep.subr.mxu0 0.0
        %7302 = vmatpush2.msra.mxu0 0.0
        %7303 = vmatprep.subr.mxu0 0.0
        %7304 = vmatpush2.msra.mxu0 0.0
        %7305 = vmatprep.subr.mxu0 0.0
        %7306 = vmatpush2.msra.mxu0 0.0
        %7307 = vmatprep.subr.mxu0 0.0
        %7308 = vmatpush2.msra.mxu0 0.0
        %7309 = vmatprep.subr.mxu0 0.0
        %7310 = vmatpush2.msra.mxu0 0.0
        %7311 = vmatprep.subr.mxu0 0.0
        %7312 = vmatpush2.msra.mxu0 0.0
        %7313 = vmatprep.subr.mxu0 0.0
        %7314 = vmatpush2.msra.mxu0 0.0
        %7315 = vmatprep.subr.mxu0 0.0
        %7316 = vmatpush2.msra.mxu0 0.0
        %7317 = vmatprep.subr.mxu0 0.0
        %7318 = vmatpush2.msra.mxu0 0.0
        %7319 = vmatprep.subr.mxu0 0.0
        %7320 = vmatpush2.msra.mxu0 0.0
        %7321 = vmatprep.mubr.f32.mxu0 0.0
        %v7322 = vand.u32 %v6608, 4294901760
        %7323 = vmatmul.mubr.f32.gmra.mxu0 %v7322
        %v7324 = vpop.f32.mrf.mxu0
        %v7325 = vadd.f32 %v7232, %v7324
        %v7326 = vpop.f32.mrf.mxu0
        %7327 = vmatprep.mubr.f32.mxu0 0.0
        %v7328 = vand.u32 %v6609, 4294901760
        %7329 = vmatmul.mubr.f32.gmra.mxu0 %v7328
        %v7330 = vpop.f32.mrf.mxu0
        %v7331 = vadd.f32 %v7238, %v7330
        %v7332 = vpop.f32.mrf.mxu0
        %7333 = vdwg.mxu0
        %7334 = vmatprep.subr.mxu0 0.0
        %v7335 = vand.u32 %v6632, 4294901760
        %7336 = vmatpush1.msra.mxu0 %v7335
        %7337 = vmatprep.subr.mxu0 0.0
        %v7338 = vand.u32 %v6631, 4294901760
        %7339 = vmatpush1.msra.mxu0 %v7338
        %7340 = vmatprep.subr.mxu0 0.0
        %v7341 = vand.u32 %v6630, 4294901760
        %7342 = vmatpush1.msra.mxu0 %v7341
        %7343 = vmatprep.subr.mxu0 0.0
        %v7344 = vand.u32 %v6629, 4294901760
        %7345 = vmatpush1.msra.mxu0 %v7344
        %7346 = vmatprep.subr.mxu0 0.0
        %v7347 = vand.u32 %v6628, 4294901760
        %7348 = vmatpush1.msra.mxu0 %v7347
        %7349 = vmatprep.subr.mxu0 0.0
        %v7350 = vand.u32 %v6627, 4294901760
        %7351 = vmatpush1.msra.mxu0 %v7350
        %7352 = vmatprep.subr.mxu0 0.0
        %v7353 = vand.u32 %v6626, 4294901760
        %7354 = vmatpush1.msra.mxu0 %v7353
        %7355 = vmatprep.subr.mxu0 0.0
        %v7356 = vand.u32 %v6625, 4294901760
        %7357 = vmatpush1.msra.mxu0 %v7356
        %7358 = vmatprep.subr.mxu0 0.0
        %v7359 = vand.u32 %v6624, 4294901760
        %7360 = vmatpush1.msra.mxu0 %v7359
        %7361 = vmatprep.subr.mxu0 0.0
        %v7362 = vand.u32 %v6623, 4294901760
        %7363 = vmatpush1.msra.mxu0 %v7362
        %7364 = vmatprep.subr.mxu0 0.0
        %v7365 = vand.u32 %v6622, 4294901760
        %7366 = vmatpush1.msra.mxu0 %v7365
        %7367 = vmatprep.subr.mxu0 0.0
        %v7368 = vand.u32 %v6621, 4294901760
        %7369 = vmatpush1.msra.mxu0 %v7368
        %7370 = vmatprep.subr.mxu0 0.0
        %v7371 = vand.u32 %v6620, 4294901760
        %7372 = vmatpush1.msra.mxu0 %v7371
        %7373 = vmatprep.subr.mxu0 0.0
        %v7374 = vand.u32 %v6619, 4294901760
        %7375 = vmatpush1.msra.mxu0 %v7374
        %7376 = vmatprep.subr.mxu0 0.0
        %v7377 = vand.u32 %v6618, 4294901760
        %7378 = vmatpush1.msra.mxu0 %v7377
        %7379 = vmatprep.subr.mxu0 0.0
        %v7380 = vand.u32 %v6617, 4294901760
        %7381 = vmatpush1.msra.mxu0 %v7380
        %7382 = vmatprep.subr.mxu0 0.0
        %7383 = vmatpush2.msra.mxu0 0.0
        %7384 = vmatprep.subr.mxu0 0.0
        %7385 = vmatpush2.msra.mxu0 0.0
        %7386 = vmatprep.subr.mxu0 0.0
        %7387 = vmatpush2.msra.mxu0 0.0
        %7388 = vmatprep.subr.mxu0 0.0
        %7389 = vmatpush2.msra.mxu0 0.0
        %7390 = vmatprep.subr.mxu0 0.0
        %7391 = vmatpush2.msra.mxu0 0.0
        %7392 = vmatprep.subr.mxu0 0.0
        %7393 = vmatpush2.msra.mxu0 0.0
        %7394 = vmatprep.subr.mxu0 0.0
        %7395 = vmatpush2.msra.mxu0 0.0
        %7396 = vmatprep.subr.mxu0 0.0
        %7397 = vmatpush2.msra.mxu0 0.0
        %7398 = vmatprep.subr.mxu0 0.0
        %7399 = vmatpush2.msra.mxu0 0.0
        %7400 = vmatprep.subr.mxu0 0.0
        %7401 = vmatpush2.msra.mxu0 0.0
        %7402 = vmatprep.subr.mxu0 0.0
        %7403 = vmatpush2.msra.mxu0 0.0
        %7404 = vmatprep.subr.mxu0 0.0
        %7405 = vmatpush2.msra.mxu0 0.0
        %7406 = vmatprep.subr.mxu0 0.0
        %7407 = vmatpush2.msra.mxu0 0.0
        %7408 = vmatprep.subr.mxu0 0.0
        %7409 = vmatpush2.msra.mxu0 0.0
        %7410 = vmatprep.subr.mxu0 0.0
        %7411 = vmatpush2.msra.mxu0 0.0
        %7412 = vmatprep.subr.mxu0 0.0
        %7413 = vmatpush2.msra.mxu0 0.0
        %7414 = vmatprep.mubr.f32.mxu0 0.0
        %v7415 = vand.u32 %v6614, 4294901760
        %v7416 = vsub.f32 %v6614, %v7415
        %v7417 = vand.u32 %v7416, 4294901760
        %v7418 = vsub.f32 %v7416, %v7417
        %v7419 = vand.u32 %v7418, 4294901760
        %7420 = vmatmul.mubr.f32.gmra.mxu0 %v7419
        %v7421 = vpop.f32.mrf.mxu0
        %v7422 = vadd.f32 %v7325, %v7421
        %v7423 = vpop.f32.mrf.mxu0
        %7424 = vmatprep.mubr.f32.mxu0 0.0
        %v7425 = vand.u32 %v6615, 4294901760
        %v7426 = vsub.f32 %v6615, %v7425
        %v7427 = vand.u32 %v7426, 4294901760
        %v7428 = vsub.f32 %v7426, %v7427
        %v7429 = vand.u32 %v7428, 4294901760
        %7430 = vmatmul.mubr.f32.gmra.mxu0 %v7429
        %v7431 = vpop.f32.mrf.mxu0
        %v7432 = vadd.f32 %v7331, %v7431
        %v7433 = vpop.f32.mrf.mxu0
        %7434 = vdwg.mxu0
        %7435 = vmatprep.subr.mxu0 0.0
        %v7436 = vand.u32 %v6632, 4294901760
        %v7437 = vsub.f32 %v6632, %v7436
        %v7438 = vand.u32 %v7437, 4294901760
        %v7439 = vsub.f32 %v7437, %v7438
        %v7440 = vand.u32 %v7439, 4294901760
        %7441 = vmatpush1.msra.mxu0 %v7440
        %7442 = vmatprep.subr.mxu0 0.0
        %v7443 = vand.u32 %v6631, 4294901760
        %v7444 = vsub.f32 %v6631, %v7443
        %v7445 = vand.u32 %v7444, 4294901760
        %v7446 = vsub.f32 %v7444, %v7445
        %v7447 = vand.u32 %v7446, 4294901760
        %7448 = vmatpush1.msra.mxu0 %v7447
        %7449 = vmatprep.subr.mxu0 0.0
        %v7450 = vand.u32 %v6630, 4294901760
        %v7451 = vsub.f32 %v6630, %v7450
        %v7452 = vand.u32 %v7451, 4294901760
        %v7453 = vsub.f32 %v7451, %v7452
        %v7454 = vand.u32 %v7453, 4294901760
        %7455 = vmatpush1.msra.mxu0 %v7454
        %7456 = vmatprep.subr.mxu0 0.0
        %v7457 = vand.u32 %v6629, 4294901760
        %v7458 = vsub.f32 %v6629, %v7457
        %v7459 = vand.u32 %v7458, 4294901760
        %v7460 = vsub.f32 %v7458, %v7459
        %v7461 = vand.u32 %v7460, 4294901760
        %7462 = vmatpush1.msra.mxu0 %v7461
        %7463 = vmatprep.subr.mxu0 0.0
        %v7464 = vand.u32 %v6628, 4294901760
        %v7465 = vsub.f32 %v6628, %v7464
        %v7466 = vand.u32 %v7465, 4294901760
        %v7467 = vsub.f32 %v7465, %v7466
        %v7468 = vand.u32 %v7467, 4294901760
        %7469 = vmatpush1.msra.mxu0 %v7468
        %7470 = vmatprep.subr.mxu0 0.0
        %v7471 = vand.u32 %v6627, 4294901760
        %v7472 = vsub.f32 %v6627, %v7471
        %v7473 = vand.u32 %v7472, 4294901760
        %v7474 = vsub.f32 %v7472, %v7473
        %v7475 = vand.u32 %v7474, 4294901760
        %7476 = vmatpush1.msra.mxu0 %v7475
        %7477 = vmatprep.subr.mxu0 0.0
        %v7478 = vand.u32 %v6626, 4294901760
        %v7479 = vsub.f32 %v6626, %v7478
        %v7480 = vand.u32 %v7479, 4294901760
        %v7481 = vsub.f32 %v7479, %v7480
        %v7482 = vand.u32 %v7481, 4294901760
        %7483 = vmatpush1.msra.mxu0 %v7482
        %7484 = vmatprep.subr.mxu0 0.0
        %v7485 = vand.u32 %v6625, 4294901760
        %v7486 = vsub.f32 %v6625, %v7485
        %v7487 = vand.u32 %v7486, 4294901760
        %v7488 = vsub.f32 %v7486, %v7487
        %v7489 = vand.u32 %v7488, 4294901760
        %7490 = vmatpush1.msra.mxu0 %v7489
        %7491 = vmatprep.subr.mxu0 0.0
        %v7492 = vand.u32 %v6624, 4294901760
        %v7493 = vsub.f32 %v6624, %v7492
        %v7494 = vand.u32 %v7493, 4294901760
        %v7495 = vsub.f32 %v7493, %v7494
        %v7496 = vand.u32 %v7495, 4294901760
        %7497 = vmatpush1.msra.mxu0 %v7496
        %7498 = vmatprep.subr.mxu0 0.0
        %v7499 = vand.u32 %v6623, 4294901760
        %v7500 = vsub.f32 %v6623, %v7499
        %v7501 = vand.u32 %v7500, 4294901760
        %v7502 = vsub.f32 %v7500, %v7501
        %v7503 = vand.u32 %v7502, 4294901760
        %7504 = vmatpush1.msra.mxu0 %v7503
        %7505 = vmatprep.subr.mxu0 0.0
        %v7506 = vand.u32 %v6622, 4294901760
        %v7507 = vsub.f32 %v6622, %v7506
        %v7508 = vand.u32 %v7507, 4294901760
        %v7509 = vsub.f32 %v7507, %v7508
        %v7510 = vand.u32 %v7509, 4294901760
        %7511 = vmatpush1.msra.mxu0 %v7510
        %7512 = vmatprep.subr.mxu0 0.0
        %v7513 = vand.u32 %v6621, 4294901760
        %v7514 = vsub.f32 %v6621, %v7513
        %v7515 = vand.u32 %v7514, 4294901760
        %v7516 = vsub.f32 %v7514, %v7515
        %v7517 = vand.u32 %v7516, 4294901760
        %7518 = vmatpush1.msra.mxu0 %v7517
        %7519 = vmatprep.subr.mxu0 0.0
        %v7520 = vand.u32 %v6620, 4294901760
        %v7521 = vsub.f32 %v6620, %v7520
        %v7522 = vand.u32 %v7521, 4294901760
        %v7523 = vsub.f32 %v7521, %v7522
        %v7524 = vand.u32 %v7523, 4294901760
        %7525 = vmatpush1.msra.mxu0 %v7524
        %7526 = vmatprep.subr.mxu0 0.0
        %v7527 = vand.u32 %v6619, 4294901760
        %v7528 = vsub.f32 %v6619, %v7527
        %v7529 = vand.u32 %v7528, 4294901760
        %v7530 = vsub.f32 %v7528, %v7529
        %v7531 = vand.u32 %v7530, 4294901760
        %7532 = vmatpush1.msra.mxu0 %v7531
        %7533 = vmatprep.subr.mxu0 0.0
        %v7534 = vand.u32 %v6618, 4294901760
        %v7535 = vsub.f32 %v6618, %v7534
        %v7536 = vand.u32 %v7535, 4294901760
        %v7537 = vsub.f32 %v7535, %v7536
        %v7538 = vand.u32 %v7537, 4294901760
        %7539 = vmatpush1.msra.mxu0 %v7538
        %7540 = vmatprep.subr.mxu0 0.0
        %v7541 = vand.u32 %v6617, 4294901760
        %v7542 = vsub.f32 %v6617, %v7541
        %v7543 = vand.u32 %v7542, 4294901760
        %v7544 = vsub.f32 %v7542, %v7543
        %v7545 = vand.u32 %v7544, 4294901760
        %7546 = vmatpush1.msra.mxu0 %v7545
        %7547 = vmatprep.subr.mxu0 0.0
        %7548 = vmatpush2.msra.mxu0 0.0
        %7549 = vmatprep.subr.mxu0 0.0
        %7550 = vmatpush2.msra.mxu0 0.0
        %7551 = vmatprep.subr.mxu0 0.0
        %7552 = vmatpush2.msra.mxu0 0.0
        %7553 = vmatprep.subr.mxu0 0.0
        %7554 = vmatpush2.msra.mxu0 0.0
        %7555 = vmatprep.subr.mxu0 0.0
        %7556 = vmatpush2.msra.mxu0 0.0
        %7557 = vmatprep.subr.mxu0 0.0
        %7558 = vmatpush2.msra.mxu0 0.0
        %7559 = vmatprep.subr.mxu0 0.0
        %7560 = vmatpush2.msra.mxu0 0.0
        %7561 = vmatprep.subr.mxu0 0.0
        %7562 = vmatpush2.msra.mxu0 0.0
        %7563 = vmatprep.subr.mxu0 0.0
        %7564 = vmatpush2.msra.mxu0 0.0
        %7565 = vmatprep.subr.mxu0 0.0
        %7566 = vmatpush2.msra.mxu0 0.0
        %7567 = vmatprep.subr.mxu0 0.0
        %7568 = vmatpush2.msra.mxu0 0.0
        %7569 = vmatprep.subr.mxu0 0.0
        %7570 = vmatpush2.msra.mxu0 0.0
        %7571 = vmatprep.subr.mxu0 0.0
        %7572 = vmatpush2.msra.mxu0 0.0
        %7573 = vmatprep.subr.mxu0 0.0
        %7574 = vmatpush2.msra.mxu0 0.0
        %7575 = vmatprep.subr.mxu0 0.0
        %7576 = vmatpush2.msra.mxu0 0.0
        %7577 = vmatprep.subr.mxu0 0.0
        %7578 = vmatpush2.msra.mxu0 0.0
        %7579 = vmatprep.mubr.f32.mxu0 0.0
        %v7580 = vand.u32 %v6614, 4294901760
        %7581 = vmatmul.mubr.f32.gmra.mxu0 %v7580
        %v7582 = vpop.f32.mrf.mxu0
        %v7583 = vadd.f32 %v7422, %v7582
        %v7584 = vpop.f32.mrf.mxu0
        %7585 = vmatprep.mubr.f32.mxu0 0.0
        %v7586 = vand.u32 %v6615, 4294901760
        %7587 = vmatmul.mubr.f32.gmra.mxu0 %v7586
        %v7588 = vpop.f32.mrf.mxu0
        %v7589 = vadd.f32 %v7432, %v7588
        %v7590 = vpop.f32.mrf.mxu0
        %7591 = vdwg.mxu0
        %7592 = vmatprep.subr.mxu0 0.0
        %v7593 = vand.u32 %v6632, 4294901760
        %v7594 = vsub.f32 %v6632, %v7593
        %7595 = vmatpush1.msra.mxu0 %v7594
        %7596 = vmatprep.subr.mxu0 0.0
        %v7597 = vand.u32 %v6631, 4294901760
        %v7598 = vsub.f32 %v6631, %v7597
        %7599 = vmatpush1.msra.mxu0 %v7598
        %7600 = vmatprep.subr.mxu0 0.0
        %v7601 = vand.u32 %v6630, 4294901760
        %v7602 = vsub.f32 %v6630, %v7601
        %7603 = vmatpush1.msra.mxu0 %v7602
        %7604 = vmatprep.subr.mxu0 0.0
        %v7605 = vand.u32 %v6629, 4294901760
        %v7606 = vsub.f32 %v6629, %v7605
        %7607 = vmatpush1.msra.mxu0 %v7606
        %7608 = vmatprep.subr.mxu0 0.0
        %v7609 = vand.u32 %v6628, 4294901760
        %v7610 = vsub.f32 %v6628, %v7609
        %7611 = vmatpush1.msra.mxu0 %v7610
        %7612 = vmatprep.subr.mxu0 0.0
        %v7613 = vand.u32 %v6627, 4294901760
        %v7614 = vsub.f32 %v6627, %v7613
        %7615 = vmatpush1.msra.mxu0 %v7614
        %7616 = vmatprep.subr.mxu0 0.0
        %v7617 = vand.u32 %v6626, 4294901760
        %v7618 = vsub.f32 %v6626, %v7617
        %7619 = vmatpush1.msra.mxu0 %v7618
        %7620 = vmatprep.subr.mxu0 0.0
        %v7621 = vand.u32 %v6625, 4294901760
        %v7622 = vsub.f32 %v6625, %v7621
        %7623 = vmatpush1.msra.mxu0 %v7622
        %7624 = vmatprep.subr.mxu0 0.0
        %v7625 = vand.u32 %v6624, 4294901760
        %v7626 = vsub.f32 %v6624, %v7625
        %7627 = vmatpush1.msra.mxu0 %v7626
        %7628 = vmatprep.subr.mxu0 0.0
        %v7629 = vand.u32 %v6623, 4294901760
        %v7630 = vsub.f32 %v6623, %v7629
        %7631 = vmatpush1.msra.mxu0 %v7630
        %7632 = vmatprep.subr.mxu0 0.0
        %v7633 = vand.u32 %v6622, 4294901760
        %v7634 = vsub.f32 %v6622, %v7633
        %7635 = vmatpush1.msra.mxu0 %v7634
        %7636 = vmatprep.subr.mxu0 0.0
        %v7637 = vand.u32 %v6621, 4294901760
        %v7638 = vsub.f32 %v6621, %v7637
        %7639 = vmatpush1.msra.mxu0 %v7638
        %7640 = vmatprep.subr.mxu0 0.0
        %v7641 = vand.u32 %v6620, 4294901760
        %v7642 = vsub.f32 %v6620, %v7641
        %7643 = vmatpush1.msra.mxu0 %v7642
        %7644 = vmatprep.subr.mxu0 0.0
        %v7645 = vand.u32 %v6619, 4294901760
        %v7646 = vsub.f32 %v6619, %v7645
        %7647 = vmatpush1.msra.mxu0 %v7646
        %7648 = vmatprep.subr.mxu0 0.0
        %v7649 = vand.u32 %v6618, 4294901760
        %v7650 = vsub.f32 %v6618, %v7649
        %7651 = vmatpush1.msra.mxu0 %v7650
        %7652 = vmatprep.subr.mxu0 0.0
        %v7653 = vand.u32 %v6617, 4294901760
        %v7654 = vsub.f32 %v6617, %v7653
        %7655 = vmatpush1.msra.mxu0 %v7654
        %7656 = vmatprep.subr.mxu0 0.0
        %7657 = vmatpush2.msra.mxu0 0.0
        %7658 = vmatprep.subr.mxu0 0.0
        %7659 = vmatpush2.msra.mxu0 0.0
        %7660 = vmatprep.subr.mxu0 0.0
        %7661 = vmatpush2.msra.mxu0 0.0
        %7662 = vmatprep.subr.mxu0 0.0
        %7663 = vmatpush2.msra.mxu0 0.0
        %7664 = vmatprep.subr.mxu0 0.0
        %7665 = vmatpush2.msra.mxu0 0.0
        %7666 = vmatprep.subr.mxu0 0.0
        %7667 = vmatpush2.msra.mxu0 0.0
        %7668 = vmatprep.subr.mxu0 0.0
        %7669 = vmatpush2.msra.mxu0 0.0
        %7670 = vmatprep.subr.mxu0 0.0
        %7671 = vmatpush2.msra.mxu0 0.0
        %7672 = vmatprep.subr.mxu0 0.0
        %7673 = vmatpush2.msra.mxu0 0.0
        %7674 = vmatprep.subr.mxu0 0.0
        %7675 = vmatpush2.msra.mxu0 0.0
        %7676 = vmatprep.subr.mxu0 0.0
        %7677 = vmatpush2.msra.mxu0 0.0
        %7678 = vmatprep.subr.mxu0 0.0
        %7679 = vmatpush2.msra.mxu0 0.0
        %7680 = vmatprep.subr.mxu0 0.0
        %7681 = vmatpush2.msra.mxu0 0.0
        %7682 = vmatprep.subr.mxu0 0.0
        %7683 = vmatpush2.msra.mxu0 0.0
        %7684 = vmatprep.subr.mxu0 0.0
        %7685 = vmatpush2.msra.mxu0 0.0
        %7686 = vmatprep.subr.mxu0 0.0
        %7687 = vmatpush2.msra.mxu0 0.0
        %7688 = vmatprep.mubr.f32.mxu0 0.0
        %v7689 = vand.u32 %v6614, 4294901760
        %v7690 = vsub.f32 %v6614, %v7689
        %7691 = vmatmul.mubr.f32.gmra.mxu0 %v7690
        %v7692 = vpop.f32.mrf.mxu0
        %v7693 = vadd.f32 %v7583, %v7692
        %v7694 = vpop.f32.mrf.mxu0
        %7695 = vmatprep.mubr.f32.mxu0 0.0
        %v7696 = vand.u32 %v6615, 4294901760
        %v7697 = vsub.f32 %v6615, %v7696
        %7698 = vmatmul.mubr.f32.gmra.mxu0 %v7697
        %v7699 = vpop.f32.mrf.mxu0
        %v7700 = vadd.f32 %v7589, %v7699
        %v7701 = vpop.f32.mrf.mxu0
        %7702 = vdwg.mxu0
        %7703 = vmatprep.subr.mxu0 0.0
        %v7704 = vand.u32 %v6632, 4294901760
        %7705 = vmatpush1.msra.mxu0 %v7704
        %7706 = vmatprep.subr.mxu0 0.0
        %v7707 = vand.u32 %v6631, 4294901760
        %7708 = vmatpush1.msra.mxu0 %v7707
        %7709 = vmatprep.subr.mxu0 0.0
        %v7710 = vand.u32 %v6630, 4294901760
        %7711 = vmatpush1.msra.mxu0 %v7710
        %7712 = vmatprep.subr.mxu0 0.0
        %v7713 = vand.u32 %v6629, 4294901760
        %7714 = vmatpush1.msra.mxu0 %v7713
        %7715 = vmatprep.subr.mxu0 0.0
        %v7716 = vand.u32 %v6628, 4294901760
        %7717 = vmatpush1.msra.mxu0 %v7716
        %7718 = vmatprep.subr.mxu0 0.0
        %v7719 = vand.u32 %v6627, 4294901760
        %7720 = vmatpush1.msra.mxu0 %v7719
        %7721 = vmatprep.subr.mxu0 0.0
        %v7722 = vand.u32 %v6626, 4294901760
        %7723 = vmatpush1.msra.mxu0 %v7722
        %7724 = vmatprep.subr.mxu0 0.0
        %v7725 = vand.u32 %v6625, 4294901760
        %7726 = vmatpush1.msra.mxu0 %v7725
        %7727 = vmatprep.subr.mxu0 0.0
        %v7728 = vand.u32 %v6624, 4294901760
        %7729 = vmatpush1.msra.mxu0 %v7728
        %7730 = vmatprep.subr.mxu0 0.0
        %v7731 = vand.u32 %v6623, 4294901760
        %7732 = vmatpush1.msra.mxu0 %v7731
        %7733 = vmatprep.subr.mxu0 0.0
        %v7734 = vand.u32 %v6622, 4294901760
        %7735 = vmatpush1.msra.mxu0 %v7734
        %7736 = vmatprep.subr.mxu0 0.0
        %v7737 = vand.u32 %v6621, 4294901760
        %7738 = vmatpush1.msra.mxu0 %v7737
        %7739 = vmatprep.subr.mxu0 0.0
        %v7740 = vand.u32 %v6620, 4294901760
        %7741 = vmatpush1.msra.mxu0 %v7740
        %7742 = vmatprep.subr.mxu0 0.0
        %v7743 = vand.u32 %v6619, 4294901760
        %7744 = vmatpush1.msra.mxu0 %v7743
        %7745 = vmatprep.subr.mxu0 0.0
        %v7746 = vand.u32 %v6618, 4294901760
        %7747 = vmatpush1.msra.mxu0 %v7746
        %7748 = vmatprep.subr.mxu0 0.0
        %v7749 = vand.u32 %v6617, 4294901760
        %7750 = vmatpush1.msra.mxu0 %v7749
        %7751 = vmatprep.subr.mxu0 0.0
        %7752 = vmatpush2.msra.mxu0 0.0
        %7753 = vmatprep.subr.mxu0 0.0
        %7754 = vmatpush2.msra.mxu0 0.0
        %7755 = vmatprep.subr.mxu0 0.0
        %7756 = vmatpush2.msra.mxu0 0.0
        %7757 = vmatprep.subr.mxu0 0.0
        %7758 = vmatpush2.msra.mxu0 0.0
        %7759 = vmatprep.subr.mxu0 0.0
        %7760 = vmatpush2.msra.mxu0 0.0
        %7761 = vmatprep.subr.mxu0 0.0
        %7762 = vmatpush2.msra.mxu0 0.0
        %7763 = vmatprep.subr.mxu0 0.0
        %7764 = vmatpush2.msra.mxu0 0.0
        %7765 = vmatprep.subr.mxu0 0.0
        %7766 = vmatpush2.msra.mxu0 0.0
        %7767 = vmatprep.subr.mxu0 0.0
        %7768 = vmatpush2.msra.mxu0 0.0
        %7769 = vmatprep.subr.mxu0 0.0
        %7770 = vmatpush2.msra.mxu0 0.0
        %7771 = vmatprep.subr.mxu0 0.0
        %7772 = vmatpush2.msra.mxu0 0.0
        %7773 = vmatprep.subr.mxu0 0.0
        %7774 = vmatpush2.msra.mxu0 0.0
        %7775 = vmatprep.subr.mxu0 0.0
        %7776 = vmatpush2.msra.mxu0 0.0
        %7777 = vmatprep.subr.mxu0 0.0
        %7778 = vmatpush2.msra.mxu0 0.0
        %7779 = vmatprep.subr.mxu0 0.0
        %7780 = vmatpush2.msra.mxu0 0.0
        %7781 = vmatprep.subr.mxu0 0.0
        %7782 = vmatpush2.msra.mxu0 0.0
        %7783 = vmatprep.mubr.f32.mxu0 0.0
        %v7784 = vand.u32 %v6614, 4294901760
        %v7785 = vsub.f32 %v6614, %v7784
        %v7786 = vand.u32 %v7785, 4294901760
        %7787 = vmatmul.mubr.f32.gmra.mxu0 %v7786
        %v7788 = vpop.f32.mrf.mxu0
        %v7789 = vadd.f32 %v7693, %v7788
        %v7790 = vpop.f32.mrf.mxu0
        %7791 = vmatprep.mubr.f32.mxu0 0.0
        %v7792 = vand.u32 %v6615, 4294901760
        %v7793 = vsub.f32 %v6615, %v7792
        %v7794 = vand.u32 %v7793, 4294901760
        %7795 = vmatmul.mubr.f32.gmra.mxu0 %v7794
        %v7796 = vpop.f32.mrf.mxu0
        %v7797 = vadd.f32 %v7700, %v7796
        %v7798 = vpop.f32.mrf.mxu0
        %7799 = vdwg.mxu0
        %7800 = vmatprep.subr.mxu0 0.0
        %v7801 = vand.u32 %v6632, 4294901760
        %v7802 = vsub.f32 %v6632, %v7801
        %v7803 = vand.u32 %v7802, 4294901760
        %7804 = vmatpush1.msra.mxu0 %v7803
        %7805 = vmatprep.subr.mxu0 0.0
        %v7806 = vand.u32 %v6631, 4294901760
        %v7807 = vsub.f32 %v6631, %v7806
        %v7808 = vand.u32 %v7807, 4294901760
        %7809 = vmatpush1.msra.mxu0 %v7808
        %7810 = vmatprep.subr.mxu0 0.0
        %v7811 = vand.u32 %v6630, 4294901760
        %v7812 = vsub.f32 %v6630, %v7811
        %v7813 = vand.u32 %v7812, 4294901760
        %7814 = vmatpush1.msra.mxu0 %v7813
        %7815 = vmatprep.subr.mxu0 0.0
        %v7816 = vand.u32 %v6629, 4294901760
        %v7817 = vsub.f32 %v6629, %v7816
        %v7818 = vand.u32 %v7817, 4294901760
        %7819 = vmatpush1.msra.mxu0 %v7818
        %7820 = vmatprep.subr.mxu0 0.0
        %v7821 = vand.u32 %v6628, 4294901760
        %v7822 = vsub.f32 %v6628, %v7821
        %v7823 = vand.u32 %v7822, 4294901760
        %7824 = vmatpush1.msra.mxu0 %v7823
        %7825 = vmatprep.subr.mxu0 0.0
        %v7826 = vand.u32 %v6627, 4294901760
        %v7827 = vsub.f32 %v6627, %v7826
        %v7828 = vand.u32 %v7827, 4294901760
        %7829 = vmatpush1.msra.mxu0 %v7828
        %7830 = vmatprep.subr.mxu0 0.0
        %v7831 = vand.u32 %v6626, 4294901760
        %v7832 = vsub.f32 %v6626, %v7831
        %v7833 = vand.u32 %v7832, 4294901760
        %7834 = vmatpush1.msra.mxu0 %v7833
        %7835 = vmatprep.subr.mxu0 0.0
        %v7836 = vand.u32 %v6625, 4294901760
        %v7837 = vsub.f32 %v6625, %v7836
        %v7838 = vand.u32 %v7837, 4294901760
        %7839 = vmatpush1.msra.mxu0 %v7838
        %7840 = vmatprep.subr.mxu0 0.0
        %v7841 = vand.u32 %v6624, 4294901760
        %v7842 = vsub.f32 %v6624, %v7841
        %v7843 = vand.u32 %v7842, 4294901760
        %7844 = vmatpush1.msra.mxu0 %v7843
        %7845 = vmatprep.subr.mxu0 0.0
        %v7846 = vand.u32 %v6623, 4294901760
        %v7847 = vsub.f32 %v6623, %v7846
        %v7848 = vand.u32 %v7847, 4294901760
        %7849 = vmatpush1.msra.mxu0 %v7848
        %7850 = vmatprep.subr.mxu0 0.0
        %v7851 = vand.u32 %v6622, 4294901760
        %v7852 = vsub.f32 %v6622, %v7851
        %v7853 = vand.u32 %v7852, 4294901760
        %7854 = vmatpush1.msra.mxu0 %v7853
        %7855 = vmatprep.subr.mxu0 0.0
        %v7856 = vand.u32 %v6621, 4294901760
        %v7857 = vsub.f32 %v6621, %v7856
        %v7858 = vand.u32 %v7857, 4294901760
        %7859 = vmatpush1.msra.mxu0 %v7858
        %7860 = vmatprep.subr.mxu0 0.0
        %v7861 = vand.u32 %v6620, 4294901760
        %v7862 = vsub.f32 %v6620, %v7861
        %v7863 = vand.u32 %v7862, 4294901760
        %7864 = vmatpush1.msra.mxu0 %v7863
        %7865 = vmatprep.subr.mxu0 0.0
        %v7866 = vand.u32 %v6619, 4294901760
        %v7867 = vsub.f32 %v6619, %v7866
        %v7868 = vand.u32 %v7867, 4294901760
        %7869 = vmatpush1.msra.mxu0 %v7868
        %7870 = vmatprep.subr.mxu0 0.0
        %v7871 = vand.u32 %v6618, 4294901760
        %v7872 = vsub.f32 %v6618, %v7871
        %v7873 = vand.u32 %v7872, 4294901760
        %7874 = vmatpush1.msra.mxu0 %v7873
        %7875 = vmatprep.subr.mxu0 0.0
        %v7876 = vand.u32 %v6617, 4294901760
        %v7877 = vsub.f32 %v6617, %v7876
        %v7878 = vand.u32 %v7877, 4294901760
        %7879 = vmatpush1.msra.mxu0 %v7878
        %7880 = vmatprep.subr.mxu0 0.0
        %7881 = vmatpush2.msra.mxu0 0.0
        %7882 = vmatprep.subr.mxu0 0.0
        %7883 = vmatpush2.msra.mxu0 0.0
        %7884 = vmatprep.subr.mxu0 0.0
        %7885 = vmatpush2.msra.mxu0 0.0
        %7886 = vmatprep.subr.mxu0 0.0
        %7887 = vmatpush2.msra.mxu0 0.0
        %7888 = vmatprep.subr.mxu0 0.0
        %7889 = vmatpush2.msra.mxu0 0.0
        %7890 = vmatprep.subr.mxu0 0.0
        %7891 = vmatpush2.msra.mxu0 0.0
        %7892 = vmatprep.subr.mxu0 0.0
        %7893 = vmatpush2.msra.mxu0 0.0
        %7894 = vmatprep.subr.mxu0 0.0
        %7895 = vmatpush2.msra.mxu0 0.0
        %7896 = vmatprep.subr.mxu0 0.0
        %7897 = vmatpush2.msra.mxu0 0.0
        %7898 = vmatprep.subr.mxu0 0.0
        %7899 = vmatpush2.msra.mxu0 0.0
        %7900 = vmatprep.subr.mxu0 0.0
        %7901 = vmatpush2.msra.mxu0 0.0
        %7902 = vmatprep.subr.mxu0 0.0
        %7903 = vmatpush2.msra.mxu0 0.0
        %7904 = vmatprep.subr.mxu0 0.0
        %7905 = vmatpush2.msra.mxu0 0.0
        %7906 = vmatprep.subr.mxu0 0.0
        %7907 = vmatpush2.msra.mxu0 0.0
        %7908 = vmatprep.subr.mxu0 0.0
        %7909 = vmatpush2.msra.mxu0 0.0
        %7910 = vmatprep.subr.mxu0 0.0
        %7911 = vmatpush2.msra.mxu0 0.0
        %7912 = vmatprep.mubr.f32.mxu0 0.0
        %v7913 = vand.u32 %v6614, 4294901760
        %7914 = vmatmul.mubr.f32.gmra.mxu0 %v7913
        %v7915 = vpop.f32.mrf.mxu0
        %v7916 = vadd.f32 %v7789, %v7915
        %v7917 = vpop.f32.mrf.mxu0
        %7918 = vmatprep.mubr.f32.mxu0 0.0
        %v7919 = vand.u32 %v6615, 4294901760
        %7920 = vmatmul.mubr.f32.gmra.mxu0 %v7919
        %v7921 = vpop.f32.mrf.mxu0
        %v7922 = vadd.f32 %v7797, %v7921
        %v7923 = vpop.f32.mrf.mxu0
        %7924 = vdwg.mxu0
        %7925 = vmatprep.subr.mxu0 0.0
        %v7926 = vand.u32 %v6632, 4294901760
        %7927 = vmatpush1.msra.mxu0 %v7926
        %7928 = vmatprep.subr.mxu0 0.0
        %v7929 = vand.u32 %v6631, 4294901760
        %7930 = vmatpush1.msra.mxu0 %v7929
        %7931 = vmatprep.subr.mxu0 0.0
        %v7932 = vand.u32 %v6630, 4294901760
        %7933 = vmatpush1.msra.mxu0 %v7932
        %7934 = vmatprep.subr.mxu0 0.0
        %v7935 = vand.u32 %v6629, 4294901760
        %7936 = vmatpush1.msra.mxu0 %v7935
        %7937 = vmatprep.subr.mxu0 0.0
        %v7938 = vand.u32 %v6628, 4294901760
        %7939 = vmatpush1.msra.mxu0 %v7938
        %7940 = vmatprep.subr.mxu0 0.0
        %v7941 = vand.u32 %v6627, 4294901760
        %7942 = vmatpush1.msra.mxu0 %v7941
        %7943 = vmatprep.subr.mxu0 0.0
        %v7944 = vand.u32 %v6626, 4294901760
        %7945 = vmatpush1.msra.mxu0 %v7944
        %7946 = vmatprep.subr.mxu0 0.0
        %v7947 = vand.u32 %v6625, 4294901760
        %7948 = vmatpush1.msra.mxu0 %v7947
        %7949 = vmatprep.subr.mxu0 0.0
        %v7950 = vand.u32 %v6624, 4294901760
        %7951 = vmatpush1.msra.mxu0 %v7950
        %7952 = vmatprep.subr.mxu0 0.0
        %v7953 = vand.u32 %v6623, 4294901760
        %7954 = vmatpush1.msra.mxu0 %v7953
        %7955 = vmatprep.subr.mxu0 0.0
        %v7956 = vand.u32 %v6622, 4294901760
        %7957 = vmatpush1.msra.mxu0 %v7956
        %7958 = vmatprep.subr.mxu0 0.0
        %v7959 = vand.u32 %v6621, 4294901760
        %7960 = vmatpush1.msra.mxu0 %v7959
        %7961 = vmatprep.subr.mxu0 0.0
        %v7962 = vand.u32 %v6620, 4294901760
        %7963 = vmatpush1.msra.mxu0 %v7962
        %7964 = vmatprep.subr.mxu0 0.0
        %v7965 = vand.u32 %v6619, 4294901760
        %7966 = vmatpush1.msra.mxu0 %v7965
        %7967 = vmatprep.subr.mxu0 0.0
        %v7968 = vand.u32 %v6618, 4294901760
        %7969 = vmatpush1.msra.mxu0 %v7968
        %7970 = vmatprep.subr.mxu0 0.0
        %v7971 = vand.u32 %v6617, 4294901760
        %7972 = vmatpush1.msra.mxu0 %v7971
        %7973 = vmatprep.subr.mxu0 0.0
        %7974 = vmatpush2.msra.mxu0 0.0
        %7975 = vmatprep.subr.mxu0 0.0
        %7976 = vmatpush2.msra.mxu0 0.0
        %7977 = vmatprep.subr.mxu0 0.0
        %7978 = vmatpush2.msra.mxu0 0.0
        %7979 = vmatprep.subr.mxu0 0.0
        %7980 = vmatpush2.msra.mxu0 0.0
        %7981 = vmatprep.subr.mxu0 0.0
        %7982 = vmatpush2.msra.mxu0 0.0
        %7983 = vmatprep.subr.mxu0 0.0
        %7984 = vmatpush2.msra.mxu0 0.0
        %7985 = vmatprep.subr.mxu0 0.0
        %7986 = vmatpush2.msra.mxu0 0.0
        %7987 = vmatprep.subr.mxu0 0.0
        %7988 = vmatpush2.msra.mxu0 0.0
        %7989 = vmatprep.subr.mxu0 0.0
        %7990 = vmatpush2.msra.mxu0 0.0
        %7991 = vmatprep.subr.mxu0 0.0
        %7992 = vmatpush2.msra.mxu0 0.0
        %7993 = vmatprep.subr.mxu0 0.0
        %7994 = vmatpush2.msra.mxu0 0.0
        %7995 = vmatprep.subr.mxu0 0.0
        %7996 = vmatpush2.msra.mxu0 0.0
        %7997 = vmatprep.subr.mxu0 0.0
        %7998 = vmatpush2.msra.mxu0 0.0
        %7999 = vmatprep.subr.mxu0 0.0
        %8000 = vmatpush2.msra.mxu0 0.0
        %8001 = vmatprep.subr.mxu0 0.0
        %8002 = vmatpush2.msra.mxu0 0.0
        %8003 = vmatprep.subr.mxu0 0.0
        %8004 = vmatpush2.msra.mxu0 0.0
        %8005 = vmatprep.mubr.f32.mxu0 0.0
        %v8006 = vand.u32 %v6614, 4294901760
        %8007 = vmatmul.mubr.f32.gmra.mxu0 %v8006
        %v8008 = vpop.f32.mrf.mxu0
        %v8009 = vadd.f32 %v7916, %v8008
        %v8010 = vpop.f32.mrf.mxu0
        %8011 = vmatprep.mubr.f32.mxu0 0.0
        %v8012 = vand.u32 %v6615, 4294901760
        %8013 = vmatmul.mubr.f32.gmra.mxu0 %v8012
        %v8014 = vpop.f32.mrf.mxu0
        %v8015 = vadd.f32 %v7922, %v8014
        %v8016 = vpop.f32.mrf.mxu0
        %8017 = vdwg.mxu0
        %v8018 = vrot.slane %v6608, 1
        %v8019 = vrot.slane %v6609, 1
        %v8020 = vsel %vm1632, %v8018, %v8019
        %v8021 = vsel %vm1632, %v8019, %v8018
        %v8022 = vsel %vm218, %v8020, 0.0
        %v8023 = vsel %vm219, %v8021, 0.0
        %s8024 = scalar_lea.vmem [#allocation2], 640
        %v8025 = vld [vmem:[%s8024] sm:$0xff]
        %v8026 = vld [vmem:[%s8024 + $0x8] sm:$0xff]
        %v8027 = vld [vmem:[%s8024 + $0x10] sm:$0xff]
        %v8028 = vld [vmem:[%s8024 + $0x18] sm:$0xff]
        %v8029 = vld [vmem:[%s8024 + $0x20] sm:$0xff]
        %v8030 = vld [vmem:[%s8024 + $0x28] sm:$0xff]
        %v8031 = vld [vmem:[%s8024 + $0x30] sm:$0xff]
        %v8032 = vld [vmem:[%s8024 + $0x38] sm:$0xff]
        %v8033 = vld [vmem:[%s8024 + $0x40] sm:$0xff]
        %v8034 = vld [vmem:[%s8024 + $0x48] sm:$0xff]
        %v8035 = vld [vmem:[%s8024 + $0x50] sm:$0xff]
        %v8036 = vld [vmem:[%s8024 + $0x58] sm:$0xff]
        %v8037 = vld [vmem:[%s8024 + $0x60] sm:$0xff]
        %v8038 = vld [vmem:[%s8024 + $0x68] sm:$0xff]
        %v8039 = vld [vmem:[%s8024 + $0x70] sm:$0xff]
        %v8040 = vld [vmem:[%s8024 + $0x78] sm:$0xff]
        %8041 = vmatprep.subr.mxu0 0.0
        %v8042 = vand.u32 %v8040, 4294901760
        %8043 = vmatpush1.msra.mxu0 %v8042
        %8044 = vmatprep.subr.mxu0 0.0
        %v8045 = vand.u32 %v8039, 4294901760
        %8046 = vmatpush1.msra.mxu0 %v8045
        %8047 = vmatprep.subr.mxu0 0.0
        %v8048 = vand.u32 %v8038, 4294901760
        %8049 = vmatpush1.msra.mxu0 %v8048
        %8050 = vmatprep.subr.mxu0 0.0
        %v8051 = vand.u32 %v8037, 4294901760
        %8052 = vmatpush1.msra.mxu0 %v8051
        %8053 = vmatprep.subr.mxu0 0.0
        %v8054 = vand.u32 %v8036, 4294901760
        %8055 = vmatpush1.msra.mxu0 %v8054
        %8056 = vmatprep.subr.mxu0 0.0
        %v8057 = vand.u32 %v8035, 4294901760
        %8058 = vmatpush1.msra.mxu0 %v8057
        %8059 = vmatprep.subr.mxu0 0.0
        %v8060 = vand.u32 %v8034, 4294901760
        %8061 = vmatpush1.msra.mxu0 %v8060
        %8062 = vmatprep.subr.mxu0 0.0
        %v8063 = vand.u32 %v8033, 4294901760
        %8064 = vmatpush1.msra.mxu0 %v8063
        %8065 = vmatprep.subr.mxu0 0.0
        %v8066 = vand.u32 %v8032, 4294901760
        %8067 = vmatpush1.msra.mxu0 %v8066
        %8068 = vmatprep.subr.mxu0 0.0
        %v8069 = vand.u32 %v8031, 4294901760
        %8070 = vmatpush1.msra.mxu0 %v8069
        %8071 = vmatprep.subr.mxu0 0.0
        %v8072 = vand.u32 %v8030, 4294901760
        %8073 = vmatpush1.msra.mxu0 %v8072
        %8074 = vmatprep.subr.mxu0 0.0
        %v8075 = vand.u32 %v8029, 4294901760
        %8076 = vmatpush1.msra.mxu0 %v8075
        %8077 = vmatprep.subr.mxu0 0.0
        %v8078 = vand.u32 %v8028, 4294901760
        %8079 = vmatpush1.msra.mxu0 %v8078
        %8080 = vmatprep.subr.mxu0 0.0
        %v8081 = vand.u32 %v8027, 4294901760
        %8082 = vmatpush1.msra.mxu0 %v8081
        %8083 = vmatprep.subr.mxu0 0.0
        %v8084 = vand.u32 %v8026, 4294901760
        %8085 = vmatpush1.msra.mxu0 %v8084
        %8086 = vmatprep.subr.mxu0 0.0
        %v8087 = vand.u32 %v8025, 4294901760
        %8088 = vmatpush1.msra.mxu0 %v8087
        %8089 = vmatprep.subr.mxu0 0.0
        %8090 = vmatpush2.msra.mxu0 0.0
        %8091 = vmatprep.subr.mxu0 0.0
        %8092 = vmatpush2.msra.mxu0 0.0
        %8093 = vmatprep.subr.mxu0 0.0
        %8094 = vmatpush2.msra.mxu0 0.0
        %8095 = vmatprep.subr.mxu0 0.0
        %8096 = vmatpush2.msra.mxu0 0.0
        %8097 = vmatprep.subr.mxu0 0.0
        %8098 = vmatpush2.msra.mxu0 0.0
        %8099 = vmatprep.subr.mxu0 0.0
        %8100 = vmatpush2.msra.mxu0 0.0
        %8101 = vmatprep.subr.mxu0 0.0
        %8102 = vmatpush2.msra.mxu0 0.0
        %8103 = vmatprep.subr.mxu0 0.0
        %8104 = vmatpush2.msra.mxu0 0.0
        %8105 = vmatprep.subr.mxu0 0.0
        %8106 = vmatpush2.msra.mxu0 0.0
        %8107 = vmatprep.subr.mxu0 0.0
        %8108 = vmatpush2.msra.mxu0 0.0
        %8109 = vmatprep.subr.mxu0 0.0
        %8110 = vmatpush2.msra.mxu0 0.0
        %8111 = vmatprep.subr.mxu0 0.0
        %8112 = vmatpush2.msra.mxu0 0.0
        %8113 = vmatprep.subr.mxu0 0.0
        %8114 = vmatpush2.msra.mxu0 0.0
        %8115 = vmatprep.subr.mxu0 0.0
        %8116 = vmatpush2.msra.mxu0 0.0
        %8117 = vmatprep.subr.mxu0 0.0
        %8118 = vmatpush2.msra.mxu0 0.0
        %8119 = vmatprep.subr.mxu0 0.0
        %8120 = vmatpush2.msra.mxu0 0.0
        %8121 = vmatprep.mubr.f32.mxu0 0.0
        %v8122 = vand.u32 %v8022, 4294901760
        %v8123 = vsub.f32 %v8022, %v8122
        %v8124 = vand.u32 %v8123, 4294901760
        %v8125 = vsub.f32 %v8123, %v8124
        %v8126 = vand.u32 %v8125, 4294901760
        %8127 = vmatmul.mubr.f32.gmra.mxu0 %v8126
        %v8128 = vpop.f32.mrf.mxu0
        %v8129 = vadd.f32 0.0, %v8128
        %v8130 = vpop.f32.mrf.mxu0
        %8131 = vmatprep.mubr.f32.mxu0 0.0
        %v8132 = vand.u32 %v8023, 4294901760
        %v8133 = vsub.f32 %v8023, %v8132
        %v8134 = vand.u32 %v8133, 4294901760
        %v8135 = vsub.f32 %v8133, %v8134
        %v8136 = vand.u32 %v8135, 4294901760
        %8137 = vmatmul.mubr.f32.gmra.mxu0 %v8136
        %v8138 = vpop.f32.mrf.mxu0
        %v8139 = vadd.f32 0.0, %v8138
        %v8140 = vpop.f32.mrf.mxu0
        %8141 = vdwg.mxu0
        %8142 = vmatprep.subr.mxu0 0.0
        %v8143 = vand.u32 %v8040, 4294901760
        %v8144 = vsub.f32 %v8040, %v8143
        %v8145 = vand.u32 %v8144, 4294901760
        %v8146 = vsub.f32 %v8144, %v8145
        %v8147 = vand.u32 %v8146, 4294901760
        %8148 = vmatpush1.msra.mxu0 %v8147
        %8149 = vmatprep.subr.mxu0 0.0
        %v8150 = vand.u32 %v8039, 4294901760
        %v8151 = vsub.f32 %v8039, %v8150
        %v8152 = vand.u32 %v8151, 4294901760
        %v8153 = vsub.f32 %v8151, %v8152
        %v8154 = vand.u32 %v8153, 4294901760
        %8155 = vmatpush1.msra.mxu0 %v8154
        %8156 = vmatprep.subr.mxu0 0.0
        %v8157 = vand.u32 %v8038, 4294901760
        %v8158 = vsub.f32 %v8038, %v8157
        %v8159 = vand.u32 %v8158, 4294901760
        %v8160 = vsub.f32 %v8158, %v8159
        %v8161 = vand.u32 %v8160, 4294901760
        %8162 = vmatpush1.msra.mxu0 %v8161
        %8163 = vmatprep.subr.mxu0 0.0
        %v8164 = vand.u32 %v8037, 4294901760
        %v8165 = vsub.f32 %v8037, %v8164
        %v8166 = vand.u32 %v8165, 4294901760
        %v8167 = vsub.f32 %v8165, %v8166
        %v8168 = vand.u32 %v8167, 4294901760
        %8169 = vmatpush1.msra.mxu0 %v8168
        %8170 = vmatprep.subr.mxu0 0.0
        %v8171 = vand.u32 %v8036, 4294901760
        %v8172 = vsub.f32 %v8036, %v8171
        %v8173 = vand.u32 %v8172, 4294901760
        %v8174 = vsub.f32 %v8172, %v8173
        %v8175 = vand.u32 %v8174, 4294901760
        %8176 = vmatpush1.msra.mxu0 %v8175
        %8177 = vmatprep.subr.mxu0 0.0
        %v8178 = vand.u32 %v8035, 4294901760
        %v8179 = vsub.f32 %v8035, %v8178
        %v8180 = vand.u32 %v8179, 4294901760
        %v8181 = vsub.f32 %v8179, %v8180
        %v8182 = vand.u32 %v8181, 4294901760
        %8183 = vmatpush1.msra.mxu0 %v8182
        %8184 = vmatprep.subr.mxu0 0.0
        %v8185 = vand.u32 %v8034, 4294901760
        %v8186 = vsub.f32 %v8034, %v8185
        %v8187 = vand.u32 %v8186, 4294901760
        %v8188 = vsub.f32 %v8186, %v8187
        %v8189 = vand.u32 %v8188, 4294901760
        %8190 = vmatpush1.msra.mxu0 %v8189
        %8191 = vmatprep.subr.mxu0 0.0
        %v8192 = vand.u32 %v8033, 4294901760
        %v8193 = vsub.f32 %v8033, %v8192
        %v8194 = vand.u32 %v8193, 4294901760
        %v8195 = vsub.f32 %v8193, %v8194
        %v8196 = vand.u32 %v8195, 4294901760
        %8197 = vmatpush1.msra.mxu0 %v8196
        %8198 = vmatprep.subr.mxu0 0.0
        %v8199 = vand.u32 %v8032, 4294901760
        %v8200 = vsub.f32 %v8032, %v8199
        %v8201 = vand.u32 %v8200, 4294901760
        %v8202 = vsub.f32 %v8200, %v8201
        %v8203 = vand.u32 %v8202, 4294901760
        %8204 = vmatpush1.msra.mxu0 %v8203
        %8205 = vmatprep.subr.mxu0 0.0
        %v8206 = vand.u32 %v8031, 4294901760
        %v8207 = vsub.f32 %v8031, %v8206
        %v8208 = vand.u32 %v8207, 4294901760
        %v8209 = vsub.f32 %v8207, %v8208
        %v8210 = vand.u32 %v8209, 4294901760
        %8211 = vmatpush1.msra.mxu0 %v8210
        %8212 = vmatprep.subr.mxu0 0.0
        %v8213 = vand.u32 %v8030, 4294901760
        %v8214 = vsub.f32 %v8030, %v8213
        %v8215 = vand.u32 %v8214, 4294901760
        %v8216 = vsub.f32 %v8214, %v8215
        %v8217 = vand.u32 %v8216, 4294901760
        %8218 = vmatpush1.msra.mxu0 %v8217
        %8219 = vmatprep.subr.mxu0 0.0
        %v8220 = vand.u32 %v8029, 4294901760
        %v8221 = vsub.f32 %v8029, %v8220
        %v8222 = vand.u32 %v8221, 4294901760
        %v8223 = vsub.f32 %v8221, %v8222
        %v8224 = vand.u32 %v8223, 4294901760
        %8225 = vmatpush1.msra.mxu0 %v8224
        %8226 = vmatprep.subr.mxu0 0.0
        %v8227 = vand.u32 %v8028, 4294901760
        %v8228 = vsub.f32 %v8028, %v8227
        %v8229 = vand.u32 %v8228, 4294901760
        %v8230 = vsub.f32 %v8228, %v8229
        %v8231 = vand.u32 %v8230, 4294901760
        %8232 = vmatpush1.msra.mxu0 %v8231
        %8233 = vmatprep.subr.mxu0 0.0
        %v8234 = vand.u32 %v8027, 4294901760
        %v8235 = vsub.f32 %v8027, %v8234
        %v8236 = vand.u32 %v8235, 4294901760
        %v8237 = vsub.f32 %v8235, %v8236
        %v8238 = vand.u32 %v8237, 4294901760
        %8239 = vmatpush1.msra.mxu0 %v8238
        %8240 = vmatprep.subr.mxu0 0.0
        %v8241 = vand.u32 %v8026, 4294901760
        %v8242 = vsub.f32 %v8026, %v8241
        %v8243 = vand.u32 %v8242, 4294901760
        %v8244 = vsub.f32 %v8242, %v8243
        %v8245 = vand.u32 %v8244, 4294901760
        %8246 = vmatpush1.msra.mxu0 %v8245
        %8247 = vmatprep.subr.mxu0 0.0
        %v8248 = vand.u32 %v8025, 4294901760
        %v8249 = vsub.f32 %v8025, %v8248
        %v8250 = vand.u32 %v8249, 4294901760
        %v8251 = vsub.f32 %v8249, %v8250
        %v8252 = vand.u32 %v8251, 4294901760
        %8253 = vmatpush1.msra.mxu0 %v8252
        %8254 = vmatprep.subr.mxu0 0.0
        %8255 = vmatpush2.msra.mxu0 0.0
        %8256 = vmatprep.subr.mxu0 0.0
        %8257 = vmatpush2.msra.mxu0 0.0
        %8258 = vmatprep.subr.mxu0 0.0
        %8259 = vmatpush2.msra.mxu0 0.0
        %8260 = vmatprep.subr.mxu0 0.0
        %8261 = vmatpush2.msra.mxu0 0.0
        %8262 = vmatprep.subr.mxu0 0.0
        %8263 = vmatpush2.msra.mxu0 0.0
        %8264 = vmatprep.subr.mxu0 0.0
        %8265 = vmatpush2.msra.mxu0 0.0
        %8266 = vmatprep.subr.mxu0 0.0
        %8267 = vmatpush2.msra.mxu0 0.0
        %8268 = vmatprep.subr.mxu0 0.0
        %8269 = vmatpush2.msra.mxu0 0.0
        %8270 = vmatprep.subr.mxu0 0.0
        %8271 = vmatpush2.msra.mxu0 0.0
        %8272 = vmatprep.subr.mxu0 0.0
        %8273 = vmatpush2.msra.mxu0 0.0
        %8274 = vmatprep.subr.mxu0 0.0
        %8275 = vmatpush2.msra.mxu0 0.0
        %8276 = vmatprep.subr.mxu0 0.0
        %8277 = vmatpush2.msra.mxu0 0.0
        %8278 = vmatprep.subr.mxu0 0.0
        %8279 = vmatpush2.msra.mxu0 0.0
        %8280 = vmatprep.subr.mxu0 0.0
        %8281 = vmatpush2.msra.mxu0 0.0
        %8282 = vmatprep.subr.mxu0 0.0
        %8283 = vmatpush2.msra.mxu0 0.0
        %8284 = vmatprep.subr.mxu0 0.0
        %8285 = vmatpush2.msra.mxu0 0.0
        %8286 = vmatprep.mubr.f32.mxu0 0.0
        %v8287 = vand.u32 %v8022, 4294901760
        %8288 = vmatmul.mubr.f32.gmra.mxu0 %v8287
        %v8289 = vpop.f32.mrf.mxu0
        %v8290 = vadd.f32 %v8129, %v8289
        %v8291 = vpop.f32.mrf.mxu0
        %8292 = vmatprep.mubr.f32.mxu0 0.0
        %v8293 = vand.u32 %v8023, 4294901760
        %8294 = vmatmul.mubr.f32.gmra.mxu0 %v8293
        %v8295 = vpop.f32.mrf.mxu0
        %v8296 = vadd.f32 %v8139, %v8295
        %v8297 = vpop.f32.mrf.mxu0
        %8298 = vdwg.mxu0
        %8299 = vmatprep.subr.mxu0 0.0
        %v8300 = vand.u32 %v8040, 4294901760
        %v8301 = vsub.f32 %v8040, %v8300
        %8302 = vmatpush1.msra.mxu0 %v8301
        %8303 = vmatprep.subr.mxu0 0.0
        %v8304 = vand.u32 %v8039, 4294901760
        %v8305 = vsub.f32 %v8039, %v8304
        %8306 = vmatpush1.msra.mxu0 %v8305
        %8307 = vmatprep.subr.mxu0 0.0
        %v8308 = vand.u32 %v8038, 4294901760
        %v8309 = vsub.f32 %v8038, %v8308
        %8310 = vmatpush1.msra.mxu0 %v8309
        %8311 = vmatprep.subr.mxu0 0.0
        %v8312 = vand.u32 %v8037, 4294901760
        %v8313 = vsub.f32 %v8037, %v8312
        %8314 = vmatpush1.msra.mxu0 %v8313
        %8315 = vmatprep.subr.mxu0 0.0
        %v8316 = vand.u32 %v8036, 4294901760
        %v8317 = vsub.f32 %v8036, %v8316
        %8318 = vmatpush1.msra.mxu0 %v8317
        %8319 = vmatprep.subr.mxu0 0.0
        %v8320 = vand.u32 %v8035, 4294901760
        %v8321 = vsub.f32 %v8035, %v8320
        %8322 = vmatpush1.msra.mxu0 %v8321
        %8323 = vmatprep.subr.mxu0 0.0
        %v8324 = vand.u32 %v8034, 4294901760
        %v8325 = vsub.f32 %v8034, %v8324
        %8326 = vmatpush1.msra.mxu0 %v8325
        %8327 = vmatprep.subr.mxu0 0.0
        %v8328 = vand.u32 %v8033, 4294901760
        %v8329 = vsub.f32 %v8033, %v8328
        %8330 = vmatpush1.msra.mxu0 %v8329
        %8331 = vmatprep.subr.mxu0 0.0
        %v8332 = vand.u32 %v8032, 4294901760
        %v8333 = vsub.f32 %v8032, %v8332
        %8334 = vmatpush1.msra.mxu0 %v8333
        %8335 = vmatprep.subr.mxu0 0.0
        %v8336 = vand.u32 %v8031, 4294901760
        %v8337 = vsub.f32 %v8031, %v8336
        %8338 = vmatpush1.msra.mxu0 %v8337
        %8339 = vmatprep.subr.mxu0 0.0
        %v8340 = vand.u32 %v8030, 4294901760
        %v8341 = vsub.f32 %v8030, %v8340
        %8342 = vmatpush1.msra.mxu0 %v8341
        %8343 = vmatprep.subr.mxu0 0.0
        %v8344 = vand.u32 %v8029, 4294901760
        %v8345 = vsub.f32 %v8029, %v8344
        %8346 = vmatpush1.msra.mxu0 %v8345
        %8347 = vmatprep.subr.mxu0 0.0
        %v8348 = vand.u32 %v8028, 4294901760
        %v8349 = vsub.f32 %v8028, %v8348
        %8350 = vmatpush1.msra.mxu0 %v8349
        %8351 = vmatprep.subr.mxu0 0.0
        %v8352 = vand.u32 %v8027, 4294901760
        %v8353 = vsub.f32 %v8027, %v8352
        %8354 = vmatpush1.msra.mxu0 %v8353
        %8355 = vmatprep.subr.mxu0 0.0
        %v8356 = vand.u32 %v8026, 4294901760
        %v8357 = vsub.f32 %v8026, %v8356
        %8358 = vmatpush1.msra.mxu0 %v8357
        %8359 = vmatprep.subr.mxu0 0.0
        %v8360 = vand.u32 %v8025, 4294901760
        %v8361 = vsub.f32 %v8025, %v8360
        %8362 = vmatpush1.msra.mxu0 %v8361
        %8363 = vmatprep.subr.mxu0 0.0
        %8364 = vmatpush2.msra.mxu0 0.0
        %8365 = vmatprep.subr.mxu0 0.0
        %8366 = vmatpush2.msra.mxu0 0.0
        %8367 = vmatprep.subr.mxu0 0.0
        %8368 = vmatpush2.msra.mxu0 0.0
        %8369 = vmatprep.subr.mxu0 0.0
        %8370 = vmatpush2.msra.mxu0 0.0
        %8371 = vmatprep.subr.mxu0 0.0
        %8372 = vmatpush2.msra.mxu0 0.0
        %8373 = vmatprep.subr.mxu0 0.0
        %8374 = vmatpush2.msra.mxu0 0.0
        %8375 = vmatprep.subr.mxu0 0.0
        %8376 = vmatpush2.msra.mxu0 0.0
        %8377 = vmatprep.subr.mxu0 0.0
        %8378 = vmatpush2.msra.mxu0 0.0
        %8379 = vmatprep.subr.mxu0 0.0
        %8380 = vmatpush2.msra.mxu0 0.0
        %8381 = vmatprep.subr.mxu0 0.0
        %8382 = vmatpush2.msra.mxu0 0.0
        %8383 = vmatprep.subr.mxu0 0.0
        %8384 = vmatpush2.msra.mxu0 0.0
        %8385 = vmatprep.subr.mxu0 0.0
        %8386 = vmatpush2.msra.mxu0 0.0
        %8387 = vmatprep.subr.mxu0 0.0
        %8388 = vmatpush2.msra.mxu0 0.0
        %8389 = vmatprep.subr.mxu0 0.0
        %8390 = vmatpush2.msra.mxu0 0.0
        %8391 = vmatprep.subr.mxu0 0.0
        %8392 = vmatpush2.msra.mxu0 0.0
        %8393 = vmatprep.subr.mxu0 0.0
        %8394 = vmatpush2.msra.mxu0 0.0
        %8395 = vmatprep.mubr.f32.mxu0 0.0
        %v8396 = vand.u32 %v8022, 4294901760
        %v8397 = vsub.f32 %v8022, %v8396
        %8398 = vmatmul.mubr.f32.gmra.mxu0 %v8397
        %v8399 = vpop.f32.mrf.mxu0
        %v8400 = vadd.f32 %v8290, %v8399
        %v8401 = vpop.f32.mrf.mxu0
        %8402 = vmatprep.mubr.f32.mxu0 0.0
        %v8403 = vand.u32 %v8023, 4294901760
        %v8404 = vsub.f32 %v8023, %v8403
        %8405 = vmatmul.mubr.f32.gmra.mxu0 %v8404
        %v8406 = vpop.f32.mrf.mxu0
        %v8407 = vadd.f32 %v8296, %v8406
        %v8408 = vpop.f32.mrf.mxu0
        %8409 = vdwg.mxu0
        %8410 = vmatprep.subr.mxu0 0.0
        %v8411 = vand.u32 %v8040, 4294901760
        %8412 = vmatpush1.msra.mxu0 %v8411
        %8413 = vmatprep.subr.mxu0 0.0
        %v8414 = vand.u32 %v8039, 4294901760
        %8415 = vmatpush1.msra.mxu0 %v8414
        %8416 = vmatprep.subr.mxu0 0.0
        %v8417 = vand.u32 %v8038, 4294901760
        %8418 = vmatpush1.msra.mxu0 %v8417
        %8419 = vmatprep.subr.mxu0 0.0
        %v8420 = vand.u32 %v8037, 4294901760
        %8421 = vmatpush1.msra.mxu0 %v8420
        %8422 = vmatprep.subr.mxu0 0.0
        %v8423 = vand.u32 %v8036, 4294901760
        %8424 = vmatpush1.msra.mxu0 %v8423
        %8425 = vmatprep.subr.mxu0 0.0
        %v8426 = vand.u32 %v8035, 4294901760
        %8427 = vmatpush1.msra.mxu0 %v8426
        %8428 = vmatprep.subr.mxu0 0.0
        %v8429 = vand.u32 %v8034, 4294901760
        %8430 = vmatpush1.msra.mxu0 %v8429
        %8431 = vmatprep.subr.mxu0 0.0
        %v8432 = vand.u32 %v8033, 4294901760
        %8433 = vmatpush1.msra.mxu0 %v8432
        %8434 = vmatprep.subr.mxu0 0.0
        %v8435 = vand.u32 %v8032, 4294901760
        %8436 = vmatpush1.msra.mxu0 %v8435
        %8437 = vmatprep.subr.mxu0 0.0
        %v8438 = vand.u32 %v8031, 4294901760
        %8439 = vmatpush1.msra.mxu0 %v8438
        %8440 = vmatprep.subr.mxu0 0.0
        %v8441 = vand.u32 %v8030, 4294901760
        %8442 = vmatpush1.msra.mxu0 %v8441
        %8443 = vmatprep.subr.mxu0 0.0
        %v8444 = vand.u32 %v8029, 4294901760
        %8445 = vmatpush1.msra.mxu0 %v8444
        %8446 = vmatprep.subr.mxu0 0.0
        %v8447 = vand.u32 %v8028, 4294901760
        %8448 = vmatpush1.msra.mxu0 %v8447
        %8449 = vmatprep.subr.mxu0 0.0
        %v8450 = vand.u32 %v8027, 4294901760
        %8451 = vmatpush1.msra.mxu0 %v8450
        %8452 = vmatprep.subr.mxu0 0.0
        %v8453 = vand.u32 %v8026, 4294901760
        %8454 = vmatpush1.msra.mxu0 %v8453
        %8455 = vmatprep.subr.mxu0 0.0
        %v8456 = vand.u32 %v8025, 4294901760
        %8457 = vmatpush1.msra.mxu0 %v8456
        %8458 = vmatprep.subr.mxu0 0.0
        %8459 = vmatpush2.msra.mxu0 0.0
        %8460 = vmatprep.subr.mxu0 0.0
        %8461 = vmatpush2.msra.mxu0 0.0
        %8462 = vmatprep.subr.mxu0 0.0
        %8463 = vmatpush2.msra.mxu0 0.0
        %8464 = vmatprep.subr.mxu0 0.0
        %8465 = vmatpush2.msra.mxu0 0.0
        %8466 = vmatprep.subr.mxu0 0.0
        %8467 = vmatpush2.msra.mxu0 0.0
        %8468 = vmatprep.subr.mxu0 0.0
        %8469 = vmatpush2.msra.mxu0 0.0
        %8470 = vmatprep.subr.mxu0 0.0
        %8471 = vmatpush2.msra.mxu0 0.0
        %8472 = vmatprep.subr.mxu0 0.0
        %8473 = vmatpush2.msra.mxu0 0.0
        %8474 = vmatprep.subr.mxu0 0.0
        %8475 = vmatpush2.msra.mxu0 0.0
        %8476 = vmatprep.subr.mxu0 0.0
        %8477 = vmatpush2.msra.mxu0 0.0
        %8478 = vmatprep.subr.mxu0 0.0
        %8479 = vmatpush2.msra.mxu0 0.0
        %8480 = vmatprep.subr.mxu0 0.0
        %8481 = vmatpush2.msra.mxu0 0.0
        %8482 = vmatprep.subr.mxu0 0.0
        %8483 = vmatpush2.msra.mxu0 0.0
        %8484 = vmatprep.subr.mxu0 0.0
        %8485 = vmatpush2.msra.mxu0 0.0
        %8486 = vmatprep.subr.mxu0 0.0
        %8487 = vmatpush2.msra.mxu0 0.0
        %8488 = vmatprep.subr.mxu0 0.0
        %8489 = vmatpush2.msra.mxu0 0.0
        %8490 = vmatprep.mubr.f32.mxu0 0.0
        %v8491 = vand.u32 %v8022, 4294901760
        %v8492 = vsub.f32 %v8022, %v8491
        %v8493 = vand.u32 %v8492, 4294901760
        %8494 = vmatmul.mubr.f32.gmra.mxu0 %v8493
        %v8495 = vpop.f32.mrf.mxu0
        %v8496 = vadd.f32 %v8400, %v8495
        %v8497 = vpop.f32.mrf.mxu0
        %8498 = vmatprep.mubr.f32.mxu0 0.0
        %v8499 = vand.u32 %v8023, 4294901760
        %v8500 = vsub.f32 %v8023, %v8499
        %v8501 = vand.u32 %v8500, 4294901760
        %8502 = vmatmul.mubr.f32.gmra.mxu0 %v8501
        %v8503 = vpop.f32.mrf.mxu0
        %v8504 = vadd.f32 %v8407, %v8503
        %v8505 = vpop.f32.mrf.mxu0
        %8506 = vdwg.mxu0
        %8507 = vmatprep.subr.mxu0 0.0
        %v8508 = vand.u32 %v8040, 4294901760
        %v8509 = vsub.f32 %v8040, %v8508
        %v8510 = vand.u32 %v8509, 4294901760
        %8511 = vmatpush1.msra.mxu0 %v8510
        %8512 = vmatprep.subr.mxu0 0.0
        %v8513 = vand.u32 %v8039, 4294901760
        %v8514 = vsub.f32 %v8039, %v8513
        %v8515 = vand.u32 %v8514, 4294901760
        %8516 = vmatpush1.msra.mxu0 %v8515
        %8517 = vmatprep.subr.mxu0 0.0
        %v8518 = vand.u32 %v8038, 4294901760
        %v8519 = vsub.f32 %v8038, %v8518
        %v8520 = vand.u32 %v8519, 4294901760
        %8521 = vmatpush1.msra.mxu0 %v8520
        %8522 = vmatprep.subr.mxu0 0.0
        %v8523 = vand.u32 %v8037, 4294901760
        %v8524 = vsub.f32 %v8037, %v8523
        %v8525 = vand.u32 %v8524, 4294901760
        %8526 = vmatpush1.msra.mxu0 %v8525
        %8527 = vmatprep.subr.mxu0 0.0
        %v8528 = vand.u32 %v8036, 4294901760
        %v8529 = vsub.f32 %v8036, %v8528
        %v8530 = vand.u32 %v8529, 4294901760
        %8531 = vmatpush1.msra.mxu0 %v8530
        %8532 = vmatprep.subr.mxu0 0.0
        %v8533 = vand.u32 %v8035, 4294901760
        %v8534 = vsub.f32 %v8035, %v8533
        %v8535 = vand.u32 %v8534, 4294901760
        %8536 = vmatpush1.msra.mxu0 %v8535
        %8537 = vmatprep.subr.mxu0 0.0
        %v8538 = vand.u32 %v8034, 4294901760
        %v8539 = vsub.f32 %v8034, %v8538
        %v8540 = vand.u32 %v8539, 4294901760
        %8541 = vmatpush1.msra.mxu0 %v8540
        %8542 = vmatprep.subr.mxu0 0.0
        %v8543 = vand.u32 %v8033, 4294901760
        %v8544 = vsub.f32 %v8033, %v8543
        %v8545 = vand.u32 %v8544, 4294901760
        %8546 = vmatpush1.msra.mxu0 %v8545
        %8547 = vmatprep.subr.mxu0 0.0
        %v8548 = vand.u32 %v8032, 4294901760
        %v8549 = vsub.f32 %v8032, %v8548
        %v8550 = vand.u32 %v8549, 4294901760
        %8551 = vmatpush1.msra.mxu0 %v8550
        %8552 = vmatprep.subr.mxu0 0.0
        %v8553 = vand.u32 %v8031, 4294901760
        %v8554 = vsub.f32 %v8031, %v8553
        %v8555 = vand.u32 %v8554, 4294901760
        %8556 = vmatpush1.msra.mxu0 %v8555
        %8557 = vmatprep.subr.mxu0 0.0
        %v8558 = vand.u32 %v8030, 4294901760
        %v8559 = vsub.f32 %v8030, %v8558
        %v8560 = vand.u32 %v8559, 4294901760
        %8561 = vmatpush1.msra.mxu0 %v8560
        %8562 = vmatprep.subr.mxu0 0.0
        %v8563 = vand.u32 %v8029, 4294901760
        %v8564 = vsub.f32 %v8029, %v8563
        %v8565 = vand.u32 %v8564, 4294901760
        %8566 = vmatpush1.msra.mxu0 %v8565
        %8567 = vmatprep.subr.mxu0 0.0
        %v8568 = vand.u32 %v8028, 4294901760
        %v8569 = vsub.f32 %v8028, %v8568
        %v8570 = vand.u32 %v8569, 4294901760
        %8571 = vmatpush1.msra.mxu0 %v8570
        %8572 = vmatprep.subr.mxu0 0.0
        %v8573 = vand.u32 %v8027, 4294901760
        %v8574 = vsub.f32 %v8027, %v8573
        %v8575 = vand.u32 %v8574, 4294901760
        %8576 = vmatpush1.msra.mxu0 %v8575
        %8577 = vmatprep.subr.mxu0 0.0
        %v8578 = vand.u32 %v8026, 4294901760
        %v8579 = vsub.f32 %v8026, %v8578
        %v8580 = vand.u32 %v8579, 4294901760
        %8581 = vmatpush1.msra.mxu0 %v8580
        %8582 = vmatprep.subr.mxu0 0.0
        %v8583 = vand.u32 %v8025, 4294901760
        %v8584 = vsub.f32 %v8025, %v8583
        %v8585 = vand.u32 %v8584, 4294901760
        %8586 = vmatpush1.msra.mxu0 %v8585
        %8587 = vmatprep.subr.mxu0 0.0
        %8588 = vmatpush2.msra.mxu0 0.0
        %8589 = vmatprep.subr.mxu0 0.0
        %8590 = vmatpush2.msra.mxu0 0.0
        %8591 = vmatprep.subr.mxu0 0.0
        %8592 = vmatpush2.msra.mxu0 0.0
        %8593 = vmatprep.subr.mxu0 0.0
        %8594 = vmatpush2.msra.mxu0 0.0
        %8595 = vmatprep.subr.mxu0 0.0
        %8596 = vmatpush2.msra.mxu0 0.0
        %8597 = vmatprep.subr.mxu0 0.0
        %8598 = vmatpush2.msra.mxu0 0.0
        %8599 = vmatprep.subr.mxu0 0.0
        %8600 = vmatpush2.msra.mxu0 0.0
        %8601 = vmatprep.subr.mxu0 0.0
        %8602 = vmatpush2.msra.mxu0 0.0
        %8603 = vmatprep.subr.mxu0 0.0
        %8604 = vmatpush2.msra.mxu0 0.0
        %8605 = vmatprep.subr.mxu0 0.0
        %8606 = vmatpush2.msra.mxu0 0.0
        %8607 = vmatprep.subr.mxu0 0.0
        %8608 = vmatpush2.msra.mxu0 0.0
        %8609 = vmatprep.subr.mxu0 0.0
        %8610 = vmatpush2.msra.mxu0 0.0
        %8611 = vmatprep.subr.mxu0 0.0
        %8612 = vmatpush2.msra.mxu0 0.0
        %8613 = vmatprep.subr.mxu0 0.0
        %8614 = vmatpush2.msra.mxu0 0.0
        %8615 = vmatprep.subr.mxu0 0.0
        %8616 = vmatpush2.msra.mxu0 0.0
        %8617 = vmatprep.subr.mxu0 0.0
        %8618 = vmatpush2.msra.mxu0 0.0
        %8619 = vmatprep.mubr.f32.mxu0 0.0
        %v8620 = vand.u32 %v8022, 4294901760
        %8621 = vmatmul.mubr.f32.gmra.mxu0 %v8620
        %v8622 = vpop.f32.mrf.mxu0
        %v8623 = vadd.f32 %v8496, %v8622
        %v8624 = vpop.f32.mrf.mxu0
        %8625 = vmatprep.mubr.f32.mxu0 0.0
        %v8626 = vand.u32 %v8023, 4294901760
        %8627 = vmatmul.mubr.f32.gmra.mxu0 %v8626
        %v8628 = vpop.f32.mrf.mxu0
        %v8629 = vadd.f32 %v8504, %v8628
        %v8630 = vpop.f32.mrf.mxu0
        %8631 = vdwg.mxu0
        %8632 = vmatprep.subr.mxu0 0.0
        %v8633 = vand.u32 %v8040, 4294901760
        %8634 = vmatpush1.msra.mxu0 %v8633
        %8635 = vmatprep.subr.mxu0 0.0
        %v8636 = vand.u32 %v8039, 4294901760
        %8637 = vmatpush1.msra.mxu0 %v8636
        %8638 = vmatprep.subr.mxu0 0.0
        %v8639 = vand.u32 %v8038, 4294901760
        %8640 = vmatpush1.msra.mxu0 %v8639
        %8641 = vmatprep.subr.mxu0 0.0
        %v8642 = vand.u32 %v8037, 4294901760
        %8643 = vmatpush1.msra.mxu0 %v8642
        %8644 = vmatprep.subr.mxu0 0.0
        %v8645 = vand.u32 %v8036, 4294901760
        %8646 = vmatpush1.msra.mxu0 %v8645
        %8647 = vmatprep.subr.mxu0 0.0
        %v8648 = vand.u32 %v8035, 4294901760
        %8649 = vmatpush1.msra.mxu0 %v8648
        %8650 = vmatprep.subr.mxu0 0.0
        %v8651 = vand.u32 %v8034, 4294901760
        %8652 = vmatpush1.msra.mxu0 %v8651
        %8653 = vmatprep.subr.mxu0 0.0
        %v8654 = vand.u32 %v8033, 4294901760
        %8655 = vmatpush1.msra.mxu0 %v8654
        %8656 = vmatprep.subr.mxu0 0.0
        %v8657 = vand.u32 %v8032, 4294901760
        %8658 = vmatpush1.msra.mxu0 %v8657
        %8659 = vmatprep.subr.mxu0 0.0
        %v8660 = vand.u32 %v8031, 4294901760
        %8661 = vmatpush1.msra.mxu0 %v8660
        %8662 = vmatprep.subr.mxu0 0.0
        %v8663 = vand.u32 %v8030, 4294901760
        %8664 = vmatpush1.msra.mxu0 %v8663
        %8665 = vmatprep.subr.mxu0 0.0
        %v8666 = vand.u32 %v8029, 4294901760
        %8667 = vmatpush1.msra.mxu0 %v8666
        %8668 = vmatprep.subr.mxu0 0.0
        %v8669 = vand.u32 %v8028, 4294901760
        %8670 = vmatpush1.msra.mxu0 %v8669
        %8671 = vmatprep.subr.mxu0 0.0
        %v8672 = vand.u32 %v8027, 4294901760
        %8673 = vmatpush1.msra.mxu0 %v8672
        %8674 = vmatprep.subr.mxu0 0.0
        %v8675 = vand.u32 %v8026, 4294901760
        %8676 = vmatpush1.msra.mxu0 %v8675
        %8677 = vmatprep.subr.mxu0 0.0
        %v8678 = vand.u32 %v8025, 4294901760
        %8679 = vmatpush1.msra.mxu0 %v8678
        %8680 = vmatprep.subr.mxu0 0.0
        %8681 = vmatpush2.msra.mxu0 0.0
        %8682 = vmatprep.subr.mxu0 0.0
        %8683 = vmatpush2.msra.mxu0 0.0
        %8684 = vmatprep.subr.mxu0 0.0
        %8685 = vmatpush2.msra.mxu0 0.0
        %8686 = vmatprep.subr.mxu0 0.0
        %8687 = vmatpush2.msra.mxu0 0.0
        %8688 = vmatprep.subr.mxu0 0.0
        %8689 = vmatpush2.msra.mxu0 0.0
        %8690 = vmatprep.subr.mxu0 0.0
        %8691 = vmatpush2.msra.mxu0 0.0
        %8692 = vmatprep.subr.mxu0 0.0
        %8693 = vmatpush2.msra.mxu0 0.0
        %8694 = vmatprep.subr.mxu0 0.0
        %8695 = vmatpush2.msra.mxu0 0.0
        %8696 = vmatprep.subr.mxu0 0.0
        %8697 = vmatpush2.msra.mxu0 0.0
        %8698 = vmatprep.subr.mxu0 0.0
        %8699 = vmatpush2.msra.mxu0 0.0
        %8700 = vmatprep.subr.mxu0 0.0
        %8701 = vmatpush2.msra.mxu0 0.0
        %8702 = vmatprep.subr.mxu0 0.0
        %8703 = vmatpush2.msra.mxu0 0.0
        %8704 = vmatprep.subr.mxu0 0.0
        %8705 = vmatpush2.msra.mxu0 0.0
        %8706 = vmatprep.subr.mxu0 0.0
        %8707 = vmatpush2.msra.mxu0 0.0
        %8708 = vmatprep.subr.mxu0 0.0
        %8709 = vmatpush2.msra.mxu0 0.0
        %8710 = vmatprep.subr.mxu0 0.0
        %8711 = vmatpush2.msra.mxu0 0.0
        %8712 = vmatprep.mubr.f32.mxu0 0.0
        %v8713 = vand.u32 %v8022, 4294901760
        %8714 = vmatmul.mubr.f32.gmra.mxu0 %v8713
        %v8715 = vpop.f32.mrf.mxu0
        %v8716 = vadd.f32 %v8623, %v8715
        %v8717 = vpop.f32.mrf.mxu0
        %8718 = vmatprep.mubr.f32.mxu0 0.0
        %v8719 = vand.u32 %v8023, 4294901760
        %8720 = vmatmul.mubr.f32.gmra.mxu0 %v8719
        %v8721 = vpop.f32.mrf.mxu0
        %v8722 = vadd.f32 %v8629, %v8721
        %v8723 = vpop.f32.mrf.mxu0
        %8724 = vdwg.mxu0
        %v8725 = vadd.f32 %v8009, %v8716
        %v8726 = vadd.f32 %v8015, %v8722
        %s8727 = scalar_lea.vmem %s3, 3
        %v8728 = vld [vmem:[%s8727] sm:$0x1]
        %v8730 = vlaneseq
        %v8731 = vshrl.u32 %v8730, 7
        %v8732 = vsub.s32 0, %v8731
        %v8733 = vrot.slane %v8728, %v8732
        %v8735 = vadd.f32 %v8725, %v8733
        %v8736 = vadd.f32 %v8726, %v8733
        %v8737 = vmul.f32 %v8735, 0.1
        %v8738 = vmul.f32 %v8736, 0.1
        %v8739 = vadd.f32 %v4479, %v8737
        %v8740 = vadd.f32 %v4480, %v8738
        %8741 = vst [vmem:[%s212] sm:$0xff] %v8739
        %8742 = vst [vmem:[%s212 + $0x8] sm:$0xff] %v8740
        %p8743 = scmp.lt.s32.totalorder %s16, 1
        %s8744 = scalar_select %p8743, %s16, 1
        %s8745 = smul.addr %s8744, 2
        %s8746 = smul.addr %s8745, 8
        %s8747 = scalar_lea.vmem %s4, %s8746
        // Predicated region
        $region41: #{resnet_backbone_apply.1} parent=35 // pred_check
          %p8748 = pneg %p123
        $region42: #{resnet_backbone_apply.1} parent=35 // pred_check_branch
          %8750 = sbr.rel (%p8748) target = $region44
        $region43: #{resnet_backbone_apply.1} parent=35 // pred_region
          _
        $region44: #{resnet_backbone_apply.1} parent=35 // pred_fallthru
          _
      $region36: #{resnet_backbone_apply.1} parent=5 // pred_fallthru
        _
      %p8751 = scmp.le.s32.totalorder 2, %s11
      // Predicated region
      $region45: #{resnet_backbone_apply.1} parent=5 // pred_check
        %p8752 = pneg %p8751
      $region46: #{resnet_backbone_apply.1} parent=5 // pred_check_branch
        %8754 = sbr.rel (%p8752) target = $region48
      $region47: #{resnet_backbone_apply.1} parent=5 // pred_region
        %s8755 = ssub.s32 %s11, 2
        // Predicated region
        $region49: #{resnet_backbone_apply.1} parent=47 // pred_check
          %p8756 = pneg %p129
        $region50: #{resnet_backbone_apply.1} parent=47 // pred_check_branch
          %8758 = sbr.rel (%p8756) target = $region52
        $region51: #{resnet_backbone_apply.1} parent=47 // pred_region
          %p8759 = scmp.lt.s32.totalorder %s17, 1
          %s8760 = scalar_select %p8759, %s17, 1
          %s8761 = smul.addr %s8760, 2
          %s8762 = smul.addr %s8761, 8
          %s8763 = scalar_lea.vmem %s4, %s8762
        $region52: #{resnet_backbone_apply.1} parent=47 // pred_fallthru
          _
      $region48: #{resnet_backbone_apply.1} parent=5 // pred_fallthru
        _
    $region6: #{resnet_backbone_apply.1} parent=1 // loop_footer
      %s15 = sadd.s32 1, %s11
    $region7: #{resnet_backbone_apply.1} parent=1 // loop_footer_branch
      %10 = sbr.rel target = $region3
    $region8: #{resnet_backbone_apply.1} parent=1 // loop_exit
      _
    %8764 = vsyncpa [#allocation3], 1
    %s8765 = scalar_lea.sflag [#allocation3], 1
    %8766 = vsyncpa %s8765, 1

</llo_original>
